<compile_context>
chip_gen: v7x
topology: tpu7x:2x2x1
jax: 0.10.0
libtpu: 0.0.40
codegen_flags: <defaults>
</compile_context>

<pallas_src>
import functools

import jax
import jax.numpy as jnp
from jax.experimental import pallas as pl
from jax.experimental.pallas import tpu as pltpu

IMAGENET_MEAN = jnp.array([0.485, 0.456, 0.406], dtype=jnp.float32)
IMAGENET_STD = jnp.array([0.229, 0.224, 0.225], dtype=jnp.float32)

_VMEM_TILE_BUDGET = 18 * 1024 * 1024    # per-step working-set target (bytes)
_VMEM_LIMIT = 48 * 1024 * 1024          # scoped VMEM limit (< v7x 64 MiB phys)


def _compiler_params():
    return pltpu.CompilerParams(
        dimension_semantics=("parallel", "parallel"),
        vmem_limit_bytes=_VMEM_LIMIT)


# ---------------------------------------------------------------------------
# Pallas kernels
# ---------------------------------------------------------------------------
def _conv3x3_kernel(x_ref, w_ref, b_ref, o_ref, acc_ref, *, fuse_dx, pool):
    """3x3 conv + bias + ReLU (+ optional fused 2x2 maxpool) on one row tile.

    x_ref  : (1, TH+2, TW+2, Cin)      bf16 zero-halo row tile
    w_ref  : (3, 3*Cin, Cout)          bf16, K ordered as (dx, cin)
    b_ref  : (1, Cout)                 f32
    o_ref  : (1, TH_out, TW_out, Cout) bf16
    acc_ref: (TH*TW, Cout)             f32 VMEM scratch accumulator
    """
    th = x_ref.shape[1] - 2
    tw = x_ref.shape[2] - 2
    cin = x_ref.shape[3]
    cout = o_ref.shape[3]

    first = True
    for dy in range(3):
        if fuse_dx:
            # one (TH*TW, 3*Cin) @ (3*Cin, Cout) matmul per dy.
            patch = jnp.concatenate(
                [x_ref[0, dy:dy + th, dx:dx + tw, :] for dx in range(3)],
                axis=-1).reshape(th * tw, 3 * cin)
            part = jnp.dot(patch, w_ref[dy],
                           preferred_element_type=jnp.float32)
            if first:
                acc_ref[...] = part
            else:
                acc_ref[...] += part
            first = False
        else:
            for dx in range(3):
                patch = x_ref[0, dy:dy + th, dx:dx + tw, :].reshape(th * tw,
                                                                    cin)
                part = jnp.dot(patch, w_ref[dy, dx * cin:(dx + 1) * cin, :],
                               preferred_element_type=jnp.float32)
                if first:
                    acc_ref[...] = part
                else:
                    acc_ref[...] += part
                first = False

    y = jnp.maximum(acc_ref[...] + b_ref[...], 0.0)       # bias + ReLU (f32)
    y = y.reshape(th, tw, cout)
    if pool:
        # fused 2x2 / stride-2 maxpool epilogue.
        # TODO(synk): the W-axis reshape splits the sublane dim (XLU relayout);
        # acceptable since it runs once on VMEM-resident data.
        y = y.reshape(th // 2, 2, tw, cout)
        y = jnp.maximum(y[:, 0], y[:, 1])
        y = y.reshape(th // 2, tw // 2, 2, cout)
        y = jnp.maximum(y[:, :, 0], y[:, :, 1])
    o_ref[0] = y.astype(o_ref.dtype)


def _im2col_matmul_kernel(x_ref, w_ref, b_ref, o_ref):
    """conv1_1 as a single matmul on im2col'ed patches (K = 27).

    x_ref: (1, TH, TW, K) bf16; w_ref: (K, Cout) bf16; b_ref: (1, Cout) f32
    o_ref: (1, TH, TW, Cout) bf16
    """
    th, tw, k = x_ref.shape[1], x_ref.shape[2], x_ref.shape[3]
    cout = o_ref.shape[3]
    x = x_ref[0].reshape(th * tw, k)
    y = jnp.dot(x, w_ref[...], preferred_element_type=jnp.float32)
    y = jnp.maximum(y + b_ref[...], 0.0)
    o_ref[0] = y.reshape(th, tw, cout).astype(o_ref.dtype)


# ---------------------------------------------------------------------------
# Wrappers (tiling, halo duplication, weight layout)
# ---------------------------------------------------------------------------
def _pick_row_tile(h, w, cin, cout, pool, row_cap):
    """Largest row-tile height dividing H that respects pooling parity and the
    per-step VMEM budget (2x in + 2x out double-buffers + weights + f32 acc)."""
    step = 2 if pool else 1
    cands = [t for t in range(step, min(h, row_cap) + 1, step) if h % t == 0]
    if not cands:
        return h

    def vmem_bytes(t):
        return (2 * (t + 2) * (w + 2) * cin * 2            # input tile, bf16
                + 2 * (t // step) * (w // step) * cout * 2  # output tile, bf16
                + 9 * cin * cout * 2                        # weights, bf16
                + t * w * cout * 4)                         # f32 accumulator

    fitting = [t for t in cands if vmem_bytes(t) <= _VMEM_TILE_BUDGET]
    return max(fitting) if fitting else min(cands)


def _build_halo_row_tiles(x, th):
    """(N, H, W, C) -> (N * H//th, th+2, W+2, C) zero-padded row tiles with a
    1-row halo on each side, so BlockSpec blocks are disjoint.
    TODO(synk): for very large images switch to manual make_async_copy halos
    (pl.ANY input) to avoid this extra HBM copy of the activations."""
    n, h, w, c = x.shape
    n_t = h // th
    xp = jnp.pad(x, ((0, 0), (1, 1), (1, 1), (0, 0)))
    tiles = jnp.stack([xp[:, t * th:t * th + th + 2] for t in range(n_t)],
                      axis=1)
    return tiles.reshape(n * n_t, th + 2, w + 2, c)


def conv3x3_bias_relu(x, w, b, *, pool, row_cap=64):
    """3x3 conv (stride 1, SAME) + bias + ReLU, optionally fused 2x2 maxpool.

    x: (N, H, W, Cin);  w: (3, 3, Cin, Cout) f32;  b: (Cout,) f32
    returns (N, H_out, W_out, Cout) bf16.
    """
    x = x.astype(jnp.bfloat16)
    n, h, wd, cin = x.shape
    cout = w.shape[-1]
    if pool:
        assert h % 2 == 0 and wd % 2 == 0, "fused maxpool needs even H, W"
    step = 2 if pool else 1
    th = _pick_row_tile(h, wd, cin, cout, pool, row_cap)
    n_t = h // th
    th_o, tw_o = th // step, wd // step

    x_tiles = _build_halo_row_tiles(x, th)                      # bf16
    w_k = w.reshape(3, 3 * cin, cout).astype(jnp.bfloat16)      # K = (dx, cin)
    b_k = b.reshape(1, cout).astype(jnp.float32)
    fuse_dx = (cin % 128 == 0)   # keep 9-tap form for Cin=64 (lane alignment)

    kernel = functools.partial(_conv3x3_kernel, fuse_dx=fuse_dx, pool=pool)
    return pl.pallas_call(
        kernel,
        out_shape=jax.ShapeDtypeStruct((n, h // step, wd // step, cout),
                                       jnp.bfloat16),
        grid=(n, n_t),
        in_specs=[
            pl.BlockSpec((1, th + 2, wd + 2, cin),
                         lambda i, t: (i * n_t + t, 0, 0, 0)),
            pl.BlockSpec((3, 3 * cin, cout), lambda i, t: (0, 0, 0)),
            pl.BlockSpec((1, cout), lambda i, t: (0, 0)),
        ],
        out_specs=pl.BlockSpec((1, th_o, tw_o, cout),
                               lambda i, t: (i, t, 0, 0)),
        scratch_shapes=[pltpu.VMEM((th * wd, cout), jnp.float32)],
        compiler_params=_compiler_params(),
    )(x_tiles, w_k, b_k)


def _im2col3x3(x):
    """(N, H, W, C) -> (N, H, W, 9*C); K ordered as (dy, dx, c)."""
    n, h, w, c = x.shape
    xp = jnp.pad(x, ((0, 0), (1, 1), (1, 1), (0, 0)))
    cols = [xp[:, dy:dy + h, dx:dx + w, :]
            for dy in range(3) for dx in range(3)]
    return jnp.concatenate(cols, axis=-1)


def conv1_1_im2col(img, w, b, *, row_cap=64):
    """First VGG conv with ImageNet normalization folded in:
    (x-mean)/std conv w  ==  (x-mean) conv (w/std). Im2col to K=27."""
    n, h, wd, _ = img.shape
    cout = w.shape[-1]
    x0 = (img - IMAGENET_MEAN).astype(jnp.bfloat16)   # fused into im2col by XLA
    patches = _im2col3x3(x0)                          # (N, H, W, 27) bf16
    k = patches.shape[-1]
    w_k = (w / IMAGENET_STD[None, None, :, None]).reshape(k, cout)
    w_k = w_k.astype(jnp.bfloat16)
    b_k = b.reshape(1, cout).astype(jnp.float32)

    cands = [t for t in range(1, min(h, row_cap) + 1) if h % t == 0]

    def vmem_bytes(t):
        return 2 * t * wd * k * 2 + 2 * t * wd * cout * 2 + k * cout * 2

    fitting = [t for t in cands if vmem_bytes(t) <= _VMEM_TILE_BUDGET]
    th = max(fitting) if fitting else min(cands)
    n_t = h // th

    return pl.pallas_call(
        _im2col_matmul_kernel,
        out_shape=jax.ShapeDtypeStruct((n, h, wd, cout), jnp.bfloat16),
        grid=(n, n_t),
        in_specs=[
            pl.BlockSpec((1, th, wd, k), lambda i, t: (i, t, 0, 0)),
            pl.BlockSpec((k, cout), lambda i, t: (0, 0)),
            pl.BlockSpec((1, cout), lambda i, t: (0, 0)),
        ],
        out_specs=pl.BlockSpec((1, th, wd, cout), lambda i, t: (i, t, 0, 0)),
        compiler_params=_compiler_params(),
    )(patches, w_k, b_k)


# ---------------------------------------------------------------------------
# VGG19 (up to relu3_1) parameters + forward
# ---------------------------------------------------------------------------
VGG_CFG = [                 # vgg19 conv layers up to relu3_1
    ("conv1_1", 3, 64),
    ("conv1_2", 64, 64),
    ("conv2_1", 64, 128),
    ("conv2_2", 128, 128),
    ("conv3_1", 128, 256),
]


def init_params(seed=0):
    key = jax.random.PRNGKey(seed)
    params = {}
    for name, cin, cout in VGG_CFG:
        key, kw, kb = jax.random.split(key, 3)
        fan_in = 9 * cin
        wgt = jax.random.normal(kw, (3, 3, cin, cout), jnp.float32) * \
            (2.0 / fan_in) ** 0.5
        bias = 0.01 * jax.random.normal(kb, (cout,), jnp.float32)
        params[name] = (wgt, bias)
    return params


def correspondence_generation_forward(img_ref_hr_nchw, params, row_tile_cap=64):
    """Matches CorrespondenceGenerationArch.forward: runs the VGG feature
    extractor and returns {'relu1_1','relu2_1','relu3_1'} feature maps (NCHW)."""
    x = jnp.transpose(img_ref_hr_nchw, (0, 2, 3, 1)).astype(jnp.float32)  # NHWC

    feats = {}
    f1 = conv1_1_im2col(x, *params["conv1_1"], row_cap=row_tile_cap)
    feats["relu1_1"] = f1
    x = conv3x3_bias_relu(f1, *params["conv1_2"], pool=True,
                          row_cap=row_tile_cap)          # conv1_2 + fused pool1
    f2 = conv3x3_bias_relu(x, *params["conv2_1"], pool=False,
                           row_cap=row_tile_cap)
    feats["relu2_1"] = f2
    x = conv3x3_bias_relu(f2, *params["conv2_2"], pool=True,
                          row_cap=row_tile_cap)          # conv2_2 + fused pool2
    f3 = conv3x3_bias_relu(x, *params["conv3_1"], pool=False,
                           row_cap=row_tile_cap)
    feats["relu3_1"] = f3

    # back to NCHW / f32 to mirror the PyTorch module's output convention.
    return {k: jnp.transpose(v, (0, 3, 1, 2)).astype(jnp.float32)
            for k, v in feats.items()}


# ---------------------------------------------------------------------------
# Pure-XLA f32 reference for correctness checking
# ---------------------------------------------------------------------------
def _reference_forward(img_ref_hr_nchw, params):
    x = jnp.transpose(img_ref_hr_nchw, (0, 2, 3, 1)).astype(jnp.float32)
    x = (x - IMAGENET_MEAN) / IMAGENET_STD

    def conv(v, name):
        wgt, bias = params[name]
        wgt = wgt.astype(jnp.bfloat16).astype(jnp.float32)  # same quantized w
        y = jax.lax.conv_general_dilated(
            v, wgt, (1, 1), "SAME",
            dimension_numbers=("NHWC", "HWIO", "NHWC"))
        return jnp.maximum(y + bias, 0.0)

    def pool(v):
        return jax.lax.reduce_window(v, -jnp.inf, jax.lax.max,
                                     (1, 2, 2, 1), (1, 2, 2, 1), "VALID")

    feats = {}
    v = conv(x, "conv1_1"); feats["relu1_1"] = v
    v = pool(conv(v, "conv1_2"))
    v = conv(v, "conv2_1"); feats["relu2_1"] = v
    v = pool(conv(v, "conv2_2"))
    v = conv(v, "conv3_1"); feats["relu3_1"] = v
    return {k: jnp.transpose(a, (0, 3, 1, 2)) for k, a in feats.items()}


if __name__ == "__main__":
    key = jax.random.PRNGKey(0)
    img_ref_hr = jax.random.uniform(key, (2, 3, 16, 16), jnp.float32)   # [0, 1]
    params = init_params(0)

    # row_tile_cap=8 so this small test exercises the multi-row-tile + halo path.
    fwd = jax.jit(functools.partial(correspondence_generation_forward,
                                    row_tile_cap=8))
    out = fwd(img_ref_hr, params)
    for name in ("relu1_1", "relu2_1", "relu3_1"):
        jax.block_until_ready(out[name])

    assert out["relu1_1"].shape == (2, 64, 16, 16)
    assert out["relu2_1"].shape == (2, 128, 8, 8)
    assert out["relu3_1"].shape == (2, 256, 4, 4)
    assert all(v.dtype == jnp.float32 for v in out.values())

    # numeric check vs a pure-XLA reference (bf16 MXU path -> loose tolerance)
    ref = _reference_forward(img_ref_hr, params)
    for name in ("relu1_1", "relu2_1", "relu3_1"):
        err = float(jnp.max(jnp.abs(out[name] - ref[name])))
        scale = float(jnp.max(jnp.abs(ref[name]))) + 1e-6
        assert err / scale < 5e-2, (name, err, scale)

    print("KERNEL_OK")
</pallas_src>

<mosaic_0001>
module attributes {stable_mosaic.version = 11 : i64} {
  func.func @_im2col_matmul_kernel(%arg0: i32, %arg1: i32, %arg2: memref<1x8x16x27xbf16, #tpu.memory_space<vmem>>, %arg3: memref<27x64xbf16, #tpu.memory_space<vmem>>, %arg4: memref<1x64xf32, #tpu.memory_space<vmem>>, %arg5: memref<1x8x16x64xbf16, #tpu.memory_space<vmem>>) attributes {dimension_semantics = [#tpu.dimension_semantics<parallel>, #tpu.dimension_semantics<parallel>], iteration_bounds = array<i64: 2, 2>, scalar_prefetch = 0 : i64, scratch_operands = 0 : i64, tpu.core_type = #tpu.core_type<tc>, window_params = [{transform_indices = @transform_0, window_bounds = array<i64: 1, 8, 16, 27>}, {pipeline_mode = #tpu.pipeline_mode<synchronous>, transform_indices = @transform_1, window_bounds = array<i64: 27, 64>}, {pipeline_mode = #tpu.pipeline_mode<synchronous>, transform_indices = @transform_2, window_bounds = array<i64: 1, 64>}, {transform_indices = @transform_3, window_bounds = array<i64: 1, 8, 16, 64>}]} {
    %c0 = arith.constant 0 : index
    %c0_0 = arith.constant 0 : index
    %c0_1 = arith.constant 0 : index
    %c0_2 = arith.constant 0 : index
    %0 = vector.load %arg2[%c0, %c0_0, %c0_1, %c0_2] : memref<1x8x16x27xbf16, #tpu.memory_space<vmem>>, vector<1x8x16x27xbf16>
    %1 = vector.shape_cast %0 : vector<1x8x16x27xbf16> to vector<8x16x27xbf16>
    %2 = vector.shape_cast %1 : vector<8x16x27xbf16> to vector<128x27xbf16>
    %c0_3 = arith.constant 0 : index
    %c0_4 = arith.constant 0 : index
    %3 = vector.load %arg3[%c0_3, %c0_4] : memref<27x64xbf16, #tpu.memory_space<vmem>>, vector<27x64xbf16>
    %cst = arith.constant dense<0.000000e+00> : vector<128x64xf32>
    %4 = tpu.matmul %2, %3, %cst {dimension_numbers = #tpu.dot_dimension_numbers<[1], [0], [0], [1], [0, 0, 1, 1], [], []>} : vector<128x27xbf16>, vector<27x64xbf16>, vector<128x64xf32> -> vector<128x64xf32>
    %c0_5 = arith.constant 0 : index
    %c0_6 = arith.constant 0 : index
    %5 = vector.load %arg4[%c0_5, %c0_6] : memref<1x64xf32, #tpu.memory_space<vmem>>, vector<1x64xf32>
    %6 = vector.broadcast %5 : vector<1x64xf32> to vector<128x64xf32>
    %7 = arith.addf %4, %6 : vector<128x64xf32>
    %cst_7 = arith.constant 0.000000e+00 : f32
    %8 = vector.broadcast %cst_7 : f32 to vector<128x64xf32>
    %9 = arith.maximumf %7, %8 : vector<128x64xf32>
    %10 = vector.shape_cast %9 : vector<128x64xf32> to vector<8x16x64xf32>
    %11 = arith.truncf %10 : vector<8x16x64xf32> to vector<8x16x64xbf16>
    %c0_8 = arith.constant 0 : index
    %c0_9 = arith.constant 0 : index
    %c0_10 = arith.constant 0 : index
    %c0_11 = arith.constant 0 : index
    %12 = vector.load %arg5[%c0_8, %c0_9, %c0_10, %c0_11] : memref<1x8x16x64xbf16, #tpu.memory_space<vmem>>, vector<1x8x16x64xbf16>
    %13 = vector.shape_cast %12 : vector<1x8x16x64xbf16> to vector<8x16x64xbf16>
    %14 = vector.shape_cast %11 : vector<8x16x64xbf16> to vector<1x8x16x64xbf16>
    tpu.vector_store %arg5[%c0_8, %c0_9, %c0_10, %c0_11], %14 {strides = array<i32>} : memref<1x8x16x64xbf16, #tpu.memory_space<vmem>>, vector<1x8x16x64xbf16>,
    return
  }
  func.func @transform_0(%arg0: i32, %arg1: i32) -> (i32, i32, i32, i32) {
    %c0_i32 = arith.constant 0 : i32
    %c0_i32_0 = arith.constant 0 : i32
    %c0_i32_1 = arith.constant 0 : i32
    return %arg0, %arg1, %c0_i32, %c0_i32_0 : i32, i32, i32, i32
  }
  func.func @transform_1(%arg0: i32, %arg1: i32) -> (i32, i32) {
    %c0_i32 = arith.constant 0 : i32
    %c0_i32_0 = arith.constant 0 : i32
    %c0_i32_1 = arith.constant 0 : i32
    return %c0_i32, %c0_i32_0 : i32, i32
  }
  func.func @transform_2(%arg0: i32, %arg1: i32) -> (i32, i32) {
    %c0_i32 = arith.constant 0 : i32
    %c0_i32_0 = arith.constant 0 : i32
    %c0_i32_1 = arith.constant 0 : i32
    return %c0_i32, %c0_i32_0 : i32, i32
  }
  func.func @transform_3(%arg0: i32, %arg1: i32) -> (i32, i32, i32, i32) {
    %c0_i32 = arith.constant 0 : i32
    %c0_i32_0 = arith.constant 0 : i32
    %c0_i32_1 = arith.constant 0 : i32
    return %arg0, %arg1, %c0_i32, %c0_i32_0 : i32, i32, i32, i32
  }
}

module attributes {stable_mosaic.version = 11 : i64} {
  func.func @_conv3x3_kernel(%arg0: i32, %arg1: i32, %arg2: memref<1x10x18x64xbf16, #tpu.memory_space<vmem>>, %arg3: memref<3x192x64xbf16, #tpu.memory_space<vmem>>, %arg4: memref<1x64xf32, #tpu.memory_space<vmem>>, %arg5: memref<1x4x8x64xbf16, #tpu.memory_space<vmem>>, %arg6: memref<128x64xf32, #tpu.memory_space<vmem>>) attributes {dimension_semantics = [#tpu.dimension_semantics<parallel>, #tpu.dimension_semantics<parallel>], iteration_bounds = array<i64: 2, 2>, scalar_prefetch = 0 : i64, scratch_operands = 1 : i64, tpu.core_type = #tpu.core_type<tc>, window_params = [{transform_indices = @transform_0, window_bounds = array<i64: 1, 10, 18, 64>}, {pipeline_mode = #tpu.pipeline_mode<synchronous>, transform_indices = @transform_1, window_bounds = array<i64: 3, 192, 64>}, {pipeline_mode = #tpu.pipeline_mode<synchronous>, transform_indices = @transform_2, window_bounds = array<i64: 1, 64>}, {transform_indices = @transform_3, window_bounds = array<i64: 1, 4, 8, 64>}]} {
    %c0 = arith.constant 0 : index
    %c0_0 = arith.constant 0 : index
    %c0_1 = arith.constant 0 : index
    %c0_2 = arith.constant 0 : index
    %0 = vector.load %arg2[%c0, %c0_0, %c0_1, %c0_2] : memref<1x10x18x64xbf16, #tpu.memory_space<vmem>>, vector<1x8x16x64xbf16>
    %1 = vector.shape_cast %0 : vector<1x8x16x64xbf16> to vector<8x16x64xbf16>
    %2 = vector.shape_cast %1 : vector<8x16x64xbf16> to vector<128x64xbf16>
    %c0_3 = arith.constant 0 : index
    %c0_4 = arith.constant 0 : index
    %c0_5 = arith.constant 0 : index
    %3 = vector.load %arg3[%c0_3, %c0_4, %c0_5] : memref<3x192x64xbf16, #tpu.memory_space<vmem>>, vector<1x64x64xbf16>
    %4 = vector.shape_cast %3 : vector<1x64x64xbf16> to vector<64x64xbf16>
    %cst = arith.constant dense<0.000000e+00> : vector<128x64xf32>
    %5 = tpu.matmul %2, %4, %cst {dimension_numbers = #tpu.dot_dimension_numbers<[1], [0], [0], [1], [0, 0, 1, 1], [], []>} : vector<128x64xbf16>, vector<64x64xbf16>, vector<128x64xf32> -> vector<128x64xf32>
    %c0_6 = arith.constant 0 : index
    %c0_7 = arith.constant 0 : index
    %6 = vector.load %arg6[%c0_6, %c0_7] : memref<128x64xf32, #tpu.memory_space<vmem>>, vector<128x64xf32>
    tpu.vector_store %arg6[%c0_6, %c0_7], %5 {strides = array<i32>} : memref<128x64xf32, #tpu.memory_space<vmem>>, vector<128x64xf32>,
    %c0_8 = arith.constant 0 : index
    %c0_9 = arith.constant 0 : index
    %c1 = arith.constant 1 : index
    %c0_10 = arith.constant 0 : index
    %7 = vector.load %arg2[%c0_8, %c0_9, %c1, %c0_10] : memref<1x10x18x64xbf16, #tpu.memory_space<vmem>>, vector<1x8x16x64xbf16>
    %8 = vector.shape_cast %7 : vector<1x8x16x64xbf16> to vector<8x16x64xbf16>
    %9 = vector.shape_cast %8 : vector<8x16x64xbf16> to vector<128x64xbf16>
    %c0_11 = arith.constant 0 : index
    %c64 = arith.constant 64 : index
    %c0_12 = arith.constant 0 : index
    %10 = vector.load %arg3[%c0_11, %c64, %c0_12] : memref<3x192x64xbf16, #tpu.memory_space<vmem>>, vector<1x64x64xbf16>
    %11 = vector.shape_cast %10 : vector<1x64x64xbf16> to vector<64x64xbf16>
    %cst_13 = arith.constant dense<0.000000e+00> : vector<128x64xf32>
    %12 = tpu.matmul %9, %11, %cst_13 {dimension_numbers = #tpu.dot_dimension_numbers<[1], [0], [0], [1], [0, 0, 1, 1], [], []>} : vector<128x64xbf16>, vector<64x64xbf16>, vector<128x64xf32> -> vector<128x64xf32>
    %c0_14 = arith.constant 0 : index
    %c0_15 = arith.constant 0 : index
    %13 = vector.load %arg6[%c0_14, %c0_15] : memref<128x64xf32, #tpu.memory_space<vmem>>, vector<128x64xf32>
    %14 = arith.addf %13, %12 : vector<128x64xf32>
    %c0_16 = arith.constant 0 : index
    %c0_17 = arith.constant 0 : index
    %15 = vector.load %arg6[%c0_16, %c0_17] : memref<128x64xf32, #tpu.memory_space<vmem>>, vector<128x64xf32>
    tpu.vector_store %arg6[%c0_16, %c0_17], %14 {strides = array<i32>} : memref<128x64xf32, #tpu.memory_space<vmem>>, vector<128x64xf32>,
    %c0_18 = arith.constant 0 : index
    %c0_19 = arith.constant 0 : index
    %c2 = arith.constant 2 : index
    %c0_20 = arith.constant 0 : index
    %16 = vector.load %arg2[%c0_18, %c0_19, %c2, %c0_20] : memref<1x10x18x64xbf16, #tpu.memory_space<vmem>>, vector<1x8x16x64xbf16>
    %17 = vector.shape_cast %16 : vector<1x8x16x64xbf16> to vector<8x16x64xbf16>
    %18 = vector.shape_cast %17 : vector<8x16x64xbf16> to vector<128x64xbf16>
    %c0_21 = arith.constant 0 : index
    %c128 = arith.constant 128 : index
    %c0_22 = arith.constant 0 : index
    %19 = vector.load %arg3[%c0_21, %c128, %c0_22] : memref<3x192x64xbf16, #tpu.memory_space<vmem>>, vector<1x64x64xbf16>
    %20 = vector.shape_cast %19 : vector<1x64x64xbf16> to vector<64x64xbf16>
    %cst_23 = arith.constant dense<0.000000e+00> : vector<128x64xf32>
    %21 = tpu.matmul %18, %20, %cst_23 {dimension_numbers = #tpu.dot_dimension_numbers<[1], [0], [0], [1], [0, 0, 1, 1], [], []>} : vector<128x64xbf16>, vector<64x64xbf16>, vector<128x64xf32> -> vector<128x64xf32>
    %c0_24 = arith.constant 0 : index
    %c0_25 = arith.constant 0 : index
    %22 = vector.load %arg6[%c0_24, %c0_25] : memref<128x64xf32, #tpu.memory_space<vmem>>, vector<128x64xf32>
    %23 = arith.addf %22, %21 : vector<128x64xf32>
    %c0_26 = arith.constant 0 : index
    %c0_27 = arith.constant 0 : index
    %24 = vector.load %arg6[%c0_26, %c0_27] : memref<128x64xf32, #tpu.memory_space<vmem>>, vector<128x64xf32>
    tpu.vector_store %arg6[%c0_26, %c0_27], %23 {strides = array<i32>} : memref<128x64xf32, #tpu.memory_space<vmem>>, vector<128x64xf32>,
    %c0_28 = arith.constant 0 : index
    %c1_29 = arith.constant 1 : index
    %c0_30 = arith.constant 0 : index
    %c0_31 = arith.constant 0 : index
    %25 = vector.load %arg2[%c0_28, %c1_29, %c0_30, %c0_31] : memref<1x10x18x64xbf16, #tpu.memory_space<vmem>>, vector<1x8x16x64xbf16>
    %26 = vector.shape_cast %25 : vector<1x8x16x64xbf16> to vector<8x16x64xbf16>
    %27 = vector.shape_cast %26 : vector<8x16x64xbf16> to vector<128x64xbf16>
    %c1_32 = arith.constant 1 : index
    %c0_33 = arith.constant 0 : index
    %c0_34 = arith.constant 0 : index
    %28 = vector.load %arg3[%c1_32, %c0_33, %c0_34] : memref<3x192x64xbf16, #tpu.memory_space<vmem>>, vector<1x64x64xbf16>
    %29 = vector.shape_cast %28 : vector<1x64x64xbf16> to vector<64x64xbf16>
    %cst_35 = arith.constant dense<0.000000e+00> : vector<128x64xf32>
    %30 = tpu.matmul %27, %29, %cst_35 {dimension_numbers = #tpu.dot_dimension_numbers<[1], [0], [0], [1], [0, 0, 1, 1], [], []>} : vector<128x64xbf16>, vector<64x64xbf16>, vector<128x64xf32> -> vector<128x64xf32>
    %c0_36 = arith.constant 0 : index
    %c0_37 = arith.constant 0 : index
    %31 = vector.load %arg6[%c0_36, %c0_37] : memref<128x64xf32, #tpu.memory_space<vmem>>, vector<128x64xf32>
    %32 = arith.addf %31, %30 : vector<128x64xf32>
    %c0_38 = arith.constant 0 : index
    %c0_39 = arith.constant 0 : index
    %33 = vector.load %arg6[%c0_38, %c0_39] : memref<128x64xf32, #tpu.memory_space<vmem>>, vector<128x64xf32>
    tpu.vector_store %arg6[%c0_38, %c0_39], %32 {strides = array<i32>} : memref<128x64xf32, #tpu.memory_space<vmem>>, vector<128x64xf32>,
    %c0_40 = arith.constant 0 : index
    %c1_41 = arith.constant 1 : index
    %c1_42 = arith.constant 1 : index
    %c0_43 = arith.constant 0 : index
    %34 = vector.load %arg2[%c0_40, %c1_41, %c1_42, %c0_43] : memref<1x10x18x64xbf16, #tpu.memory_space<vmem>>, vector<1x8x16x64xbf16>
    %35 = vector.shape_cast %34 : vector<1x8x16x64xbf16> to vector<8x16x64xbf16>
    %36 = vector.shape_cast %35 : vector<8x16x64xbf16> to vector<128x64xbf16>
    %c1_44 = arith.constant 1 : index
    %c64_45 = arith.constant 64 : index
    %c0_46 = arith.constant 0 : index
    %37 = vector.load %arg3[%c1_44, %c64_45, %c0_46] : memref<3x192x64xbf16, #tpu.memory_space<vmem>>, vector<1x64x64xbf16>
    %38 = vector.shape_cast %37 : vector<1x64x64xbf16> to vector<64x64xbf16>
    %cst_47 = arith.constant dense<0.000000e+00> : vector<128x64xf32>
    %39 = tpu.matmul %36, %38, %cst_47 {dimension_numbers = #tpu.dot_dimension_numbers<[1], [0], [0], [1], [0, 0, 1, 1], [], []>} : vector<128x64xbf16>, vector<64x64xbf16>, vector<128x64xf32> -> vector<128x64xf32>
    %c0_48 = arith.constant 0 : index
    %c0_49 = arith.constant 0 : index
    %40 = vector.load %arg6[%c0_48, %c0_49] : memref<128x64xf32, #tpu.memory_space<vmem>>, vector<128x64xf32>
    %41 = arith.addf %40, %39 : vector<128x64xf32>
    %c0_50 = arith.constant 0 : index
    %c0_51 = arith.constant 0 : index
    %42 = vector.load %arg6[%c0_50, %c0_51] : memref<128x64xf32, #tpu.memory_space<vmem>>, vector<128x64xf32>
    tpu.vector_store %arg6[%c0_50, %c0_51], %41 {strides = array<i32>} : memref<128x64xf32, #tpu.memory_space<vmem>>, vector<128x64xf32>,
    %c0_52 = arith.constant 0 : index
    %c1_53 = arith.constant 1 : index
    %c2_54 = arith.constant 2 : index
    %c0_55 = arith.constant 0 : index
    %43 = vector.load %arg2[%c0_52, %c1_53, %c2_54, %c0_55] : memref<1x10x18x64xbf16, #tpu.memory_space<vmem>>, vector<1x8x16x64xbf16>
    %44 = vector.shape_cast %43 : vector<1x8x16x64xbf16> to vector<8x16x64xbf16>
    %45 = vector.shape_cast %44 : vector<8x16x64xbf16> to vector<128x64xbf16>
    %c1_56 = arith.constant 1 : index
    %c128_57 = arith.constant 128 : index
    %c0_58 = arith.constant 0 : index
    %46 = vector.load %arg3[%c1_56, %c128_57, %c0_58] : memref<3x192x64xbf16, #tpu.memory_space<vmem>>, vector<1x64x64xbf16>
    %47 = vector.shape_cast %46 : vector<1x64x64xbf16> to vector<64x64xbf16>
    %cst_59 = arith.constant dense<0.000000e+00> : vector<128x64xf32>
    %48 = tpu.matmul %45, %47, %cst_59 {dimension_numbers = #tpu.dot_dimension_numbers<[1], [0], [0], [1], [0, 0, 1, 1], [], []>} : vector<128x64xbf16>, vector<64x64xbf16>, vector<128x64xf32> -> vector<128x64xf32>
    %c0_60 = arith.constant 0 : index
    %c0_61 = arith.constant 0 : index
    %49 = vector.load %arg6[%c0_60, %c0_61] : memref<128x64xf32, #tpu.memory_space<vmem>>, vector<128x64xf32>
    %50 = arith.addf %49, %48 : vector<128x64xf32>
    %c0_62 = arith.constant 0 : index
    %c0_63 = arith.constant 0 : index
    %51 = vector.load %arg6[%c0_62, %c0_63] : memref<128x64xf32, #tpu.memory_space<vmem>>, vector<128x64xf32>
    tpu.vector_store %arg6[%c0_62, %c0_63], %50 {strides = array<i32>} : memref<128x64xf32, #tpu.memory_space<vmem>>, vector<128x64xf32>,
    %c0_64 = arith.constant 0 : index
    %c2_65 = arith.constant 2 : index
    %c0_66 = arith.constant 0 : index
    %c0_67 = arith.constant 0 : index
    %52 = vector.load %arg2[%c0_64, %c2_65, %c0_66, %c0_67] : memref<1x10x18x64xbf16, #tpu.memory_space<vmem>>, vector<1x8x16x64xbf16>
    %53 = vector.shape_cast %52 : vector<1x8x16x64xbf16> to vector<8x16x64xbf16>
    %54 = vector.shape_cast %53 : vector<8x16x64xbf16> to vector<128x64xbf16>
    %c2_68 = arith.constant 2 : index
    %c0_69 = arith.constant 0 : index
    %c0_70 = arith.constant 0 : index
    %55 = vector.load %arg3[%c2_68, %c0_69, %c0_70] : memref<3x192x64xbf16, #tpu.memory_space<vmem>>, vector<1x64x64xbf16>
    %56 = vector.shape_cast %55 : vector<1x64x64xbf16> to vector<64x64xbf16>
    %cst_71 = arith.constant dense<0.000000e+00> : vector<128x64xf32>
    %57 = tpu.matmul %54, %56, %cst_71 {dimension_numbers = #tpu.dot_dimension_numbers<[1], [0], [0], [1], [0, 0, 1, 1], [], []>} : vector<128x64xbf16>, vector<64x64xbf16>, vector<128x64xf32> -> vector<128x64xf32>
    %c0_72 = arith.constant 0 : index
    %c0_73 = arith.constant 0 : index
    %58 = vector.load %arg6[%c0_72, %c0_73] : memref<128x64xf32, #tpu.memory_space<vmem>>, vector<128x64xf32>
    %59 = arith.addf %58, %57 : vector<128x64xf32>
    %c0_74 = arith.constant 0 : index
    %c0_75 = arith.constant 0 : index
    %60 = vector.load %arg6[%c0_74, %c0_75] : memref<128x64xf32, #tpu.memory_space<vmem>>, vector<128x64xf32>
    tpu.vector_store %arg6[%c0_74, %c0_75], %59 {strides = array<i32>} : memref<128x64xf32, #tpu.memory_space<vmem>>, vector<128x64xf32>,
    %c0_76 = arith.constant 0 : index
    %c2_77 = arith.constant 2 : index
    %c1_78 = arith.constant 1 : index
    %c0_79 = arith.constant 0 : index
    %61 = vector.load %arg2[%c0_76, %c2_77, %c1_78, %c0_79] : memref<1x10x18x64xbf16, #tpu.memory_space<vmem>>, vector<1x8x16x64xbf16>
    %62 = vector.shape_cast %61 : vector<1x8x16x64xbf16> to vector<8x16x64xbf16>
    %63 = vector.shape_cast %62 : vector<8x16x64xbf16> to vector<128x64xbf16>
    %c2_80 = arith.constant 2 : index
    %c64_81 = arith.constant 64 : index
    %c0_82 = arith.constant 0 : index
    %64 = vector.load %arg3[%c2_80, %c64_81, %c0_82] : memref<3x192x64xbf16, #tpu.memory_space<vmem>>, vector<1x64x64xbf16>
    %65 = vector.shape_cast %64 : vector<1x64x64xbf16> to vector<64x64xbf16>
    %cst_83 = arith.constant dense<0.000000e+00> : vector<128x64xf32>
    %66 = tpu.matmul %63, %65, %cst_83 {dimension_numbers = #tpu.dot_dimension_numbers<[1], [0], [0], [1], [0, 0, 1, 1], [], []>} : vector<128x64xbf16>, vector<64x64xbf16>, vector<128x64xf32> -> vector<128x64xf32>
    %c0_84 = arith.constant 0 : index
    %c0_85 = arith.constant 0 : index
    %67 = vector.load %arg6[%c0_84, %c0_85] : memref<128x64xf32, #tpu.memory_space<vmem>>, vector<128x64xf32>
    %68 = arith.addf %67, %66 : vector<128x64xf32>
    %c0_86 = arith.constant 0 : index
    %c0_87 = arith.constant 0 : index
    %69 = vector.load %arg6[%c0_86, %c0_87] : memref<128x64xf32, #tpu.memory_space<vmem>>, vector<128x64xf32>
    tpu.vector_store %arg6[%c0_86, %c0_87], %68 {strides = array<i32>} : memref<128x64xf32, #tpu.memory_space<vmem>>, vector<128x64xf32>,
    %c0_88 = arith.constant 0 : index
    %c2_89 = arith.constant 2 : index
    %c2_90 = arith.constant 2 : index
    %c0_91 = arith.constant 0 : index
    %70 = vector.load %arg2[%c0_88, %c2_89, %c2_90, %c0_91] : memref<1x10x18x64xbf16, #tpu.memory_space<vmem>>, vector<1x8x16x64xbf16>
    %71 = vector.shape_cast %70 : vector<1x8x16x64xbf16> to vector<8x16x64xbf16>
    %72 = vector.shape_cast %71 : vector<8x16x64xbf16> to vector<128x64xbf16>
    %c2_92 = arith.constant 2 : index
    %c128_93 = arith.constant 128 : index
    %c0_94 = arith.constant 0 : index
    %73 = vector.load %arg3[%c2_92, %c128_93, %c0_94] : memref<3x192x64xbf16, #tpu.memory_space<vmem>>, vector<1x64x64xbf16>
    %74 = vector.shape_cast %73 : vector<1x64x64xbf16> to vector<64x64xbf16>
    %cst_95 = arith.constant dense<0.000000e+00> : vector<128x64xf32>
    %75 = tpu.matmul %72, %74, %cst_95 {dimension_numbers = #tpu.dot_dimension_numbers<[1], [0], [0], [1], [0, 0, 1, 1], [], []>} : vector<128x64xbf16>, vector<64x64xbf16>, vector<128x64xf32> -> vector<128x64xf32>
    %c0_96 = arith.constant 0 : index
    %c0_97 = arith.constant 0 : index
    %76 = vector.load %arg6[%c0_96, %c0_97] : memref<128x64xf32, #tpu.memory_space<vmem>>, vector<128x64xf32>
    %77 = arith.addf %76, %75 : vector<128x64xf32>
    %c0_98 = arith.constant 0 : index
    %c0_99 = arith.constant 0 : index
    %78 = vector.load %arg6[%c0_98, %c0_99] : memref<128x64xf32, #tpu.memory_space<vmem>>, vector<128x64xf32>
    tpu.vector_store %arg6[%c0_98, %c0_99], %77 {strides = array<i32>} : memref<128x64xf32, #tpu.memory_space<vmem>>, vector<128x64xf32>,
    %c0_100 = arith.constant 0 : index
    %c0_101 = arith.constant 0 : index
    %79 = vector.load %arg6[%c0_100, %c0_101] : memref<128x64xf32, #tpu.memory_space<vmem>>, vector<128x64xf32>
    %c0_102 = arith.constant 0 : index
    %c0_103 = arith.constant 0 : index
    %80 = vector.load %arg4[%c0_102, %c0_103] : memref<1x64xf32, #tpu.memory_space<vmem>>, vector<1x64xf32>
    %81 = vector.broadcast %80 : vector<1x64xf32> to vector<128x64xf32>
    %82 = arith.addf %79, %81 : vector<128x64xf32>
    %cst_104 = arith.constant 0.000000e+00 : f32
    %83 = vector.broadcast %cst_104 : f32 to vector<128x64xf32>
    %84 = arith.maximumf %82, %83 : vector<128x64xf32>
    %85 = vector.shape_cast %84 : vector<128x64xf32> to vector<8x16x64xf32>
    %86 = vector.shape_cast %85 : vector<8x16x64xf32> to vector<4x2x16x64xf32>
    %87 = vector.extract_strided_slice %86 {offsets = [0, 0, 0, 0], sizes = [4, 1, 16, 64], strides = [1, 1, 1, 1]} : vector<4x2x16x64xf32> to vector<4x1x16x64xf32>
    %88 = vector.shape_cast %87 : vector<4x1x16x64xf32> to vector<4x16x64xf32>
    %89 = vector.extract_strided_slice %86 {offsets = [0, 1, 0, 0], sizes = [4, 1, 16, 64], strides = [1, 1, 1, 1]} : vector<4x2x16x64xf32> to vector<4x1x16x64xf32>
    %90 = vector.shape_cast %89 : vector<4x1x16x64xf32> to vector<4x16x64xf32>
    %91 = arith.maximumf %88, %90 : vector<4x16x64xf32>
    %92 = vector.shape_cast %91 : vector<4x16x64xf32> to vector<4x8x2x64xf32>
    %93 = vector.extract_strided_slice %92 {offsets = [0, 0, 0, 0], sizes = [4, 8, 1, 64], strides = [1, 1, 1, 1]} : vector<4x8x2x64xf32> to vector<4x8x1x64xf32>
    %94 = vector.shape_cast %93 : vector<4x8x1x64xf32> to vector<4x8x64xf32>
    %95 = vector.extract_strided_slice %92 {offsets = [0, 0, 1, 0], sizes = [4, 8, 1, 64], strides = [1, 1, 1, 1]} : vector<4x8x2x64xf32> to vector<4x8x1x64xf32>
    %96 = vector.shape_cast %95 : vector<4x8x1x64xf32> to vector<4x8x64xf32>
    %97 = arith.maximumf %94, %96 : vector<4x8x64xf32>
    %98 = arith.truncf %97 : vector<4x8x64xf32> to vector<4x8x64xbf16>
    %c0_105 = arith.constant 0 : index
    %c0_106 = arith.constant 0 : index
    %c0_107 = arith.constant 0 : index
    %c0_108 = arith.constant 0 : index
    %99 = vector.load %arg5[%c0_105, %c0_106, %c0_107, %c0_108] : memref<1x4x8x64xbf16, #tpu.memory_space<vmem>>, vector<1x4x8x64xbf16>
    %100 = vector.shape_cast %99 : vector<1x4x8x64xbf16> to vector<4x8x64xbf16>
    %101 = vector.shape_cast %98 : vector<4x8x64xbf16> to vector<1x4x8x64xbf16>
    tpu.vector_store %arg5[%c0_105, %c0_106, %c0_107, %c0_108], %101 {strides = array<i32>} : memref<1x4x8x64xbf16, #tpu.memory_space<vmem>>, vector<1x4x8x64xbf16>,
    return
  }
  func.func @transform_0(%arg0: i32, %arg1: i32) -> (i32, i32, i32, i32) {
    %c2_i32 = arith.constant 2 : i32
    %0 = arith.muli %arg0, %c2_i32 : i32
    %1 = arith.addi %0, %arg1 : i32
    %c0_i32 = arith.constant 0 : i32
    %c0_i32_0 = arith.constant 0 : i32
    %c0_i32_1 = arith.constant 0 : i32
    %c0_i32_2 = arith.constant 0 : i32
    return %1, %c0_i32, %c0_i32_0, %c0_i32_1 : i32, i32, i32, i32
  }
  func.func @transform_1(%arg0: i32, %arg1: i32) -> (i32, i32, i32) {
    %c0_i32 = arith.constant 0 : i32
    %c0_i32_0 = arith.constant 0 : i32
    %c0_i32_1 = arith.constant 0 : i32
    %c0_i32_2 = arith.constant 0 : i32
    return %c0_i32, %c0_i32_0, %c0_i32_1 : i32, i32, i32
  }
  func.func @transform_2(%arg0: i32, %arg1: i32) -> (i32, i32) {
    %c0_i32 = arith.constant 0 : i32
    %c0_i32_0 = arith.constant 0 : i32
    %c0_i32_1 = arith.constant 0 : i32
    return %c0_i32, %c0_i32_0 : i32, i32
  }
  func.func @transform_3(%arg0: i32, %arg1: i32) -> (i32, i32, i32, i32) {
    %c0_i32 = arith.constant 0 : i32
    %c0_i32_0 = arith.constant 0 : i32
    %c0_i32_1 = arith.constant 0 : i32
    return %arg0, %arg1, %c0_i32, %c0_i32_0 : i32, i32, i32, i32
  }
}

module attributes {stable_mosaic.version = 11 : i64} {
  func.func @_conv3x3_kernel(%arg0: i32, %arg1: i32, %arg2: memref<1x10x10x64xbf16, #tpu.memory_space<vmem>>, %arg3: memref<3x192x128xbf16, #tpu.memory_space<vmem>>, %arg4: memref<1x128xf32, #tpu.memory_space<vmem>>, %arg5: memref<1x8x8x128xbf16, #tpu.memory_space<vmem>>, %arg6: memref<64x128xf32, #tpu.memory_space<vmem>>) attributes {dimension_semantics = [#tpu.dimension_semantics<parallel>, #tpu.dimension_semantics<parallel>], iteration_bounds = array<i64: 2, 1>, scalar_prefetch = 0 : i64, scratch_operands = 1 : i64, tpu.core_type = #tpu.core_type<tc>, window_params = [{transform_indices = @transform_0, window_bounds = array<i64: 1, 10, 10, 64>}, {pipeline_mode = #tpu.pipeline_mode<synchronous>, transform_indices = @transform_1, window_bounds = array<i64: 3, 192, 128>}, {pipeline_mode = #tpu.pipeline_mode<synchronous>, transform_indices = @transform_2, window_bounds = array<i64: 1, 128>}, {transform_indices = @transform_3, window_bounds = array<i64: 1, 8, 8, 128>}]} {
    %c0 = arith.constant 0 : index
    %c0_0 = arith.constant 0 : index
    %c0_1 = arith.constant 0 : index
    %c0_2 = arith.constant 0 : index
    %0 = vector.load %arg2[%c0, %c0_0, %c0_1, %c0_2] : memref<1x10x10x64xbf16, #tpu.memory_space<vmem>>, vector<1x8x8x64xbf16>
    %1 = vector.shape_cast %0 : vector<1x8x8x64xbf16> to vector<8x8x64xbf16>
    %2 = vector.shape_cast %1 : vector<8x8x64xbf16> to vector<64x64xbf16>
    %c0_3 = arith.constant 0 : index
    %c0_4 = arith.constant 0 : index
    %c0_5 = arith.constant 0 : index
    %3 = vector.load %arg3[%c0_3, %c0_4, %c0_5] : memref<3x192x128xbf16, #tpu.memory_space<vmem>>, vector<1x64x128xbf16>
    %4 = vector.shape_cast %3 : vector<1x64x128xbf16> to vector<64x128xbf16>
    %cst = arith.constant dense<0.000000e+00> : vector<64x128xf32>
    %5 = tpu.matmul %2, %4, %cst {dimension_numbers = #tpu.dot_dimension_numbers<[1], [0], [0], [1], [0, 0, 1, 1], [], []>} : vector<64x64xbf16>, vector<64x128xbf16>, vector<64x128xf32> -> vector<64x128xf32>
    %c0_6 = arith.constant 0 : index
    %c0_7 = arith.constant 0 : index
    %6 = vector.load %arg6[%c0_6, %c0_7] : memref<64x128xf32, #tpu.memory_space<vmem>>, vector<64x128xf32>
    tpu.vector_store %arg6[%c0_6, %c0_7], %5 {strides = array<i32>} : memref<64x128xf32, #tpu.memory_space<vmem>>, vector<64x128xf32>,
    %c0_8 = arith.constant 0 : index
    %c0_9 = arith.constant 0 : index
    %c1 = arith.constant 1 : index
    %c0_10 = arith.constant 0 : index
    %7 = vector.load %arg2[%c0_8, %c0_9, %c1, %c0_10] : memref<1x10x10x64xbf16, #tpu.memory_space<vmem>>, vector<1x8x8x64xbf16>
    %8 = vector.shape_cast %7 : vector<1x8x8x64xbf16> to vector<8x8x64xbf16>
    %9 = vector.shape_cast %8 : vector<8x8x64xbf16> to vector<64x64xbf16>
    %c0_11 = arith.constant 0 : index
    %c64 = arith.constant 64 : index
    %c0_12 = arith.constant 0 : index
    %10 = vector.load %arg3[%c0_11, %c64, %c0_12] : memref<3x192x128xbf16, #tpu.memory_space<vmem>>, vector<1x64x128xbf16>
    %11 = vector.shape_cast %10 : vector<1x64x128xbf16> to vector<64x128xbf16>
    %cst_13 = arith.constant dense<0.000000e+00> : vector<64x128xf32>
    %12 = tpu.matmul %9, %11, %cst_13 {dimension_numbers = #tpu.dot_dimension_numbers<[1], [0], [0], [1], [0, 0, 1, 1], [], []>} : vector<64x64xbf16>, vector<64x128xbf16>, vector<64x128xf32> -> vector<64x128xf32>
    %c0_14 = arith.constant 0 : index
    %c0_15 = arith.constant 0 : index
    %13 = vector.load %arg6[%c0_14, %c0_15] : memref<64x128xf32, #tpu.memory_space<vmem>>, vector<64x128xf32>
    %14 = arith.addf %13, %12 : vector<64x128xf32>
    %c0_16 = arith.constant 0 : index
    %c0_17 = arith.constant 0 : index
    %15 = vector.load %arg6[%c0_16, %c0_17] : memref<64x128xf32, #tpu.memory_space<vmem>>, vector<64x128xf32>
    tpu.vector_store %arg6[%c0_16, %c0_17], %14 {strides = array<i32>} : memref<64x128xf32, #tpu.memory_space<vmem>>, vector<64x128xf32>,
    %c0_18 = arith.constant 0 : index
    %c0_19 = arith.constant 0 : index
    %c2 = arith.constant 2 : index
    %c0_20 = arith.constant 0 : index
    %16 = vector.load %arg2[%c0_18, %c0_19, %c2, %c0_20] : memref<1x10x10x64xbf16, #tpu.memory_space<vmem>>, vector<1x8x8x64xbf16>
    %17 = vector.shape_cast %16 : vector<1x8x8x64xbf16> to vector<8x8x64xbf16>
    %18 = vector.shape_cast %17 : vector<8x8x64xbf16> to vector<64x64xbf16>
    %c0_21 = arith.constant 0 : index
    %c128 = arith.constant 128 : index
    %c0_22 = arith.constant 0 : index
    %19 = vector.load %arg3[%c0_21, %c128, %c0_22] : memref<3x192x128xbf16, #tpu.memory_space<vmem>>, vector<1x64x128xbf16>
    %20 = vector.shape_cast %19 : vector<1x64x128xbf16> to vector<64x128xbf16>
    %cst_23 = arith.constant dense<0.000000e+00> : vector<64x128xf32>
    %21 = tpu.matmul %18, %20, %cst_23 {dimension_numbers = #tpu.dot_dimension_numbers<[1], [0], [0], [1], [0, 0, 1, 1], [], []>} : vector<64x64xbf16>, vector<64x128xbf16>, vector<64x128xf32> -> vector<64x128xf32>
    %c0_24 = arith.constant 0 : index
    %c0_25 = arith.constant 0 : index
    %22 = vector.load %arg6[%c0_24, %c0_25] : memref<64x128xf32, #tpu.memory_space<vmem>>, vector<64x128xf32>
    %23 = arith.addf %22, %21 : vector<64x128xf32>
    %c0_26 = arith.constant 0 : index
    %c0_27 = arith.constant 0 : index
    %24 = vector.load %arg6[%c0_26, %c0_27] : memref<64x128xf32, #tpu.memory_space<vmem>>, vector<64x128xf32>
    tpu.vector_store %arg6[%c0_26, %c0_27], %23 {strides = array<i32>} : memref<64x128xf32, #tpu.memory_space<vmem>>, vector<64x128xf32>,
    %c0_28 = arith.constant 0 : index
    %c1_29 = arith.constant 1 : index
    %c0_30 = arith.constant 0 : index
    %c0_31 = arith.constant 0 : index
    %25 = vector.load %arg2[%c0_28, %c1_29, %c0_30, %c0_31] : memref<1x10x10x64xbf16, #tpu.memory_space<vmem>>, vector<1x8x8x64xbf16>
    %26 = vector.shape_cast %25 : vector<1x8x8x64xbf16> to vector<8x8x64xbf16>
    %27 = vector.shape_cast %26 : vector<8x8x64xbf16> to vector<64x64xbf16>
    %c1_32 = arith.constant 1 : index
    %c0_33 = arith.constant 0 : index
    %c0_34 = arith.constant 0 : index
    %28 = vector.load %arg3[%c1_32, %c0_33, %c0_34] : memref<3x192x128xbf16, #tpu.memory_space<vmem>>, vector<1x64x128xbf16>
    %29 = vector.shape_cast %28 : vector<1x64x128xbf16> to vector<64x128xbf16>
    %cst_35 = arith.constant dense<0.000000e+00> : vector<64x128xf32>
    %30 = tpu.matmul %27, %29, %cst_35 {dimension_numbers = #tpu.dot_dimension_numbers<[1], [0], [0], [1], [0, 0, 1, 1], [], []>} : vector<64x64xbf16>, vector<64x128xbf16>, vector<64x128xf32> -> vector<64x128xf32>
    %c0_36 = arith.constant 0 : index
    %c0_37 = arith.constant 0 : index
    %31 = vector.load %arg6[%c0_36, %c0_37] : memref<64x128xf32, #tpu.memory_space<vmem>>, vector<64x128xf32>
    %32 = arith.addf %31, %30 : vector<64x128xf32>
    %c0_38 = arith.constant 0 : index
    %c0_39 = arith.constant 0 : index
    %33 = vector.load %arg6[%c0_38, %c0_39] : memref<64x128xf32, #tpu.memory_space<vmem>>, vector<64x128xf32>
    tpu.vector_store %arg6[%c0_38, %c0_39], %32 {strides = array<i32>} : memref<64x128xf32, #tpu.memory_space<vmem>>, vector<64x128xf32>,
    %c0_40 = arith.constant 0 : index
    %c1_41 = arith.constant 1 : index
    %c1_42 = arith.constant 1 : index
    %c0_43 = arith.constant 0 : index
    %34 = vector.load %arg2[%c0_40, %c1_41, %c1_42, %c0_43] : memref<1x10x10x64xbf16, #tpu.memory_space<vmem>>, vector<1x8x8x64xbf16>
    %35 = vector.shape_cast %34 : vector<1x8x8x64xbf16> to vector<8x8x64xbf16>
    %36 = vector.shape_cast %35 : vector<8x8x64xbf16> to vector<64x64xbf16>
    %c1_44 = arith.constant 1 : index
    %c64_45 = arith.constant 64 : index
    %c0_46 = arith.constant 0 : index
    %37 = vector.load %arg3[%c1_44, %c64_45, %c0_46] : memref<3x192x128xbf16, #tpu.memory_space<vmem>>, vector<1x64x128xbf16>
    %38 = vector.shape_cast %37 : vector<1x64x128xbf16> to vector<64x128xbf16>
    %cst_47 = arith.constant dense<0.000000e+00> : vector<64x128xf32>
    %39 = tpu.matmul %36, %38, %cst_47 {dimension_numbers = #tpu.dot_dimension_numbers<[1], [0], [0], [1], [0, 0, 1, 1], [], []>} : vector<64x64xbf16>, vector<64x128xbf16>, vector<64x128xf32> -> vector<64x128xf32>
    %c0_48 = arith.constant 0 : index
    %c0_49 = arith.constant 0 : index
    %40 = vector.load %arg6[%c0_48, %c0_49] : memref<64x128xf32, #tpu.memory_space<vmem>>, vector<64x128xf32>
    %41 = arith.addf %40, %39 : vector<64x128xf32>
    %c0_50 = arith.constant 0 : index
    %c0_51 = arith.constant 0 : index
    %42 = vector.load %arg6[%c0_50, %c0_51] : memref<64x128xf32, #tpu.memory_space<vmem>>, vector<64x128xf32>
    tpu.vector_store %arg6[%c0_50, %c0_51], %41 {strides = array<i32>} : memref<64x128xf32, #tpu.memory_space<vmem>>, vector<64x128xf32>,
    %c0_52 = arith.constant 0 : index
    %c1_53 = arith.constant 1 : index
    %c2_54 = arith.constant 2 : index
    %c0_55 = arith.constant 0 : index
    %43 = vector.load %arg2[%c0_52, %c1_53, %c2_54, %c0_55] : memref<1x10x10x64xbf16, #tpu.memory_space<vmem>>, vector<1x8x8x64xbf16>
    %44 = vector.shape_cast %43 : vector<1x8x8x64xbf16> to vector<8x8x64xbf16>
    %45 = vector.shape_cast %44 : vector<8x8x64xbf16> to vector<64x64xbf16>
    %c1_56 = arith.constant 1 : index
    %c128_57 = arith.constant 128 : index
    %c0_58 = arith.constant 0 : index
    %46 = vector.load %arg3[%c1_56, %c128_57, %c0_58] : memref<3x192x128xbf16, #tpu.memory_space<vmem>>, vector<1x64x128xbf16>
    %47 = vector.shape_cast %46 : vector<1x64x128xbf16> to vector<64x128xbf16>
    %cst_59 = arith.constant dense<0.000000e+00> : vector<64x128xf32>
    %48 = tpu.matmul %45, %47, %cst_59 {dimension_numbers = #tpu.dot_dimension_numbers<[1], [0], [0], [1], [0, 0, 1, 1], [], []>} : vector<64x64xbf16>, vector<64x128xbf16>, vector<64x128xf32> -> vector<64x128xf32>
    %c0_60 = arith.constant 0 : index
    %c0_61 = arith.constant 0 : index
    %49 = vector.load %arg6[%c0_60, %c0_61] : memref<64x128xf32, #tpu.memory_space<vmem>>, vector<64x128xf32>
    %50 = arith.addf %49, %48 : vector<64x128xf32>
    %c0_62 = arith.constant 0 : index
    %c0_63 = arith.constant 0 : index
    %51 = vector.load %arg6[%c0_62, %c0_63] : memref<64x128xf32, #tpu.memory_space<vmem>>, vector<64x128xf32>
    tpu.vector_store %arg6[%c0_62, %c0_63], %50 {strides = array<i32>} : memref<64x128xf32, #tpu.memory_space<vmem>>, vector<64x128xf32>,
    %c0_64 = arith.constant 0 : index
    %c2_65 = arith.constant 2 : index
    %c0_66 = arith.constant 0 : index
    %c0_67 = arith.constant 0 : index
    %52 = vector.load %arg2[%c0_64, %c2_65, %c0_66, %c0_67] : memref<1x10x10x64xbf16, #tpu.memory_space<vmem>>, vector<1x8x8x64xbf16>
    %53 = vector.shape_cast %52 : vector<1x8x8x64xbf16> to vector<8x8x64xbf16>
    %54 = vector.shape_cast %53 : vector<8x8x64xbf16> to vector<64x64xbf16>
    %c2_68 = arith.constant 2 : index
    %c0_69 = arith.constant 0 : index
    %c0_70 = arith.constant 0 : index
    %55 = vector.load %arg3[%c2_68, %c0_69, %c0_70] : memref<3x192x128xbf16, #tpu.memory_space<vmem>>, vector<1x64x128xbf16>
    %56 = vector.shape_cast %55 : vector<1x64x128xbf16> to vector<64x128xbf16>
    %cst_71 = arith.constant dense<0.000000e+00> : vector<64x128xf32>
    %57 = tpu.matmul %54, %56, %cst_71 {dimension_numbers = #tpu.dot_dimension_numbers<[1], [0], [0], [1], [0, 0, 1, 1], [], []>} : vector<64x64xbf16>, vector<64x128xbf16>, vector<64x128xf32> -> vector<64x128xf32>
    %c0_72 = arith.constant 0 : index
    %c0_73 = arith.constant 0 : index
    %58 = vector.load %arg6[%c0_72, %c0_73] : memref<64x128xf32, #tpu.memory_space<vmem>>, vector<64x128xf32>
    %59 = arith.addf %58, %57 : vector<64x128xf32>
    %c0_74 = arith.constant 0 : index
    %c0_75 = arith.constant 0 : index
    %60 = vector.load %arg6[%c0_74, %c0_75] : memref<64x128xf32, #tpu.memory_space<vmem>>, vector<64x128xf32>
    tpu.vector_store %arg6[%c0_74, %c0_75], %59 {strides = array<i32>} : memref<64x128xf32, #tpu.memory_space<vmem>>, vector<64x128xf32>,
    %c0_76 = arith.constant 0 : index
    %c2_77 = arith.constant 2 : index
    %c1_78 = arith.constant 1 : index
    %c0_79 = arith.constant 0 : index
    %61 = vector.load %arg2[%c0_76, %c2_77, %c1_78, %c0_79] : memref<1x10x10x64xbf16, #tpu.memory_space<vmem>>, vector<1x8x8x64xbf16>
    %62 = vector.shape_cast %61 : vector<1x8x8x64xbf16> to vector<8x8x64xbf16>
    %63 = vector.shape_cast %62 : vector<8x8x64xbf16> to vector<64x64xbf16>
    %c2_80 = arith.constant 2 : index
    %c64_81 = arith.constant 64 : index
    %c0_82 = arith.constant 0 : index
    %64 = vector.load %arg3[%c2_80, %c64_81, %c0_82] : memref<3x192x128xbf16, #tpu.memory_space<vmem>>, vector<1x64x128xbf16>
    %65 = vector.shape_cast %64 : vector<1x64x128xbf16> to vector<64x128xbf16>
    %cst_83 = arith.constant dense<0.000000e+00> : vector<64x128xf32>
    %66 = tpu.matmul %63, %65, %cst_83 {dimension_numbers = #tpu.dot_dimension_numbers<[1], [0], [0], [1], [0, 0, 1, 1], [], []>} : vector<64x64xbf16>, vector<64x128xbf16>, vector<64x128xf32> -> vector<64x128xf32>
    %c0_84 = arith.constant 0 : index
    %c0_85 = arith.constant 0 : index
    %67 = vector.load %arg6[%c0_84, %c0_85] : memref<64x128xf32, #tpu.memory_space<vmem>>, vector<64x128xf32>
    %68 = arith.addf %67, %66 : vector<64x128xf32>
    %c0_86 = arith.constant 0 : index
    %c0_87 = arith.constant 0 : index
    %69 = vector.load %arg6[%c0_86, %c0_87] : memref<64x128xf32, #tpu.memory_space<vmem>>, vector<64x128xf32>
    tpu.vector_store %arg6[%c0_86, %c0_87], %68 {strides = array<i32>} : memref<64x128xf32, #tpu.memory_space<vmem>>, vector<64x128xf32>,
    %c0_88 = arith.constant 0 : index
    %c2_89 = arith.constant 2 : index
    %c2_90 = arith.constant 2 : index
    %c0_91 = arith.constant 0 : index
    %70 = vector.load %arg2[%c0_88, %c2_89, %c2_90, %c0_91] : memref<1x10x10x64xbf16, #tpu.memory_space<vmem>>, vector<1x8x8x64xbf16>
    %71 = vector.shape_cast %70 : vector<1x8x8x64xbf16> to vector<8x8x64xbf16>
    %72 = vector.shape_cast %71 : vector<8x8x64xbf16> to vector<64x64xbf16>
    %c2_92 = arith.constant 2 : index
    %c128_93 = arith.constant 128 : index
    %c0_94 = arith.constant 0 : index
    %73 = vector.load %arg3[%c2_92, %c128_93, %c0_94] : memref<3x192x128xbf16, #tpu.memory_space<vmem>>, vector<1x64x128xbf16>
    %74 = vector.shape_cast %73 : vector<1x64x128xbf16> to vector<64x128xbf16>
    %cst_95 = arith.constant dense<0.000000e+00> : vector<64x128xf32>
    %75 = tpu.matmul %72, %74, %cst_95 {dimension_numbers = #tpu.dot_dimension_numbers<[1], [0], [0], [1], [0, 0, 1, 1], [], []>} : vector<64x64xbf16>, vector<64x128xbf16>, vector<64x128xf32> -> vector<64x128xf32>
    %c0_96 = arith.constant 0 : index
    %c0_97 = arith.constant 0 : index
    %76 = vector.load %arg6[%c0_96, %c0_97] : memref<64x128xf32, #tpu.memory_space<vmem>>, vector<64x128xf32>
    %77 = arith.addf %76, %75 : vector<64x128xf32>
    %c0_98 = arith.constant 0 : index
    %c0_99 = arith.constant 0 : index
    %78 = vector.load %arg6[%c0_98, %c0_99] : memref<64x128xf32, #tpu.memory_space<vmem>>, vector<64x128xf32>
    tpu.vector_store %arg6[%c0_98, %c0_99], %77 {strides = array<i32>} : memref<64x128xf32, #tpu.memory_space<vmem>>, vector<64x128xf32>,
    %c0_100 = arith.constant 0 : index
    %c0_101 = arith.constant 0 : index
    %79 = vector.load %arg6[%c0_100, %c0_101] : memref<64x128xf32, #tpu.memory_space<vmem>>, vector<64x128xf32>
    %c0_102 = arith.constant 0 : index
    %c0_103 = arith.constant 0 : index
    %80 = vector.load %arg4[%c0_102, %c0_103] : memref<1x128xf32, #tpu.memory_space<vmem>>, vector<1x128xf32>
    %81 = vector.broadcast %80 : vector<1x128xf32> to vector<64x128xf32>
    %82 = arith.addf %79, %81 : vector<64x128xf32>
    %cst_104 = arith.constant 0.000000e+00 : f32
    %83 = vector.broadcast %cst_104 : f32 to vector<64x128xf32>
    %84 = arith.maximumf %82, %83 : vector<64x128xf32>
    %85 = vector.shape_cast %84 : vector<64x128xf32> to vector<8x8x128xf32>
    %86 = arith.truncf %85 : vector<8x8x128xf32> to vector<8x8x128xbf16>
    %c0_105 = arith.constant 0 : index
    %c0_106 = arith.constant 0 : index
    %c0_107 = arith.constant 0 : index
    %c0_108 = arith.constant 0 : index
    %87 = vector.load %arg5[%c0_105, %c0_106, %c0_107, %c0_108] : memref<1x8x8x128xbf16, #tpu.memory_space<vmem>>, vector<1x8x8x128xbf16>
    %88 = vector.shape_cast %87 : vector<1x8x8x128xbf16> to vector<8x8x128xbf16>
    %89 = vector.shape_cast %86 : vector<8x8x128xbf16> to vector<1x8x8x128xbf16>
    tpu.vector_store %arg5[%c0_105, %c0_106, %c0_107, %c0_108], %89 {strides = array<i32>} : memref<1x8x8x128xbf16, #tpu.memory_space<vmem>>, vector<1x8x8x128xbf16>,
    return
  }
  func.func @transform_0(%arg0: i32, %arg1: i32) -> (i32, i32, i32, i32) {
    %c1_i32 = arith.constant 1 : i32
    %0 = arith.muli %arg0, %c1_i32 : i32
    %1 = arith.addi %0, %arg1 : i32
    %c0_i32 = arith.constant 0 : i32
    %c0_i32_0 = arith.constant 0 : i32
    %c0_i32_1 = arith.constant 0 : i32
    %c0_i32_2 = arith.constant 0 : i32
    return %1, %c0_i32, %c0_i32_0, %c0_i32_1 : i32, i32, i32, i32
  }
  func.func @transform_1(%arg0: i32, %arg1: i32) -> (i32, i32, i32) {
    %c0_i32 = arith.constant 0 : i32
    %c0_i32_0 = arith.constant 0 : i32
    %c0_i32_1 = arith.constant 0 : i32
    %c0_i32_2 = arith.constant 0 : i32
    return %c0_i32, %c0_i32_0, %c0_i32_1 : i32, i32, i32
  }
  func.func @transform_2(%arg0: i32, %arg1: i32) -> (i32, i32) {
    %c0_i32 = arith.constant 0 : i32
    %c0_i32_0 = arith.constant 0 : i32
    %c0_i32_1 = arith.constant 0 : i32
    return %c0_i32, %c0_i32_0 : i32, i32
  }
  func.func @transform_3(%arg0: i32, %arg1: i32) -> (i32, i32, i32, i32) {
    %c0_i32 = arith.constant 0 : i32
    %c0_i32_0 = arith.constant 0 : i32
    %c0_i32_1 = arith.constant 0 : i32
    return %arg0, %arg1, %c0_i32, %c0_i32_0 : i32, i32, i32, i32
  }
}

module attributes {stable_mosaic.version = 11 : i64} {
  func.func @_conv3x3_kernel(%arg0: i32, %arg1: i32, %arg2: memref<1x10x10x128xbf16, #tpu.memory_space<vmem>>, %arg3: memref<3x384x128xbf16, #tpu.memory_space<vmem>>, %arg4: memref<1x128xf32, #tpu.memory_space<vmem>>, %arg5: memref<1x4x4x128xbf16, #tpu.memory_space<vmem>>, %arg6: memref<64x128xf32, #tpu.memory_space<vmem>>) attributes {dimension_semantics = [#tpu.dimension_semantics<parallel>, #tpu.dimension_semantics<parallel>], iteration_bounds = array<i64: 2, 1>, scalar_prefetch = 0 : i64, scratch_operands = 1 : i64, tpu.core_type = #tpu.core_type<tc>, window_params = [{transform_indices = @transform_0, window_bounds = array<i64: 1, 10, 10, 128>}, {pipeline_mode = #tpu.pipeline_mode<synchronous>, transform_indices = @transform_1, window_bounds = array<i64: 3, 384, 128>}, {pipeline_mode = #tpu.pipeline_mode<synchronous>, transform_indices = @transform_2, window_bounds = array<i64: 1, 128>}, {transform_indices = @transform_3, window_bounds = array<i64: 1, 4, 4, 128>}]} {
    %c0 = arith.constant 0 : index
    %c0_0 = arith.constant 0 : index
    %c0_1 = arith.constant 0 : index
    %c0_2 = arith.constant 0 : index
    %0 = vector.load %arg2[%c0, %c0_0, %c0_1, %c0_2] : memref<1x10x10x128xbf16, #tpu.memory_space<vmem>>, vector<1x8x8x128xbf16>
    %1 = vector.shape_cast %0 : vector<1x8x8x128xbf16> to vector<8x8x128xbf16>
    %c0_3 = arith.constant 0 : index
    %c0_4 = arith.constant 0 : index
    %c1 = arith.constant 1 : index
    %c0_5 = arith.constant 0 : index
    %2 = vector.load %arg2[%c0_3, %c0_4, %c1, %c0_5] : memref<1x10x10x128xbf16, #tpu.memory_space<vmem>>, vector<1x8x8x128xbf16>
    %3 = vector.shape_cast %2 : vector<1x8x8x128xbf16> to vector<8x8x128xbf16>
    %c0_6 = arith.constant 0 : index
    %c0_7 = arith.constant 0 : index
    %c2 = arith.constant 2 : index
    %c0_8 = arith.constant 0 : index
    %4 = vector.load %arg2[%c0_6, %c0_7, %c2, %c0_8] : memref<1x10x10x128xbf16, #tpu.memory_space<vmem>>, vector<1x8x8x128xbf16>
    %5 = vector.shape_cast %4 : vector<1x8x8x128xbf16> to vector<8x8x128xbf16>
    %6 = tpu.concatenate %1, %3, %5 in 2 : vector<8x8x128xbf16>, vector<8x8x128xbf16>, vector<8x8x128xbf16> -> vector<8x8x384xbf16>
    %7 = vector.shape_cast %6 : vector<8x8x384xbf16> to vector<64x384xbf16>
    %c0_9 = arith.constant 0 : index
    %c0_10 = arith.constant 0 : index
    %c0_11 = arith.constant 0 : index
    %8 = vector.load %arg3[%c0_9, %c0_10, %c0_11] : memref<3x384x128xbf16, #tpu.memory_space<vmem>>, vector<1x384x128xbf16>
    %9 = vector.shape_cast %8 : vector<1x384x128xbf16> to vector<384x128xbf16>
    %cst = arith.constant dense<0.000000e+00> : vector<64x128xf32>
    %10 = tpu.matmul %7, %9, %cst {dimension_numbers = #tpu.dot_dimension_numbers<[1], [0], [0], [1], [0, 0, 1, 1], [], []>} : vector<64x384xbf16>, vector<384x128xbf16>, vector<64x128xf32> -> vector<64x128xf32>
    %c0_12 = arith.constant 0 : index
    %c0_13 = arith.constant 0 : index
    %11 = vector.load %arg6[%c0_12, %c0_13] : memref<64x128xf32, #tpu.memory_space<vmem>>, vector<64x128xf32>
    tpu.vector_store %arg6[%c0_12, %c0_13], %10 {strides = array<i32>} : memref<64x128xf32, #tpu.memory_space<vmem>>, vector<64x128xf32>,
    %c0_14 = arith.constant 0 : index
    %c1_15 = arith.constant 1 : index
    %c0_16 = arith.constant 0 : index
    %c0_17 = arith.constant 0 : index
    %12 = vector.load %arg2[%c0_14, %c1_15, %c0_16, %c0_17] : memref<1x10x10x128xbf16, #tpu.memory_space<vmem>>, vector<1x8x8x128xbf16>
    %13 = vector.shape_cast %12 : vector<1x8x8x128xbf16> to vector<8x8x128xbf16>
    %c0_18 = arith.constant 0 : index
    %c1_19 = arith.constant 1 : index
    %c1_20 = arith.constant 1 : index
    %c0_21 = arith.constant 0 : index
    %14 = vector.load %arg2[%c0_18, %c1_19, %c1_20, %c0_21] : memref<1x10x10x128xbf16, #tpu.memory_space<vmem>>, vector<1x8x8x128xbf16>
    %15 = vector.shape_cast %14 : vector<1x8x8x128xbf16> to vector<8x8x128xbf16>
    %c0_22 = arith.constant 0 : index
    %c1_23 = arith.constant 1 : index
    %c2_24 = arith.constant 2 : index
    %c0_25 = arith.constant 0 : index
    %16 = vector.load %arg2[%c0_22, %c1_23, %c2_24, %c0_25] : memref<1x10x10x128xbf16, #tpu.memory_space<vmem>>, vector<1x8x8x128xbf16>
    %17 = vector.shape_cast %16 : vector<1x8x8x128xbf16> to vector<8x8x128xbf16>
    %18 = tpu.concatenate %13, %15, %17 in 2 : vector<8x8x128xbf16>, vector<8x8x128xbf16>, vector<8x8x128xbf16> -> vector<8x8x384xbf16>
    %19 = vector.shape_cast %18 : vector<8x8x384xbf16> to vector<64x384xbf16>
    %c1_26 = arith.constant 1 : index
    %c0_27 = arith.constant 0 : index
    %c0_28 = arith.constant 0 : index
    %20 = vector.load %arg3[%c1_26, %c0_27, %c0_28] : memref<3x384x128xbf16, #tpu.memory_space<vmem>>, vector<1x384x128xbf16>
    %21 = vector.shape_cast %20 : vector<1x384x128xbf16> to vector<384x128xbf16>
    %cst_29 = arith.constant dense<0.000000e+00> : vector<64x128xf32>
    %22 = tpu.matmul %19, %21, %cst_29 {dimension_numbers = #tpu.dot_dimension_numbers<[1], [0], [0], [1], [0, 0, 1, 1], [], []>} : vector<64x384xbf16>, vector<384x128xbf16>, vector<64x128xf32> -> vector<64x128xf32>
    %c0_30 = arith.constant 0 : index
    %c0_31 = arith.constant 0 : index
    %23 = vector.load %arg6[%c0_30, %c0_31] : memref<64x128xf32, #tpu.memory_space<vmem>>, vector<64x128xf32>
    %24 = arith.addf %23, %22 : vector<64x128xf32>
    %c0_32 = arith.constant 0 : index
    %c0_33 = arith.constant 0 : index
    %25 = vector.load %arg6[%c0_32, %c0_33] : memref<64x128xf32, #tpu.memory_space<vmem>>, vector<64x128xf32>
    tpu.vector_store %arg6[%c0_32, %c0_33], %24 {strides = array<i32>} : memref<64x128xf32, #tpu.memory_space<vmem>>, vector<64x128xf32>,
    %c0_34 = arith.constant 0 : index
    %c2_35 = arith.constant 2 : index
    %c0_36 = arith.constant 0 : index
    %c0_37 = arith.constant 0 : index
    %26 = vector.load %arg2[%c0_34, %c2_35, %c0_36, %c0_37] : memref<1x10x10x128xbf16, #tpu.memory_space<vmem>>, vector<1x8x8x128xbf16>
    %27 = vector.shape_cast %26 : vector<1x8x8x128xbf16> to vector<8x8x128xbf16>
    %c0_38 = arith.constant 0 : index
    %c2_39 = arith.constant 2 : index
    %c1_40 = arith.constant 1 : index
    %c0_41 = arith.constant 0 : index
    %28 = vector.load %arg2[%c0_38, %c2_39, %c1_40, %c0_41] : memref<1x10x10x128xbf16, #tpu.memory_space<vmem>>, vector<1x8x8x128xbf16>
    %29 = vector.shape_cast %28 : vector<1x8x8x128xbf16> to vector<8x8x128xbf16>
    %c0_42 = arith.constant 0 : index
    %c2_43 = arith.constant 2 : index
    %c2_44 = arith.constant 2 : index
    %c0_45 = arith.constant 0 : index
    %30 = vector.load %arg2[%c0_42, %c2_43, %c2_44, %c0_45] : memref<1x10x10x128xbf16, #tpu.memory_space<vmem>>, vector<1x8x8x128xbf16>
    %31 = vector.shape_cast %30 : vector<1x8x8x128xbf16> to vector<8x8x128xbf16>
    %32 = tpu.concatenate %27, %29, %31 in 2 : vector<8x8x128xbf16>, vector<8x8x128xbf16>, vector<8x8x128xbf16> -> vector<8x8x384xbf16>
    %33 = vector.shape_cast %32 : vector<8x8x384xbf16> to vector<64x384xbf16>
    %c2_46 = arith.constant 2 : index
    %c0_47 = arith.constant 0 : index
    %c0_48 = arith.constant 0 : index
    %34 = vector.load %arg3[%c2_46, %c0_47, %c0_48] : memref<3x384x128xbf16, #tpu.memory_space<vmem>>, vector<1x384x128xbf16>
    %35 = vector.shape_cast %34 : vector<1x384x128xbf16> to vector<384x128xbf16>
    %cst_49 = arith.constant dense<0.000000e+00> : vector<64x128xf32>
    %36 = tpu.matmul %33, %35, %cst_49 {dimension_numbers = #tpu.dot_dimension_numbers<[1], [0], [0], [1], [0, 0, 1, 1], [], []>} : vector<64x384xbf16>, vector<384x128xbf16>, vector<64x128xf32> -> vector<64x128xf32>
    %c0_50 = arith.constant 0 : index
    %c0_51 = arith.constant 0 : index
    %37 = vector.load %arg6[%c0_50, %c0_51] : memref<64x128xf32, #tpu.memory_space<vmem>>, vector<64x128xf32>
    %38 = arith.addf %37, %36 : vector<64x128xf32>
    %c0_52 = arith.constant 0 : index
    %c0_53 = arith.constant 0 : index
    %39 = vector.load %arg6[%c0_52, %c0_53] : memref<64x128xf32, #tpu.memory_space<vmem>>, vector<64x128xf32>
    tpu.vector_store %arg6[%c0_52, %c0_53], %38 {strides = array<i32>} : memref<64x128xf32, #tpu.memory_space<vmem>>, vector<64x128xf32>,
    %c0_54 = arith.constant 0 : index
    %c0_55 = arith.constant 0 : index
    %40 = vector.load %arg6[%c0_54, %c0_55] : memref<64x128xf32, #tpu.memory_space<vmem>>, vector<64x128xf32>
    %c0_56 = arith.constant 0 : index
    %c0_57 = arith.constant 0 : index
    %41 = vector.load %arg4[%c0_56, %c0_57] : memref<1x128xf32, #tpu.memory_space<vmem>>, vector<1x128xf32>
    %42 = vector.broadcast %41 : vector<1x128xf32> to vector<64x128xf32>
    %43 = arith.addf %40, %42 : vector<64x128xf32>
    %cst_58 = arith.constant 0.000000e+00 : f32
    %44 = vector.broadcast %cst_58 : f32 to vector<64x128xf32>
    %45 = arith.maximumf %43, %44 : vector<64x128xf32>
    %46 = vector.shape_cast %45 : vector<64x128xf32> to vector<8x8x128xf32>
    %47 = vector.shape_cast %46 : vector<8x8x128xf32> to vector<4x2x8x128xf32>
    %48 = vector.extract_strided_slice %47 {offsets = [0, 0, 0, 0], sizes = [4, 1, 8, 128], strides = [1, 1, 1, 1]} : vector<4x2x8x128xf32> to vector<4x1x8x128xf32>
    %49 = vector.shape_cast %48 : vector<4x1x8x128xf32> to vector<4x8x128xf32>
    %50 = vector.extract_strided_slice %47 {offsets = [0, 1, 0, 0], sizes = [4, 1, 8, 128], strides = [1, 1, 1, 1]} : vector<4x2x8x128xf32> to vector<4x1x8x128xf32>
    %51 = vector.shape_cast %50 : vector<4x1x8x128xf32> to vector<4x8x128xf32>
    %52 = arith.maximumf %49, %51 : vector<4x8x128xf32>
    %53 = vector.shape_cast %52 : vector<4x8x128xf32> to vector<4x4x2x128xf32>
    %54 = vector.extract_strided_slice %53 {offsets = [0, 0, 0, 0], sizes = [4, 4, 1, 128], strides = [1, 1, 1, 1]} : vector<4x4x2x128xf32> to vector<4x4x1x128xf32>
    %55 = vector.shape_cast %54 : vector<4x4x1x128xf32> to vector<4x4x128xf32>
    %56 = vector.extract_strided_slice %53 {offsets = [0, 0, 1, 0], sizes = [4, 4, 1, 128], strides = [1, 1, 1, 1]} : vector<4x4x2x128xf32> to vector<4x4x1x128xf32>
    %57 = vector.shape_cast %56 : vector<4x4x1x128xf32> to vector<4x4x128xf32>
    %58 = arith.maximumf %55, %57 : vector<4x4x128xf32>
    %59 = arith.truncf %58 : vector<4x4x128xf32> to vector<4x4x128xbf16>
    %c0_59 = arith.constant 0 : index
    %c0_60 = arith.constant 0 : index
    %c0_61 = arith.constant 0 : index
    %c0_62 = arith.constant 0 : index
    %60 = vector.load %arg5[%c0_59, %c0_60, %c0_61, %c0_62] : memref<1x4x4x128xbf16, #tpu.memory_space<vmem>>, vector<1x4x4x128xbf16>
    %61 = vector.shape_cast %60 : vector<1x4x4x128xbf16> to vector<4x4x128xbf16>
    %62 = vector.shape_cast %59 : vector<4x4x128xbf16> to vector<1x4x4x128xbf16>
    tpu.vector_store %arg5[%c0_59, %c0_60, %c0_61, %c0_62], %62 {strides = array<i32>} : memref<1x4x4x128xbf16, #tpu.memory_space<vmem>>, vector<1x4x4x128xbf16>,
    return
  }
  func.func @transform_0(%arg0: i32, %arg1: i32) -> (i32, i32, i32, i32) {
    %c1_i32 = arith.constant 1 : i32
    %0 = arith.muli %arg0, %c1_i32 : i32
    %1 = arith.addi %0, %arg1 : i32
    %c0_i32 = arith.constant 0 : i32
    %c0_i32_0 = arith.constant 0 : i32
    %c0_i32_1 = arith.constant 0 : i32
    %c0_i32_2 = arith.constant 0 : i32
    return %1, %c0_i32, %c0_i32_0, %c0_i32_1 : i32, i32, i32, i32
  }
  func.func @transform_1(%arg0: i32, %arg1: i32) -> (i32, i32, i32) {
    %c0_i32 = arith.constant 0 : i32
    %c0_i32_0 = arith.constant 0 : i32
    %c0_i32_1 = arith.constant 0 : i32
    %c0_i32_2 = arith.constant 0 : i32
    return %c0_i32, %c0_i32_0, %c0_i32_1 : i32, i32, i32
  }
  func.func @transform_2(%arg0: i32, %arg1: i32) -> (i32, i32) {
    %c0_i32 = arith.constant 0 : i32
    %c0_i32_0 = arith.constant 0 : i32
    %c0_i32_1 = arith.constant 0 : i32
    return %c0_i32, %c0_i32_0 : i32, i32
  }
  func.func @transform_3(%arg0: i32, %arg1: i32) -> (i32, i32, i32, i32) {
    %c0_i32 = arith.constant 0 : i32
    %c0_i32_0 = arith.constant 0 : i32
    %c0_i32_1 = arith.constant 0 : i32
    return %arg0, %arg1, %c0_i32, %c0_i32_0 : i32, i32, i32, i32
  }
}

module attributes {stable_mosaic.version = 11 : i64} {
  func.func @_conv3x3_kernel(%arg0: i32, %arg1: i32, %arg2: memref<1x6x6x128xbf16, #tpu.memory_space<vmem>>, %arg3: memref<3x384x256xbf16, #tpu.memory_space<vmem>>, %arg4: memref<1x256xf32, #tpu.memory_space<vmem>>, %arg5: memref<1x4x4x256xbf16, #tpu.memory_space<vmem>>, %arg6: memref<16x256xf32, #tpu.memory_space<vmem>>) attributes {dimension_semantics = [#tpu.dimension_semantics<parallel>, #tpu.dimension_semantics<parallel>], iteration_bounds = array<i64: 2, 1>, scalar_prefetch = 0 : i64, scratch_operands = 1 : i64, tpu.core_type = #tpu.core_type<tc>, window_params = [{transform_indices = @transform_0, window_bounds = array<i64: 1, 6, 6, 128>}, {pipeline_mode = #tpu.pipeline_mode<synchronous>, transform_indices = @transform_1, window_bounds = array<i64: 3, 384, 256>}, {pipeline_mode = #tpu.pipeline_mode<synchronous>, transform_indices = @transform_2, window_bounds = array<i64: 1, 256>}, {transform_indices = @transform_3, window_bounds = array<i64: 1, 4, 4, 256>}]} {
    %c0 = arith.constant 0 : index
    %c0_0 = arith.constant 0 : index
    %c0_1 = arith.constant 0 : index
    %c0_2 = arith.constant 0 : index
    %0 = vector.load %arg2[%c0, %c0_0, %c0_1, %c0_2] : memref<1x6x6x128xbf16, #tpu.memory_space<vmem>>, vector<1x4x4x128xbf16>
    %1 = vector.shape_cast %0 : vector<1x4x4x128xbf16> to vector<4x4x128xbf16>
    %c0_3 = arith.constant 0 : index
    %c0_4 = arith.constant 0 : index
    %c1 = arith.constant 1 : index
    %c0_5 = arith.constant 0 : index
    %2 = vector.load %arg2[%c0_3, %c0_4, %c1, %c0_5] : memref<1x6x6x128xbf16, #tpu.memory_space<vmem>>, vector<1x4x4x128xbf16>
    %3 = vector.shape_cast %2 : vector<1x4x4x128xbf16> to vector<4x4x128xbf16>
    %c0_6 = arith.constant 0 : index
    %c0_7 = arith.constant 0 : index
    %c2 = arith.constant 2 : index
    %c0_8 = arith.constant 0 : index
    %4 = vector.load %arg2[%c0_6, %c0_7, %c2, %c0_8] : memref<1x6x6x128xbf16, #tpu.memory_space<vmem>>, vector<1x4x4x128xbf16>
    %5 = vector.shape_cast %4 : vector<1x4x4x128xbf16> to vector<4x4x128xbf16>
    %6 = tpu.concatenate %1, %3, %5 in 2 : vector<4x4x128xbf16>, vector<4x4x128xbf16>, vector<4x4x128xbf16> -> vector<4x4x384xbf16>
    %7 = vector.shape_cast %6 : vector<4x4x384xbf16> to vector<16x384xbf16>
    %c0_9 = arith.constant 0 : index
    %c0_10 = arith.constant 0 : index
    %c0_11 = arith.constant 0 : index
    %8 = vector.load %arg3[%c0_9, %c0_10, %c0_11] : memref<3x384x256xbf16, #tpu.memory_space<vmem>>, vector<1x384x256xbf16>
    %9 = vector.shape_cast %8 : vector<1x384x256xbf16> to vector<384x256xbf16>
    %cst = arith.constant dense<0.000000e+00> : vector<16x256xf32>
    %10 = tpu.matmul %7, %9, %cst {dimension_numbers = #tpu.dot_dimension_numbers<[1], [0], [0], [1], [0, 0, 1, 1], [], []>} : vector<16x384xbf16>, vector<384x256xbf16>, vector<16x256xf32> -> vector<16x256xf32>
    %c0_12 = arith.constant 0 : index
    %c0_13 = arith.constant 0 : index
    %11 = vector.load %arg6[%c0_12, %c0_13] : memref<16x256xf32, #tpu.memory_space<vmem>>, vector<16x256xf32>
    tpu.vector_store %arg6[%c0_12, %c0_13], %10 {strides = array<i32>} : memref<16x256xf32, #tpu.memory_space<vmem>>, vector<16x256xf32>,
    %c0_14 = arith.constant 0 : index
    %c1_15 = arith.constant 1 : index
    %c0_16 = arith.constant 0 : index
    %c0_17 = arith.constant 0 : index
    %12 = vector.load %arg2[%c0_14, %c1_15, %c0_16, %c0_17] : memref<1x6x6x128xbf16, #tpu.memory_space<vmem>>, vector<1x4x4x128xbf16>
    %13 = vector.shape_cast %12 : vector<1x4x4x128xbf16> to vector<4x4x128xbf16>
    %c0_18 = arith.constant 0 : index
    %c1_19 = arith.constant 1 : index
    %c1_20 = arith.constant 1 : index
    %c0_21 = arith.constant 0 : index
    %14 = vector.load %arg2[%c0_18, %c1_19, %c1_20, %c0_21] : memref<1x6x6x128xbf16, #tpu.memory_space<vmem>>, vector<1x4x4x128xbf16>
    %15 = vector.shape_cast %14 : vector<1x4x4x128xbf16> to vector<4x4x128xbf16>
    %c0_22 = arith.constant 0 : index
    %c1_23 = arith.constant 1 : index
    %c2_24 = arith.constant 2 : index
    %c0_25 = arith.constant 0 : index
    %16 = vector.load %arg2[%c0_22, %c1_23, %c2_24, %c0_25] : memref<1x6x6x128xbf16, #tpu.memory_space<vmem>>, vector<1x4x4x128xbf16>
    %17 = vector.shape_cast %16 : vector<1x4x4x128xbf16> to vector<4x4x128xbf16>
    %18 = tpu.concatenate %13, %15, %17 in 2 : vector<4x4x128xbf16>, vector<4x4x128xbf16>, vector<4x4x128xbf16> -> vector<4x4x384xbf16>
    %19 = vector.shape_cast %18 : vector<4x4x384xbf16> to vector<16x384xbf16>
    %c1_26 = arith.constant 1 : index
    %c0_27 = arith.constant 0 : index
    %c0_28 = arith.constant 0 : index
    %20 = vector.load %arg3[%c1_26, %c0_27, %c0_28] : memref<3x384x256xbf16, #tpu.memory_space<vmem>>, vector<1x384x256xbf16>
    %21 = vector.shape_cast %20 : vector<1x384x256xbf16> to vector<384x256xbf16>
    %cst_29 = arith.constant dense<0.000000e+00> : vector<16x256xf32>
    %22 = tpu.matmul %19, %21, %cst_29 {dimension_numbers = #tpu.dot_dimension_numbers<[1], [0], [0], [1], [0, 0, 1, 1], [], []>} : vector<16x384xbf16>, vector<384x256xbf16>, vector<16x256xf32> -> vector<16x256xf32>
    %c0_30 = arith.constant 0 : index
    %c0_31 = arith.constant 0 : index
    %23 = vector.load %arg6[%c0_30, %c0_31] : memref<16x256xf32, #tpu.memory_space<vmem>>, vector<16x256xf32>
    %24 = arith.addf %23, %22 : vector<16x256xf32>
    %c0_32 = arith.constant 0 : index
    %c0_33 = arith.constant 0 : index
    %25 = vector.load %arg6[%c0_32, %c0_33] : memref<16x256xf32, #tpu.memory_space<vmem>>, vector<16x256xf32>
    tpu.vector_store %arg6[%c0_32, %c0_33], %24 {strides = array<i32>} : memref<16x256xf32, #tpu.memory_space<vmem>>, vector<16x256xf32>,
    %c0_34 = arith.constant 0 : index
    %c2_35 = arith.constant 2 : index
    %c0_36 = arith.constant 0 : index
    %c0_37 = arith.constant 0 : index
    %26 = vector.load %arg2[%c0_34, %c2_35, %c0_36, %c0_37] : memref<1x6x6x128xbf16, #tpu.memory_space<vmem>>, vector<1x4x4x128xbf16>
    %27 = vector.shape_cast %26 : vector<1x4x4x128xbf16> to vector<4x4x128xbf16>
    %c0_38 = arith.constant 0 : index
    %c2_39 = arith.constant 2 : index
    %c1_40 = arith.constant 1 : index
    %c0_41 = arith.constant 0 : index
    %28 = vector.load %arg2[%c0_38, %c2_39, %c1_40, %c0_41] : memref<1x6x6x128xbf16, #tpu.memory_space<vmem>>, vector<1x4x4x128xbf16>
    %29 = vector.shape_cast %28 : vector<1x4x4x128xbf16> to vector<4x4x128xbf16>
    %c0_42 = arith.constant 0 : index
    %c2_43 = arith.constant 2 : index
    %c2_44 = arith.constant 2 : index
    %c0_45 = arith.constant 0 : index
    %30 = vector.load %arg2[%c0_42, %c2_43, %c2_44, %c0_45] : memref<1x6x6x128xbf16, #tpu.memory_space<vmem>>, vector<1x4x4x128xbf16>
    %31 = vector.shape_cast %30 : vector<1x4x4x128xbf16> to vector<4x4x128xbf16>
    %32 = tpu.concatenate %27, %29, %31 in 2 : vector<4x4x128xbf16>, vector<4x4x128xbf16>, vector<4x4x128xbf16> -> vector<4x4x384xbf16>
    %33 = vector.shape_cast %32 : vector<4x4x384xbf16> to vector<16x384xbf16>
    %c2_46 = arith.constant 2 : index
    %c0_47 = arith.constant 0 : index
    %c0_48 = arith.constant 0 : index
    %34 = vector.load %arg3[%c2_46, %c0_47, %c0_48] : memref<3x384x256xbf16, #tpu.memory_space<vmem>>, vector<1x384x256xbf16>
    %35 = vector.shape_cast %34 : vector<1x384x256xbf16> to vector<384x256xbf16>
    %cst_49 = arith.constant dense<0.000000e+00> : vector<16x256xf32>
    %36 = tpu.matmul %33, %35, %cst_49 {dimension_numbers = #tpu.dot_dimension_numbers<[1], [0], [0], [1], [0, 0, 1, 1], [], []>} : vector<16x384xbf16>, vector<384x256xbf16>, vector<16x256xf32> -> vector<16x256xf32>
    %c0_50 = arith.constant 0 : index
    %c0_51 = arith.constant 0 : index
    %37 = vector.load %arg6[%c0_50, %c0_51] : memref<16x256xf32, #tpu.memory_space<vmem>>, vector<16x256xf32>
    %38 = arith.addf %37, %36 : vector<16x256xf32>
    %c0_52 = arith.constant 0 : index
    %c0_53 = arith.constant 0 : index
    %39 = vector.load %arg6[%c0_52, %c0_53] : memref<16x256xf32, #tpu.memory_space<vmem>>, vector<16x256xf32>
    tpu.vector_store %arg6[%c0_52, %c0_53], %38 {strides = array<i32>} : memref<16x256xf32, #tpu.memory_space<vmem>>, vector<16x256xf32>,
    %c0_54 = arith.constant 0 : index
    %c0_55 = arith.constant 0 : index
    %40 = vector.load %arg6[%c0_54, %c0_55] : memref<16x256xf32, #tpu.memory_space<vmem>>, vector<16x256xf32>
    %c0_56 = arith.constant 0 : index
    %c0_57 = arith.constant 0 : index
    %41 = vector.load %arg4[%c0_56, %c0_57] : memref<1x256xf32, #tpu.memory_space<vmem>>, vector<1x256xf32>
    %42 = vector.broadcast %41 : vector<1x256xf32> to vector<16x256xf32>
    %43 = arith.addf %40, %42 : vector<16x256xf32>
    %cst_58 = arith.constant 0.000000e+00 : f32
    %44 = vector.broadcast %cst_58 : f32 to vector<16x256xf32>
    %45 = arith.maximumf %43, %44 : vector<16x256xf32>
    %46 = vector.shape_cast %45 : vector<16x256xf32> to vector<4x4x256xf32>
    %47 = arith.truncf %46 : vector<4x4x256xf32> to vector<4x4x256xbf16>
    %c0_59 = arith.constant 0 : index
    %c0_60 = arith.constant 0 : index
    %c0_61 = arith.constant 0 : index
    %c0_62 = arith.constant 0 : index
    %48 = vector.load %arg5[%c0_59, %c0_60, %c0_61, %c0_62] : memref<1x4x4x256xbf16, #tpu.memory_space<vmem>>, vector<1x4x4x256xbf16>
    %49 = vector.shape_cast %48 : vector<1x4x4x256xbf16> to vector<4x4x256xbf16>
    %50 = vector.shape_cast %47 : vector<4x4x256xbf16> to vector<1x4x4x256xbf16>
    tpu.vector_store %arg5[%c0_59, %c0_60, %c0_61, %c0_62], %50 {strides = array<i32>} : memref<1x4x4x256xbf16, #tpu.memory_space<vmem>>, vector<1x4x4x256xbf16>,
    return
  }
  func.func @transform_0(%arg0: i32, %arg1: i32) -> (i32, i32, i32, i32) {
    %c1_i32 = arith.constant 1 : i32
    %0 = arith.muli %arg0, %c1_i32 : i32
    %1 = arith.addi %0, %arg1 : i32
    %c0_i32 = arith.constant 0 : i32
    %c0_i32_0 = arith.constant 0 : i32
    %c0_i32_1 = arith.constant 0 : i32
    %c0_i32_2 = arith.constant 0 : i32
    return %1, %c0_i32, %c0_i32_0, %c0_i32_1 : i32, i32, i32, i32
  }
  func.func @transform_1(%arg0: i32, %arg1: i32) -> (i32, i32, i32) {
    %c0_i32 = arith.constant 0 : i32
    %c0_i32_0 = arith.constant 0 : i32
    %c0_i32_1 = arith.constant 0 : i32
    %c0_i32_2 = arith.constant 0 : i32
    return %c0_i32, %c0_i32_0, %c0_i32_1 : i32, i32, i32
  }
  func.func @transform_2(%arg0: i32, %arg1: i32) -> (i32, i32) {
    %c0_i32 = arith.constant 0 : i32
    %c0_i32_0 = arith.constant 0 : i32
    %c0_i32_1 = arith.constant 0 : i32
    return %c0_i32, %c0_i32_0 : i32, i32
  }
  func.func @transform_3(%arg0: i32, %arg1: i32) -> (i32, i32, i32, i32) {
    %c0_i32 = arith.constant 0 : i32
    %c0_i32_0 = arith.constant 0 : i32
    %c0_i32_1 = arith.constant 0 : i32
    return %arg0, %arg1, %c0_i32, %c0_i32_0 : i32, i32, i32, i32
  }
}

</mosaic_0001>

<llo_original>
// kernel: correspondence_generation_forward.5
$region0: #{correspondence_generation_forward.5}
  #allocation0 [shape = 'u32[]', space=smem, size = 0x4, offset = 0x4, fixed_abs, tag = 'smem constant byte address 0x4 - core index']
  #allocation1 [shape = 'u32[144,128]{1,0:T(1,128)}', space=vmem, size = 0x12000, scoped, tag = 'internal scratch']
  %s0 = inlined_call_operand.vmem [shape: bf16[2,16,16,27], index: 0, kind: input, shape index: {}]
  %s1 = inlined_call_operand.vmem [shape: bf16[27,64], index: 1, kind: input, shape index: {}]
  %s2 = inlined_call_operand.vmem [shape: f32[1,64], index: 2, kind: input, shape index: {}]
  %s3 = inlined_call_operand.vmem [shape: bf16[2,16,16,64], index: 3, kind: output, shape index: {}]
  %s4 = sld [smem:[#allocation0]]
  $region45: #{correspondence_generation_forward.5} parent=0
    _
  %s6 = ssub.s32 1, %s4
  %s7 = scalar_select 0, %s6, %s4
  loop: start=0, step=1, limit=6
  $region2: #{correspondence_generation_forward.5} parent=0 // loop_pre_header
    _
  $region3: #{correspondence_generation_forward.5} parent=0 // loop_header
    %s9 = sphi 0, %s13
    %p10 = scmp.ge.s32.totalorder %s9, 6
    %s16 = sphi 0, %s28
    %s17 = sphi 0, %s24
    %s18 = sphi 0, %s16
    %s19 = sphi 0, %s17
    %s20 = sphi 0, %s18
    %s21 = sphi 0, %s19
    %s33 = sphi 0, %s35
    %s36 = sphi 0, %s33
    %s37 = sphi 0, %s36
    %s53 = sphi 0, %s37
    %s57 = sphi 0, %s57
    %s59 = sphi 0, %s57
    %s60 = sphi 0, %s59
    %s74 = sphi 0, %s60
    %s78 = sphi 0, %s78
    %s80 = sphi 0, %s78
    %s81 = sphi 0, %s80
    %s95 = sphi 0, %s81
    %s103 = sphi 0, %s105
    %s106 = sphi 0, %s103
    %s107 = sphi 0, %s106
    %s123 = sphi 0, %s107
  $region4: #{correspondence_generation_forward.5} parent=0 // loop_header_branch
    %12 = sbr.rel (%p10) target = $region8
  $region5: #{correspondence_generation_forward.5} parent=0 // loop_body
    %s14 = ssub.s32 %s9, 1
    %s15 = ssub.s32 %s9, 2
    %s22 = sadd.s32 1, %s17
    %p23 = scmp.ge.s32.totalorder %s22, 2
    %s24 = scalar_select %p23, 0, %s22
    %s25 = sadd.s32 1, %s16
    %s26 = scalar_select %p23, %s25, %s16
    %p27 = scmp.ge.s32.totalorder %s26, 2
    %s28 = scalar_select %p27, 0, %s26
    %s29 = ssub.s32 %s16, %s28
    %s30 = ssub.s32 %s17, %s24
    %s31 = sor.u32 %s29, %s30
    %p32 = scmp.eq.s32.totalorder %s31, 0
    %s34 = sadd.s32 %s33, 1
    %s35 = scalar_select %p32, %s33, %s34
    %p38 = pneg %p32
    %p39 = scmp.eq.s32.totalorder %s9, 3
    %p40 = por %p38, %p39
    %p41 = scmp.ne.s32.totalorder %s33, %s36
    %p42 = scmp.eq.s32.totalorder %s9, 0
    %p43 = por %p41, %p42
    %p44 = scmp.ne.s32.totalorder %s33, %s36
    %p45 = scmp.eq.s32.totalorder %s14, 3
    %p46 = por %p44, %p45
    %p47 = scmp.ne.s32.totalorder %s36, %s37
    %p48 = scmp.eq.s32.totalorder %s14, 0
    %p49 = por %p47, %p48
    %p50 = scmp.ne.s32.totalorder %s36, %s37
    %p51 = scmp.eq.s32.totalorder %s15, 3
    %p52 = por %p50, %p51
    %p54 = scmp.ne.s32.totalorder %s37, %s53
    %p55 = scmp.eq.s32.totalorder %s15, 0
    %p56 = por %p54, %p55
    %s58 = sadd.s32 %s57, 1
    %p61 = scmp.eq.s32.totalorder %s9, 3
    %p62 = scmp.ne.s32.totalorder %s57, %s59
    %p63 = scmp.eq.s32.totalorder %s9, 0
    %p64 = por %p62, %p63
    %p65 = scmp.ne.s32.totalorder %s57, %s59
    %p66 = scmp.eq.s32.totalorder %s14, 3
    %p67 = por %p65, %p66
    %p68 = scmp.ne.s32.totalorder %s59, %s60
    %p69 = scmp.eq.s32.totalorder %s14, 0
    %p70 = por %p68, %p69
    %p71 = scmp.ne.s32.totalorder %s59, %s60
    %p72 = scmp.eq.s32.totalorder %s15, 3
    %p73 = por %p71, %p72
    %p75 = scmp.ne.s32.totalorder %s60, %s74
    %p76 = scmp.eq.s32.totalorder %s15, 0
    %p77 = por %p75, %p76
    %s79 = sadd.s32 %s78, 1
    %p82 = scmp.eq.s32.totalorder %s9, 3
    %p83 = scmp.ne.s32.totalorder %s78, %s80
    %p84 = scmp.eq.s32.totalorder %s9, 0
    %p85 = por %p83, %p84
    %p86 = scmp.ne.s32.totalorder %s78, %s80
    %p87 = scmp.eq.s32.totalorder %s14, 3
    %p88 = por %p86, %p87
    %p89 = scmp.ne.s32.totalorder %s80, %s81
    %p90 = scmp.eq.s32.totalorder %s14, 0
    %p91 = por %p89, %p90
    %p92 = scmp.ne.s32.totalorder %s80, %s81
    %p93 = scmp.eq.s32.totalorder %s15, 3
    %p94 = por %p92, %p93
    %p96 = scmp.ne.s32.totalorder %s81, %s95
    %p97 = scmp.eq.s32.totalorder %s15, 0
    %p98 = por %p96, %p97
    %s99 = ssub.s32 %s16, %s28
    %s100 = ssub.s32 %s17, %s24
    %s101 = sor.u32 %s99, %s100
    %p102 = scmp.eq.s32.totalorder %s101, 0
    %s104 = sadd.s32 %s103, 1
    %s105 = scalar_select %p102, %s103, %s104
    %p108 = pneg %p102
    %p109 = scmp.eq.s32.totalorder %s9, 3
    %p110 = por %p108, %p109
    %p111 = scmp.ne.s32.totalorder %s103, %s106
    %p112 = scmp.eq.s32.totalorder %s9, 0
    %p113 = por %p111, %p112
    %p114 = scmp.ne.s32.totalorder %s103, %s106
    %p115 = scmp.eq.s32.totalorder %s14, 3
    %p116 = por %p114, %p115
    %p117 = scmp.ne.s32.totalorder %s106, %s107
    %p118 = scmp.eq.s32.totalorder %s14, 0
    %p119 = por %p117, %p118
    %p120 = scmp.ne.s32.totalorder %s106, %s107
    %p121 = scmp.eq.s32.totalorder %s15, 3
    %p122 = por %p120, %p121
    %p124 = scmp.ne.s32.totalorder %s107, %s123
    %p125 = scmp.eq.s32.totalorder %s15, 0
    %p126 = por %p124, %p125
    %p127 = scmp.le.s32.totalorder 1, %s9
    %p128 = scmp.lt.s32.totalorder %s9, 5
    %p129 = pnand %p127, %p128
    %p130 = pneg %p129
    // Predicated region
    $region9: #{correspondence_generation_forward.5} parent=5 // pred_check
      _
    $region10: #{correspondence_generation_forward.5} parent=5 // pred_check_branch
      %132 = sbr.rel (%p129) target = $region12
    $region11: #{correspondence_generation_forward.5} parent=5 // pred_region
      %s133 = ssub.s32 %s9, 1
      // Predicated region
      $region13: #{correspondence_generation_forward.5} parent=11 // pred_check
        %p134 = pneg %p70
      $region14: #{correspondence_generation_forward.5} parent=11 // pred_check_branch
        %136 = sbr.rel (%p134) target = $region16
      $region15: #{correspondence_generation_forward.5} parent=11 // pred_region
        _
      $region16: #{correspondence_generation_forward.5} parent=11 // pred_fallthru
        _
      // Predicated region
      $region17: #{correspondence_generation_forward.5} parent=11 // pred_check
        %p137 = pneg %p91
      $region18: #{correspondence_generation_forward.5} parent=11 // pred_check_branch
        %139 = sbr.rel (%p137) target = $region20
      $region19: #{correspondence_generation_forward.5} parent=11 // pred_region
        _
      $region20: #{correspondence_generation_forward.5} parent=11 // pred_fallthru
        _
    $region12: #{correspondence_generation_forward.5} parent=5 // pred_fallthru
      _
    %p140 = scmp.lt.s32.totalorder %s9, 4
    // Predicated region
    $region21: #{correspondence_generation_forward.5} parent=5 // pred_check
      %p141 = pneg %p140
    $region22: #{correspondence_generation_forward.5} parent=5 // pred_check_branch
      %143 = sbr.rel (%p141) target = $region24
    $region23: #{correspondence_generation_forward.5} parent=5 // pred_region
      // Predicated region
      $region25: #{correspondence_generation_forward.5} parent=23 // pred_check
        %p144 = pneg %p43
      $region26: #{correspondence_generation_forward.5} parent=23 // pred_check_branch
        %146 = sbr.rel (%p144) target = $region28
      $region27: #{correspondence_generation_forward.5} parent=23 // pred_region
        %s147 = smul.u32 8, %s17
        %p148 = scmp.lt.s32.totalorder %s16, 1
        %s149 = scalar_select %p148, %s16, 1
        %p150 = scmp.lt.s32.totalorder %s147, 15
        %s151 = scalar_select %p150, %s147, 15
        %s152 = smul.addr %s151, 2
        %s153 = smul.addr %s149, 32
        %s154 = sadd.s32 %s152, %s153
        %s155 = smul.addr %s154, 4
        %s156 = scalar_lea.vmem %s0, %s155
        %s157 = smul.u32 8, %s17
      $region28: #{correspondence_generation_forward.5} parent=23 // pred_fallthru
        _
    $region24: #{correspondence_generation_forward.5} parent=5 // pred_fallthru
      _
    %p158 = scmp.le.s32.totalorder 1, %s9
    %p159 = scmp.lt.s32.totalorder %s9, 5
    %p160 = pnand %p158, %p159
    %p161 = pneg %p160
    // Predicated region
    $region29: #{correspondence_generation_forward.5} parent=5 // pred_check
      _
    $region30: #{correspondence_generation_forward.5} parent=5 // pred_check_branch
      %163 = sbr.rel (%p160) target = $region32
    $region31: #{correspondence_generation_forward.5} parent=5 // pred_region
      %s164 = ssub.s32 %s9, 1
      %s165 = smul.u32 8, %s19
      %p166 = scmp.lt.s32.totalorder %s18, 1
      %s167 = scalar_select %p166, %s18, 1
      %p168 = scmp.lt.s32.totalorder %s165, 15
      %s169 = scalar_select %p168, %s165, 15
      %s170 = smul.addr %s169, 2
      %s171 = smul.addr %s167, 32
      %s172 = sadd.s32 %s170, %s171
      %s173 = smul.addr %s172, 4
      %s174 = scalar_lea.vmem %s0, %s173
      %p175 = pneg %p49
      %p176 = pneg %p46
      %p177 = pneg %p70
      %p178 = pneg %p67
      %p179 = pneg %p91
      %p180 = pneg %p88
      %p181 = pneg %p119
      %p182 = pneg %p116
      %s183 = smul.u32 8, %s19
      %p184 = scmp.lt.s32.totalorder %s18, 1
      %s185 = scalar_select %p184, %s18, 1
      %p186 = scmp.lt.s32.totalorder %s183, 15
      %s187 = scalar_select %p186, %s183, 15
      %s188 = smul.addr %s187, 2
      %s189 = smul.addr %s185, 32
      %s190 = sadd.s32 %s188, %s189
      %s191 = smul.addr %s190, 4
      %s192 = scalar_lea.vmem %s3, %s191
      %s193 = smul.u32 8, %s19
      %p194 = scmp.lt.s32.totalorder %s18, 1
      %s195 = scalar_select %p194, %s18, 1
      %p196 = scmp.lt.s32.totalorder %s193, 15
      %s197 = scalar_select %p196, %s193, 15
      %s198 = smul.addr %s197, 2
      %s199 = smul.addr %s195, 32
      %s200 = sadd.s32 %s198, %s199
      %s201 = smul.addr %s200, 4
      %s202 = scalar_lea.vmem %s0, %s201
      %s203 = smul.u32 8, %s19
      %s204 = smul.u32 8, %s19
      %p205 = scmp.lt.s32.totalorder %s18, 1
      %s206 = scalar_select %p205, %s18, 1
      %p207 = scmp.lt.s32.totalorder %s204, 15
      %s208 = scalar_select %p207, %s204, 15
      %s209 = smul.addr %s208, 2
      %s210 = smul.addr %s206, 32
      %s211 = sadd.s32 %s209, %s210
      %s212 = smul.addr %s211, 4
      %s213 = scalar_lea.vmem %s3, %s212
      %s214 = smul.u32 8, %s19
      %v216 = vld [vmem:[%s202] sm:$0xf]
      %v217 = vld [vmem:[%s202 + $0x4] sm:$0xf]
      %v218 = vld [vmem:[%s202 + $0x8] sm:$0xf]
      %v219 = vld [vmem:[%s202 + $0xc] sm:$0xf]
      %v220 = vld [vmem:[%s202 + $0x10] sm:$0xf]
      %v221 = vld [vmem:[%s202 + $0x14] sm:$0xf]
      %v222 = vld [vmem:[%s202 + $0x18] sm:$0xf]
      %v223 = vld [vmem:[%s202 + $0x1c] sm:$0xf]
      %v224 = vld [vmem:[%s202 + $0x20] sm:$0xf]
      %v225 = vld [vmem:[%s202 + $0x24] sm:$0xf]
      %v226 = vld [vmem:[%s202 + $0x28] sm:$0xf]
      %v227 = vld [vmem:[%s202 + $0x2c] sm:$0xf]
      %v228 = vld [vmem:[%s202 + $0x30] sm:$0xf]
      %v229 = vld [vmem:[%s202 + $0x34] sm:$0xf]
      %v230 = vld [vmem:[%s202 + $0x38] sm:$0xf]
      %v231 = vld [vmem:[%s202 + $0x3c] sm:$0xf]
      %v232 = vld [vmem:[%s1] sm:$0xf]
      %v233 = vld [vmem:[%s1 + $0x4] sm:$0xf]
      %v234 = vld [vmem:[%s1 + $0x8] sm:$0xf]
      %v235 = vld [vmem:[%s1 + $0xc] sm:$0x3]
      %v236 = vld [vmem:[%s2] sm:$0x1]
      %v238 = vlaneseq
      %v239 = vshrl.u32 %v238, 7
      %v240 = vsub.s32 0, %v239
      %v241 = vrot.slane %v236, %v240
      %v259 = vunpack.c.l.b16 %v216
      %v260 = vunpack.c.l.b16 %v217
      %v261 = vunpack.c.l.b16 %v218
      %v262 = vunpack.c.l.b16 %v219
      %v263 = vunpack.c.l.b16 %v220
      %v264 = vunpack.c.l.b16 %v221
      %v265 = vunpack.c.l.b16 %v222
      %v266 = vunpack.c.l.b16 %v223
      %v267 = vunpack.c.l.b16 %v224
      %v268 = vunpack.c.l.b16 %v225
      %v269 = vunpack.c.l.b16 %v226
      %v270 = vunpack.c.l.b16 %v227
      %v271 = vunpack.c.l.b16 %v228
      %v272 = vunpack.c.l.b16 %v229
      %v273 = vunpack.c.l.b16 %v230
      %v274 = vunpack.c.l.b16 %v231
      %v275 = vpack.c.b16 %v260, %v259
      %v276 = vpack.c.b16 %v262, %v261
      %v277 = vpack.c.b16 %v264, %v263
      %v278 = vpack.c.b16 %v266, %v265
      %v279 = vpack.c.b16 %v268, %v267
      %v280 = vpack.c.b16 %v270, %v269
      %v281 = vpack.c.b16 %v272, %v271
      %v282 = vpack.c.b16 %v274, %v273
      %v287 = vunpack.c.l.b16 %v232
      %v288 = vunpack.c.l.b16 %v233
      %v289 = vunpack.c.l.b16 %v234
      %v290 = vunpack.c.l.b16 %v235
      %v291 = vpack.c.b16 %v288, %v287
      %v292 = vpack.c.b16 %v290, %v289
      %vm294 = vcmask 220160
      %v296 = vsel %vm294, %v275, 0
      %v299 = vsel %vm294, %v276, 0
      %v302 = vsel %vm294, %v277, 0
      %v305 = vsel %vm294, %v278, 0
      %v308 = vsel %vm294, %v279, 0
      %v311 = vsel %vm294, %v280, 0
      %v314 = vsel %vm294, %v281, 0
      %v317 = vsel %vm294, %v282, 0
      %vm319 = vcmask 1044480
      %vm320 = vcmask 1045504
      %v321 = vsel %vm319, 4294967295, 65535
      %v322 = vsel %vm320, %v321, 0
      %v324 = vand.u32 %v292, %v322
      %326 = vmatprep.subr.bf16.mxu0 0
      %327 = vmatpush1.bf16.msra.mxu0 %v291
      %328 = vmatprep.subr.bf16.mxu0 0
      %329 = vmatpush1.bf16.msra.mxu0 %v324
      %330 = vmatprep.subr.bf16.mxu0 0
      %331 = vmatpush1.bf16.msra.mxu0 0
      %332 = vmatprep.subr.bf16.mxu0 0
      %333 = vmatpush1.bf16.msra.mxu0 0
      %334 = vmatprep.subr.bf16.mxu0 0
      %335 = vmatpush1.bf16.msra.mxu0 0
      %336 = vmatprep.subr.bf16.mxu0 0
      %337 = vmatpush1.bf16.msra.mxu0 0
      %338 = vmatprep.subr.bf16.mxu0 0
      %339 = vmatpush1.bf16.msra.mxu0 0
      %340 = vmatprep.subr.bf16.mxu0 0
      %341 = vmatpush1.bf16.msra.mxu0 0
      %342 = vmatprep.subr.bf16.mxu0 0
      %343 = vmatpush1.bf16.msra.mxu0 0
      %344 = vmatprep.subr.bf16.mxu0 0
      %345 = vmatpush1.bf16.msra.mxu0 0
      %346 = vmatprep.subr.bf16.mxu0 0
      %347 = vmatpush1.bf16.msra.mxu0 0
      %348 = vmatprep.subr.bf16.mxu0 0
      %349 = vmatpush1.bf16.msra.mxu0 0
      %350 = vmatprep.subr.bf16.mxu0 0
      %351 = vmatpush1.bf16.msra.mxu0 0
      %352 = vmatprep.subr.bf16.mxu0 0
      %353 = vmatpush1.bf16.msra.mxu0 0
      %354 = vmatprep.subr.bf16.mxu0 0
      %355 = vmatpush1.bf16.msra.mxu0 0
      %356 = vmatprep.subr.bf16.mxu0 0
      %357 = vmatpush1.bf16.msra.mxu0 0
      %358 = vmatprep.mubr.bf16.mxu0 0
      %359 = vmatmul.mubr.bf16.gmra.mrb[0].mxu0 %v296
      %v360 = vpop.f32.mrb[0].mxu0
      %v361 = vadd.f32 %v241, %v360
      %v362 = vpop.f32.mrb[0].mxu0
      %v363 = vpop.f32.mrb[0].mxu0
      %v364 = vadd.f32 %v241, %v363
      %v365 = vpop.f32.mrb[0].mxu0
      %366 = vmatprep.mubr.bf16.mxu0 0
      %367 = vmatmul.mubr.bf16.gmra.mrb[0].mxu0 %v299
      %v368 = vpop.f32.mrb[0].mxu0
      %v369 = vadd.f32 %v241, %v368
      %v370 = vpop.f32.mrb[0].mxu0
      %v371 = vpop.f32.mrb[0].mxu0
      %v372 = vadd.f32 %v241, %v371
      %v373 = vpop.f32.mrb[0].mxu0
      %374 = vmatprep.mubr.bf16.mxu0 0
      %375 = vmatmul.mubr.bf16.gmra.mrb[0].mxu0 %v302
      %v376 = vpop.f32.mrb[0].mxu0
      %v377 = vadd.f32 %v241, %v376
      %v378 = vpop.f32.mrb[0].mxu0
      %v379 = vpop.f32.mrb[0].mxu0
      %v380 = vadd.f32 %v241, %v379
      %v381 = vpop.f32.mrb[0].mxu0
      %382 = vmatprep.mubr.bf16.mxu0 0
      %383 = vmatmul.mubr.bf16.gmra.mrb[0].mxu0 %v305
      %v384 = vpop.f32.mrb[0].mxu0
      %v385 = vadd.f32 %v241, %v384
      %v386 = vpop.f32.mrb[0].mxu0
      %v387 = vpop.f32.mrb[0].mxu0
      %v388 = vadd.f32 %v241, %v387
      %v389 = vpop.f32.mrb[0].mxu0
      %390 = vmatprep.mubr.bf16.mxu0 0
      %391 = vmatmul.mubr.bf16.gmra.mrb[0].mxu0 %v308
      %v392 = vpop.f32.mrb[0].mxu0
      %v393 = vadd.f32 %v241, %v392
      %v394 = vpop.f32.mrb[0].mxu0
      %v395 = vpop.f32.mrb[0].mxu0
      %v396 = vadd.f32 %v241, %v395
      %v397 = vpop.f32.mrb[0].mxu0
      %398 = vmatprep.mubr.bf16.mxu0 0
      %399 = vmatmul.mubr.bf16.gmra.mrb[0].mxu0 %v311
      %v400 = vpop.f32.mrb[0].mxu0
      %v401 = vadd.f32 %v241, %v400
      %v402 = vpop.f32.mrb[0].mxu0
      %v403 = vpop.f32.mrb[0].mxu0
      %v404 = vadd.f32 %v241, %v403
      %v405 = vpop.f32.mrb[0].mxu0
      %406 = vmatprep.mubr.bf16.mxu0 0
      %407 = vmatmul.mubr.bf16.gmra.mrb[0].mxu0 %v314
      %v408 = vpop.f32.mrb[0].mxu0
      %v409 = vadd.f32 %v241, %v408
      %v410 = vpop.f32.mrb[0].mxu0
      %v411 = vpop.f32.mrb[0].mxu0
      %v412 = vadd.f32 %v241, %v411
      %v413 = vpop.f32.mrb[0].mxu0
      %414 = vmatprep.mubr.bf16.mxu0 0
      %415 = vmatmul.mubr.bf16.gmra.mrb[0].mxu0 %v317
      %v416 = vpop.f32.mrb[0].mxu0
      %v417 = vadd.f32 %v241, %v416
      %v418 = vpop.f32.mrb[0].mxu0
      %v419 = vpop.f32.mrb[0].mxu0
      %v420 = vadd.f32 %v241, %v419
      %v421 = vpop.f32.mrb[0].mxu0
      %422 = vdwg.mxu0
      %v423 = vmax.f32 %v361, 0.0
      %v424 = vmax.f32 %v364, 0.0
      %v425 = vmax.f32 %v369, 0.0
      %v426 = vmax.f32 %v372, 0.0
      %v427 = vmax.f32 %v377, 0.0
      %v428 = vmax.f32 %v380, 0.0
      %v429 = vmax.f32 %v385, 0.0
      %v430 = vmax.f32 %v388, 0.0
      %v431 = vmax.f32 %v393, 0.0
      %v432 = vmax.f32 %v396, 0.0
      %v433 = vmax.f32 %v401, 0.0
      %v434 = vmax.f32 %v404, 0.0
      %v435 = vmax.f32 %v409, 0.0
      %v436 = vmax.f32 %v412, 0.0
      %v437 = vmax.f32 %v417, 0.0
      %v438 = vmax.f32 %v420, 0.0
      %v439 = vpack.c.bf16 %v424, %v423
      %v440 = vpack.c.bf16 %v426, %v425
      %v441 = vpack.c.bf16 %v428, %v427
      %v442 = vpack.c.bf16 %v430, %v429
      %v443 = vpack.c.bf16 %v432, %v431
      %v444 = vpack.c.bf16 %v434, %v433
      %v445 = vpack.c.bf16 %v436, %v435
      %v446 = vpack.c.bf16 %v438, %v437
      %v455 = vunpack.c.l.b16 %v439
      %v456 = vunpack.c.h.b16 %v439
      %v457 = vunpack.c.l.b16 %v440
      %v458 = vunpack.c.h.b16 %v440
      %v459 = vunpack.c.l.b16 %v441
      %v460 = vunpack.c.h.b16 %v441
      %v461 = vunpack.c.l.b16 %v442
      %v462 = vunpack.c.h.b16 %v442
      %v463 = vunpack.c.l.b16 %v443
      %v464 = vunpack.c.h.b16 %v443
      %v465 = vunpack.c.l.b16 %v444
      %v466 = vunpack.c.h.b16 %v444
      %v467 = vunpack.c.l.b16 %v445
      %v468 = vunpack.c.h.b16 %v445
      %v469 = vunpack.c.l.b16 %v446
      %v470 = vunpack.c.h.b16 %v446
      %v471 = vpack.c.b16 %v455, %v455
      %v472 = vpack.c.b16 %v456, %v456
      %v473 = vpack.c.b16 %v457, %v457
      %v474 = vpack.c.b16 %v458, %v458
      %v475 = vpack.c.b16 %v459, %v459
      %v476 = vpack.c.b16 %v460, %v460
      %v477 = vpack.c.b16 %v461, %v461
      %v478 = vpack.c.b16 %v462, %v462
      %v479 = vpack.c.b16 %v463, %v463
      %v480 = vpack.c.b16 %v464, %v464
      %v481 = vpack.c.b16 %v465, %v465
      %v482 = vpack.c.b16 %v466, %v466
      %v483 = vpack.c.b16 %v467, %v467
      %v484 = vpack.c.b16 %v468, %v468
      %v485 = vpack.c.b16 %v469, %v469
      %v486 = vpack.c.b16 %v470, %v470
      %vm503 = vcmask 519168
      %504 = vst.msk [vmem:[%s213] sm:$0xf] %vm503, %v471
      %505 = vst.msk [vmem:[%s213 + $0x4] sm:$0xf] %vm503, %v472
      %506 = vst.msk [vmem:[%s213 + $0x8] sm:$0xf] %vm503, %v473
      %507 = vst.msk [vmem:[%s213 + $0xc] sm:$0xf] %vm503, %v474
      %508 = vst.msk [vmem:[%s213 + $0x10] sm:$0xf] %vm503, %v475
      %509 = vst.msk [vmem:[%s213 + $0x14] sm:$0xf] %vm503, %v476
      %510 = vst.msk [vmem:[%s213 + $0x18] sm:$0xf] %vm503, %v477
      %511 = vst.msk [vmem:[%s213 + $0x1c] sm:$0xf] %vm503, %v478
      %512 = vst.msk [vmem:[%s213 + $0x20] sm:$0xf] %vm503, %v479
      %513 = vst.msk [vmem:[%s213 + $0x24] sm:$0xf] %vm503, %v480
      %514 = vst.msk [vmem:[%s213 + $0x28] sm:$0xf] %vm503, %v481
      %515 = vst.msk [vmem:[%s213 + $0x2c] sm:$0xf] %vm503, %v482
      %516 = vst.msk [vmem:[%s213 + $0x30] sm:$0xf] %vm503, %v483
      %517 = vst.msk [vmem:[%s213 + $0x34] sm:$0xf] %vm503, %v484
      %518 = vst.msk [vmem:[%s213 + $0x38] sm:$0xf] %vm503, %v485
      %519 = vst.msk [vmem:[%s213 + $0x3c] sm:$0xf] %vm503, %v486
      %s520 = smul.u32 8, %s19
      %p521 = scmp.lt.s32.totalorder %s18, 1
      %s522 = scalar_select %p521, %s18, 1
      %p523 = scmp.lt.s32.totalorder %s520, 15
      %s524 = scalar_select %p523, %s520, 15
      %s525 = smul.addr %s524, 2
      %s526 = smul.addr %s522, 32
      %s527 = sadd.s32 %s525, %s526
      %s528 = smul.addr %s527, 4
      %s529 = scalar_lea.vmem %s3, %s528
      // Predicated region
      $region33: #{correspondence_generation_forward.5} parent=31 // pred_check
        %p530 = pneg %p116
      $region34: #{correspondence_generation_forward.5} parent=31 // pred_check_branch
        %532 = sbr.rel (%p530) target = $region36
      $region35: #{correspondence_generation_forward.5} parent=31 // pred_region
        %s533 = smul.u32 8, %s19
      $region36: #{correspondence_generation_forward.5} parent=31 // pred_fallthru
        _
    $region32: #{correspondence_generation_forward.5} parent=5 // pred_fallthru
      _
    %p534 = scmp.le.s32.totalorder 2, %s9
    // Predicated region
    $region37: #{correspondence_generation_forward.5} parent=5 // pred_check
      %p535 = pneg %p534
    $region38: #{correspondence_generation_forward.5} parent=5 // pred_check_branch
      %537 = sbr.rel (%p535) target = $region40
    $region39: #{correspondence_generation_forward.5} parent=5 // pred_region
      %s538 = ssub.s32 %s9, 2
      // Predicated region
      $region41: #{correspondence_generation_forward.5} parent=39 // pred_check
        %p539 = pneg %p122
      $region42: #{correspondence_generation_forward.5} parent=39 // pred_check_branch
        %541 = sbr.rel (%p539) target = $region44
      $region43: #{correspondence_generation_forward.5} parent=39 // pred_region
        %s542 = smul.u32 8, %s21
        %p543 = scmp.lt.s32.totalorder %s20, 1
        %s544 = scalar_select %p543, %s20, 1
        %p545 = scmp.lt.s32.totalorder %s542, 15
        %s546 = scalar_select %p545, %s542, 15
        %s547 = smul.addr %s546, 2
        %s548 = smul.addr %s544, 32
        %s549 = sadd.s32 %s547, %s548
        %s550 = smul.addr %s549, 4
        %s551 = scalar_lea.vmem %s3, %s550
      $region44: #{correspondence_generation_forward.5} parent=39 // pred_fallthru
        _
    $region40: #{correspondence_generation_forward.5} parent=5 // pred_fallthru
      _
  $region6: #{correspondence_generation_forward.5} parent=0 // loop_footer
    %s13 = sadd.s32 1, %s9
  $region7: #{correspondence_generation_forward.5} parent=0 // loop_footer_branch
    %8 = sbr.rel target = $region3
  $region8: #{correspondence_generation_forward.5} parent=0 // loop_exit
    _

// kernel: correspondence_generation_forward.8
$region0: #{correspondence_generation_forward.8}
  #allocation0 [shape = 'u32[]', space=smem, size = 0x4, offset = 0x4, fixed_abs, tag = 'smem constant byte address 0x4 - core index']
  #allocation1 [shape = 'u32[144,128]{1,0:T(1,128)}', space=vmem, size = 0x12000, scoped, tag = 'internal scratch']
  #allocation2 [shape = 'f32[64,128]{1,0:T(8,128)}', space=vmem, size = 0x8000, scoped, tag = 'scratch operand']
  %s0 = inlined_call_operand.vmem [shape: bf16[2,10,10,128], index: 0, kind: input, shape index: {}]
  %s1 = inlined_call_operand.vmem [shape: bf16[3,384,128], index: 1, kind: input, shape index: {}]
  %s2 = inlined_call_operand.vmem [shape: f32[1,128], index: 2, kind: input, shape index: {}]
  %s3 = inlined_call_operand.vmem [shape: bf16[2,4,4,128], index: 3, kind: output, shape index: {}]
  %s4 = sld [smem:[#allocation0]]
  $region45: #{correspondence_generation_forward.8} parent=0
    _
  %s6 = ssub.s32 1, %s4
  %s7 = scalar_select 0, %s6, %s4
  loop: start=0, step=1, limit=4
  $region2: #{correspondence_generation_forward.8} parent=0 // loop_pre_header
    _
  $region3: #{correspondence_generation_forward.8} parent=0 // loop_header
    %s9 = sphi 0, %s13
    %p10 = scmp.ge.s32.totalorder %s9, 4
    %s16 = sphi 0, %s28
    %s17 = sphi 0, %s24
    %s18 = sphi 0, %s16
    %s19 = sphi 0, %s17
    %s20 = sphi 0, %s18
    %s21 = sphi 0, %s19
    %s33 = sphi 0, %s35
    %s36 = sphi 0, %s33
    %s37 = sphi 0, %s36
    %s53 = sphi 0, %s37
    %s57 = sphi 0, %s57
    %s59 = sphi 0, %s57
    %s60 = sphi 0, %s59
    %s74 = sphi 0, %s60
    %s78 = sphi 0, %s78
    %s80 = sphi 0, %s78
    %s81 = sphi 0, %s80
    %s95 = sphi 0, %s81
    %s103 = sphi 0, %s105
    %s106 = sphi 0, %s103
    %s107 = sphi 0, %s106
    %s123 = sphi 0, %s107
  $region4: #{correspondence_generation_forward.8} parent=0 // loop_header_branch
    %12 = sbr.rel (%p10) target = $region8
  $region5: #{correspondence_generation_forward.8} parent=0 // loop_body
    %s14 = ssub.s32 %s9, 1
    %s15 = ssub.s32 %s9, 2
    %s22 = sadd.s32 1, %s17
    %p23 = scmp.ge.s32.totalorder %s22, 1
    %s24 = scalar_select %p23, 0, %s22
    %s25 = sadd.s32 1, %s16
    %s26 = scalar_select %p23, %s25, %s16
    %p27 = scmp.ge.s32.totalorder %s26, 2
    %s28 = scalar_select %p27, 0, %s26
    %s29 = sadd.s32 %s16, %s17
    %s30 = sadd.s32 %s28, %s24
    %s31 = ssub.s32 %s29, %s30
    %p32 = scmp.eq.s32.totalorder %s31, 0
    %s34 = sadd.s32 %s33, 1
    %s35 = scalar_select %p32, %s33, %s34
    %p38 = pneg %p32
    %p39 = scmp.eq.s32.totalorder %s9, 1
    %p40 = por %p38, %p39
    %p41 = scmp.ne.s32.totalorder %s33, %s36
    %p42 = scmp.eq.s32.totalorder %s9, 0
    %p43 = por %p41, %p42
    %p44 = scmp.ne.s32.totalorder %s33, %s36
    %p45 = scmp.eq.s32.totalorder %s14, 1
    %p46 = por %p44, %p45
    %p47 = scmp.ne.s32.totalorder %s36, %s37
    %p48 = scmp.eq.s32.totalorder %s14, 0
    %p49 = por %p47, %p48
    %p50 = scmp.ne.s32.totalorder %s36, %s37
    %p51 = scmp.eq.s32.totalorder %s15, 1
    %p52 = por %p50, %p51
    %p54 = scmp.ne.s32.totalorder %s37, %s53
    %p55 = scmp.eq.s32.totalorder %s15, 0
    %p56 = por %p54, %p55
    %s58 = sadd.s32 %s57, 1
    %p61 = scmp.eq.s32.totalorder %s9, 1
    %p62 = scmp.ne.s32.totalorder %s57, %s59
    %p63 = scmp.eq.s32.totalorder %s9, 0
    %p64 = por %p62, %p63
    %p65 = scmp.ne.s32.totalorder %s57, %s59
    %p66 = scmp.eq.s32.totalorder %s14, 1
    %p67 = por %p65, %p66
    %p68 = scmp.ne.s32.totalorder %s59, %s60
    %p69 = scmp.eq.s32.totalorder %s14, 0
    %p70 = por %p68, %p69
    %p71 = scmp.ne.s32.totalorder %s59, %s60
    %p72 = scmp.eq.s32.totalorder %s15, 1
    %p73 = por %p71, %p72
    %p75 = scmp.ne.s32.totalorder %s60, %s74
    %p76 = scmp.eq.s32.totalorder %s15, 0
    %p77 = por %p75, %p76
    %s79 = sadd.s32 %s78, 1
    %p82 = scmp.eq.s32.totalorder %s9, 1
    %p83 = scmp.ne.s32.totalorder %s78, %s80
    %p84 = scmp.eq.s32.totalorder %s9, 0
    %p85 = por %p83, %p84
    %p86 = scmp.ne.s32.totalorder %s78, %s80
    %p87 = scmp.eq.s32.totalorder %s14, 1
    %p88 = por %p86, %p87
    %p89 = scmp.ne.s32.totalorder %s80, %s81
    %p90 = scmp.eq.s32.totalorder %s14, 0
    %p91 = por %p89, %p90
    %p92 = scmp.ne.s32.totalorder %s80, %s81
    %p93 = scmp.eq.s32.totalorder %s15, 1
    %p94 = por %p92, %p93
    %p96 = scmp.ne.s32.totalorder %s81, %s95
    %p97 = scmp.eq.s32.totalorder %s15, 0
    %p98 = por %p96, %p97
    %s99 = ssub.s32 %s16, %s28
    %s100 = ssub.s32 %s17, %s24
    %s101 = sor.u32 %s99, %s100
    %p102 = scmp.eq.s32.totalorder %s101, 0
    %s104 = sadd.s32 %s103, 1
    %s105 = scalar_select %p102, %s103, %s104
    %p108 = pneg %p102
    %p109 = scmp.eq.s32.totalorder %s9, 1
    %p110 = por %p108, %p109
    %p111 = scmp.ne.s32.totalorder %s103, %s106
    %p112 = scmp.eq.s32.totalorder %s9, 0
    %p113 = por %p111, %p112
    %p114 = scmp.ne.s32.totalorder %s103, %s106
    %p115 = scmp.eq.s32.totalorder %s14, 1
    %p116 = por %p114, %p115
    %p117 = scmp.ne.s32.totalorder %s106, %s107
    %p118 = scmp.eq.s32.totalorder %s14, 0
    %p119 = por %p117, %p118
    %p120 = scmp.ne.s32.totalorder %s106, %s107
    %p121 = scmp.eq.s32.totalorder %s15, 1
    %p122 = por %p120, %p121
    %p124 = scmp.ne.s32.totalorder %s107, %s123
    %p125 = scmp.eq.s32.totalorder %s15, 0
    %p126 = por %p124, %p125
    %p127 = scmp.le.s32.totalorder 1, %s9
    %p128 = scmp.lt.s32.totalorder %s9, 3
    %p129 = pnand %p127, %p128
    %p130 = pneg %p129
    // Predicated region
    $region9: #{correspondence_generation_forward.8} parent=5 // pred_check
      _
    $region10: #{correspondence_generation_forward.8} parent=5 // pred_check_branch
      %132 = sbr.rel (%p129) target = $region12
    $region11: #{correspondence_generation_forward.8} parent=5 // pred_region
      %s133 = ssub.s32 %s9, 1
      // Predicated region
      $region13: #{correspondence_generation_forward.8} parent=11 // pred_check
        %p134 = pneg %p70
      $region14: #{correspondence_generation_forward.8} parent=11 // pred_check_branch
        %136 = sbr.rel (%p134) target = $region16
      $region15: #{correspondence_generation_forward.8} parent=11 // pred_region
        _
      $region16: #{correspondence_generation_forward.8} parent=11 // pred_fallthru
        _
      // Predicated region
      $region17: #{correspondence_generation_forward.8} parent=11 // pred_check
        %p137 = pneg %p91
      $region18: #{correspondence_generation_forward.8} parent=11 // pred_check_branch
        %139 = sbr.rel (%p137) target = $region20
      $region19: #{correspondence_generation_forward.8} parent=11 // pred_region
        _
      $region20: #{correspondence_generation_forward.8} parent=11 // pred_fallthru
        _
    $region12: #{correspondence_generation_forward.8} parent=5 // pred_fallthru
      _
    %p140 = scmp.lt.s32.totalorder %s9, 2
    // Predicated region
    $region21: #{correspondence_generation_forward.8} parent=5 // pred_check
      %p141 = pneg %p140
    $region22: #{correspondence_generation_forward.8} parent=5 // pred_check_branch
      %143 = sbr.rel (%p141) target = $region24
    $region23: #{correspondence_generation_forward.8} parent=5 // pred_region
      // Predicated region
      $region25: #{correspondence_generation_forward.8} parent=23 // pred_check
        %p144 = pneg %p43
      $region26: #{correspondence_generation_forward.8} parent=23 // pred_check_branch
        %146 = sbr.rel (%p144) target = $region28
      $region27: #{correspondence_generation_forward.8} parent=23 // pred_region
        %s147 = sadd.s32 %s16, %s17
        %p148 = scmp.lt.s32.totalorder %s147, 1
        %s149 = scalar_select %p148, %s147, 1
        %s150 = smul.addr %s149, 20
        %s151 = smul.addr %s150, 4
        %s152 = scalar_lea.vmem %s0, %s151
        %s153 = sadd.s32 %s16, %s17
      $region28: #{correspondence_generation_forward.8} parent=23 // pred_fallthru
        _
    $region24: #{correspondence_generation_forward.8} parent=5 // pred_fallthru
      _
    %p154 = scmp.le.s32.totalorder 1, %s9
    %p155 = scmp.lt.s32.totalorder %s9, 3
    %p156 = pnand %p154, %p155
    %p157 = pneg %p156
    // Predicated region
    $region29: #{correspondence_generation_forward.8} parent=5 // pred_check
      _
    $region30: #{correspondence_generation_forward.8} parent=5 // pred_check_branch
      %159 = sbr.rel (%p156) target = $region32
    $region31: #{correspondence_generation_forward.8} parent=5 // pred_region
      %s160 = ssub.s32 %s9, 1
      %s161 = sadd.s32 %s18, %s19
      %p162 = scmp.lt.s32.totalorder %s161, 1
      %s163 = scalar_select %p162, %s161, 1
      %s164 = smul.addr %s163, 20
      %s165 = smul.addr %s164, 4
      %s166 = scalar_lea.vmem %s0, %s165
      %p167 = pneg %p49
      %p168 = pneg %p46
      %p169 = pneg %p70
      %p170 = pneg %p67
      %p171 = pneg %p91
      %p172 = pneg %p88
      %p173 = pneg %p119
      %p174 = pneg %p116
      %s175 = smul.u32 4, %s19
      %p176 = scmp.lt.s32.totalorder %s18, 1
      %s177 = scalar_select %p176, %s18, 1
      %p178 = scmp.lt.s32.totalorder %s175, 3
      %s179 = scalar_select %p178, %s175, 3
      %s180 = smul.addr %s177, 4
      %s181 = sadd.s32 %s179, %s180
      %s182 = smul.addr %s181, 2
      %s183 = scalar_lea.vmem %s3, %s182
      %s184 = sadd.s32 %s18, %s19
      %p185 = scmp.lt.s32.totalorder %s184, 1
      %s186 = scalar_select %p185, %s184, 1
      %s187 = smul.addr %s186, 20
      %s188 = smul.addr %s187, 4
      %s189 = scalar_lea.vmem %s0, %s188
      %s190 = sadd.s32 %s18, %s19
      %s191 = smul.u32 4, %s19
      %p192 = scmp.lt.s32.totalorder %s18, 1
      %s193 = scalar_select %p192, %s18, 1
      %p194 = scmp.lt.s32.totalorder %s191, 3
      %s195 = scalar_select %p194, %s191, 3
      %s196 = smul.addr %s193, 4
      %s197 = sadd.s32 %s195, %s196
      %s198 = smul.addr %s197, 2
      %s199 = scalar_lea.vmem %s3, %s198
      %s200 = smul.u32 4, %s19
      %v202 = vld [vmem:[%s189] sm:$0xf]
      %v203 = vld [vmem:[%s189 + $0x8] sm:$0xf]
      %v204 = vld [vmem:[%s189 + $0x10] sm:$0xf]
      %v205 = vld [vmem:[%s189 + $0x18] sm:$0xf]
      %v206 = vld [vmem:[%s189 + $0x20] sm:$0xf]
      %v207 = vld [vmem:[%s189 + $0x28] sm:$0xf]
      %v208 = vld [vmem:[%s189 + $0x30] sm:$0xf]
      %v209 = vld [vmem:[%s189 + $0x38] sm:$0xf]
      %v210 = vld [vmem:[%s189 + $0x4] sm:$0x1]
      %v211 = vld [vmem:[%s189 + $0xc] sm:$0x1]
      %v212 = vld [vmem:[%s189 + $0x14] sm:$0x1]
      %v213 = vld [vmem:[%s189 + $0x1c] sm:$0x1]
      %v214 = vld [vmem:[%s189 + $0x24] sm:$0x1]
      %v215 = vld [vmem:[%s189 + $0x2c] sm:$0x1]
      %v216 = vld [vmem:[%s189 + $0x34] sm:$0x1]
      %v217 = vld [vmem:[%s189 + $0x3c] sm:$0x1]
      %v218 = vld [vmem:[%s189] sm:$0xe]
      %v219 = vld [vmem:[%s189 + $0x8] sm:$0xe]
      %v220 = vld [vmem:[%s189 + $0x10] sm:$0xe]
      %v221 = vld [vmem:[%s189 + $0x18] sm:$0xe]
      %v222 = vld [vmem:[%s189 + $0x20] sm:$0xe]
      %v223 = vld [vmem:[%s189 + $0x28] sm:$0xe]
      %v224 = vld [vmem:[%s189 + $0x30] sm:$0xe]
      %v225 = vld [vmem:[%s189 + $0x38] sm:$0xe]
      %v242 = vunpack.c.l.b16 %v202
      %v243 = vunpack.c.l.b16 %v210
      %v244 = vunpack.c.l.b16 %v203
      %v245 = vunpack.c.l.b16 %v211
      %v246 = vunpack.c.l.b16 %v204
      %v247 = vunpack.c.l.b16 %v212
      %v248 = vunpack.c.l.b16 %v205
      %v249 = vunpack.c.l.b16 %v213
      %v250 = vunpack.c.l.b16 %v206
      %v251 = vunpack.c.l.b16 %v214
      %v252 = vunpack.c.l.b16 %v207
      %v253 = vunpack.c.l.b16 %v215
      %v254 = vunpack.c.l.b16 %v208
      %v255 = vunpack.c.l.b16 %v216
      %v256 = vunpack.c.l.b16 %v209
      %v257 = vunpack.c.l.b16 %v217
      %v258 = vpack.c.b16 %v243, %v242
      %v259 = vpack.c.b16 %v245, %v244
      %v260 = vpack.c.b16 %v247, %v246
      %v261 = vpack.c.b16 %v249, %v248
      %v262 = vpack.c.b16 %v251, %v250
      %v263 = vpack.c.b16 %v253, %v252
      %v264 = vpack.c.b16 %v255, %v254
      %v265 = vpack.c.b16 %v257, %v256
      %v267 = vshrl.u32 %v258, 16
      %v269 = vshll.u32 %v258, 16
      %v271 = vrot.slane %v269, 1
      %v272 = vor.u32 %v267, %v271
      %v274 = vshrl.u32 %v259, 16
      %v276 = vshll.u32 %v259, 16
      %v278 = vrot.slane %v276, 1
      %v279 = vor.u32 %v274, %v278
      %v281 = vshrl.u32 %v260, 16
      %v283 = vshll.u32 %v260, 16
      %v285 = vrot.slane %v283, 1
      %v286 = vor.u32 %v281, %v285
      %v288 = vshrl.u32 %v261, 16
      %v290 = vshll.u32 %v261, 16
      %v292 = vrot.slane %v290, 1
      %v293 = vor.u32 %v288, %v292
      %v295 = vshrl.u32 %v262, 16
      %v297 = vshll.u32 %v262, 16
      %v299 = vrot.slane %v297, 1
      %v300 = vor.u32 %v295, %v299
      %v302 = vshrl.u32 %v263, 16
      %v304 = vshll.u32 %v263, 16
      %v306 = vrot.slane %v304, 1
      %v307 = vor.u32 %v302, %v306
      %v309 = vshrl.u32 %v264, 16
      %v311 = vshll.u32 %v264, 16
      %v313 = vrot.slane %v311, 1
      %v314 = vor.u32 %v309, %v313
      %v316 = vshrl.u32 %v265, 16
      %v318 = vshll.u32 %v265, 16
      %v320 = vrot.slane %v318, 1
      %v321 = vor.u32 %v316, %v320
      %v330 = vunpack.c.l.b16 %v218
      %v331 = vunpack.c.l.b16 %v219
      %v332 = vunpack.c.l.b16 %v220
      %v333 = vunpack.c.l.b16 %v221
      %v334 = vunpack.c.l.b16 %v222
      %v335 = vunpack.c.l.b16 %v223
      %v336 = vunpack.c.l.b16 %v224
      %v337 = vunpack.c.l.b16 %v225
      %v338 = vpack.c.b16 %v243, %v330
      %v339 = vpack.c.b16 %v245, %v331
      %v340 = vpack.c.b16 %v247, %v332
      %v341 = vpack.c.b16 %v249, %v333
      %v342 = vpack.c.b16 %v251, %v334
      %v343 = vpack.c.b16 %v253, %v335
      %v344 = vpack.c.b16 %v255, %v336
      %v345 = vpack.c.b16 %v257, %v337
      %v346 = vrot.slane %v338, 1
      %v347 = vrot.slane %v339, 1
      %v348 = vrot.slane %v340, 1
      %v349 = vrot.slane %v341, 1
      %v350 = vrot.slane %v342, 1
      %v351 = vrot.slane %v343, 1
      %v352 = vrot.slane %v344, 1
      %v353 = vrot.slane %v345, 1
      %v354 = vunpack.c.l.b16 %v272
      %v355 = vunpack.c.l.b16 %v346
      %v356 = vunpack.c.l.b16 %v279
      %v357 = vunpack.c.l.b16 %v347
      %v358 = vunpack.c.l.b16 %v286
      %v359 = vunpack.c.l.b16 %v348
      %v360 = vunpack.c.l.b16 %v293
      %v361 = vunpack.c.l.b16 %v349
      %v362 = vunpack.c.l.b16 %v300
      %v363 = vunpack.c.l.b16 %v350
      %v364 = vunpack.c.l.b16 %v307
      %v365 = vunpack.c.l.b16 %v351
      %v366 = vunpack.c.l.b16 %v314
      %v367 = vunpack.c.l.b16 %v352
      %v368 = vunpack.c.l.b16 %v321
      %v369 = vunpack.c.l.b16 %v353
      %v370 = vld [vmem:[%s1] sm:$0xf]
      %v371 = vld [vmem:[%s1 + $0x4] sm:$0xf]
      %v372 = vld [vmem:[%s1 + $0x8] sm:$0xf]
      %v373 = vld [vmem:[%s1 + $0xc] sm:$0xf]
      %v374 = vld [vmem:[%s1 + $0x10] sm:$0xf]
      %v375 = vld [vmem:[%s1 + $0x14] sm:$0xf]
      %v376 = vld [vmem:[%s1 + $0x18] sm:$0xf]
      %v377 = vld [vmem:[%s1 + $0x1c] sm:$0xf]
      %v378 = vld [vmem:[%s1 + $0x20] sm:$0xf]
      %v379 = vld [vmem:[%s1 + $0x24] sm:$0xf]
      %v380 = vld [vmem:[%s1 + $0x28] sm:$0xf]
      %v381 = vld [vmem:[%s1 + $0x2c] sm:$0xf]
      %v382 = vld [vmem:[%s1 + $0x30] sm:$0xf]
      %v383 = vld [vmem:[%s1 + $0x34] sm:$0xf]
      %v384 = vld [vmem:[%s1 + $0x38] sm:$0xf]
      %v385 = vld [vmem:[%s1 + $0x3c] sm:$0xf]
      %v386 = vld [vmem:[%s1 + $0x40] sm:$0xf]
      %v387 = vld [vmem:[%s1 + $0x44] sm:$0xf]
      %v388 = vld [vmem:[%s1 + $0x48] sm:$0xf]
      %v389 = vld [vmem:[%s1 + $0x4c] sm:$0xf]
      %v390 = vld [vmem:[%s1 + $0x50] sm:$0xf]
      %v391 = vld [vmem:[%s1 + $0x54] sm:$0xf]
      %v392 = vld [vmem:[%s1 + $0x58] sm:$0xf]
      %v393 = vld [vmem:[%s1 + $0x5c] sm:$0xf]
      %v394 = vld [vmem:[%s1 + $0x60] sm:$0xf]
      %v395 = vld [vmem:[%s1 + $0x64] sm:$0xf]
      %v396 = vld [vmem:[%s1 + $0x68] sm:$0xf]
      %v397 = vld [vmem:[%s1 + $0x6c] sm:$0xf]
      %v398 = vld [vmem:[%s1 + $0x70] sm:$0xf]
      %v399 = vld [vmem:[%s1 + $0x74] sm:$0xf]
      %v400 = vld [vmem:[%s1 + $0x78] sm:$0xf]
      %v401 = vld [vmem:[%s1 + $0x7c] sm:$0xf]
      %v402 = vld [vmem:[%s1 + $0x80] sm:$0xf]
      %v403 = vld [vmem:[%s1 + $0x84] sm:$0xf]
      %v404 = vld [vmem:[%s1 + $0x88] sm:$0xf]
      %v405 = vld [vmem:[%s1 + $0x8c] sm:$0xf]
      %v406 = vld [vmem:[%s1 + $0x90] sm:$0xf]
      %v407 = vld [vmem:[%s1 + $0x94] sm:$0xf]
      %v408 = vld [vmem:[%s1 + $0x98] sm:$0xf]
      %v409 = vld [vmem:[%s1 + $0x9c] sm:$0xf]
      %v410 = vld [vmem:[%s1 + $0xa0] sm:$0xf]
      %v411 = vld [vmem:[%s1 + $0xa4] sm:$0xf]
      %v412 = vld [vmem:[%s1 + $0xa8] sm:$0xf]
      %v413 = vld [vmem:[%s1 + $0xac] sm:$0xf]
      %v414 = vld [vmem:[%s1 + $0xb0] sm:$0xf]
      %v415 = vld [vmem:[%s1 + $0xb4] sm:$0xf]
      %v416 = vld [vmem:[%s1 + $0xb8] sm:$0xf]
      %v417 = vld [vmem:[%s1 + $0xbc] sm:$0xf]
      %v418 = vpack.c.b16 %v244, %v242
      %v419 = vpack.c.b16 %v356, %v354
      %v420 = vpack.c.b16 %v357, %v355
      %v421 = vpack.c.b16 %v248, %v246
      %v422 = vpack.c.b16 %v360, %v358
      %v423 = vpack.c.b16 %v361, %v359
      %v424 = vpack.c.b16 %v252, %v250
      %v425 = vpack.c.b16 %v364, %v362
      %v426 = vpack.c.b16 %v365, %v363
      %v427 = vpack.c.b16 %v256, %v254
      %v428 = vpack.c.b16 %v368, %v366
      %v429 = vpack.c.b16 %v369, %v367
      %v490 = vunpack.c.l.b16 %v370
      %v491 = vunpack.c.l.b16 %v371
      %v492 = vunpack.c.l.b16 %v372
      %v493 = vunpack.c.l.b16 %v373
      %v494 = vunpack.c.l.b16 %v374
      %v495 = vunpack.c.l.b16 %v375
      %v496 = vunpack.c.l.b16 %v376
      %v497 = vunpack.c.l.b16 %v377
      %v498 = vunpack.c.l.b16 %v378
      %v499 = vunpack.c.l.b16 %v379
      %v500 = vunpack.c.l.b16 %v380
      %v501 = vunpack.c.l.b16 %v381
      %v502 = vunpack.c.l.b16 %v382
      %v503 = vunpack.c.l.b16 %v383
      %v504 = vunpack.c.l.b16 %v384
      %v505 = vunpack.c.l.b16 %v385
      %v506 = vunpack.c.l.b16 %v386
      %v507 = vunpack.c.l.b16 %v387
      %v508 = vunpack.c.l.b16 %v388
      %v509 = vunpack.c.l.b16 %v389
      %v510 = vunpack.c.l.b16 %v390
      %v511 = vunpack.c.l.b16 %v391
      %v512 = vunpack.c.l.b16 %v392
      %v513 = vunpack.c.l.b16 %v393
      %v514 = vunpack.c.l.b16 %v394
      %v515 = vunpack.c.l.b16 %v395
      %v516 = vunpack.c.l.b16 %v396
      %v517 = vunpack.c.l.b16 %v397
      %v518 = vunpack.c.l.b16 %v398
      %v519 = vunpack.c.l.b16 %v399
      %v520 = vunpack.c.l.b16 %v400
      %v521 = vunpack.c.l.b16 %v401
      %v522 = vunpack.c.l.b16 %v402
      %v523 = vunpack.c.l.b16 %v403
      %v524 = vunpack.c.l.b16 %v404
      %v525 = vunpack.c.l.b16 %v405
      %v526 = vunpack.c.l.b16 %v406
      %v527 = vunpack.c.l.b16 %v407
      %v528 = vunpack.c.l.b16 %v408
      %v529 = vunpack.c.l.b16 %v409
      %v530 = vunpack.c.l.b16 %v410
      %v531 = vunpack.c.l.b16 %v411
      %v532 = vunpack.c.l.b16 %v412
      %v533 = vunpack.c.l.b16 %v413
      %v534 = vunpack.c.l.b16 %v414
      %v535 = vunpack.c.l.b16 %v415
      %v536 = vunpack.c.l.b16 %v416
      %v537 = vunpack.c.l.b16 %v417
      %v538 = vpack.c.b16 %v491, %v490
      %v539 = vpack.c.b16 %v493, %v492
      %v540 = vpack.c.b16 %v495, %v494
      %v541 = vpack.c.b16 %v497, %v496
      %v542 = vpack.c.b16 %v499, %v498
      %v543 = vpack.c.b16 %v501, %v500
      %v544 = vpack.c.b16 %v503, %v502
      %v545 = vpack.c.b16 %v505, %v504
      %v546 = vpack.c.b16 %v507, %v506
      %v547 = vpack.c.b16 %v509, %v508
      %v548 = vpack.c.b16 %v511, %v510
      %v549 = vpack.c.b16 %v513, %v512
      %v550 = vpack.c.b16 %v515, %v514
      %v551 = vpack.c.b16 %v517, %v516
      %v552 = vpack.c.b16 %v519, %v518
      %v553 = vpack.c.b16 %v521, %v520
      %v554 = vpack.c.b16 %v523, %v522
      %v555 = vpack.c.b16 %v525, %v524
      %v556 = vpack.c.b16 %v527, %v526
      %v557 = vpack.c.b16 %v529, %v528
      %v558 = vpack.c.b16 %v531, %v530
      %v559 = vpack.c.b16 %v533, %v532
      %v560 = vpack.c.b16 %v535, %v534
      %v561 = vpack.c.b16 %v537, %v536
      %586 = vmatprep.subr.bf16.mxu0 0
      %587 = vmatpush1.bf16.msra.mxu0 %v538
      %588 = vmatprep.subr.bf16.mxu0 0
      %589 = vmatpush1.bf16.msra.mxu0 %v539
      %590 = vmatprep.subr.bf16.mxu0 0
      %591 = vmatpush1.bf16.msra.mxu0 %v540
      %592 = vmatprep.subr.bf16.mxu0 0
      %593 = vmatpush1.bf16.msra.mxu0 %v541
      %594 = vmatprep.subr.bf16.mxu0 0
      %595 = vmatpush1.bf16.msra.mxu0 %v542
      %596 = vmatprep.subr.bf16.mxu0 0
      %597 = vmatpush1.bf16.msra.mxu0 %v543
      %598 = vmatprep.subr.bf16.mxu0 0
      %599 = vmatpush1.bf16.msra.mxu0 %v544
      %600 = vmatprep.subr.bf16.mxu0 0
      %601 = vmatpush1.bf16.msra.mxu0 %v545
      %602 = vmatprep.subr.bf16.mxu0 0
      %603 = vmatpush1.bf16.msra.mxu0 %v546
      %604 = vmatprep.subr.bf16.mxu0 0
      %605 = vmatpush1.bf16.msra.mxu0 %v547
      %606 = vmatprep.subr.bf16.mxu0 0
      %607 = vmatpush1.bf16.msra.mxu0 %v548
      %608 = vmatprep.subr.bf16.mxu0 0
      %609 = vmatpush1.bf16.msra.mxu0 %v549
      %610 = vmatprep.subr.bf16.mxu0 0
      %611 = vmatpush1.bf16.msra.mxu0 %v550
      %612 = vmatprep.subr.bf16.mxu0 0
      %613 = vmatpush1.bf16.msra.mxu0 %v551
      %614 = vmatprep.subr.bf16.mxu0 0
      %615 = vmatpush1.bf16.msra.mxu0 %v552
      %616 = vmatprep.subr.bf16.mxu0 0
      %617 = vmatpush1.bf16.msra.mxu0 %v553
      %618 = vmatprep.mubr.bf16.mxu0 %v419
      %619 = vmatmul.mubr.bf16.gmra.mrb[0].mxu0 %v418
      %v620 = vpop.f32.mrb[0].mxu0
      %v621 = vadd.f32 0.0, %v620
      %v622 = vpop.f32.mrb[0].mxu0
      %v623 = vpop.f32.mrb[0].mxu0
      %v624 = vadd.f32 0.0, %v623
      %v625 = vpop.f32.mrb[0].mxu0
      %626 = vmatprep.mubr.bf16.mxu0 %v422
      %627 = vmatmul.mubr.bf16.gmra.mrb[0].mxu0 %v421
      %v628 = vpop.f32.mrb[0].mxu0
      %v629 = vadd.f32 0.0, %v628
      %v630 = vpop.f32.mrb[0].mxu0
      %v631 = vpop.f32.mrb[0].mxu0
      %v632 = vadd.f32 0.0, %v631
      %v633 = vpop.f32.mrb[0].mxu0
      %634 = vmatprep.mubr.bf16.mxu0 %v425
      %635 = vmatmul.mubr.bf16.gmra.mrb[0].mxu0 %v424
      %v636 = vpop.f32.mrb[0].mxu0
      %v637 = vadd.f32 0.0, %v636
      %v638 = vpop.f32.mrb[0].mxu0
      %v639 = vpop.f32.mrb[0].mxu0
      %v640 = vadd.f32 0.0, %v639
      %v641 = vpop.f32.mrb[0].mxu0
      %642 = vmatprep.mubr.bf16.mxu0 %v428
      %643 = vmatmul.mubr.bf16.gmra.mrb[0].mxu0 %v427
      %v644 = vpop.f32.mrb[0].mxu0
      %v645 = vadd.f32 0.0, %v644
      %v646 = vpop.f32.mrb[0].mxu0
      %v647 = vpop.f32.mrb[0].mxu0
      %v648 = vadd.f32 0.0, %v647
      %v649 = vpop.f32.mrb[0].mxu0
      %650 = vdwg.mxu0
      %651 = vmatprep.subr.bf16.mxu0 0
      %652 = vmatpush1.bf16.msra.mxu0 %v554
      %653 = vmatprep.subr.bf16.mxu0 0
      %654 = vmatpush1.bf16.msra.mxu0 %v555
      %655 = vmatprep.subr.bf16.mxu0 0
      %656 = vmatpush1.bf16.msra.mxu0 %v556
      %657 = vmatprep.subr.bf16.mxu0 0
      %658 = vmatpush1.bf16.msra.mxu0 %v557
      %659 = vmatprep.subr.bf16.mxu0 0
      %660 = vmatpush1.bf16.msra.mxu0 %v558
      %661 = vmatprep.subr.bf16.mxu0 0
      %662 = vmatpush1.bf16.msra.mxu0 %v559
      %663 = vmatprep.subr.bf16.mxu0 0
      %664 = vmatpush1.bf16.msra.mxu0 %v560
      %665 = vmatprep.subr.bf16.mxu0 0
      %666 = vmatpush1.bf16.msra.mxu0 %v561
      %667 = vmatprep.subr.bf16.mxu0 0
      %668 = vmatpush1.bf16.msra.mxu0 0
      %669 = vmatprep.subr.bf16.mxu0 0
      %670 = vmatpush1.bf16.msra.mxu0 0
      %671 = vmatprep.subr.bf16.mxu0 0
      %672 = vmatpush1.bf16.msra.mxu0 0
      %673 = vmatprep.subr.bf16.mxu0 0
      %674 = vmatpush1.bf16.msra.mxu0 0
      %675 = vmatprep.subr.bf16.mxu0 0
      %676 = vmatpush1.bf16.msra.mxu0 0
      %677 = vmatprep.subr.bf16.mxu0 0
      %678 = vmatpush1.bf16.msra.mxu0 0
      %679 = vmatprep.subr.bf16.mxu0 0
      %680 = vmatpush1.bf16.msra.mxu0 0
      %681 = vmatprep.subr.bf16.mxu0 0
      %682 = vmatpush1.bf16.msra.mxu0 0
      %683 = vmatprep.mubr.bf16.mxu0 0
      %684 = vmatmul.mubr.bf16.gmra.mrb[0].mxu0 %v420
      %v685 = vpop.f32.mrb[0].mxu0
      %v686 = vadd.f32 %v621, %v685
      %v687 = vpop.f32.mrb[0].mxu0
      %v688 = vpop.f32.mrb[0].mxu0
      %v689 = vadd.f32 %v624, %v688
      %v690 = vpop.f32.mrb[0].mxu0
      %691 = vmatprep.mubr.bf16.mxu0 0
      %692 = vmatmul.mubr.bf16.gmra.mrb[0].mxu0 %v423
      %v693 = vpop.f32.mrb[0].mxu0
      %v694 = vadd.f32 %v629, %v693
      %v695 = vpop.f32.mrb[0].mxu0
      %v696 = vpop.f32.mrb[0].mxu0
      %v697 = vadd.f32 %v632, %v696
      %v698 = vpop.f32.mrb[0].mxu0
      %699 = vmatprep.mubr.bf16.mxu0 0
      %700 = vmatmul.mubr.bf16.gmra.mrb[0].mxu0 %v426
      %v701 = vpop.f32.mrb[0].mxu0
      %v702 = vadd.f32 %v637, %v701
      %v703 = vpop.f32.mrb[0].mxu0
      %v704 = vpop.f32.mrb[0].mxu0
      %v705 = vadd.f32 %v640, %v704
      %v706 = vpop.f32.mrb[0].mxu0
      %707 = vmatprep.mubr.bf16.mxu0 0
      %708 = vmatmul.mubr.bf16.gmra.mrb[0].mxu0 %v429
      %v709 = vpop.f32.mrb[0].mxu0
      %v710 = vadd.f32 %v645, %v709
      %v711 = vpop.f32.mrb[0].mxu0
      %v712 = vpop.f32.mrb[0].mxu0
      %v713 = vadd.f32 %v648, %v712
      %v714 = vpop.f32.mrb[0].mxu0
      %715 = vdwg.mxu0
      %716 = vst [vmem:[#allocation2] sm:$0xff] %v686
      %717 = vst [vmem:[#allocation2 + $0x8] sm:$0xff] %v689
      %718 = vst [vmem:[#allocation2 + $0x10] sm:$0xff] %v694
      %719 = vst [vmem:[#allocation2 + $0x18] sm:$0xff] %v697
      %720 = vst [vmem:[#allocation2 + $0x20] sm:$0xff] %v702
      %721 = vst [vmem:[#allocation2 + $0x28] sm:$0xff] %v705
      %722 = vst [vmem:[#allocation2 + $0x30] sm:$0xff] %v710
      %723 = vst [vmem:[#allocation2 + $0x38] sm:$0xff] %v713
      %s724 = scalar_lea.vmem %s189, 8
      %v725 = vld [vmem:[%s724] sm:$0xf]
      %v726 = vld [vmem:[%s724 + $0x8] sm:$0xf]
      %v727 = vld [vmem:[%s724 + $0x10] sm:$0xf]
      %v728 = vld [vmem:[%s724 + $0x18] sm:$0xf]
      %v729 = vld [vmem:[%s724 + $0x20] sm:$0xf]
      %v730 = vld [vmem:[%s724 + $0x28] sm:$0xf]
      %v731 = vld [vmem:[%s724 + $0x30] sm:$0xf]
      %v732 = vld [vmem:[%s724 + $0x38] sm:$0xf]
      %v733 = vld [vmem:[%s724 + $0x4] sm:$0x1]
      %v734 = vld [vmem:[%s724 + $0xc] sm:$0x1]
      %v735 = vld [vmem:[%s724 + $0x14] sm:$0x1]
      %v736 = vld [vmem:[%s724 + $0x1c] sm:$0x1]
      %v737 = vld [vmem:[%s724 + $0x24] sm:$0x1]
      %v738 = vld [vmem:[%s724 + $0x2c] sm:$0x1]
      %v739 = vld [vmem:[%s724 + $0x34] sm:$0x1]
      %v740 = vld [vmem:[%s724 + $0x3c] sm:$0x1]
      %v741 = vld [vmem:[%s724] sm:$0xe]
      %v742 = vld [vmem:[%s724 + $0x8] sm:$0xe]
      %v743 = vld [vmem:[%s724 + $0x10] sm:$0xe]
      %v744 = vld [vmem:[%s724 + $0x18] sm:$0xe]
      %v745 = vld [vmem:[%s724 + $0x20] sm:$0xe]
      %v746 = vld [vmem:[%s724 + $0x28] sm:$0xe]
      %v747 = vld [vmem:[%s724 + $0x30] sm:$0xe]
      %v748 = vld [vmem:[%s724 + $0x38] sm:$0xe]
      %v765 = vunpack.c.l.b16 %v725
      %v766 = vunpack.c.l.b16 %v733
      %v767 = vunpack.c.l.b16 %v726
      %v768 = vunpack.c.l.b16 %v734
      %v769 = vunpack.c.l.b16 %v727
      %v770 = vunpack.c.l.b16 %v735
      %v771 = vunpack.c.l.b16 %v728
      %v772 = vunpack.c.l.b16 %v736
      %v773 = vunpack.c.l.b16 %v729
      %v774 = vunpack.c.l.b16 %v737
      %v775 = vunpack.c.l.b16 %v730
      %v776 = vunpack.c.l.b16 %v738
      %v777 = vunpack.c.l.b16 %v731
      %v778 = vunpack.c.l.b16 %v739
      %v779 = vunpack.c.l.b16 %v732
      %v780 = vunpack.c.l.b16 %v740
      %v781 = vpack.c.b16 %v766, %v765
      %v782 = vpack.c.b16 %v768, %v767
      %v783 = vpack.c.b16 %v770, %v769
      %v784 = vpack.c.b16 %v772, %v771
      %v785 = vpack.c.b16 %v774, %v773
      %v786 = vpack.c.b16 %v776, %v775
      %v787 = vpack.c.b16 %v778, %v777
      %v788 = vpack.c.b16 %v780, %v779
      %v790 = vshrl.u32 %v781, 16
      %v792 = vshll.u32 %v781, 16
      %v794 = vrot.slane %v792, 1
      %v795 = vor.u32 %v790, %v794
      %v797 = vshrl.u32 %v782, 16
      %v799 = vshll.u32 %v782, 16
      %v801 = vrot.slane %v799, 1
      %v802 = vor.u32 %v797, %v801
      %v804 = vshrl.u32 %v783, 16
      %v806 = vshll.u32 %v783, 16
      %v808 = vrot.slane %v806, 1
      %v809 = vor.u32 %v804, %v808
      %v811 = vshrl.u32 %v784, 16
      %v813 = vshll.u32 %v784, 16
      %v815 = vrot.slane %v813, 1
      %v816 = vor.u32 %v811, %v815
      %v818 = vshrl.u32 %v785, 16
      %v820 = vshll.u32 %v785, 16
      %v822 = vrot.slane %v820, 1
      %v823 = vor.u32 %v818, %v822
      %v825 = vshrl.u32 %v786, 16
      %v827 = vshll.u32 %v786, 16
      %v829 = vrot.slane %v827, 1
      %v830 = vor.u32 %v825, %v829
      %v832 = vshrl.u32 %v787, 16
      %v834 = vshll.u32 %v787, 16
      %v836 = vrot.slane %v834, 1
      %v837 = vor.u32 %v832, %v836
      %v839 = vshrl.u32 %v788, 16
      %v841 = vshll.u32 %v788, 16
      %v843 = vrot.slane %v841, 1
      %v844 = vor.u32 %v839, %v843
      %v853 = vunpack.c.l.b16 %v741
      %v854 = vunpack.c.l.b16 %v742
      %v855 = vunpack.c.l.b16 %v743
      %v856 = vunpack.c.l.b16 %v744
      %v857 = vunpack.c.l.b16 %v745
      %v858 = vunpack.c.l.b16 %v746
      %v859 = vunpack.c.l.b16 %v747
      %v860 = vunpack.c.l.b16 %v748
      %v861 = vpack.c.b16 %v766, %v853
      %v862 = vpack.c.b16 %v768, %v854
      %v863 = vpack.c.b16 %v770, %v855
      %v864 = vpack.c.b16 %v772, %v856
      %v865 = vpack.c.b16 %v774, %v857
      %v866 = vpack.c.b16 %v776, %v858
      %v867 = vpack.c.b16 %v778, %v859
      %v868 = vpack.c.b16 %v780, %v860
      %v869 = vrot.slane %v861, 1
      %v870 = vrot.slane %v862, 1
      %v871 = vrot.slane %v863, 1
      %v872 = vrot.slane %v864, 1
      %v873 = vrot.slane %v865, 1
      %v874 = vrot.slane %v866, 1
      %v875 = vrot.slane %v867, 1
      %v876 = vrot.slane %v868, 1
      %v877 = vunpack.c.l.b16 %v795
      %v878 = vunpack.c.l.b16 %v869
      %v879 = vunpack.c.l.b16 %v802
      %v880 = vunpack.c.l.b16 %v870
      %v881 = vunpack.c.l.b16 %v809
      %v882 = vunpack.c.l.b16 %v871
      %v883 = vunpack.c.l.b16 %v816
      %v884 = vunpack.c.l.b16 %v872
      %v885 = vunpack.c.l.b16 %v823
      %v886 = vunpack.c.l.b16 %v873
      %v887 = vunpack.c.l.b16 %v830
      %v888 = vunpack.c.l.b16 %v874
      %v889 = vunpack.c.l.b16 %v837
      %v890 = vunpack.c.l.b16 %v875
      %v891 = vunpack.c.l.b16 %v844
      %v892 = vunpack.c.l.b16 %v876
      %s893 = scalar_lea.vmem %s1, 192
      %v894 = vld [vmem:[%s893] sm:$0xf]
      %v895 = vld [vmem:[%s893 + $0x4] sm:$0xf]
      %v896 = vld [vmem:[%s893 + $0x8] sm:$0xf]
      %v897 = vld [vmem:[%s893 + $0xc] sm:$0xf]
      %v898 = vld [vmem:[%s893 + $0x10] sm:$0xf]
      %v899 = vld [vmem:[%s893 + $0x14] sm:$0xf]
      %v900 = vld [vmem:[%s893 + $0x18] sm:$0xf]
      %v901 = vld [vmem:[%s893 + $0x1c] sm:$0xf]
      %v902 = vld [vmem:[%s893 + $0x20] sm:$0xf]
      %v903 = vld [vmem:[%s893 + $0x24] sm:$0xf]
      %v904 = vld [vmem:[%s893 + $0x28] sm:$0xf]
      %v905 = vld [vmem:[%s893 + $0x2c] sm:$0xf]
      %v906 = vld [vmem:[%s893 + $0x30] sm:$0xf]
      %v907 = vld [vmem:[%s893 + $0x34] sm:$0xf]
      %v908 = vld [vmem:[%s893 + $0x38] sm:$0xf]
      %v909 = vld [vmem:[%s893 + $0x3c] sm:$0xf]
      %v910 = vld [vmem:[%s893 + $0x40] sm:$0xf]
      %v911 = vld [vmem:[%s893 + $0x44] sm:$0xf]
      %v912 = vld [vmem:[%s893 + $0x48] sm:$0xf]
      %v913 = vld [vmem:[%s893 + $0x4c] sm:$0xf]
      %v914 = vld [vmem:[%s893 + $0x50] sm:$0xf]
      %v915 = vld [vmem:[%s893 + $0x54] sm:$0xf]
      %v916 = vld [vmem:[%s893 + $0x58] sm:$0xf]
      %v917 = vld [vmem:[%s893 + $0x5c] sm:$0xf]
      %v918 = vld [vmem:[%s893 + $0x60] sm:$0xf]
      %v919 = vld [vmem:[%s893 + $0x64] sm:$0xf]
      %v920 = vld [vmem:[%s893 + $0x68] sm:$0xf]
      %v921 = vld [vmem:[%s893 + $0x6c] sm:$0xf]
      %v922 = vld [vmem:[%s893 + $0x70] sm:$0xf]
      %v923 = vld [vmem:[%s893 + $0x74] sm:$0xf]
      %v924 = vld [vmem:[%s893 + $0x78] sm:$0xf]
      %v925 = vld [vmem:[%s893 + $0x7c] sm:$0xf]
      %v926 = vld [vmem:[%s893 + $0x80] sm:$0xf]
      %v927 = vld [vmem:[%s893 + $0x84] sm:$0xf]
      %v928 = vld [vmem:[%s893 + $0x88] sm:$0xf]
      %v929 = vld [vmem:[%s893 + $0x8c] sm:$0xf]
      %v930 = vld [vmem:[%s893 + $0x90] sm:$0xf]
      %v931 = vld [vmem:[%s893 + $0x94] sm:$0xf]
      %v932 = vld [vmem:[%s893 + $0x98] sm:$0xf]
      %v933 = vld [vmem:[%s893 + $0x9c] sm:$0xf]
      %v934 = vld [vmem:[%s893 + $0xa0] sm:$0xf]
      %v935 = vld [vmem:[%s893 + $0xa4] sm:$0xf]
      %v936 = vld [vmem:[%s893 + $0xa8] sm:$0xf]
      %v937 = vld [vmem:[%s893 + $0xac] sm:$0xf]
      %v938 = vld [vmem:[%s893 + $0xb0] sm:$0xf]
      %v939 = vld [vmem:[%s893 + $0xb4] sm:$0xf]
      %v940 = vld [vmem:[%s893 + $0xb8] sm:$0xf]
      %v941 = vld [vmem:[%s893 + $0xbc] sm:$0xf]
      %v942 = vpack.c.b16 %v767, %v765
      %v943 = vpack.c.b16 %v879, %v877
      %v944 = vpack.c.b16 %v880, %v878
      %v945 = vpack.c.b16 %v771, %v769
      %v946 = vpack.c.b16 %v883, %v881
      %v947 = vpack.c.b16 %v884, %v882
      %v948 = vpack.c.b16 %v775, %v773
      %v949 = vpack.c.b16 %v887, %v885
      %v950 = vpack.c.b16 %v888, %v886
      %v951 = vpack.c.b16 %v779, %v777
      %v952 = vpack.c.b16 %v891, %v889
      %v953 = vpack.c.b16 %v892, %v890
      %v1014 = vunpack.c.l.b16 %v894
      %v1015 = vunpack.c.l.b16 %v895
      %v1016 = vunpack.c.l.b16 %v896
      %v1017 = vunpack.c.l.b16 %v897
      %v1018 = vunpack.c.l.b16 %v898
      %v1019 = vunpack.c.l.b16 %v899
      %v1020 = vunpack.c.l.b16 %v900
      %v1021 = vunpack.c.l.b16 %v901
      %v1022 = vunpack.c.l.b16 %v902
      %v1023 = vunpack.c.l.b16 %v903
      %v1024 = vunpack.c.l.b16 %v904
      %v1025 = vunpack.c.l.b16 %v905
      %v1026 = vunpack.c.l.b16 %v906
      %v1027 = vunpack.c.l.b16 %v907
      %v1028 = vunpack.c.l.b16 %v908
      %v1029 = vunpack.c.l.b16 %v909
      %v1030 = vunpack.c.l.b16 %v910
      %v1031 = vunpack.c.l.b16 %v911
      %v1032 = vunpack.c.l.b16 %v912
      %v1033 = vunpack.c.l.b16 %v913
      %v1034 = vunpack.c.l.b16 %v914
      %v1035 = vunpack.c.l.b16 %v915
      %v1036 = vunpack.c.l.b16 %v916
      %v1037 = vunpack.c.l.b16 %v917
      %v1038 = vunpack.c.l.b16 %v918
      %v1039 = vunpack.c.l.b16 %v919
      %v1040 = vunpack.c.l.b16 %v920
      %v1041 = vunpack.c.l.b16 %v921
      %v1042 = vunpack.c.l.b16 %v922
      %v1043 = vunpack.c.l.b16 %v923
      %v1044 = vunpack.c.l.b16 %v924
      %v1045 = vunpack.c.l.b16 %v925
      %v1046 = vunpack.c.l.b16 %v926
      %v1047 = vunpack.c.l.b16 %v927
      %v1048 = vunpack.c.l.b16 %v928
      %v1049 = vunpack.c.l.b16 %v929
      %v1050 = vunpack.c.l.b16 %v930
      %v1051 = vunpack.c.l.b16 %v931
      %v1052 = vunpack.c.l.b16 %v932
      %v1053 = vunpack.c.l.b16 %v933
      %v1054 = vunpack.c.l.b16 %v934
      %v1055 = vunpack.c.l.b16 %v935
      %v1056 = vunpack.c.l.b16 %v936
      %v1057 = vunpack.c.l.b16 %v937
      %v1058 = vunpack.c.l.b16 %v938
      %v1059 = vunpack.c.l.b16 %v939
      %v1060 = vunpack.c.l.b16 %v940
      %v1061 = vunpack.c.l.b16 %v941
      %v1062 = vpack.c.b16 %v1015, %v1014
      %v1063 = vpack.c.b16 %v1017, %v1016
      %v1064 = vpack.c.b16 %v1019, %v1018
      %v1065 = vpack.c.b16 %v1021, %v1020
      %v1066 = vpack.c.b16 %v1023, %v1022
      %v1067 = vpack.c.b16 %v1025, %v1024
      %v1068 = vpack.c.b16 %v1027, %v1026
      %v1069 = vpack.c.b16 %v1029, %v1028
      %v1070 = vpack.c.b16 %v1031, %v1030
      %v1071 = vpack.c.b16 %v1033, %v1032
      %v1072 = vpack.c.b16 %v1035, %v1034
      %v1073 = vpack.c.b16 %v1037, %v1036
      %v1074 = vpack.c.b16 %v1039, %v1038
      %v1075 = vpack.c.b16 %v1041, %v1040
      %v1076 = vpack.c.b16 %v1043, %v1042
      %v1077 = vpack.c.b16 %v1045, %v1044
      %v1078 = vpack.c.b16 %v1047, %v1046
      %v1079 = vpack.c.b16 %v1049, %v1048
      %v1080 = vpack.c.b16 %v1051, %v1050
      %v1081 = vpack.c.b16 %v1053, %v1052
      %v1082 = vpack.c.b16 %v1055, %v1054
      %v1083 = vpack.c.b16 %v1057, %v1056
      %v1084 = vpack.c.b16 %v1059, %v1058
      %v1085 = vpack.c.b16 %v1061, %v1060
      %1110 = vmatprep.subr.bf16.mxu0 0
      %1111 = vmatpush1.bf16.msra.mxu0 %v1062
      %1112 = vmatprep.subr.bf16.mxu0 0
      %1113 = vmatpush1.bf16.msra.mxu0 %v1063
      %1114 = vmatprep.subr.bf16.mxu0 0
      %1115 = vmatpush1.bf16.msra.mxu0 %v1064
      %1116 = vmatprep.subr.bf16.mxu0 0
      %1117 = vmatpush1.bf16.msra.mxu0 %v1065
      %1118 = vmatprep.subr.bf16.mxu0 0
      %1119 = vmatpush1.bf16.msra.mxu0 %v1066
      %1120 = vmatprep.subr.bf16.mxu0 0
      %1121 = vmatpush1.bf16.msra.mxu0 %v1067
      %1122 = vmatprep.subr.bf16.mxu0 0
      %1123 = vmatpush1.bf16.msra.mxu0 %v1068
      %1124 = vmatprep.subr.bf16.mxu0 0
      %1125 = vmatpush1.bf16.msra.mxu0 %v1069
      %1126 = vmatprep.subr.bf16.mxu0 0
      %1127 = vmatpush1.bf16.msra.mxu0 %v1070
      %1128 = vmatprep.subr.bf16.mxu0 0
      %1129 = vmatpush1.bf16.msra.mxu0 %v1071
      %1130 = vmatprep.subr.bf16.mxu0 0
      %1131 = vmatpush1.bf16.msra.mxu0 %v1072
      %1132 = vmatprep.subr.bf16.mxu0 0
      %1133 = vmatpush1.bf16.msra.mxu0 %v1073
      %1134 = vmatprep.subr.bf16.mxu0 0
      %1135 = vmatpush1.bf16.msra.mxu0 %v1074
      %1136 = vmatprep.subr.bf16.mxu0 0
      %1137 = vmatpush1.bf16.msra.mxu0 %v1075
      %1138 = vmatprep.subr.bf16.mxu0 0
      %1139 = vmatpush1.bf16.msra.mxu0 %v1076
      %1140 = vmatprep.subr.bf16.mxu0 0
      %1141 = vmatpush1.bf16.msra.mxu0 %v1077
      %1142 = vmatprep.mubr.bf16.mxu0 %v943
      %1143 = vmatmul.mubr.bf16.gmra.mrb[0].mxu0 %v942
      %v1144 = vpop.f32.mrb[0].mxu0
      %v1145 = vadd.f32 0.0, %v1144
      %v1146 = vpop.f32.mrb[0].mxu0
      %v1147 = vpop.f32.mrb[0].mxu0
      %v1148 = vadd.f32 0.0, %v1147
      %v1149 = vpop.f32.mrb[0].mxu0
      %1150 = vmatprep.mubr.bf16.mxu0 %v946
      %1151 = vmatmul.mubr.bf16.gmra.mrb[0].mxu0 %v945
      %v1152 = vpop.f32.mrb[0].mxu0
      %v1153 = vadd.f32 0.0, %v1152
      %v1154 = vpop.f32.mrb[0].mxu0
      %v1155 = vpop.f32.mrb[0].mxu0
      %v1156 = vadd.f32 0.0, %v1155
      %v1157 = vpop.f32.mrb[0].mxu0
      %1158 = vmatprep.mubr.bf16.mxu0 %v949
      %1159 = vmatmul.mubr.bf16.gmra.mrb[0].mxu0 %v948
      %v1160 = vpop.f32.mrb[0].mxu0
      %v1161 = vadd.f32 0.0, %v1160
      %v1162 = vpop.f32.mrb[0].mxu0
      %v1163 = vpop.f32.mrb[0].mxu0
      %v1164 = vadd.f32 0.0, %v1163
      %v1165 = vpop.f32.mrb[0].mxu0
      %1166 = vmatprep.mubr.bf16.mxu0 %v952
      %1167 = vmatmul.mubr.bf16.gmra.mrb[0].mxu0 %v951
      %v1168 = vpop.f32.mrb[0].mxu0
      %v1169 = vadd.f32 0.0, %v1168
      %v1170 = vpop.f32.mrb[0].mxu0
      %v1171 = vpop.f32.mrb[0].mxu0
      %v1172 = vadd.f32 0.0, %v1171
      %v1173 = vpop.f32.mrb[0].mxu0
      %1174 = vdwg.mxu0
      %1175 = vmatprep.subr.bf16.mxu0 0
      %1176 = vmatpush1.bf16.msra.mxu0 %v1078
      %1177 = vmatprep.subr.bf16.mxu0 0
      %1178 = vmatpush1.bf16.msra.mxu0 %v1079
      %1179 = vmatprep.subr.bf16.mxu0 0
      %1180 = vmatpush1.bf16.msra.mxu0 %v1080
      %1181 = vmatprep.subr.bf16.mxu0 0
      %1182 = vmatpush1.bf16.msra.mxu0 %v1081
      %1183 = vmatprep.subr.bf16.mxu0 0
      %1184 = vmatpush1.bf16.msra.mxu0 %v1082
      %1185 = vmatprep.subr.bf16.mxu0 0
      %1186 = vmatpush1.bf16.msra.mxu0 %v1083
      %1187 = vmatprep.subr.bf16.mxu0 0
      %1188 = vmatpush1.bf16.msra.mxu0 %v1084
      %1189 = vmatprep.subr.bf16.mxu0 0
      %1190 = vmatpush1.bf16.msra.mxu0 %v1085
      %1191 = vmatprep.subr.bf16.mxu0 0
      %1192 = vmatpush1.bf16.msra.mxu0 0
      %1193 = vmatprep.subr.bf16.mxu0 0
      %1194 = vmatpush1.bf16.msra.mxu0 0
      %1195 = vmatprep.subr.bf16.mxu0 0
      %1196 = vmatpush1.bf16.msra.mxu0 0
      %1197 = vmatprep.subr.bf16.mxu0 0
      %1198 = vmatpush1.bf16.msra.mxu0 0
      %1199 = vmatprep.subr.bf16.mxu0 0
      %1200 = vmatpush1.bf16.msra.mxu0 0
      %1201 = vmatprep.subr.bf16.mxu0 0
      %1202 = vmatpush1.bf16.msra.mxu0 0
      %1203 = vmatprep.subr.bf16.mxu0 0
      %1204 = vmatpush1.bf16.msra.mxu0 0
      %1205 = vmatprep.subr.bf16.mxu0 0
      %1206 = vmatpush1.bf16.msra.mxu0 0
      %1207 = vmatprep.mubr.bf16.mxu0 0
      %1208 = vmatmul.mubr.bf16.gmra.mrb[0].mxu0 %v944
      %v1209 = vpop.f32.mrb[0].mxu0
      %v1210 = vadd.f32 %v1145, %v1209
      %v1211 = vpop.f32.mrb[0].mxu0
      %v1212 = vpop.f32.mrb[0].mxu0
      %v1213 = vadd.f32 %v1148, %v1212
      %v1214 = vpop.f32.mrb[0].mxu0
      %1215 = vmatprep.mubr.bf16.mxu0 0
      %1216 = vmatmul.mubr.bf16.gmra.mrb[0].mxu0 %v947
      %v1217 = vpop.f32.mrb[0].mxu0
      %v1218 = vadd.f32 %v1153, %v1217
      %v1219 = vpop.f32.mrb[0].mxu0
      %v1220 = vpop.f32.mrb[0].mxu0
      %v1221 = vadd.f32 %v1156, %v1220
      %v1222 = vpop.f32.mrb[0].mxu0
      %1223 = vmatprep.mubr.bf16.mxu0 0
      %1224 = vmatmul.mubr.bf16.gmra.mrb[0].mxu0 %v950
      %v1225 = vpop.f32.mrb[0].mxu0
      %v1226 = vadd.f32 %v1161, %v1225
      %v1227 = vpop.f32.mrb[0].mxu0
      %v1228 = vpop.f32.mrb[0].mxu0
      %v1229 = vadd.f32 %v1164, %v1228
      %v1230 = vpop.f32.mrb[0].mxu0
      %1231 = vmatprep.mubr.bf16.mxu0 0
      %1232 = vmatmul.mubr.bf16.gmra.mrb[0].mxu0 %v953
      %v1233 = vpop.f32.mrb[0].mxu0
      %v1234 = vadd.f32 %v1169, %v1233
      %v1235 = vpop.f32.mrb[0].mxu0
      %v1236 = vpop.f32.mrb[0].mxu0
      %v1237 = vadd.f32 %v1172, %v1236
      %v1238 = vpop.f32.mrb[0].mxu0
      %1239 = vdwg.mxu0
      %v1240 = vld [vmem:[#allocation2] sm:$0xff]
      %v1241 = vld [vmem:[#allocation2 + $0x8] sm:$0xff]
      %v1242 = vld [vmem:[#allocation2 + $0x10] sm:$0xff]
      %v1243 = vld [vmem:[#allocation2 + $0x18] sm:$0xff]
      %v1244 = vld [vmem:[#allocation2 + $0x20] sm:$0xff]
      %v1245 = vld [vmem:[#allocation2 + $0x28] sm:$0xff]
      %v1246 = vld [vmem:[#allocation2 + $0x30] sm:$0xff]
      %v1247 = vld [vmem:[#allocation2 + $0x38] sm:$0xff]
      %v1248 = vadd.f32 %v1240, %v1210
      %v1249 = vadd.f32 %v1241, %v1213
      %v1250 = vadd.f32 %v1242, %v1218
      %v1251 = vadd.f32 %v1243, %v1221
      %v1252 = vadd.f32 %v1244, %v1226
      %v1253 = vadd.f32 %v1245, %v1229
      %v1254 = vadd.f32 %v1246, %v1234
      %v1255 = vadd.f32 %v1247, %v1237
      %1256 = vst [vmem:[#allocation2] sm:$0xff] %v1248
      %1257 = vst [vmem:[#allocation2 + $0x8] sm:$0xff] %v1249
      %1258 = vst [vmem:[#allocation2 + $0x10] sm:$0xff] %v1250
      %1259 = vst [vmem:[#allocation2 + $0x18] sm:$0xff] %v1251
      %1260 = vst [vmem:[#allocation2 + $0x20] sm:$0xff] %v1252
      %1261 = vst [vmem:[#allocation2 + $0x28] sm:$0xff] %v1253
      %1262 = vst [vmem:[#allocation2 + $0x30] sm:$0xff] %v1254
      %1263 = vst [vmem:[#allocation2 + $0x38] sm:$0xff] %v1255
      %s1264 = scalar_lea.vmem %s189, 16
      %v1265 = vld [vmem:[%s1264] sm:$0xf]
      %v1266 = vld [vmem:[%s1264 + $0x8] sm:$0xf]
      %v1267 = vld [vmem:[%s1264 + $0x10] sm:$0xf]
      %v1268 = vld [vmem:[%s1264 + $0x18] sm:$0xf]
      %v1269 = vld [vmem:[%s1264 + $0x20] sm:$0xf]
      %v1270 = vld [vmem:[%s1264 + $0x28] sm:$0xf]
      %v1271 = vld [vmem:[%s1264 + $0x30] sm:$0xf]
      %v1272 = vld [vmem:[%s1264 + $0x38] sm:$0xf]
      %v1273 = vld [vmem:[%s1264 + $0x4] sm:$0x1]
      %v1274 = vld [vmem:[%s1264 + $0xc] sm:$0x1]
      %v1275 = vld [vmem:[%s1264 + $0x14] sm:$0x1]
      %v1276 = vld [vmem:[%s1264 + $0x1c] sm:$0x1]
      %v1277 = vld [vmem:[%s1264 + $0x24] sm:$0x1]
      %v1278 = vld [vmem:[%s1264 + $0x2c] sm:$0x1]
      %v1279 = vld [vmem:[%s1264 + $0x34] sm:$0x1]
      %v1280 = vld [vmem:[%s1264 + $0x3c] sm:$0x1]
      %v1281 = vld [vmem:[%s1264] sm:$0xe]
      %v1282 = vld [vmem:[%s1264 + $0x8] sm:$0xe]
      %v1283 = vld [vmem:[%s1264 + $0x10] sm:$0xe]
      %v1284 = vld [vmem:[%s1264 + $0x18] sm:$0xe]
      %v1285 = vld [vmem:[%s1264 + $0x20] sm:$0xe]
      %v1286 = vld [vmem:[%s1264 + $0x28] sm:$0xe]
      %v1287 = vld [vmem:[%s1264 + $0x30] sm:$0xe]
      %v1288 = vld [vmem:[%s1264 + $0x38] sm:$0xe]
      %v1305 = vunpack.c.l.b16 %v1265
      %v1306 = vunpack.c.l.b16 %v1273
      %v1307 = vunpack.c.l.b16 %v1266
      %v1308 = vunpack.c.l.b16 %v1274
      %v1309 = vunpack.c.l.b16 %v1267
      %v1310 = vunpack.c.l.b16 %v1275
      %v1311 = vunpack.c.l.b16 %v1268
      %v1312 = vunpack.c.l.b16 %v1276
      %v1313 = vunpack.c.l.b16 %v1269
      %v1314 = vunpack.c.l.b16 %v1277
      %v1315 = vunpack.c.l.b16 %v1270
      %v1316 = vunpack.c.l.b16 %v1278
      %v1317 = vunpack.c.l.b16 %v1271
      %v1318 = vunpack.c.l.b16 %v1279
      %v1319 = vunpack.c.l.b16 %v1272
      %v1320 = vunpack.c.l.b16 %v1280
      %v1321 = vpack.c.b16 %v1306, %v1305
      %v1322 = vpack.c.b16 %v1308, %v1307
      %v1323 = vpack.c.b16 %v1310, %v1309
      %v1324 = vpack.c.b16 %v1312, %v1311
      %v1325 = vpack.c.b16 %v1314, %v1313
      %v1326 = vpack.c.b16 %v1316, %v1315
      %v1327 = vpack.c.b16 %v1318, %v1317
      %v1328 = vpack.c.b16 %v1320, %v1319
      %v1330 = vshrl.u32 %v1321, 16
      %v1332 = vshll.u32 %v1321, 16
      %v1334 = vrot.slane %v1332, 1
      %v1335 = vor.u32 %v1330, %v1334
      %v1337 = vshrl.u32 %v1322, 16
      %v1339 = vshll.u32 %v1322, 16
      %v1341 = vrot.slane %v1339, 1
      %v1342 = vor.u32 %v1337, %v1341
      %v1344 = vshrl.u32 %v1323, 16
      %v1346 = vshll.u32 %v1323, 16
      %v1348 = vrot.slane %v1346, 1
      %v1349 = vor.u32 %v1344, %v1348
      %v1351 = vshrl.u32 %v1324, 16
      %v1353 = vshll.u32 %v1324, 16
      %v1355 = vrot.slane %v1353, 1
      %v1356 = vor.u32 %v1351, %v1355
      %v1358 = vshrl.u32 %v1325, 16
      %v1360 = vshll.u32 %v1325, 16
      %v1362 = vrot.slane %v1360, 1
      %v1363 = vor.u32 %v1358, %v1362
      %v1365 = vshrl.u32 %v1326, 16
      %v1367 = vshll.u32 %v1326, 16
      %v1369 = vrot.slane %v1367, 1
      %v1370 = vor.u32 %v1365, %v1369
      %v1372 = vshrl.u32 %v1327, 16
      %v1374 = vshll.u32 %v1327, 16
      %v1376 = vrot.slane %v1374, 1
      %v1377 = vor.u32 %v1372, %v1376
      %v1379 = vshrl.u32 %v1328, 16
      %v1381 = vshll.u32 %v1328, 16
      %v1383 = vrot.slane %v1381, 1
      %v1384 = vor.u32 %v1379, %v1383
      %v1393 = vunpack.c.l.b16 %v1281
      %v1394 = vunpack.c.l.b16 %v1282
      %v1395 = vunpack.c.l.b16 %v1283
      %v1396 = vunpack.c.l.b16 %v1284
      %v1397 = vunpack.c.l.b16 %v1285
      %v1398 = vunpack.c.l.b16 %v1286
      %v1399 = vunpack.c.l.b16 %v1287
      %v1400 = vunpack.c.l.b16 %v1288
      %v1401 = vpack.c.b16 %v1306, %v1393
      %v1402 = vpack.c.b16 %v1308, %v1394
      %v1403 = vpack.c.b16 %v1310, %v1395
      %v1404 = vpack.c.b16 %v1312, %v1396
      %v1405 = vpack.c.b16 %v1314, %v1397
      %v1406 = vpack.c.b16 %v1316, %v1398
      %v1407 = vpack.c.b16 %v1318, %v1399
      %v1408 = vpack.c.b16 %v1320, %v1400
      %v1409 = vrot.slane %v1401, 1
      %v1410 = vrot.slane %v1402, 1
      %v1411 = vrot.slane %v1403, 1
      %v1412 = vrot.slane %v1404, 1
      %v1413 = vrot.slane %v1405, 1
      %v1414 = vrot.slane %v1406, 1
      %v1415 = vrot.slane %v1407, 1
      %v1416 = vrot.slane %v1408, 1
      %v1417 = vunpack.c.l.b16 %v1335
      %v1418 = vunpack.c.l.b16 %v1409
      %v1419 = vunpack.c.l.b16 %v1342
      %v1420 = vunpack.c.l.b16 %v1410
      %v1421 = vunpack.c.l.b16 %v1349
      %v1422 = vunpack.c.l.b16 %v1411
      %v1423 = vunpack.c.l.b16 %v1356
      %v1424 = vunpack.c.l.b16 %v1412
      %v1425 = vunpack.c.l.b16 %v1363
      %v1426 = vunpack.c.l.b16 %v1413
      %v1427 = vunpack.c.l.b16 %v1370
      %v1428 = vunpack.c.l.b16 %v1414
      %v1429 = vunpack.c.l.b16 %v1377
      %v1430 = vunpack.c.l.b16 %v1415
      %v1431 = vunpack.c.l.b16 %v1384
      %v1432 = vunpack.c.l.b16 %v1416
      %s1433 = scalar_lea.vmem %s1, 384
      %v1434 = vld [vmem:[%s1433] sm:$0xf]
      %v1435 = vld [vmem:[%s1433 + $0x4] sm:$0xf]
      %v1436 = vld [vmem:[%s1433 + $0x8] sm:$0xf]
      %v1437 = vld [vmem:[%s1433 + $0xc] sm:$0xf]
      %v1438 = vld [vmem:[%s1433 + $0x10] sm:$0xf]
      %v1439 = vld [vmem:[%s1433 + $0x14] sm:$0xf]
      %v1440 = vld [vmem:[%s1433 + $0x18] sm:$0xf]
      %v1441 = vld [vmem:[%s1433 + $0x1c] sm:$0xf]
      %v1442 = vld [vmem:[%s1433 + $0x20] sm:$0xf]
      %v1443 = vld [vmem:[%s1433 + $0x24] sm:$0xf]
      %v1444 = vld [vmem:[%s1433 + $0x28] sm:$0xf]
      %v1445 = vld [vmem:[%s1433 + $0x2c] sm:$0xf]
      %v1446 = vld [vmem:[%s1433 + $0x30] sm:$0xf]
      %v1447 = vld [vmem:[%s1433 + $0x34] sm:$0xf]
      %v1448 = vld [vmem:[%s1433 + $0x38] sm:$0xf]
      %v1449 = vld [vmem:[%s1433 + $0x3c] sm:$0xf]
      %v1450 = vld [vmem:[%s1433 + $0x40] sm:$0xf]
      %v1451 = vld [vmem:[%s1433 + $0x44] sm:$0xf]
      %v1452 = vld [vmem:[%s1433 + $0x48] sm:$0xf]
      %v1453 = vld [vmem:[%s1433 + $0x4c] sm:$0xf]
      %v1454 = vld [vmem:[%s1433 + $0x50] sm:$0xf]
      %v1455 = vld [vmem:[%s1433 + $0x54] sm:$0xf]
      %v1456 = vld [vmem:[%s1433 + $0x58] sm:$0xf]
      %v1457 = vld [vmem:[%s1433 + $0x5c] sm:$0xf]
      %v1458 = vld [vmem:[%s1433 + $0x60] sm:$0xf]
      %v1459 = vld [vmem:[%s1433 + $0x64] sm:$0xf]
      %v1460 = vld [vmem:[%s1433 + $0x68] sm:$0xf]
      %v1461 = vld [vmem:[%s1433 + $0x6c] sm:$0xf]
      %v1462 = vld [vmem:[%s1433 + $0x70] sm:$0xf]
      %v1463 = vld [vmem:[%s1433 + $0x74] sm:$0xf]
      %v1464 = vld [vmem:[%s1433 + $0x78] sm:$0xf]
      %v1465 = vld [vmem:[%s1433 + $0x7c] sm:$0xf]
      %v1466 = vld [vmem:[%s1433 + $0x80] sm:$0xf]
      %v1467 = vld [vmem:[%s1433 + $0x84] sm:$0xf]
      %v1468 = vld [vmem:[%s1433 + $0x88] sm:$0xf]
      %v1469 = vld [vmem:[%s1433 + $0x8c] sm:$0xf]
      %v1470 = vld [vmem:[%s1433 + $0x90] sm:$0xf]
      %v1471 = vld [vmem:[%s1433 + $0x94] sm:$0xf]
      %v1472 = vld [vmem:[%s1433 + $0x98] sm:$0xf]
      %v1473 = vld [vmem:[%s1433 + $0x9c] sm:$0xf]
      %v1474 = vld [vmem:[%s1433 + $0xa0] sm:$0xf]
      %v1475 = vld [vmem:[%s1433 + $0xa4] sm:$0xf]
      %v1476 = vld [vmem:[%s1433 + $0xa8] sm:$0xf]
      %v1477 = vld [vmem:[%s1433 + $0xac] sm:$0xf]
      %v1478 = vld [vmem:[%s1433 + $0xb0] sm:$0xf]
      %v1479 = vld [vmem:[%s1433 + $0xb4] sm:$0xf]
      %v1480 = vld [vmem:[%s1433 + $0xb8] sm:$0xf]
      %v1481 = vld [vmem:[%s1433 + $0xbc] sm:$0xf]
      %v1482 = vpack.c.b16 %v1307, %v1305
      %v1483 = vpack.c.b16 %v1419, %v1417
      %v1484 = vpack.c.b16 %v1420, %v1418
      %v1485 = vpack.c.b16 %v1311, %v1309
      %v1486 = vpack.c.b16 %v1423, %v1421
      %v1487 = vpack.c.b16 %v1424, %v1422
      %v1488 = vpack.c.b16 %v1315, %v1313
      %v1489 = vpack.c.b16 %v1427, %v1425
      %v1490 = vpack.c.b16 %v1428, %v1426
      %v1491 = vpack.c.b16 %v1319, %v1317
      %v1492 = vpack.c.b16 %v1431, %v1429
      %v1493 = vpack.c.b16 %v1432, %v1430
      %v1554 = vunpack.c.l.b16 %v1434
      %v1555 = vunpack.c.l.b16 %v1435
      %v1556 = vunpack.c.l.b16 %v1436
      %v1557 = vunpack.c.l.b16 %v1437
      %v1558 = vunpack.c.l.b16 %v1438
      %v1559 = vunpack.c.l.b16 %v1439
      %v1560 = vunpack.c.l.b16 %v1440
      %v1561 = vunpack.c.l.b16 %v1441
      %v1562 = vunpack.c.l.b16 %v1442
      %v1563 = vunpack.c.l.b16 %v1443
      %v1564 = vunpack.c.l.b16 %v1444
      %v1565 = vunpack.c.l.b16 %v1445
      %v1566 = vunpack.c.l.b16 %v1446
      %v1567 = vunpack.c.l.b16 %v1447
      %v1568 = vunpack.c.l.b16 %v1448
      %v1569 = vunpack.c.l.b16 %v1449
      %v1570 = vunpack.c.l.b16 %v1450
      %v1571 = vunpack.c.l.b16 %v1451
      %v1572 = vunpack.c.l.b16 %v1452
      %v1573 = vunpack.c.l.b16 %v1453
      %v1574 = vunpack.c.l.b16 %v1454
      %v1575 = vunpack.c.l.b16 %v1455
      %v1576 = vunpack.c.l.b16 %v1456
      %v1577 = vunpack.c.l.b16 %v1457
      %v1578 = vunpack.c.l.b16 %v1458
      %v1579 = vunpack.c.l.b16 %v1459
      %v1580 = vunpack.c.l.b16 %v1460
      %v1581 = vunpack.c.l.b16 %v1461
      %v1582 = vunpack.c.l.b16 %v1462
      %v1583 = vunpack.c.l.b16 %v1463
      %v1584 = vunpack.c.l.b16 %v1464
      %v1585 = vunpack.c.l.b16 %v1465
      %v1586 = vunpack.c.l.b16 %v1466
      %v1587 = vunpack.c.l.b16 %v1467
      %v1588 = vunpack.c.l.b16 %v1468
      %v1589 = vunpack.c.l.b16 %v1469
      %v1590 = vunpack.c.l.b16 %v1470
      %v1591 = vunpack.c.l.b16 %v1471
      %v1592 = vunpack.c.l.b16 %v1472
      %v1593 = vunpack.c.l.b16 %v1473
      %v1594 = vunpack.c.l.b16 %v1474
      %v1595 = vunpack.c.l.b16 %v1475
      %v1596 = vunpack.c.l.b16 %v1476
      %v1597 = vunpack.c.l.b16 %v1477
      %v1598 = vunpack.c.l.b16 %v1478
      %v1599 = vunpack.c.l.b16 %v1479
      %v1600 = vunpack.c.l.b16 %v1480
      %v1601 = vunpack.c.l.b16 %v1481
      %v1602 = vpack.c.b16 %v1555, %v1554
      %v1603 = vpack.c.b16 %v1557, %v1556
      %v1604 = vpack.c.b16 %v1559, %v1558
      %v1605 = vpack.c.b16 %v1561, %v1560
      %v1606 = vpack.c.b16 %v1563, %v1562
      %v1607 = vpack.c.b16 %v1565, %v1564
      %v1608 = vpack.c.b16 %v1567, %v1566
      %v1609 = vpack.c.b16 %v1569, %v1568
      %v1610 = vpack.c.b16 %v1571, %v1570
      %v1611 = vpack.c.b16 %v1573, %v1572
      %v1612 = vpack.c.b16 %v1575, %v1574
      %v1613 = vpack.c.b16 %v1577, %v1576
      %v1614 = vpack.c.b16 %v1579, %v1578
      %v1615 = vpack.c.b16 %v1581, %v1580
      %v1616 = vpack.c.b16 %v1583, %v1582
      %v1617 = vpack.c.b16 %v1585, %v1584
      %v1618 = vpack.c.b16 %v1587, %v1586
      %v1619 = vpack.c.b16 %v1589, %v1588
      %v1620 = vpack.c.b16 %v1591, %v1590
      %v1621 = vpack.c.b16 %v1593, %v1592
      %v1622 = vpack.c.b16 %v1595, %v1594
      %v1623 = vpack.c.b16 %v1597, %v1596
      %v1624 = vpack.c.b16 %v1599, %v1598
      %v1625 = vpack.c.b16 %v1601, %v1600
      %1650 = vmatprep.subr.bf16.mxu0 0
      %1651 = vmatpush1.bf16.msra.mxu0 %v1602
      %1652 = vmatprep.subr.bf16.mxu0 0
      %1653 = vmatpush1.bf16.msra.mxu0 %v1603
      %1654 = vmatprep.subr.bf16.mxu0 0
      %1655 = vmatpush1.bf16.msra.mxu0 %v1604
      %1656 = vmatprep.subr.bf16.mxu0 0
      %1657 = vmatpush1.bf16.msra.mxu0 %v1605
      %1658 = vmatprep.subr.bf16.mxu0 0
      %1659 = vmatpush1.bf16.msra.mxu0 %v1606
      %1660 = vmatprep.subr.bf16.mxu0 0
      %1661 = vmatpush1.bf16.msra.mxu0 %v1607
      %1662 = vmatprep.subr.bf16.mxu0 0
      %1663 = vmatpush1.bf16.msra.mxu0 %v1608
      %1664 = vmatprep.subr.bf16.mxu0 0
      %1665 = vmatpush1.bf16.msra.mxu0 %v1609
      %1666 = vmatprep.subr.bf16.mxu0 0
      %1667 = vmatpush1.bf16.msra.mxu0 %v1610
      %1668 = vmatprep.subr.bf16.mxu0 0
      %1669 = vmatpush1.bf16.msra.mxu0 %v1611
      %1670 = vmatprep.subr.bf16.mxu0 0
      %1671 = vmatpush1.bf16.msra.mxu0 %v1612
      %1672 = vmatprep.subr.bf16.mxu0 0
      %1673 = vmatpush1.bf16.msra.mxu0 %v1613
      %1674 = vmatprep.subr.bf16.mxu0 0
      %1675 = vmatpush1.bf16.msra.mxu0 %v1614
      %1676 = vmatprep.subr.bf16.mxu0 0
      %1677 = vmatpush1.bf16.msra.mxu0 %v1615
      %1678 = vmatprep.subr.bf16.mxu0 0
      %1679 = vmatpush1.bf16.msra.mxu0 %v1616
      %1680 = vmatprep.subr.bf16.mxu0 0
      %1681 = vmatpush1.bf16.msra.mxu0 %v1617
      %1682 = vmatprep.mubr.bf16.mxu0 %v1483
      %1683 = vmatmul.mubr.bf16.gmra.mrb[0].mxu0 %v1482
      %v1684 = vpop.f32.mrb[0].mxu0
      %v1685 = vadd.f32 0.0, %v1684
      %v1686 = vpop.f32.mrb[0].mxu0
      %v1687 = vpop.f32.mrb[0].mxu0
      %v1688 = vadd.f32 0.0, %v1687
      %v1689 = vpop.f32.mrb[0].mxu0
      %1690 = vmatprep.mubr.bf16.mxu0 %v1486
      %1691 = vmatmul.mubr.bf16.gmra.mrb[0].mxu0 %v1485
      %v1692 = vpop.f32.mrb[0].mxu0
      %v1693 = vadd.f32 0.0, %v1692
      %v1694 = vpop.f32.mrb[0].mxu0
      %v1695 = vpop.f32.mrb[0].mxu0
      %v1696 = vadd.f32 0.0, %v1695
      %v1697 = vpop.f32.mrb[0].mxu0
      %1698 = vmatprep.mubr.bf16.mxu0 %v1489
      %1699 = vmatmul.mubr.bf16.gmra.mrb[0].mxu0 %v1488
      %v1700 = vpop.f32.mrb[0].mxu0
      %v1701 = vadd.f32 0.0, %v1700
      %v1702 = vpop.f32.mrb[0].mxu0
      %v1703 = vpop.f32.mrb[0].mxu0
      %v1704 = vadd.f32 0.0, %v1703
      %v1705 = vpop.f32.mrb[0].mxu0
      %1706 = vmatprep.mubr.bf16.mxu0 %v1492
      %1707 = vmatmul.mubr.bf16.gmra.mrb[0].mxu0 %v1491
      %v1708 = vpop.f32.mrb[0].mxu0
      %v1709 = vadd.f32 0.0, %v1708
      %v1710 = vpop.f32.mrb[0].mxu0
      %v1711 = vpop.f32.mrb[0].mxu0
      %v1712 = vadd.f32 0.0, %v1711
      %v1713 = vpop.f32.mrb[0].mxu0
      %1714 = vdwg.mxu0
      %1715 = vmatprep.subr.bf16.mxu0 0
      %1716 = vmatpush1.bf16.msra.mxu0 %v1618
      %1717 = vmatprep.subr.bf16.mxu0 0
      %1718 = vmatpush1.bf16.msra.mxu0 %v1619
      %1719 = vmatprep.subr.bf16.mxu0 0
      %1720 = vmatpush1.bf16.msra.mxu0 %v1620
      %1721 = vmatprep.subr.bf16.mxu0 0
      %1722 = vmatpush1.bf16.msra.mxu0 %v1621
      %1723 = vmatprep.subr.bf16.mxu0 0
      %1724 = vmatpush1.bf16.msra.mxu0 %v1622
      %1725 = vmatprep.subr.bf16.mxu0 0
      %1726 = vmatpush1.bf16.msra.mxu0 %v1623
      %1727 = vmatprep.subr.bf16.mxu0 0
      %1728 = vmatpush1.bf16.msra.mxu0 %v1624
      %1729 = vmatprep.subr.bf16.mxu0 0
      %1730 = vmatpush1.bf16.msra.mxu0 %v1625
      %1731 = vmatprep.subr.bf16.mxu0 0
      %1732 = vmatpush1.bf16.msra.mxu0 0
      %1733 = vmatprep.subr.bf16.mxu0 0
      %1734 = vmatpush1.bf16.msra.mxu0 0
      %1735 = vmatprep.subr.bf16.mxu0 0
      %1736 = vmatpush1.bf16.msra.mxu0 0
      %1737 = vmatprep.subr.bf16.mxu0 0
      %1738 = vmatpush1.bf16.msra.mxu0 0
      %1739 = vmatprep.subr.bf16.mxu0 0
      %1740 = vmatpush1.bf16.msra.mxu0 0
      %1741 = vmatprep.subr.bf16.mxu0 0
      %1742 = vmatpush1.bf16.msra.mxu0 0
      %1743 = vmatprep.subr.bf16.mxu0 0
      %1744 = vmatpush1.bf16.msra.mxu0 0
      %1745 = vmatprep.subr.bf16.mxu0 0
      %1746 = vmatpush1.bf16.msra.mxu0 0
      %1747 = vmatprep.mubr.bf16.mxu0 0
      %1748 = vmatmul.mubr.bf16.gmra.mrb[0].mxu0 %v1484
      %v1749 = vpop.f32.mrb[0].mxu0
      %v1750 = vadd.f32 %v1685, %v1749
      %v1751 = vpop.f32.mrb[0].mxu0
      %v1752 = vpop.f32.mrb[0].mxu0
      %v1753 = vadd.f32 %v1688, %v1752
      %v1754 = vpop.f32.mrb[0].mxu0
      %1755 = vmatprep.mubr.bf16.mxu0 0
      %1756 = vmatmul.mubr.bf16.gmra.mrb[0].mxu0 %v1487
      %v1757 = vpop.f32.mrb[0].mxu0
      %v1758 = vadd.f32 %v1693, %v1757
      %v1759 = vpop.f32.mrb[0].mxu0
      %v1760 = vpop.f32.mrb[0].mxu0
      %v1761 = vadd.f32 %v1696, %v1760
      %v1762 = vpop.f32.mrb[0].mxu0
      %1763 = vmatprep.mubr.bf16.mxu0 0
      %1764 = vmatmul.mubr.bf16.gmra.mrb[0].mxu0 %v1490
      %v1765 = vpop.f32.mrb[0].mxu0
      %v1766 = vadd.f32 %v1701, %v1765
      %v1767 = vpop.f32.mrb[0].mxu0
      %v1768 = vpop.f32.mrb[0].mxu0
      %v1769 = vadd.f32 %v1704, %v1768
      %v1770 = vpop.f32.mrb[0].mxu0
      %1771 = vmatprep.mubr.bf16.mxu0 0
      %1772 = vmatmul.mubr.bf16.gmra.mrb[0].mxu0 %v1493
      %v1773 = vpop.f32.mrb[0].mxu0
      %v1774 = vadd.f32 %v1709, %v1773
      %v1775 = vpop.f32.mrb[0].mxu0
      %v1776 = vpop.f32.mrb[0].mxu0
      %v1777 = vadd.f32 %v1712, %v1776
      %v1778 = vpop.f32.mrb[0].mxu0
      %1779 = vdwg.mxu0
      %v1780 = vld [vmem:[#allocation2] sm:$0xff]
      %v1781 = vld [vmem:[#allocation2 + $0x8] sm:$0xff]
      %v1782 = vld [vmem:[#allocation2 + $0x10] sm:$0xff]
      %v1783 = vld [vmem:[#allocation2 + $0x18] sm:$0xff]
      %v1784 = vld [vmem:[#allocation2 + $0x20] sm:$0xff]
      %v1785 = vld [vmem:[#allocation2 + $0x28] sm:$0xff]
      %v1786 = vld [vmem:[#allocation2 + $0x30] sm:$0xff]
      %v1787 = vld [vmem:[#allocation2 + $0x38] sm:$0xff]
      %v1788 = vadd.f32 %v1780, %v1750
      %v1789 = vadd.f32 %v1781, %v1753
      %v1790 = vadd.f32 %v1782, %v1758
      %v1791 = vadd.f32 %v1783, %v1761
      %v1792 = vadd.f32 %v1784, %v1766
      %v1793 = vadd.f32 %v1785, %v1769
      %v1794 = vadd.f32 %v1786, %v1774
      %v1795 = vadd.f32 %v1787, %v1777
      %1796 = vst [vmem:[#allocation2] sm:$0xff] %v1788
      %1797 = vst [vmem:[#allocation2 + $0x8] sm:$0xff] %v1789
      %1798 = vst [vmem:[#allocation2 + $0x10] sm:$0xff] %v1790
      %1799 = vst [vmem:[#allocation2 + $0x18] sm:$0xff] %v1791
      %1800 = vst [vmem:[#allocation2 + $0x20] sm:$0xff] %v1792
      %1801 = vst [vmem:[#allocation2 + $0x28] sm:$0xff] %v1793
      %1802 = vst [vmem:[#allocation2 + $0x30] sm:$0xff] %v1794
      %1803 = vst [vmem:[#allocation2 + $0x38] sm:$0xff] %v1795
      %v1804 = vld [vmem:[#allocation2] sm:$0xff]
      %v1805 = vld [vmem:[#allocation2 + $0x8] sm:$0xff]
      %v1806 = vld [vmem:[#allocation2 + $0x10] sm:$0xff]
      %v1807 = vld [vmem:[#allocation2 + $0x18] sm:$0xff]
      %v1808 = vld [vmem:[#allocation2 + $0x20] sm:$0xff]
      %v1809 = vld [vmem:[#allocation2 + $0x28] sm:$0xff]
      %v1810 = vld [vmem:[#allocation2 + $0x30] sm:$0xff]
      %v1811 = vld [vmem:[#allocation2 + $0x38] sm:$0xff]
      %v1812 = vld [vmem:[%s2] sm:$0x1]
      %v1814 = vlaneseq
      %v1815 = vshrl.u32 %v1814, 7
      %v1816 = vsub.s32 0, %v1815
      %v1817 = vrot.slane %v1812, %v1816
      %v1819 = vadd.f32 %v1804, %v1817
      %v1820 = vadd.f32 %v1805, %v1817
      %v1821 = vadd.f32 %v1806, %v1817
      %v1822 = vadd.f32 %v1807, %v1817
      %v1823 = vadd.f32 %v1808, %v1817
      %v1824 = vadd.f32 %v1809, %v1817
      %v1825 = vadd.f32 %v1810, %v1817
      %v1826 = vadd.f32 %v1811, %v1817
      %v1827 = vmax.f32 %v1819, 0.0
      %v1828 = vmax.f32 %v1820, 0.0
      %v1829 = vmax.f32 %v1821, 0.0
      %v1830 = vmax.f32 %v1822, 0.0
      %v1831 = vmax.f32 %v1823, 0.0
      %v1832 = vmax.f32 %v1824, 0.0
      %v1833 = vmax.f32 %v1825, 0.0
      %v1834 = vmax.f32 %v1826, 0.0
      %v1835 = vmax.f32 %v1827, %v1828
      %v1836 = vmax.f32 %v1829, %v1830
      %v1837 = vmax.f32 %v1831, %v1832
      %v1838 = vmax.f32 %v1833, %v1834
      %v1843 = vcombine.high %v1835, %v1835
      %v1845 = vunpack.c.l.s4 1983009808
      %v1846 = vunpack.c.0.s8 %v1845
      %v1847 = vlaneseq
      %v1848 = vshrl.u32 %v1847, 7
      %v1849 = vsub.s32 %v1846, %v1848
      %v1850 = vrot.slane %v1835, %v1849
      %v1852 = vunpack.c.l.s4 1983009808
      %v1853 = vunpack.c.0.s8 %v1852
      %v1854 = vlaneseq
      %v1855 = vshrl.u32 %v1854, 7
      %v1856 = vsub.s32 %v1853, %v1855
      %v1857 = vrot.slane %v1843, %v1856
      %v1858 = vcombine.high %v1850, %v1850
      %v1859 = vcombine.high %v1857, %v1857
      %v1860 = vcombine.high %v1836, %v1836
      %v1862 = vunpack.c.l.s4 1983009808
      %v1863 = vunpack.c.0.s8 %v1862
      %v1864 = vlaneseq
      %v1865 = vshrl.u32 %v1864, 7
      %v1866 = vsub.s32 %v1863, %v1865
      %v1867 = vrot.slane %v1836, %v1866
      %v1869 = vunpack.c.l.s4 1983009808
      %v1870 = vunpack.c.0.s8 %v1869
      %v1871 = vlaneseq
      %v1872 = vshrl.u32 %v1871, 7
      %v1873 = vsub.s32 %v1870, %v1872
      %v1874 = vrot.slane %v1860, %v1873
      %v1875 = vcombine.high %v1867, %v1867
      %v1876 = vcombine.high %v1874, %v1874
      %v1877 = vcombine.high %v1837, %v1837
      %v1879 = vunpack.c.l.s4 1983009808
      %v1880 = vunpack.c.0.s8 %v1879
      %v1881 = vlaneseq
      %v1882 = vshrl.u32 %v1881, 7
      %v1883 = vsub.s32 %v1880, %v1882
      %v1884 = vrot.slane %v1837, %v1883
      %v1886 = vunpack.c.l.s4 1983009808
      %v1887 = vunpack.c.0.s8 %v1886
      %v1888 = vlaneseq
      %v1889 = vshrl.u32 %v1888, 7
      %v1890 = vsub.s32 %v1887, %v1889
      %v1891 = vrot.slane %v1877, %v1890
      %v1892 = vcombine.high %v1884, %v1884
      %v1893 = vcombine.high %v1891, %v1891
      %v1894 = vcombine.high %v1838, %v1838
      %v1896 = vunpack.c.l.s4 1983009808
      %v1897 = vunpack.c.0.s8 %v1896
      %v1898 = vlaneseq
      %v1899 = vshrl.u32 %v1898, 7
      %v1900 = vsub.s32 %v1897, %v1899
      %v1901 = vrot.slane %v1838, %v1900
      %v1903 = vunpack.c.l.s4 1983009808
      %v1904 = vunpack.c.0.s8 %v1903
      %v1905 = vlaneseq
      %v1906 = vshrl.u32 %v1905, 7
      %v1907 = vsub.s32 %v1904, %v1906
      %v1908 = vrot.slane %v1894, %v1907
      %v1909 = vcombine.high %v1901, %v1901
      %v1910 = vcombine.high %v1908, %v1908
      %v1927 = vrot.slane %v1850, 7
      %v1928 = vrot.slane %v1927, 2
      %v1929 = vrot.slane %v1858, 7
      %v1930 = vrot.slane %v1929, 2
      %v1931 = vrot.slane %v1857, 7
      %v1932 = vrot.slane %v1931, 2
      %v1933 = vrot.slane %v1859, 7
      %v1934 = vrot.slane %v1933, 2
      %v1935 = vrot.slane %v1867, 7
      %v1936 = vrot.slane %v1935, 2
      %v1937 = vrot.slane %v1875, 7
      %v1938 = vrot.slane %v1937, 2
      %v1939 = vrot.slane %v1874, 7
      %v1940 = vrot.slane %v1939, 2
      %v1941 = vrot.slane %v1876, 7
      %v1942 = vrot.slane %v1941, 2
      %v1943 = vrot.slane %v1884, 7
      %v1944 = vrot.slane %v1943, 2
      %v1945 = vrot.slane %v1892, 7
      %v1946 = vrot.slane %v1945, 2
      %v1947 = vrot.slane %v1891, 7
      %v1948 = vrot.slane %v1947, 2
      %v1949 = vrot.slane %v1893, 7
      %v1950 = vrot.slane %v1949, 2
      %v1951 = vrot.slane %v1901, 7
      %v1952 = vrot.slane %v1951, 2
      %v1953 = vrot.slane %v1909, 7
      %v1954 = vrot.slane %v1953, 2
      %v1955 = vrot.slane %v1908, 7
      %v1956 = vrot.slane %v1955, 2
      %v1957 = vrot.slane %v1910, 7
      %v1958 = vrot.slane %v1957, 2
      %v1975 = vmax.f32 %v1850, %v1928
      %v1976 = vmax.f32 %v1858, %v1930
      %v1977 = vmax.f32 %v1857, %v1932
      %v1978 = vmax.f32 %v1859, %v1934
      %v1979 = vmax.f32 %v1867, %v1936
      %v1980 = vmax.f32 %v1875, %v1938
      %v1981 = vmax.f32 %v1874, %v1940
      %v1982 = vmax.f32 %v1876, %v1942
      %v1983 = vmax.f32 %v1884, %v1944
      %v1984 = vmax.f32 %v1892, %v1946
      %v1985 = vmax.f32 %v1891, %v1948
      %v1986 = vmax.f32 %v1893, %v1950
      %v1987 = vmax.f32 %v1901, %v1952
      %v1988 = vmax.f32 %v1909, %v1954
      %v1989 = vmax.f32 %v1908, %v1956
      %v1990 = vmax.f32 %v1910, %v1958
      %v1991 = vpack.c.bf16 %v1975, %v1975
      %v1992 = vpack.c.bf16 %v1976, %v1976
      %v1993 = vpack.c.bf16 %v1977, %v1977
      %v1994 = vpack.c.bf16 %v1978, %v1978
      %v1995 = vpack.c.bf16 %v1979, %v1979
      %v1996 = vpack.c.bf16 %v1980, %v1980
      %v1997 = vpack.c.bf16 %v1981, %v1981
      %v1998 = vpack.c.bf16 %v1982, %v1982
      %v1999 = vpack.c.bf16 %v1983, %v1983
      %v2000 = vpack.c.bf16 %v1984, %v1984
      %v2001 = vpack.c.bf16 %v1985, %v1985
      %v2002 = vpack.c.bf16 %v1986, %v1986
      %v2003 = vpack.c.bf16 %v1987, %v1987
      %v2004 = vpack.c.bf16 %v1988, %v1988
      %v2005 = vpack.c.bf16 %v1989, %v1989
      %v2006 = vpack.c.bf16 %v1990, %v1990
      %v2024 = vunpack.c.l.s4 1983009808
      %v2025 = vunpack.c.0.s8 %v2024
      %v2026 = vlaneseq
      %v2027 = vshrl.u32 %v2026, 7
      %v2028 = vsub.s32 %v2025, %v2027
      %v2029 = vrot.slane %v1991, %v2028
      %v2031 = vunpack.c.l.s4 1983009808
      %v2032 = vunpack.c.0.s8 %v2031
      %v2033 = vlaneseq
      %v2034 = vshrl.u32 %v2033, 7
      %v2035 = vsub.s32 %v2032, %v2034
      %v2036 = vrot.slane %v1992, %v2035
      %v2038 = vunpack.c.l.s4 1983009808
      %v2039 = vunpack.c.0.s8 %v2038
      %v2040 = vlaneseq
      %v2041 = vshrl.u32 %v2040, 7
      %v2042 = vsub.s32 %v2039, %v2041
      %v2043 = vrot.slane %v1993, %v2042
      %v2045 = vunpack.c.l.s4 1983009808
      %v2046 = vunpack.c.0.s8 %v2045
      %v2047 = vlaneseq
      %v2048 = vshrl.u32 %v2047, 7
      %v2049 = vsub.s32 %v2046, %v2048
      %v2050 = vrot.slane %v1994, %v2049
      %v2052 = vunpack.c.l.s4 1983009808
      %v2053 = vunpack.c.0.s8 %v2052
      %v2054 = vlaneseq
      %v2055 = vshrl.u32 %v2054, 7
      %v2056 = vsub.s32 %v2053, %v2055
      %v2057 = vrot.slane %v1995, %v2056
      %v2059 = vunpack.c.l.s4 1983009808
      %v2060 = vunpack.c.0.s8 %v2059
      %v2061 = vlaneseq
      %v2062 = vshrl.u32 %v2061, 7
      %v2063 = vsub.s32 %v2060, %v2062
      %v2064 = vrot.slane %v1996, %v2063
      %v2066 = vunpack.c.l.s4 1983009808
      %v2067 = vunpack.c.0.s8 %v2066
      %v2068 = vlaneseq
      %v2069 = vshrl.u32 %v2068, 7
      %v2070 = vsub.s32 %v2067, %v2069
      %v2071 = vrot.slane %v1997, %v2070
      %v2073 = vunpack.c.l.s4 1983009808
      %v2074 = vunpack.c.0.s8 %v2073
      %v2075 = vlaneseq
      %v2076 = vshrl.u32 %v2075, 7
      %v2077 = vsub.s32 %v2074, %v2076
      %v2078 = vrot.slane %v1998, %v2077
      %v2080 = vunpack.c.l.s4 1983009808
      %v2081 = vunpack.c.0.s8 %v2080
      %v2082 = vlaneseq
      %v2083 = vshrl.u32 %v2082, 7
      %v2084 = vsub.s32 %v2081, %v2083
      %v2085 = vrot.slane %v1999, %v2084
      %v2087 = vunpack.c.l.s4 1983009808
      %v2088 = vunpack.c.0.s8 %v2087
      %v2089 = vlaneseq
      %v2090 = vshrl.u32 %v2089, 7
      %v2091 = vsub.s32 %v2088, %v2090
      %v2092 = vrot.slane %v2000, %v2091
      %v2094 = vunpack.c.l.s4 1983009808
      %v2095 = vunpack.c.0.s8 %v2094
      %v2096 = vlaneseq
      %v2097 = vshrl.u32 %v2096, 7
      %v2098 = vsub.s32 %v2095, %v2097
      %v2099 = vrot.slane %v2001, %v2098
      %v2101 = vunpack.c.l.s4 1983009808
      %v2102 = vunpack.c.0.s8 %v2101
      %v2103 = vlaneseq
      %v2104 = vshrl.u32 %v2103, 7
      %v2105 = vsub.s32 %v2102, %v2104
      %v2106 = vrot.slane %v2002, %v2105
      %v2108 = vunpack.c.l.s4 1983009808
      %v2109 = vunpack.c.0.s8 %v2108
      %v2110 = vlaneseq
      %v2111 = vshrl.u32 %v2110, 7
      %v2112 = vsub.s32 %v2109, %v2111
      %v2113 = vrot.slane %v2003, %v2112
      %v2115 = vunpack.c.l.s4 1983009808
      %v2116 = vunpack.c.0.s8 %v2115
      %v2117 = vlaneseq
      %v2118 = vshrl.u32 %v2117, 7
      %v2119 = vsub.s32 %v2116, %v2118
      %v2120 = vrot.slane %v2004, %v2119
      %v2122 = vunpack.c.l.s4 1983009808
      %v2123 = vunpack.c.0.s8 %v2122
      %v2124 = vlaneseq
      %v2125 = vshrl.u32 %v2124, 7
      %v2126 = vsub.s32 %v2123, %v2125
      %v2127 = vrot.slane %v2005, %v2126
      %v2129 = vunpack.c.l.s4 1983009808
      %v2130 = vunpack.c.0.s8 %v2129
      %v2131 = vlaneseq
      %v2132 = vshrl.u32 %v2131, 7
      %v2133 = vsub.s32 %v2130, %v2132
      %v2134 = vrot.slane %v2006, %v2133
      %v2136 = vunpack.c.l.s4 1983009808
      %v2137 = vunpack.c.0.s8 %v2136
      %v2138 = vlaneseq
      %v2139 = vshrl.u32 %v2138, 7
      %v2140 = vsub.s32 %v2137, %v2139
      %v2141 = vrot.slane %v2029, %v2140
      %v2143 = vunpack.c.l.s4 1983009808
      %v2144 = vunpack.c.0.s8 %v2143
      %v2145 = vlaneseq
      %v2146 = vshrl.u32 %v2145, 7
      %v2147 = vsub.s32 %v2144, %v2146
      %v2148 = vrot.slane %v2036, %v2147
      %v2150 = vunpack.c.l.s4 1983009808
      %v2151 = vunpack.c.0.s8 %v2150
      %v2152 = vlaneseq
      %v2153 = vshrl.u32 %v2152, 7
      %v2154 = vsub.s32 %v2151, %v2153
      %v2155 = vrot.slane %v2043, %v2154
      %v2157 = vunpack.c.l.s4 1983009808
      %v2158 = vunpack.c.0.s8 %v2157
      %v2159 = vlaneseq
      %v2160 = vshrl.u32 %v2159, 7
      %v2161 = vsub.s32 %v2158, %v2160
      %v2162 = vrot.slane %v2050, %v2161
      %v2164 = vunpack.c.l.s4 1983009808
      %v2165 = vunpack.c.0.s8 %v2164
      %v2166 = vlaneseq
      %v2167 = vshrl.u32 %v2166, 7
      %v2168 = vsub.s32 %v2165, %v2167
      %v2169 = vrot.slane %v2057, %v2168
      %v2171 = vunpack.c.l.s4 1983009808
      %v2172 = vunpack.c.0.s8 %v2171
      %v2173 = vlaneseq
      %v2174 = vshrl.u32 %v2173, 7
      %v2175 = vsub.s32 %v2172, %v2174
      %v2176 = vrot.slane %v2064, %v2175
      %v2178 = vunpack.c.l.s4 1983009808
      %v2179 = vunpack.c.0.s8 %v2178
      %v2180 = vlaneseq
      %v2181 = vshrl.u32 %v2180, 7
      %v2182 = vsub.s32 %v2179, %v2181
      %v2183 = vrot.slane %v2071, %v2182
      %v2185 = vunpack.c.l.s4 1983009808
      %v2186 = vunpack.c.0.s8 %v2185
      %v2187 = vlaneseq
      %v2188 = vshrl.u32 %v2187, 7
      %v2189 = vsub.s32 %v2186, %v2188
      %v2190 = vrot.slane %v2078, %v2189
      %v2192 = vunpack.c.l.s4 1983009808
      %v2193 = vunpack.c.0.s8 %v2192
      %v2194 = vlaneseq
      %v2195 = vshrl.u32 %v2194, 7
      %v2196 = vsub.s32 %v2193, %v2195
      %v2197 = vrot.slane %v2085, %v2196
      %v2199 = vunpack.c.l.s4 1983009808
      %v2200 = vunpack.c.0.s8 %v2199
      %v2201 = vlaneseq
      %v2202 = vshrl.u32 %v2201, 7
      %v2203 = vsub.s32 %v2200, %v2202
      %v2204 = vrot.slane %v2092, %v2203
      %v2206 = vunpack.c.l.s4 1983009808
      %v2207 = vunpack.c.0.s8 %v2206
      %v2208 = vlaneseq
      %v2209 = vshrl.u32 %v2208, 7
      %v2210 = vsub.s32 %v2207, %v2209
      %v2211 = vrot.slane %v2099, %v2210
      %v2213 = vunpack.c.l.s4 1983009808
      %v2214 = vunpack.c.0.s8 %v2213
      %v2215 = vlaneseq
      %v2216 = vshrl.u32 %v2215, 7
      %v2217 = vsub.s32 %v2214, %v2216
      %v2218 = vrot.slane %v2106, %v2217
      %v2220 = vunpack.c.l.s4 1983009808
      %v2221 = vunpack.c.0.s8 %v2220
      %v2222 = vlaneseq
      %v2223 = vshrl.u32 %v2222, 7
      %v2224 = vsub.s32 %v2221, %v2223
      %v2225 = vrot.slane %v2113, %v2224
      %v2227 = vunpack.c.l.s4 1983009808
      %v2228 = vunpack.c.0.s8 %v2227
      %v2229 = vlaneseq
      %v2230 = vshrl.u32 %v2229, 7
      %v2231 = vsub.s32 %v2228, %v2230
      %v2232 = vrot.slane %v2120, %v2231
      %v2234 = vunpack.c.l.s4 1983009808
      %v2235 = vunpack.c.0.s8 %v2234
      %v2236 = vlaneseq
      %v2237 = vshrl.u32 %v2236, 7
      %v2238 = vsub.s32 %v2235, %v2237
      %v2239 = vrot.slane %v2127, %v2238
      %v2241 = vunpack.c.l.s4 1983009808
      %v2242 = vunpack.c.0.s8 %v2241
      %v2243 = vlaneseq
      %v2244 = vshrl.u32 %v2243, 7
      %v2245 = vsub.s32 %v2242, %v2244
      %v2246 = vrot.slane %v2134, %v2245
      %v2247 = vunpack.c.l.b16 %v2141
      %v2248 = vunpack.c.l.b16 %v2148
      %v2249 = vunpack.c.l.b16 %v2155
      %v2250 = vunpack.c.l.b16 %v2162
      %v2251 = vunpack.c.l.b16 %v2169
      %v2252 = vunpack.c.l.b16 %v2176
      %v2253 = vunpack.c.l.b16 %v2183
      %v2254 = vunpack.c.l.b16 %v2190
      %v2255 = vunpack.c.l.b16 %v2197
      %v2256 = vunpack.c.l.b16 %v2204
      %v2257 = vunpack.c.l.b16 %v2211
      %v2258 = vunpack.c.l.b16 %v2218
      %v2259 = vunpack.c.l.b16 %v2225
      %v2260 = vunpack.c.l.b16 %v2232
      %v2261 = vunpack.c.l.b16 %v2239
      %v2262 = vunpack.c.l.b16 %v2246
      %v2263 = vrot.slane %v2248, 7
      %vm2264 = vcmask 1041409
      %v2265 = vsel %vm2264, %v2263, %v2247
      %v2266 = vrot.slane %v2249, 6
      %vm2267 = vcmask 1042434
      %v2268 = vsel %vm2267, %v2266, %v2265
      %v2269 = vrot.slane %v2250, 5
      %vm2270 = vcmask 1043459
      %v2271 = vsel %vm2270, %v2269, %v2268
      %v2272 = vrot.slane %v2252, 7
      %v2273 = vsel %vm2264, %v2272, %v2251
      %v2274 = vrot.slane %v2253, 6
      %v2275 = vsel %vm2267, %v2274, %v2273
      %v2276 = vrot.slane %v2254, 5
      %v2277 = vsel %vm2270, %v2276, %v2275
      %v2278 = vrot.slane %v2256, 7
      %v2279 = vsel %vm2264, %v2278, %v2255
      %v2280 = vrot.slane %v2257, 6
      %v2281 = vsel %vm2267, %v2280, %v2279
      %v2282 = vrot.slane %v2258, 5
      %v2283 = vsel %vm2270, %v2282, %v2281
      %v2284 = vrot.slane %v2260, 7
      %v2285 = vsel %vm2264, %v2284, %v2259
      %v2286 = vrot.slane %v2261, 6
      %v2287 = vsel %vm2267, %v2286, %v2285
      %v2288 = vrot.slane %v2262, 5
      %v2289 = vsel %vm2270, %v2288, %v2287
      %v2290 = vpack.c.b16 %v2271, %v2271
      %v2291 = vpack.c.b16 %v2277, %v2277
      %v2292 = vpack.c.b16 %v2283, %v2283
      %v2293 = vpack.c.b16 %v2289, %v2289
      %v2295 = vunpack.c.l.s4 1983009808
      %v2296 = vunpack.c.0.s8 %v2295
      %v2297 = vlaneseq
      %v2298 = vshrl.u32 %v2297, 7
      %v2299 = vsub.s32 %v2296, %v2298
      %v2300 = vrot.slane %v2290, %v2299
      %v2302 = vunpack.c.l.s4 1983009808
      %v2303 = vunpack.c.0.s8 %v2302
      %v2304 = vlaneseq
      %v2305 = vshrl.u32 %v2304, 7
      %v2306 = vsub.s32 %v2303, %v2305
      %v2307 = vrot.slane %v2291, %v2306
      %v2309 = vunpack.c.l.s4 1983009808
      %v2310 = vunpack.c.0.s8 %v2309
      %v2311 = vlaneseq
      %v2312 = vshrl.u32 %v2311, 7
      %v2313 = vsub.s32 %v2310, %v2312
      %v2314 = vrot.slane %v2292, %v2313
      %v2316 = vunpack.c.l.s4 1983009808
      %v2317 = vunpack.c.0.s8 %v2316
      %v2318 = vlaneseq
      %v2319 = vshrl.u32 %v2318, 7
      %v2320 = vsub.s32 %v2317, %v2319
      %v2321 = vrot.slane %v2293, %v2320
      %2326 = vst [vmem:[%s199] sm:$0x3] %v2300
      %2327 = vst [vmem:[%s199 + $0x2] sm:$0x3] %v2307
      %2328 = vst [vmem:[%s199 + $0x4] sm:$0x3] %v2314
      %2329 = vst [vmem:[%s199 + $0x6] sm:$0x3] %v2321
      %s2330 = smul.u32 4, %s19
      %p2331 = scmp.lt.s32.totalorder %s18, 1
      %s2332 = scalar_select %p2331, %s18, 1
      %p2333 = scmp.lt.s32.totalorder %s2330, 3
      %s2334 = scalar_select %p2333, %s2330, 3
      %s2335 = smul.addr %s2332, 4
      %s2336 = sadd.s32 %s2334, %s2335
      %s2337 = smul.addr %s2336, 2
      %s2338 = scalar_lea.vmem %s3, %s2337
      // Predicated region
      $region33: #{correspondence_generation_forward.8} parent=31 // pred_check
        %p2339 = pneg %p116
      $region34: #{correspondence_generation_forward.8} parent=31 // pred_check_branch
        %2341 = sbr.rel (%p2339) target = $region36
      $region35: #{correspondence_generation_forward.8} parent=31 // pred_region
        %s2342 = smul.u32 4, %s19
      $region36: #{correspondence_generation_forward.8} parent=31 // pred_fallthru
        _
    $region32: #{correspondence_generation_forward.8} parent=5 // pred_fallthru
      _
    %p2343 = scmp.le.s32.totalorder 2, %s9
    // Predicated region
    $region37: #{correspondence_generation_forward.8} parent=5 // pred_check
      %p2344 = pneg %p2343
    $region38: #{correspondence_generation_forward.8} parent=5 // pred_check_branch
      %2346 = sbr.rel (%p2344) target = $region40
    $region39: #{correspondence_generation_forward.8} parent=5 // pred_region
      %s2347 = ssub.s32 %s9, 2
      // Predicated region
      $region41: #{correspondence_generation_forward.8} parent=39 // pred_check
        %p2348 = pneg %p122
      $region42: #{correspondence_generation_forward.8} parent=39 // pred_check_branch
        %2350 = sbr.rel (%p2348) target = $region44
      $region43: #{correspondence_generation_forward.8} parent=39 // pred_region
        %s2351 = smul.u32 4, %s21
        %p2352 = scmp.lt.s32.totalorder %s20, 1
        %s2353 = scalar_select %p2352, %s20, 1
        %p2354 = scmp.lt.s32.totalorder %s2351, 3
        %s2355 = scalar_select %p2354, %s2351, 3
        %s2356 = smul.addr %s2353, 4
        %s2357 = sadd.s32 %s2355, %s2356
        %s2358 = smul.addr %s2357, 2
        %s2359 = scalar_lea.vmem %s3, %s2358
      $region44: #{correspondence_generation_forward.8} parent=39 // pred_fallthru
        _
    $region40: #{correspondence_generation_forward.8} parent=5 // pred_fallthru
      _
  $region6: #{correspondence_generation_forward.8} parent=0 // loop_footer
    %s13 = sadd.s32 1, %s9
  $region7: #{correspondence_generation_forward.8} parent=0 // loop_footer_branch
    %8 = sbr.rel target = $region3
  $region8: #{correspondence_generation_forward.8} parent=0 // loop_exit
    _

// kernel: correspondence_generation_forward.7
$region0: #{correspondence_generation_forward.7}
  #allocation0 [shape = 'u32[]', space=smem, size = 0x4, offset = 0x4, fixed_abs, tag = 'smem constant byte address 0x4 - core index']
  #allocation1 [shape = 'u32[144,128]{1,0:T(1,128)}', space=vmem, size = 0x12000, scoped, tag = 'internal scratch']
  #allocation2 [shape = 'f32[64,128]{1,0:T(8,128)}', space=vmem, size = 0x8000, scoped, tag = 'scratch operand']
  %s0 = inlined_call_operand.vmem [shape: bf16[2,10,10,64], index: 0, kind: input, shape index: {}]
  %s1 = inlined_call_operand.vmem [shape: bf16[3,192,128], index: 1, kind: input, shape index: {}]
  %s2 = inlined_call_operand.vmem [shape: f32[1,128], index: 2, kind: input, shape index: {}]
  %s3 = inlined_call_operand.vmem [shape: bf16[2,8,8,128], index: 3, kind: output, shape index: {}]
  %s4 = sld [smem:[#allocation0]]
  $region45: #{correspondence_generation_forward.7} parent=0
    _
  %s6 = ssub.s32 1, %s4
  %s7 = scalar_select 0, %s6, %s4
  loop: start=0, step=1, limit=4
  $region2: #{correspondence_generation_forward.7} parent=0 // loop_pre_header
    _
  $region3: #{correspondence_generation_forward.7} parent=0 // loop_header
    %s9 = sphi 0, %s13
    %p10 = scmp.ge.s32.totalorder %s9, 4
    %s16 = sphi 0, %s28
    %s17 = sphi 0, %s24
    %s18 = sphi 0, %s16
    %s19 = sphi 0, %s17
    %s20 = sphi 0, %s18
    %s21 = sphi 0, %s19
    %s33 = sphi 0, %s35
    %s36 = sphi 0, %s33
    %s37 = sphi 0, %s36
    %s53 = sphi 0, %s37
    %s57 = sphi 0, %s57
    %s59 = sphi 0, %s57
    %s60 = sphi 0, %s59
    %s74 = sphi 0, %s60
    %s78 = sphi 0, %s78
    %s80 = sphi 0, %s78
    %s81 = sphi 0, %s80
    %s95 = sphi 0, %s81
    %s103 = sphi 0, %s105
    %s106 = sphi 0, %s103
    %s107 = sphi 0, %s106
    %s123 = sphi 0, %s107
  $region4: #{correspondence_generation_forward.7} parent=0 // loop_header_branch
    %12 = sbr.rel (%p10) target = $region8
  $region5: #{correspondence_generation_forward.7} parent=0 // loop_body
    %s14 = ssub.s32 %s9, 1
    %s15 = ssub.s32 %s9, 2
    %s22 = sadd.s32 1, %s17
    %p23 = scmp.ge.s32.totalorder %s22, 1
    %s24 = scalar_select %p23, 0, %s22
    %s25 = sadd.s32 1, %s16
    %s26 = scalar_select %p23, %s25, %s16
    %p27 = scmp.ge.s32.totalorder %s26, 2
    %s28 = scalar_select %p27, 0, %s26
    %s29 = sadd.s32 %s16, %s17
    %s30 = sadd.s32 %s28, %s24
    %s31 = ssub.s32 %s29, %s30
    %p32 = scmp.eq.s32.totalorder %s31, 0
    %s34 = sadd.s32 %s33, 1
    %s35 = scalar_select %p32, %s33, %s34
    %p38 = pneg %p32
    %p39 = scmp.eq.s32.totalorder %s9, 1
    %p40 = por %p38, %p39
    %p41 = scmp.ne.s32.totalorder %s33, %s36
    %p42 = scmp.eq.s32.totalorder %s9, 0
    %p43 = por %p41, %p42
    %p44 = scmp.ne.s32.totalorder %s33, %s36
    %p45 = scmp.eq.s32.totalorder %s14, 1
    %p46 = por %p44, %p45
    %p47 = scmp.ne.s32.totalorder %s36, %s37
    %p48 = scmp.eq.s32.totalorder %s14, 0
    %p49 = por %p47, %p48
    %p50 = scmp.ne.s32.totalorder %s36, %s37
    %p51 = scmp.eq.s32.totalorder %s15, 1
    %p52 = por %p50, %p51
    %p54 = scmp.ne.s32.totalorder %s37, %s53
    %p55 = scmp.eq.s32.totalorder %s15, 0
    %p56 = por %p54, %p55
    %s58 = sadd.s32 %s57, 1
    %p61 = scmp.eq.s32.totalorder %s9, 1
    %p62 = scmp.ne.s32.totalorder %s57, %s59
    %p63 = scmp.eq.s32.totalorder %s9, 0
    %p64 = por %p62, %p63
    %p65 = scmp.ne.s32.totalorder %s57, %s59
    %p66 = scmp.eq.s32.totalorder %s14, 1
    %p67 = por %p65, %p66
    %p68 = scmp.ne.s32.totalorder %s59, %s60
    %p69 = scmp.eq.s32.totalorder %s14, 0
    %p70 = por %p68, %p69
    %p71 = scmp.ne.s32.totalorder %s59, %s60
    %p72 = scmp.eq.s32.totalorder %s15, 1
    %p73 = por %p71, %p72
    %p75 = scmp.ne.s32.totalorder %s60, %s74
    %p76 = scmp.eq.s32.totalorder %s15, 0
    %p77 = por %p75, %p76
    %s79 = sadd.s32 %s78, 1
    %p82 = scmp.eq.s32.totalorder %s9, 1
    %p83 = scmp.ne.s32.totalorder %s78, %s80
    %p84 = scmp.eq.s32.totalorder %s9, 0
    %p85 = por %p83, %p84
    %p86 = scmp.ne.s32.totalorder %s78, %s80
    %p87 = scmp.eq.s32.totalorder %s14, 1
    %p88 = por %p86, %p87
    %p89 = scmp.ne.s32.totalorder %s80, %s81
    %p90 = scmp.eq.s32.totalorder %s14, 0
    %p91 = por %p89, %p90
    %p92 = scmp.ne.s32.totalorder %s80, %s81
    %p93 = scmp.eq.s32.totalorder %s15, 1
    %p94 = por %p92, %p93
    %p96 = scmp.ne.s32.totalorder %s81, %s95
    %p97 = scmp.eq.s32.totalorder %s15, 0
    %p98 = por %p96, %p97
    %s99 = ssub.s32 %s16, %s28
    %s100 = ssub.s32 %s17, %s24
    %s101 = sor.u32 %s99, %s100
    %p102 = scmp.eq.s32.totalorder %s101, 0
    %s104 = sadd.s32 %s103, 1
    %s105 = scalar_select %p102, %s103, %s104
    %p108 = pneg %p102
    %p109 = scmp.eq.s32.totalorder %s9, 1
    %p110 = por %p108, %p109
    %p111 = scmp.ne.s32.totalorder %s103, %s106
    %p112 = scmp.eq.s32.totalorder %s9, 0
    %p113 = por %p111, %p112
    %p114 = scmp.ne.s32.totalorder %s103, %s106
    %p115 = scmp.eq.s32.totalorder %s14, 1
    %p116 = por %p114, %p115
    %p117 = scmp.ne.s32.totalorder %s106, %s107
    %p118 = scmp.eq.s32.totalorder %s14, 0
    %p119 = por %p117, %p118
    %p120 = scmp.ne.s32.totalorder %s106, %s107
    %p121 = scmp.eq.s32.totalorder %s15, 1
    %p122 = por %p120, %p121
    %p124 = scmp.ne.s32.totalorder %s107, %s123
    %p125 = scmp.eq.s32.totalorder %s15, 0
    %p126 = por %p124, %p125
    %p127 = scmp.le.s32.totalorder 1, %s9
    %p128 = scmp.lt.s32.totalorder %s9, 3
    %p129 = pnand %p127, %p128
    %p130 = pneg %p129
    // Predicated region
    $region9: #{correspondence_generation_forward.7} parent=5 // pred_check
      _
    $region10: #{correspondence_generation_forward.7} parent=5 // pred_check_branch
      %132 = sbr.rel (%p129) target = $region12
    $region11: #{correspondence_generation_forward.7} parent=5 // pred_region
      %s133 = ssub.s32 %s9, 1
      // Predicated region
      $region13: #{correspondence_generation_forward.7} parent=11 // pred_check
        %p134 = pneg %p70
      $region14: #{correspondence_generation_forward.7} parent=11 // pred_check_branch
        %136 = sbr.rel (%p134) target = $region16
      $region15: #{correspondence_generation_forward.7} parent=11 // pred_region
        _
      $region16: #{correspondence_generation_forward.7} parent=11 // pred_fallthru
        _
      // Predicated region
      $region17: #{correspondence_generation_forward.7} parent=11 // pred_check
        %p137 = pneg %p91
      $region18: #{correspondence_generation_forward.7} parent=11 // pred_check_branch
        %139 = sbr.rel (%p137) target = $region20
      $region19: #{correspondence_generation_forward.7} parent=11 // pred_region
        _
      $region20: #{correspondence_generation_forward.7} parent=11 // pred_fallthru
        _
    $region12: #{correspondence_generation_forward.7} parent=5 // pred_fallthru
      _
    %p140 = scmp.lt.s32.totalorder %s9, 2
    // Predicated region
    $region21: #{correspondence_generation_forward.7} parent=5 // pred_check
      %p141 = pneg %p140
    $region22: #{correspondence_generation_forward.7} parent=5 // pred_check_branch
      %143 = sbr.rel (%p141) target = $region24
    $region23: #{correspondence_generation_forward.7} parent=5 // pred_region
      // Predicated region
      $region25: #{correspondence_generation_forward.7} parent=23 // pred_check
        %p144 = pneg %p43
      $region26: #{correspondence_generation_forward.7} parent=23 // pred_check_branch
        %146 = sbr.rel (%p144) target = $region28
      $region27: #{correspondence_generation_forward.7} parent=23 // pred_region
        %s147 = sadd.s32 %s16, %s17
        %p148 = scmp.lt.s32.totalorder %s147, 1
        %s149 = scalar_select %p148, %s147, 1
        %s150 = smul.addr %s149, 20
        %s151 = smul.addr %s150, 4
        %s152 = scalar_lea.vmem %s0, %s151
        %s153 = sadd.s32 %s16, %s17
      $region28: #{correspondence_generation_forward.7} parent=23 // pred_fallthru
        _
    $region24: #{correspondence_generation_forward.7} parent=5 // pred_fallthru
      _
    %p154 = scmp.le.s32.totalorder 1, %s9
    %p155 = scmp.lt.s32.totalorder %s9, 3
    %p156 = pnand %p154, %p155
    %p157 = pneg %p156
    // Predicated region
    $region29: #{correspondence_generation_forward.7} parent=5 // pred_check
      _
    $region30: #{correspondence_generation_forward.7} parent=5 // pred_check_branch
      %159 = sbr.rel (%p156) target = $region32
    $region31: #{correspondence_generation_forward.7} parent=5 // pred_region
      %s160 = ssub.s32 %s9, 1
      %s161 = sadd.s32 %s18, %s19
      %p162 = scmp.lt.s32.totalorder %s161, 1
      %s163 = scalar_select %p162, %s161, 1
      %s164 = smul.addr %s163, 20
      %s165 = smul.addr %s164, 4
      %s166 = scalar_lea.vmem %s0, %s165
      %p167 = pneg %p49
      %p168 = pneg %p46
      %p169 = pneg %p70
      %p170 = pneg %p67
      %p171 = pneg %p91
      %p172 = pneg %p88
      %p173 = pneg %p119
      %p174 = pneg %p116
      %s175 = smul.u32 8, %s19
      %p176 = scmp.lt.s32.totalorder %s18, 1
      %s177 = scalar_select %p176, %s18, 1
      %p178 = scmp.lt.s32.totalorder %s175, 7
      %s179 = scalar_select %p178, %s175, 7
      %s180 = smul.addr %s177, 8
      %s181 = sadd.s32 %s179, %s180
      %s182 = smul.addr %s181, 4
      %s183 = scalar_lea.vmem %s3, %s182
      %s184 = sadd.s32 %s18, %s19
      %p185 = scmp.lt.s32.totalorder %s184, 1
      %s186 = scalar_select %p185, %s184, 1
      %s187 = smul.addr %s186, 20
      %s188 = smul.addr %s187, 4
      %s189 = scalar_lea.vmem %s0, %s188
      %s190 = sadd.s32 %s18, %s19
      %s191 = smul.u32 8, %s19
      %p192 = scmp.lt.s32.totalorder %s18, 1
      %s193 = scalar_select %p192, %s18, 1
      %p194 = scmp.lt.s32.totalorder %s191, 7
      %s195 = scalar_select %p194, %s191, 7
      %s196 = smul.addr %s193, 8
      %s197 = sadd.s32 %s195, %s196
      %s198 = smul.addr %s197, 4
      %s199 = scalar_lea.vmem %s3, %s198
      %s200 = smul.u32 8, %s19
      %v202 = vld [vmem:[%s189] sm:$0xf]
      %v203 = vld [vmem:[%s189 + $0x8] sm:$0xf]
      %v204 = vld [vmem:[%s189 + $0x10] sm:$0xf]
      %v205 = vld [vmem:[%s189 + $0x18] sm:$0xf]
      %v206 = vld [vmem:[%s189 + $0x20] sm:$0xf]
      %v207 = vld [vmem:[%s189 + $0x28] sm:$0xf]
      %v208 = vld [vmem:[%s189 + $0x30] sm:$0xf]
      %v209 = vld [vmem:[%s189 + $0x38] sm:$0xf]
      %v210 = vld [vmem:[%s1] sm:$0xf]
      %v211 = vld [vmem:[%s1 + $0x4] sm:$0xf]
      %v212 = vld [vmem:[%s1 + $0x8] sm:$0xf]
      %v213 = vld [vmem:[%s1 + $0xc] sm:$0xf]
      %v214 = vld [vmem:[%s1 + $0x10] sm:$0xf]
      %v215 = vld [vmem:[%s1 + $0x14] sm:$0xf]
      %v216 = vld [vmem:[%s1 + $0x18] sm:$0xf]
      %v217 = vld [vmem:[%s1 + $0x1c] sm:$0xf]
      %v226 = vunpack.c.l.b16 %v202
      %v227 = vunpack.c.l.b16 %v203
      %v228 = vunpack.c.l.b16 %v204
      %v229 = vunpack.c.l.b16 %v205
      %v230 = vunpack.c.l.b16 %v206
      %v231 = vunpack.c.l.b16 %v207
      %v232 = vunpack.c.l.b16 %v208
      %v233 = vunpack.c.l.b16 %v209
      %v234 = vpack.c.b16 %v227, %v226
      %v235 = vpack.c.b16 %v229, %v228
      %v236 = vpack.c.b16 %v231, %v230
      %v237 = vpack.c.b16 %v233, %v232
      %v246 = vunpack.c.l.b16 %v210
      %v247 = vunpack.c.l.b16 %v211
      %v248 = vunpack.c.l.b16 %v212
      %v249 = vunpack.c.l.b16 %v213
      %v250 = vunpack.c.l.b16 %v214
      %v251 = vunpack.c.l.b16 %v215
      %v252 = vunpack.c.l.b16 %v216
      %v253 = vunpack.c.l.b16 %v217
      %v254 = vpack.c.b16 %v247, %v246
      %v255 = vpack.c.b16 %v249, %v248
      %v256 = vpack.c.b16 %v251, %v250
      %v257 = vpack.c.b16 %v253, %v252
      %vm262 = vcmask 523264
      %v264 = vsel %vm262, %v234, 0
      %v267 = vsel %vm262, %v235, 0
      %v270 = vsel %vm262, %v236, 0
      %v273 = vsel %vm262, %v237, 0
      %275 = vmatprep.subr.bf16.mxu0 0
      %276 = vmatpush1.bf16.msra.mxu0 %v254
      %277 = vmatprep.subr.bf16.mxu0 0
      %278 = vmatpush1.bf16.msra.mxu0 %v255
      %279 = vmatprep.subr.bf16.mxu0 0
      %280 = vmatpush1.bf16.msra.mxu0 %v256
      %281 = vmatprep.subr.bf16.mxu0 0
      %282 = vmatpush1.bf16.msra.mxu0 %v257
      %283 = vmatprep.subr.bf16.mxu0 0
      %284 = vmatpush1.bf16.msra.mxu0 0
      %285 = vmatprep.subr.bf16.mxu0 0
      %286 = vmatpush1.bf16.msra.mxu0 0
      %287 = vmatprep.subr.bf16.mxu0 0
      %288 = vmatpush1.bf16.msra.mxu0 0
      %289 = vmatprep.subr.bf16.mxu0 0
      %290 = vmatpush1.bf16.msra.mxu0 0
      %291 = vmatprep.subr.bf16.mxu0 0
      %292 = vmatpush1.bf16.msra.mxu0 0
      %293 = vmatprep.subr.bf16.mxu0 0
      %294 = vmatpush1.bf16.msra.mxu0 0
      %295 = vmatprep.subr.bf16.mxu0 0
      %296 = vmatpush1.bf16.msra.mxu0 0
      %297 = vmatprep.subr.bf16.mxu0 0
      %298 = vmatpush1.bf16.msra.mxu0 0
      %299 = vmatprep.subr.bf16.mxu0 0
      %300 = vmatpush1.bf16.msra.mxu0 0
      %301 = vmatprep.subr.bf16.mxu0 0
      %302 = vmatpush1.bf16.msra.mxu0 0
      %303 = vmatprep.subr.bf16.mxu0 0
      %304 = vmatpush1.bf16.msra.mxu0 0
      %305 = vmatprep.subr.bf16.mxu0 0
      %306 = vmatpush1.bf16.msra.mxu0 0
      %307 = vmatprep.mubr.bf16.mxu0 0
      %308 = vmatmul.mubr.bf16.gmra.mrb[0].mxu0 %v264
      %v309 = vpop.f32.mrb[0].mxu0
      %v310 = vadd.f32 0.0, %v309
      %v311 = vpop.f32.mrb[0].mxu0
      %v312 = vpop.f32.mrb[0].mxu0
      %v313 = vadd.f32 0.0, %v312
      %v314 = vpop.f32.mrb[0].mxu0
      %315 = vmatprep.mubr.bf16.mxu0 0
      %316 = vmatmul.mubr.bf16.gmra.mrb[0].mxu0 %v267
      %v317 = vpop.f32.mrb[0].mxu0
      %v318 = vadd.f32 0.0, %v317
      %v319 = vpop.f32.mrb[0].mxu0
      %v320 = vpop.f32.mrb[0].mxu0
      %v321 = vadd.f32 0.0, %v320
      %v322 = vpop.f32.mrb[0].mxu0
      %323 = vmatprep.mubr.bf16.mxu0 0
      %324 = vmatmul.mubr.bf16.gmra.mrb[0].mxu0 %v270
      %v325 = vpop.f32.mrb[0].mxu0
      %v326 = vadd.f32 0.0, %v325
      %v327 = vpop.f32.mrb[0].mxu0
      %v328 = vpop.f32.mrb[0].mxu0
      %v329 = vadd.f32 0.0, %v328
      %v330 = vpop.f32.mrb[0].mxu0
      %331 = vmatprep.mubr.bf16.mxu0 0
      %332 = vmatmul.mubr.bf16.gmra.mrb[0].mxu0 %v273
      %v333 = vpop.f32.mrb[0].mxu0
      %v334 = vadd.f32 0.0, %v333
      %v335 = vpop.f32.mrb[0].mxu0
      %v336 = vpop.f32.mrb[0].mxu0
      %v337 = vadd.f32 0.0, %v336
      %v338 = vpop.f32.mrb[0].mxu0
      %339 = vdwg.mxu0
      %340 = vst [vmem:[#allocation2] sm:$0xff] %v310
      %341 = vst [vmem:[#allocation2 + $0x8] sm:$0xff] %v313
      %342 = vst [vmem:[#allocation2 + $0x10] sm:$0xff] %v318
      %343 = vst [vmem:[#allocation2 + $0x18] sm:$0xff] %v321
      %344 = vst [vmem:[#allocation2 + $0x20] sm:$0xff] %v326
      %345 = vst [vmem:[#allocation2 + $0x28] sm:$0xff] %v329
      %346 = vst [vmem:[#allocation2 + $0x30] sm:$0xff] %v334
      %347 = vst [vmem:[#allocation2 + $0x38] sm:$0xff] %v337
      %v348 = vld [vmem:[%s189] sm:$0xf]
      %v349 = vld [vmem:[%s189 + $0x4] sm:$0x1]
      %v350 = vld [vmem:[%s189 + $0x8] sm:$0xf]
      %v351 = vld [vmem:[%s189 + $0xc] sm:$0x1]
      %v352 = vld [vmem:[%s189 + $0x10] sm:$0xf]
      %v353 = vld [vmem:[%s189 + $0x14] sm:$0x1]
      %v354 = vld [vmem:[%s189 + $0x18] sm:$0xf]
      %v355 = vld [vmem:[%s189 + $0x1c] sm:$0x1]
      %v356 = vld [vmem:[%s189 + $0x20] sm:$0xf]
      %v357 = vld [vmem:[%s189 + $0x24] sm:$0x1]
      %v358 = vld [vmem:[%s189 + $0x28] sm:$0xf]
      %v359 = vld [vmem:[%s189 + $0x2c] sm:$0x1]
      %v360 = vld [vmem:[%s189 + $0x30] sm:$0xf]
      %v361 = vld [vmem:[%s189 + $0x34] sm:$0x1]
      %v362 = vld [vmem:[%s189 + $0x38] sm:$0xf]
      %v363 = vld [vmem:[%s189 + $0x3c] sm:$0x1]
      %vm364 = vsmask.f32 3328
      %vm365 = vsmask.f32 7440
      %vm366 = vmor %vm364, %vm365
      %v368 = vshrl.u32 %v348, 16
      %v370 = vrot.slane %v368, 4
      %v371 = vshll.u32 %v348, 16
      %v373 = vrot.slane %v371, 5
      %v374 = vor.u32 %v370, %v373
      %v375 = vrot.slane %v374, 4
      %v377 = vshll.u32 %v349, 16
      %v379 = vrot.slane %v377, 5
      %v380 = vsel %vm366, %v375, %v379
      %v382 = vshrl.u32 %v350, 16
      %v384 = vrot.slane %v382, 4
      %v385 = vshll.u32 %v350, 16
      %v387 = vrot.slane %v385, 5
      %v388 = vor.u32 %v384, %v387
      %v389 = vrot.slane %v388, 4
      %v391 = vshll.u32 %v351, 16
      %v393 = vrot.slane %v391, 5
      %v394 = vsel %vm366, %v389, %v393
      %v396 = vshrl.u32 %v352, 16
      %v398 = vrot.slane %v396, 4
      %v399 = vshll.u32 %v352, 16
      %v401 = vrot.slane %v399, 5
      %v402 = vor.u32 %v398, %v401
      %v403 = vrot.slane %v402, 4
      %v405 = vshll.u32 %v353, 16
      %v407 = vrot.slane %v405, 5
      %v408 = vsel %vm366, %v403, %v407
      %v410 = vshrl.u32 %v354, 16
      %v412 = vrot.slane %v410, 4
      %v413 = vshll.u32 %v354, 16
      %v415 = vrot.slane %v413, 5
      %v416 = vor.u32 %v412, %v415
      %v417 = vrot.slane %v416, 4
      %v419 = vshll.u32 %v355, 16
      %v421 = vrot.slane %v419, 5
      %v422 = vsel %vm366, %v417, %v421
      %v424 = vshrl.u32 %v356, 16
      %v426 = vrot.slane %v424, 4
      %v427 = vshll.u32 %v356, 16
      %v429 = vrot.slane %v427, 5
      %v430 = vor.u32 %v426, %v429
      %v431 = vrot.slane %v430, 4
      %v433 = vshll.u32 %v357, 16
      %v435 = vrot.slane %v433, 5
      %v436 = vsel %vm366, %v431, %v435
      %v438 = vshrl.u32 %v358, 16
      %v440 = vrot.slane %v438, 4
      %v441 = vshll.u32 %v358, 16
      %v443 = vrot.slane %v441, 5
      %v444 = vor.u32 %v440, %v443
      %v445 = vrot.slane %v444, 4
      %v447 = vshll.u32 %v359, 16
      %v449 = vrot.slane %v447, 5
      %v450 = vsel %vm366, %v445, %v449
      %v452 = vshrl.u32 %v360, 16
      %v454 = vrot.slane %v452, 4
      %v455 = vshll.u32 %v360, 16
      %v457 = vrot.slane %v455, 5
      %v458 = vor.u32 %v454, %v457
      %v459 = vrot.slane %v458, 4
      %v461 = vshll.u32 %v361, 16
      %v463 = vrot.slane %v461, 5
      %v464 = vsel %vm366, %v459, %v463
      %v466 = vshrl.u32 %v362, 16
      %v468 = vrot.slane %v466, 4
      %v469 = vshll.u32 %v362, 16
      %v471 = vrot.slane %v469, 5
      %v472 = vor.u32 %v468, %v471
      %v473 = vrot.slane %v472, 4
      %v475 = vshll.u32 %v363, 16
      %v477 = vrot.slane %v475, 5
      %v478 = vsel %vm366, %v473, %v477
      %v479 = vld [vmem:[%s1 + $0x20] sm:$0xf]
      %v480 = vld [vmem:[%s1 + $0x24] sm:$0xf]
      %v481 = vld [vmem:[%s1 + $0x28] sm:$0xf]
      %v482 = vld [vmem:[%s1 + $0x2c] sm:$0xf]
      %v483 = vld [vmem:[%s1 + $0x30] sm:$0xf]
      %v484 = vld [vmem:[%s1 + $0x34] sm:$0xf]
      %v485 = vld [vmem:[%s1 + $0x38] sm:$0xf]
      %v486 = vld [vmem:[%s1 + $0x3c] sm:$0xf]
      %v487 = vunpack.c.l.b16 %v380
      %v488 = vunpack.c.l.b16 %v394
      %v489 = vunpack.c.l.b16 %v408
      %v490 = vunpack.c.l.b16 %v422
      %v491 = vunpack.c.l.b16 %v436
      %v492 = vunpack.c.l.b16 %v450
      %v493 = vunpack.c.l.b16 %v464
      %v494 = vunpack.c.l.b16 %v478
      %v495 = vpack.c.b16 %v488, %v487
      %v496 = vpack.c.b16 %v490, %v489
      %v497 = vpack.c.b16 %v492, %v491
      %v498 = vpack.c.b16 %v494, %v493
      %v507 = vunpack.c.l.b16 %v479
      %v508 = vunpack.c.l.b16 %v480
      %v509 = vunpack.c.l.b16 %v481
      %v510 = vunpack.c.l.b16 %v482
      %v511 = vunpack.c.l.b16 %v483
      %v512 = vunpack.c.l.b16 %v484
      %v513 = vunpack.c.l.b16 %v485
      %v514 = vunpack.c.l.b16 %v486
      %v515 = vpack.c.b16 %v508, %v507
      %v516 = vpack.c.b16 %v510, %v509
      %v517 = vpack.c.b16 %v512, %v511
      %v518 = vpack.c.b16 %v514, %v513
      %v524 = vsel %vm262, %v495, 0
      %v527 = vsel %vm262, %v496, 0
      %v530 = vsel %vm262, %v497, 0
      %v533 = vsel %vm262, %v498, 0
      %535 = vmatprep.subr.bf16.mxu0 0
      %536 = vmatpush1.bf16.msra.mxu0 %v515
      %537 = vmatprep.subr.bf16.mxu0 0
      %538 = vmatpush1.bf16.msra.mxu0 %v516
      %539 = vmatprep.subr.bf16.mxu0 0
      %540 = vmatpush1.bf16.msra.mxu0 %v517
      %541 = vmatprep.subr.bf16.mxu0 0
      %542 = vmatpush1.bf16.msra.mxu0 %v518
      %543 = vmatprep.subr.bf16.mxu0 0
      %544 = vmatpush1.bf16.msra.mxu0 0
      %545 = vmatprep.subr.bf16.mxu0 0
      %546 = vmatpush1.bf16.msra.mxu0 0
      %547 = vmatprep.subr.bf16.mxu0 0
      %548 = vmatpush1.bf16.msra.mxu0 0
      %549 = vmatprep.subr.bf16.mxu0 0
      %550 = vmatpush1.bf16.msra.mxu0 0
      %551 = vmatprep.subr.bf16.mxu0 0
      %552 = vmatpush1.bf16.msra.mxu0 0
      %553 = vmatprep.subr.bf16.mxu0 0
      %554 = vmatpush1.bf16.msra.mxu0 0
      %555 = vmatprep.subr.bf16.mxu0 0
      %556 = vmatpush1.bf16.msra.mxu0 0
      %557 = vmatprep.subr.bf16.mxu0 0
      %558 = vmatpush1.bf16.msra.mxu0 0
      %559 = vmatprep.subr.bf16.mxu0 0
      %560 = vmatpush1.bf16.msra.mxu0 0
      %561 = vmatprep.subr.bf16.mxu0 0
      %562 = vmatpush1.bf16.msra.mxu0 0
      %563 = vmatprep.subr.bf16.mxu0 0
      %564 = vmatpush1.bf16.msra.mxu0 0
      %565 = vmatprep.subr.bf16.mxu0 0
      %566 = vmatpush1.bf16.msra.mxu0 0
      %567 = vmatprep.mubr.bf16.mxu0 0
      %568 = vmatmul.mubr.bf16.gmra.mrb[0].mxu0 %v524
      %v569 = vpop.f32.mrb[0].mxu0
      %v570 = vadd.f32 0.0, %v569
      %v571 = vpop.f32.mrb[0].mxu0
      %v572 = vpop.f32.mrb[0].mxu0
      %v573 = vadd.f32 0.0, %v572
      %v574 = vpop.f32.mrb[0].mxu0
      %575 = vmatprep.mubr.bf16.mxu0 0
      %576 = vmatmul.mubr.bf16.gmra.mrb[0].mxu0 %v527
      %v577 = vpop.f32.mrb[0].mxu0
      %v578 = vadd.f32 0.0, %v577
      %v579 = vpop.f32.mrb[0].mxu0
      %v580 = vpop.f32.mrb[0].mxu0
      %v581 = vadd.f32 0.0, %v580
      %v582 = vpop.f32.mrb[0].mxu0
      %583 = vmatprep.mubr.bf16.mxu0 0
      %584 = vmatmul.mubr.bf16.gmra.mrb[0].mxu0 %v530
      %v585 = vpop.f32.mrb[0].mxu0
      %v586 = vadd.f32 0.0, %v585
      %v587 = vpop.f32.mrb[0].mxu0
      %v588 = vpop.f32.mrb[0].mxu0
      %v589 = vadd.f32 0.0, %v588
      %v590 = vpop.f32.mrb[0].mxu0
      %591 = vmatprep.mubr.bf16.mxu0 0
      %592 = vmatmul.mubr.bf16.gmra.mrb[0].mxu0 %v533
      %v593 = vpop.f32.mrb[0].mxu0
      %v594 = vadd.f32 0.0, %v593
      %v595 = vpop.f32.mrb[0].mxu0
      %v596 = vpop.f32.mrb[0].mxu0
      %v597 = vadd.f32 0.0, %v596
      %v598 = vpop.f32.mrb[0].mxu0
      %599 = vdwg.mxu0
      %v600 = vld [vmem:[#allocation2] sm:$0xff]
      %v601 = vld [vmem:[#allocation2 + $0x8] sm:$0xff]
      %v602 = vld [vmem:[#allocation2 + $0x10] sm:$0xff]
      %v603 = vld [vmem:[#allocation2 + $0x18] sm:$0xff]
      %v604 = vld [vmem:[#allocation2 + $0x20] sm:$0xff]
      %v605 = vld [vmem:[#allocation2 + $0x28] sm:$0xff]
      %v606 = vld [vmem:[#allocation2 + $0x30] sm:$0xff]
      %v607 = vld [vmem:[#allocation2 + $0x38] sm:$0xff]
      %v608 = vadd.f32 %v600, %v570
      %v609 = vadd.f32 %v601, %v573
      %v610 = vadd.f32 %v602, %v578
      %v611 = vadd.f32 %v603, %v581
      %v612 = vadd.f32 %v604, %v586
      %v613 = vadd.f32 %v605, %v589
      %v614 = vadd.f32 %v606, %v594
      %v615 = vadd.f32 %v607, %v597
      %616 = vst [vmem:[#allocation2] sm:$0xff] %v608
      %617 = vst [vmem:[#allocation2 + $0x8] sm:$0xff] %v609
      %618 = vst [vmem:[#allocation2 + $0x10] sm:$0xff] %v610
      %619 = vst [vmem:[#allocation2 + $0x18] sm:$0xff] %v611
      %620 = vst [vmem:[#allocation2 + $0x20] sm:$0xff] %v612
      %621 = vst [vmem:[#allocation2 + $0x28] sm:$0xff] %v613
      %622 = vst [vmem:[#allocation2 + $0x30] sm:$0xff] %v614
      %623 = vst [vmem:[#allocation2 + $0x38] sm:$0xff] %v615
      %v624 = vld [vmem:[%s189] sm:$0xe]
      %v625 = vld [vmem:[%s189 + $0x4] sm:$0x1]
      %v626 = vld [vmem:[%s189 + $0x8] sm:$0xe]
      %v627 = vld [vmem:[%s189 + $0xc] sm:$0x1]
      %v628 = vld [vmem:[%s189 + $0x10] sm:$0xe]
      %v629 = vld [vmem:[%s189 + $0x14] sm:$0x1]
      %v630 = vld [vmem:[%s189 + $0x18] sm:$0xe]
      %v631 = vld [vmem:[%s189 + $0x1c] sm:$0x1]
      %v632 = vld [vmem:[%s189 + $0x20] sm:$0xe]
      %v633 = vld [vmem:[%s189 + $0x24] sm:$0x1]
      %v634 = vld [vmem:[%s189 + $0x28] sm:$0xe]
      %v635 = vld [vmem:[%s189 + $0x2c] sm:$0x1]
      %v636 = vld [vmem:[%s189 + $0x30] sm:$0xe]
      %v637 = vld [vmem:[%s189 + $0x34] sm:$0x1]
      %v638 = vld [vmem:[%s189 + $0x38] sm:$0xe]
      %v639 = vld [vmem:[%s189 + $0x3c] sm:$0x1]
      %vm656 = vcmask 1042432
      %vm657 = vcmask 1046532
      %vm658 = vmor %vm656, %vm657
      %v659 = vrot.slane %v624, 5
      %v660 = vrot.slane %v659, 4
      %v661 = vrot.slane %v625, 5
      %v662 = vsel %vm658, %v660, %v661
      %v663 = vrot.slane %v626, 5
      %v664 = vrot.slane %v663, 4
      %v665 = vrot.slane %v627, 5
      %v666 = vsel %vm658, %v664, %v665
      %v667 = vrot.slane %v628, 5
      %v668 = vrot.slane %v667, 4
      %v669 = vrot.slane %v629, 5
      %v670 = vsel %vm658, %v668, %v669
      %v671 = vrot.slane %v630, 5
      %v672 = vrot.slane %v671, 4
      %v673 = vrot.slane %v631, 5
      %v674 = vsel %vm658, %v672, %v673
      %v675 = vrot.slane %v632, 5
      %v676 = vrot.slane %v675, 4
      %v677 = vrot.slane %v633, 5
      %v678 = vsel %vm658, %v676, %v677
      %v679 = vrot.slane %v634, 5
      %v680 = vrot.slane %v679, 4
      %v681 = vrot.slane %v635, 5
      %v682 = vsel %vm658, %v680, %v681
      %v683 = vrot.slane %v636, 5
      %v684 = vrot.slane %v683, 4
      %v685 = vrot.slane %v637, 5
      %v686 = vsel %vm658, %v684, %v685
      %v687 = vrot.slane %v638, 5
      %v688 = vrot.slane %v687, 4
      %v689 = vrot.slane %v639, 5
      %v690 = vsel %vm658, %v688, %v689
      %v691 = vld [vmem:[%s1 + $0x40] sm:$0xf]
      %v692 = vld [vmem:[%s1 + $0x44] sm:$0xf]
      %v693 = vld [vmem:[%s1 + $0x48] sm:$0xf]
      %v694 = vld [vmem:[%s1 + $0x4c] sm:$0xf]
      %v695 = vld [vmem:[%s1 + $0x50] sm:$0xf]
      %v696 = vld [vmem:[%s1 + $0x54] sm:$0xf]
      %v697 = vld [vmem:[%s1 + $0x58] sm:$0xf]
      %v698 = vld [vmem:[%s1 + $0x5c] sm:$0xf]
      %v699 = vunpack.c.l.b16 %v662
      %v700 = vunpack.c.l.b16 %v666
      %v701 = vunpack.c.l.b16 %v670
      %v702 = vunpack.c.l.b16 %v674
      %v703 = vunpack.c.l.b16 %v678
      %v704 = vunpack.c.l.b16 %v682
      %v705 = vunpack.c.l.b16 %v686
      %v706 = vunpack.c.l.b16 %v690
      %v707 = vpack.c.b16 %v700, %v699
      %v708 = vpack.c.b16 %v702, %v701
      %v709 = vpack.c.b16 %v704, %v703
      %v710 = vpack.c.b16 %v706, %v705
      %v719 = vunpack.c.l.b16 %v691
      %v720 = vunpack.c.l.b16 %v692
      %v721 = vunpack.c.l.b16 %v693
      %v722 = vunpack.c.l.b16 %v694
      %v723 = vunpack.c.l.b16 %v695
      %v724 = vunpack.c.l.b16 %v696
      %v725 = vunpack.c.l.b16 %v697
      %v726 = vunpack.c.l.b16 %v698
      %v727 = vpack.c.b16 %v720, %v719
      %v728 = vpack.c.b16 %v722, %v721
      %v729 = vpack.c.b16 %v724, %v723
      %v730 = vpack.c.b16 %v726, %v725
      %v736 = vsel %vm262, %v707, 0
      %v739 = vsel %vm262, %v708, 0
      %v742 = vsel %vm262, %v709, 0
      %v745 = vsel %vm262, %v710, 0
      %747 = vmatprep.subr.bf16.mxu0 0
      %748 = vmatpush1.bf16.msra.mxu0 %v727
      %749 = vmatprep.subr.bf16.mxu0 0
      %750 = vmatpush1.bf16.msra.mxu0 %v728
      %751 = vmatprep.subr.bf16.mxu0 0
      %752 = vmatpush1.bf16.msra.mxu0 %v729
      %753 = vmatprep.subr.bf16.mxu0 0
      %754 = vmatpush1.bf16.msra.mxu0 %v730
      %755 = vmatprep.subr.bf16.mxu0 0
      %756 = vmatpush1.bf16.msra.mxu0 0
      %757 = vmatprep.subr.bf16.mxu0 0
      %758 = vmatpush1.bf16.msra.mxu0 0
      %759 = vmatprep.subr.bf16.mxu0 0
      %760 = vmatpush1.bf16.msra.mxu0 0
      %761 = vmatprep.subr.bf16.mxu0 0
      %762 = vmatpush1.bf16.msra.mxu0 0
      %763 = vmatprep.subr.bf16.mxu0 0
      %764 = vmatpush1.bf16.msra.mxu0 0
      %765 = vmatprep.subr.bf16.mxu0 0
      %766 = vmatpush1.bf16.msra.mxu0 0
      %767 = vmatprep.subr.bf16.mxu0 0
      %768 = vmatpush1.bf16.msra.mxu0 0
      %769 = vmatprep.subr.bf16.mxu0 0
      %770 = vmatpush1.bf16.msra.mxu0 0
      %771 = vmatprep.subr.bf16.mxu0 0
      %772 = vmatpush1.bf16.msra.mxu0 0
      %773 = vmatprep.subr.bf16.mxu0 0
      %774 = vmatpush1.bf16.msra.mxu0 0
      %775 = vmatprep.subr.bf16.mxu0 0
      %776 = vmatpush1.bf16.msra.mxu0 0
      %777 = vmatprep.subr.bf16.mxu0 0
      %778 = vmatpush1.bf16.msra.mxu0 0
      %779 = vmatprep.mubr.bf16.mxu0 0
      %780 = vmatmul.mubr.bf16.gmra.mrb[0].mxu0 %v736
      %v781 = vpop.f32.mrb[0].mxu0
      %v782 = vadd.f32 0.0, %v781
      %v783 = vpop.f32.mrb[0].mxu0
      %v784 = vpop.f32.mrb[0].mxu0
      %v785 = vadd.f32 0.0, %v784
      %v786 = vpop.f32.mrb[0].mxu0
      %787 = vmatprep.mubr.bf16.mxu0 0
      %788 = vmatmul.mubr.bf16.gmra.mrb[0].mxu0 %v739
      %v789 = vpop.f32.mrb[0].mxu0
      %v790 = vadd.f32 0.0, %v789
      %v791 = vpop.f32.mrb[0].mxu0
      %v792 = vpop.f32.mrb[0].mxu0
      %v793 = vadd.f32 0.0, %v792
      %v794 = vpop.f32.mrb[0].mxu0
      %795 = vmatprep.mubr.bf16.mxu0 0
      %796 = vmatmul.mubr.bf16.gmra.mrb[0].mxu0 %v742
      %v797 = vpop.f32.mrb[0].mxu0
      %v798 = vadd.f32 0.0, %v797
      %v799 = vpop.f32.mrb[0].mxu0
      %v800 = vpop.f32.mrb[0].mxu0
      %v801 = vadd.f32 0.0, %v800
      %v802 = vpop.f32.mrb[0].mxu0
      %803 = vmatprep.mubr.bf16.mxu0 0
      %804 = vmatmul.mubr.bf16.gmra.mrb[0].mxu0 %v745
      %v805 = vpop.f32.mrb[0].mxu0
      %v806 = vadd.f32 0.0, %v805
      %v807 = vpop.f32.mrb[0].mxu0
      %v808 = vpop.f32.mrb[0].mxu0
      %v809 = vadd.f32 0.0, %v808
      %v810 = vpop.f32.mrb[0].mxu0
      %811 = vdwg.mxu0
      %v812 = vld [vmem:[#allocation2] sm:$0xff]
      %v813 = vld [vmem:[#allocation2 + $0x8] sm:$0xff]
      %v814 = vld [vmem:[#allocation2 + $0x10] sm:$0xff]
      %v815 = vld [vmem:[#allocation2 + $0x18] sm:$0xff]
      %v816 = vld [vmem:[#allocation2 + $0x20] sm:$0xff]
      %v817 = vld [vmem:[#allocation2 + $0x28] sm:$0xff]
      %v818 = vld [vmem:[#allocation2 + $0x30] sm:$0xff]
      %v819 = vld [vmem:[#allocation2 + $0x38] sm:$0xff]
      %v820 = vadd.f32 %v812, %v782
      %v821 = vadd.f32 %v813, %v785
      %v822 = vadd.f32 %v814, %v790
      %v823 = vadd.f32 %v815, %v793
      %v824 = vadd.f32 %v816, %v798
      %v825 = vadd.f32 %v817, %v801
      %v826 = vadd.f32 %v818, %v806
      %v827 = vadd.f32 %v819, %v809
      %828 = vst [vmem:[#allocation2] sm:$0xff] %v820
      %829 = vst [vmem:[#allocation2 + $0x8] sm:$0xff] %v821
      %830 = vst [vmem:[#allocation2 + $0x10] sm:$0xff] %v822
      %831 = vst [vmem:[#allocation2 + $0x18] sm:$0xff] %v823
      %832 = vst [vmem:[#allocation2 + $0x20] sm:$0xff] %v824
      %833 = vst [vmem:[#allocation2 + $0x28] sm:$0xff] %v825
      %834 = vst [vmem:[#allocation2 + $0x30] sm:$0xff] %v826
      %835 = vst [vmem:[#allocation2 + $0x38] sm:$0xff] %v827
      %s836 = scalar_lea.vmem %s189, 8
      %v837 = vld [vmem:[%s836] sm:$0xf]
      %v838 = vld [vmem:[%s836 + $0x8] sm:$0xf]
      %v839 = vld [vmem:[%s836 + $0x10] sm:$0xf]
      %v840 = vld [vmem:[%s836 + $0x18] sm:$0xf]
      %v841 = vld [vmem:[%s836 + $0x20] sm:$0xf]
      %v842 = vld [vmem:[%s836 + $0x28] sm:$0xf]
      %v843 = vld [vmem:[%s836 + $0x30] sm:$0xf]
      %v844 = vld [vmem:[%s836 + $0x38] sm:$0xf]
      %s845 = scalar_lea.vmem %s1, 96
      %v846 = vld [vmem:[%s845] sm:$0xf]
      %v847 = vld [vmem:[%s845 + $0x4] sm:$0xf]
      %v848 = vld [vmem:[%s845 + $0x8] sm:$0xf]
      %v849 = vld [vmem:[%s845 + $0xc] sm:$0xf]
      %v850 = vld [vmem:[%s845 + $0x10] sm:$0xf]
      %v851 = vld [vmem:[%s845 + $0x14] sm:$0xf]
      %v852 = vld [vmem:[%s845 + $0x18] sm:$0xf]
      %v853 = vld [vmem:[%s845 + $0x1c] sm:$0xf]
      %v862 = vunpack.c.l.b16 %v837
      %v863 = vunpack.c.l.b16 %v838
      %v864 = vunpack.c.l.b16 %v839
      %v865 = vunpack.c.l.b16 %v840
      %v866 = vunpack.c.l.b16 %v841
      %v867 = vunpack.c.l.b16 %v842
      %v868 = vunpack.c.l.b16 %v843
      %v869 = vunpack.c.l.b16 %v844
      %v870 = vpack.c.b16 %v863, %v862
      %v871 = vpack.c.b16 %v865, %v864
      %v872 = vpack.c.b16 %v867, %v866
      %v873 = vpack.c.b16 %v869, %v868
      %v882 = vunpack.c.l.b16 %v846
      %v883 = vunpack.c.l.b16 %v847
      %v884 = vunpack.c.l.b16 %v848
      %v885 = vunpack.c.l.b16 %v849
      %v886 = vunpack.c.l.b16 %v850
      %v887 = vunpack.c.l.b16 %v851
      %v888 = vunpack.c.l.b16 %v852
      %v889 = vunpack.c.l.b16 %v853
      %v890 = vpack.c.b16 %v883, %v882
      %v891 = vpack.c.b16 %v885, %v884
      %v892 = vpack.c.b16 %v887, %v886
      %v893 = vpack.c.b16 %v889, %v888
      %v899 = vsel %vm262, %v870, 0
      %v902 = vsel %vm262, %v871, 0
      %v905 = vsel %vm262, %v872, 0
      %v908 = vsel %vm262, %v873, 0
      %910 = vmatprep.subr.bf16.mxu0 0
      %911 = vmatpush1.bf16.msra.mxu0 %v890
      %912 = vmatprep.subr.bf16.mxu0 0
      %913 = vmatpush1.bf16.msra.mxu0 %v891
      %914 = vmatprep.subr.bf16.mxu0 0
      %915 = vmatpush1.bf16.msra.mxu0 %v892
      %916 = vmatprep.subr.bf16.mxu0 0
      %917 = vmatpush1.bf16.msra.mxu0 %v893
      %918 = vmatprep.subr.bf16.mxu0 0
      %919 = vmatpush1.bf16.msra.mxu0 0
      %920 = vmatprep.subr.bf16.mxu0 0
      %921 = vmatpush1.bf16.msra.mxu0 0
      %922 = vmatprep.subr.bf16.mxu0 0
      %923 = vmatpush1.bf16.msra.mxu0 0
      %924 = vmatprep.subr.bf16.mxu0 0
      %925 = vmatpush1.bf16.msra.mxu0 0
      %926 = vmatprep.subr.bf16.mxu0 0
      %927 = vmatpush1.bf16.msra.mxu0 0
      %928 = vmatprep.subr.bf16.mxu0 0
      %929 = vmatpush1.bf16.msra.mxu0 0
      %930 = vmatprep.subr.bf16.mxu0 0
      %931 = vmatpush1.bf16.msra.mxu0 0
      %932 = vmatprep.subr.bf16.mxu0 0
      %933 = vmatpush1.bf16.msra.mxu0 0
      %934 = vmatprep.subr.bf16.mxu0 0
      %935 = vmatpush1.bf16.msra.mxu0 0
      %936 = vmatprep.subr.bf16.mxu0 0
      %937 = vmatpush1.bf16.msra.mxu0 0
      %938 = vmatprep.subr.bf16.mxu0 0
      %939 = vmatpush1.bf16.msra.mxu0 0
      %940 = vmatprep.subr.bf16.mxu0 0
      %941 = vmatpush1.bf16.msra.mxu0 0
      %942 = vmatprep.mubr.bf16.mxu0 0
      %943 = vmatmul.mubr.bf16.gmra.mrb[0].mxu0 %v899
      %v944 = vpop.f32.mrb[0].mxu0
      %v945 = vadd.f32 0.0, %v944
      %v946 = vpop.f32.mrb[0].mxu0
      %v947 = vpop.f32.mrb[0].mxu0
      %v948 = vadd.f32 0.0, %v947
      %v949 = vpop.f32.mrb[0].mxu0
      %950 = vmatprep.mubr.bf16.mxu0 0
      %951 = vmatmul.mubr.bf16.gmra.mrb[0].mxu0 %v902
      %v952 = vpop.f32.mrb[0].mxu0
      %v953 = vadd.f32 0.0, %v952
      %v954 = vpop.f32.mrb[0].mxu0
      %v955 = vpop.f32.mrb[0].mxu0
      %v956 = vadd.f32 0.0, %v955
      %v957 = vpop.f32.mrb[0].mxu0
      %958 = vmatprep.mubr.bf16.mxu0 0
      %959 = vmatmul.mubr.bf16.gmra.mrb[0].mxu0 %v905
      %v960 = vpop.f32.mrb[0].mxu0
      %v961 = vadd.f32 0.0, %v960
      %v962 = vpop.f32.mrb[0].mxu0
      %v963 = vpop.f32.mrb[0].mxu0
      %v964 = vadd.f32 0.0, %v963
      %v965 = vpop.f32.mrb[0].mxu0
      %966 = vmatprep.mubr.bf16.mxu0 0
      %967 = vmatmul.mubr.bf16.gmra.mrb[0].mxu0 %v908
      %v968 = vpop.f32.mrb[0].mxu0
      %v969 = vadd.f32 0.0, %v968
      %v970 = vpop.f32.mrb[0].mxu0
      %v971 = vpop.f32.mrb[0].mxu0
      %v972 = vadd.f32 0.0, %v971
      %v973 = vpop.f32.mrb[0].mxu0
      %974 = vdwg.mxu0
      %v975 = vld [vmem:[#allocation2] sm:$0xff]
      %v976 = vld [vmem:[#allocation2 + $0x8] sm:$0xff]
      %v977 = vld [vmem:[#allocation2 + $0x10] sm:$0xff]
      %v978 = vld [vmem:[#allocation2 + $0x18] sm:$0xff]
      %v979 = vld [vmem:[#allocation2 + $0x20] sm:$0xff]
      %v980 = vld [vmem:[#allocation2 + $0x28] sm:$0xff]
      %v981 = vld [vmem:[#allocation2 + $0x30] sm:$0xff]
      %v982 = vld [vmem:[#allocation2 + $0x38] sm:$0xff]
      %v983 = vadd.f32 %v975, %v945
      %v984 = vadd.f32 %v976, %v948
      %v985 = vadd.f32 %v977, %v953
      %v986 = vadd.f32 %v978, %v956
      %v987 = vadd.f32 %v979, %v961
      %v988 = vadd.f32 %v980, %v964
      %v989 = vadd.f32 %v981, %v969
      %v990 = vadd.f32 %v982, %v972
      %991 = vst [vmem:[#allocation2] sm:$0xff] %v983
      %992 = vst [vmem:[#allocation2 + $0x8] sm:$0xff] %v984
      %993 = vst [vmem:[#allocation2 + $0x10] sm:$0xff] %v985
      %994 = vst [vmem:[#allocation2 + $0x18] sm:$0xff] %v986
      %995 = vst [vmem:[#allocation2 + $0x20] sm:$0xff] %v987
      %996 = vst [vmem:[#allocation2 + $0x28] sm:$0xff] %v988
      %997 = vst [vmem:[#allocation2 + $0x30] sm:$0xff] %v989
      %998 = vst [vmem:[#allocation2 + $0x38] sm:$0xff] %v990
      %v999 = vld [vmem:[%s836] sm:$0xf]
      %v1000 = vld [vmem:[%s836 + $0x4] sm:$0x1]
      %v1001 = vld [vmem:[%s836 + $0x8] sm:$0xf]
      %v1002 = vld [vmem:[%s836 + $0xc] sm:$0x1]
      %v1003 = vld [vmem:[%s836 + $0x10] sm:$0xf]
      %v1004 = vld [vmem:[%s836 + $0x14] sm:$0x1]
      %v1005 = vld [vmem:[%s836 + $0x18] sm:$0xf]
      %v1006 = vld [vmem:[%s836 + $0x1c] sm:$0x1]
      %v1007 = vld [vmem:[%s836 + $0x20] sm:$0xf]
      %v1008 = vld [vmem:[%s836 + $0x24] sm:$0x1]
      %v1009 = vld [vmem:[%s836 + $0x28] sm:$0xf]
      %v1010 = vld [vmem:[%s836 + $0x2c] sm:$0x1]
      %v1011 = vld [vmem:[%s836 + $0x30] sm:$0xf]
      %v1012 = vld [vmem:[%s836 + $0x34] sm:$0x1]
      %v1013 = vld [vmem:[%s836 + $0x38] sm:$0xf]
      %v1014 = vld [vmem:[%s836 + $0x3c] sm:$0x1]
      %v1016 = vshrl.u32 %v999, 16
      %v1018 = vrot.slane %v1016, 4
      %v1019 = vshll.u32 %v999, 16
      %v1021 = vrot.slane %v1019, 5
      %v1022 = vor.u32 %v1018, %v1021
      %v1023 = vrot.slane %v1022, 4
      %v1025 = vshll.u32 %v1000, 16
      %v1027 = vrot.slane %v1025, 5
      %v1028 = vsel %vm366, %v1023, %v1027
      %v1030 = vshrl.u32 %v1001, 16
      %v1032 = vrot.slane %v1030, 4
      %v1033 = vshll.u32 %v1001, 16
      %v1035 = vrot.slane %v1033, 5
      %v1036 = vor.u32 %v1032, %v1035
      %v1037 = vrot.slane %v1036, 4
      %v1039 = vshll.u32 %v1002, 16
      %v1041 = vrot.slane %v1039, 5
      %v1042 = vsel %vm366, %v1037, %v1041
      %v1044 = vshrl.u32 %v1003, 16
      %v1046 = vrot.slane %v1044, 4
      %v1047 = vshll.u32 %v1003, 16
      %v1049 = vrot.slane %v1047, 5
      %v1050 = vor.u32 %v1046, %v1049
      %v1051 = vrot.slane %v1050, 4
      %v1053 = vshll.u32 %v1004, 16
      %v1055 = vrot.slane %v1053, 5
      %v1056 = vsel %vm366, %v1051, %v1055
      %v1058 = vshrl.u32 %v1005, 16
      %v1060 = vrot.slane %v1058, 4
      %v1061 = vshll.u32 %v1005, 16
      %v1063 = vrot.slane %v1061, 5
      %v1064 = vor.u32 %v1060, %v1063
      %v1065 = vrot.slane %v1064, 4
      %v1067 = vshll.u32 %v1006, 16
      %v1069 = vrot.slane %v1067, 5
      %v1070 = vsel %vm366, %v1065, %v1069
      %v1072 = vshrl.u32 %v1007, 16
      %v1074 = vrot.slane %v1072, 4
      %v1075 = vshll.u32 %v1007, 16
      %v1077 = vrot.slane %v1075, 5
      %v1078 = vor.u32 %v1074, %v1077
      %v1079 = vrot.slane %v1078, 4
      %v1081 = vshll.u32 %v1008, 16
      %v1083 = vrot.slane %v1081, 5
      %v1084 = vsel %vm366, %v1079, %v1083
      %v1086 = vshrl.u32 %v1009, 16
      %v1088 = vrot.slane %v1086, 4
      %v1089 = vshll.u32 %v1009, 16
      %v1091 = vrot.slane %v1089, 5
      %v1092 = vor.u32 %v1088, %v1091
      %v1093 = vrot.slane %v1092, 4
      %v1095 = vshll.u32 %v1010, 16
      %v1097 = vrot.slane %v1095, 5
      %v1098 = vsel %vm366, %v1093, %v1097
      %v1100 = vshrl.u32 %v1011, 16
      %v1102 = vrot.slane %v1100, 4
      %v1103 = vshll.u32 %v1011, 16
      %v1105 = vrot.slane %v1103, 5
      %v1106 = vor.u32 %v1102, %v1105
      %v1107 = vrot.slane %v1106, 4
      %v1109 = vshll.u32 %v1012, 16
      %v1111 = vrot.slane %v1109, 5
      %v1112 = vsel %vm366, %v1107, %v1111
      %v1114 = vshrl.u32 %v1013, 16
      %v1116 = vrot.slane %v1114, 4
      %v1117 = vshll.u32 %v1013, 16
      %v1119 = vrot.slane %v1117, 5
      %v1120 = vor.u32 %v1116, %v1119
      %v1121 = vrot.slane %v1120, 4
      %v1123 = vshll.u32 %v1014, 16
      %v1125 = vrot.slane %v1123, 5
      %v1126 = vsel %vm366, %v1121, %v1125
      %v1127 = vld [vmem:[%s845 + $0x20] sm:$0xf]
      %v1128 = vld [vmem:[%s845 + $0x24] sm:$0xf]
      %v1129 = vld [vmem:[%s845 + $0x28] sm:$0xf]
      %v1130 = vld [vmem:[%s845 + $0x2c] sm:$0xf]
      %v1131 = vld [vmem:[%s845 + $0x30] sm:$0xf]
      %v1132 = vld [vmem:[%s845 + $0x34] sm:$0xf]
      %v1133 = vld [vmem:[%s845 + $0x38] sm:$0xf]
      %v1134 = vld [vmem:[%s845 + $0x3c] sm:$0xf]
      %v1135 = vunpack.c.l.b16 %v1028
      %v1136 = vunpack.c.l.b16 %v1042
      %v1137 = vunpack.c.l.b16 %v1056
      %v1138 = vunpack.c.l.b16 %v1070
      %v1139 = vunpack.c.l.b16 %v1084
      %v1140 = vunpack.c.l.b16 %v1098
      %v1141 = vunpack.c.l.b16 %v1112
      %v1142 = vunpack.c.l.b16 %v1126
      %v1143 = vpack.c.b16 %v1136, %v1135
      %v1144 = vpack.c.b16 %v1138, %v1137
      %v1145 = vpack.c.b16 %v1140, %v1139
      %v1146 = vpack.c.b16 %v1142, %v1141
      %v1155 = vunpack.c.l.b16 %v1127
      %v1156 = vunpack.c.l.b16 %v1128
      %v1157 = vunpack.c.l.b16 %v1129
      %v1158 = vunpack.c.l.b16 %v1130
      %v1159 = vunpack.c.l.b16 %v1131
      %v1160 = vunpack.c.l.b16 %v1132
      %v1161 = vunpack.c.l.b16 %v1133
      %v1162 = vunpack.c.l.b16 %v1134
      %v1163 = vpack.c.b16 %v1156, %v1155
      %v1164 = vpack.c.b16 %v1158, %v1157
      %v1165 = vpack.c.b16 %v1160, %v1159
      %v1166 = vpack.c.b16 %v1162, %v1161
      %v1172 = vsel %vm262, %v1143, 0
      %v1175 = vsel %vm262, %v1144, 0
      %v1178 = vsel %vm262, %v1145, 0
      %v1181 = vsel %vm262, %v1146, 0
      %1183 = vmatprep.subr.bf16.mxu0 0
      %1184 = vmatpush1.bf16.msra.mxu0 %v1163
      %1185 = vmatprep.subr.bf16.mxu0 0
      %1186 = vmatpush1.bf16.msra.mxu0 %v1164
      %1187 = vmatprep.subr.bf16.mxu0 0
      %1188 = vmatpush1.bf16.msra.mxu0 %v1165
      %1189 = vmatprep.subr.bf16.mxu0 0
      %1190 = vmatpush1.bf16.msra.mxu0 %v1166
      %1191 = vmatprep.subr.bf16.mxu0 0
      %1192 = vmatpush1.bf16.msra.mxu0 0
      %1193 = vmatprep.subr.bf16.mxu0 0
      %1194 = vmatpush1.bf16.msra.mxu0 0
      %1195 = vmatprep.subr.bf16.mxu0 0
      %1196 = vmatpush1.bf16.msra.mxu0 0
      %1197 = vmatprep.subr.bf16.mxu0 0
      %1198 = vmatpush1.bf16.msra.mxu0 0
      %1199 = vmatprep.subr.bf16.mxu0 0
      %1200 = vmatpush1.bf16.msra.mxu0 0
      %1201 = vmatprep.subr.bf16.mxu0 0
      %1202 = vmatpush1.bf16.msra.mxu0 0
      %1203 = vmatprep.subr.bf16.mxu0 0
      %1204 = vmatpush1.bf16.msra.mxu0 0
      %1205 = vmatprep.subr.bf16.mxu0 0
      %1206 = vmatpush1.bf16.msra.mxu0 0
      %1207 = vmatprep.subr.bf16.mxu0 0
      %1208 = vmatpush1.bf16.msra.mxu0 0
      %1209 = vmatprep.subr.bf16.mxu0 0
      %1210 = vmatpush1.bf16.msra.mxu0 0
      %1211 = vmatprep.subr.bf16.mxu0 0
      %1212 = vmatpush1.bf16.msra.mxu0 0
      %1213 = vmatprep.subr.bf16.mxu0 0
      %1214 = vmatpush1.bf16.msra.mxu0 0
      %1215 = vmatprep.mubr.bf16.mxu0 0
      %1216 = vmatmul.mubr.bf16.gmra.mrb[0].mxu0 %v1172
      %v1217 = vpop.f32.mrb[0].mxu0
      %v1218 = vadd.f32 0.0, %v1217
      %v1219 = vpop.f32.mrb[0].mxu0
      %v1220 = vpop.f32.mrb[0].mxu0
      %v1221 = vadd.f32 0.0, %v1220
      %v1222 = vpop.f32.mrb[0].mxu0
      %1223 = vmatprep.mubr.bf16.mxu0 0
      %1224 = vmatmul.mubr.bf16.gmra.mrb[0].mxu0 %v1175
      %v1225 = vpop.f32.mrb[0].mxu0
      %v1226 = vadd.f32 0.0, %v1225
      %v1227 = vpop.f32.mrb[0].mxu0
      %v1228 = vpop.f32.mrb[0].mxu0
      %v1229 = vadd.f32 0.0, %v1228
      %v1230 = vpop.f32.mrb[0].mxu0
      %1231 = vmatprep.mubr.bf16.mxu0 0
      %1232 = vmatmul.mubr.bf16.gmra.mrb[0].mxu0 %v1178
      %v1233 = vpop.f32.mrb[0].mxu0
      %v1234 = vadd.f32 0.0, %v1233
      %v1235 = vpop.f32.mrb[0].mxu0
      %v1236 = vpop.f32.mrb[0].mxu0
      %v1237 = vadd.f32 0.0, %v1236
      %v1238 = vpop.f32.mrb[0].mxu0
      %1239 = vmatprep.mubr.bf16.mxu0 0
      %1240 = vmatmul.mubr.bf16.gmra.mrb[0].mxu0 %v1181
      %v1241 = vpop.f32.mrb[0].mxu0
      %v1242 = vadd.f32 0.0, %v1241
      %v1243 = vpop.f32.mrb[0].mxu0
      %v1244 = vpop.f32.mrb[0].mxu0
      %v1245 = vadd.f32 0.0, %v1244
      %v1246 = vpop.f32.mrb[0].mxu0
      %1247 = vdwg.mxu0
      %v1248 = vld [vmem:[#allocation2] sm:$0xff]
      %v1249 = vld [vmem:[#allocation2 + $0x8] sm:$0xff]
      %v1250 = vld [vmem:[#allocation2 + $0x10] sm:$0xff]
      %v1251 = vld [vmem:[#allocation2 + $0x18] sm:$0xff]
      %v1252 = vld [vmem:[#allocation2 + $0x20] sm:$0xff]
      %v1253 = vld [vmem:[#allocation2 + $0x28] sm:$0xff]
      %v1254 = vld [vmem:[#allocation2 + $0x30] sm:$0xff]
      %v1255 = vld [vmem:[#allocation2 + $0x38] sm:$0xff]
      %v1256 = vadd.f32 %v1248, %v1218
      %v1257 = vadd.f32 %v1249, %v1221
      %v1258 = vadd.f32 %v1250, %v1226
      %v1259 = vadd.f32 %v1251, %v1229
      %v1260 = vadd.f32 %v1252, %v1234
      %v1261 = vadd.f32 %v1253, %v1237
      %v1262 = vadd.f32 %v1254, %v1242
      %v1263 = vadd.f32 %v1255, %v1245
      %1264 = vst [vmem:[#allocation2] sm:$0xff] %v1256
      %1265 = vst [vmem:[#allocation2 + $0x8] sm:$0xff] %v1257
      %1266 = vst [vmem:[#allocation2 + $0x10] sm:$0xff] %v1258
      %1267 = vst [vmem:[#allocation2 + $0x18] sm:$0xff] %v1259
      %1268 = vst [vmem:[#allocation2 + $0x20] sm:$0xff] %v1260
      %1269 = vst [vmem:[#allocation2 + $0x28] sm:$0xff] %v1261
      %1270 = vst [vmem:[#allocation2 + $0x30] sm:$0xff] %v1262
      %1271 = vst [vmem:[#allocation2 + $0x38] sm:$0xff] %v1263
      %v1272 = vld [vmem:[%s836] sm:$0xe]
      %v1273 = vld [vmem:[%s836 + $0x4] sm:$0x1]
      %v1274 = vld [vmem:[%s836 + $0x8] sm:$0xe]
      %v1275 = vld [vmem:[%s836 + $0xc] sm:$0x1]
      %v1276 = vld [vmem:[%s836 + $0x10] sm:$0xe]
      %v1277 = vld [vmem:[%s836 + $0x14] sm:$0x1]
      %v1278 = vld [vmem:[%s836 + $0x18] sm:$0xe]
      %v1279 = vld [vmem:[%s836 + $0x1c] sm:$0x1]
      %v1280 = vld [vmem:[%s836 + $0x20] sm:$0xe]
      %v1281 = vld [vmem:[%s836 + $0x24] sm:$0x1]
      %v1282 = vld [vmem:[%s836 + $0x28] sm:$0xe]
      %v1283 = vld [vmem:[%s836 + $0x2c] sm:$0x1]
      %v1284 = vld [vmem:[%s836 + $0x30] sm:$0xe]
      %v1285 = vld [vmem:[%s836 + $0x34] sm:$0x1]
      %v1286 = vld [vmem:[%s836 + $0x38] sm:$0xe]
      %v1287 = vld [vmem:[%s836 + $0x3c] sm:$0x1]
      %v1304 = vrot.slane %v1272, 5
      %v1305 = vrot.slane %v1304, 4
      %v1306 = vrot.slane %v1273, 5
      %v1307 = vsel %vm658, %v1305, %v1306
      %v1308 = vrot.slane %v1274, 5
      %v1309 = vrot.slane %v1308, 4
      %v1310 = vrot.slane %v1275, 5
      %v1311 = vsel %vm658, %v1309, %v1310
      %v1312 = vrot.slane %v1276, 5
      %v1313 = vrot.slane %v1312, 4
      %v1314 = vrot.slane %v1277, 5
      %v1315 = vsel %vm658, %v1313, %v1314
      %v1316 = vrot.slane %v1278, 5
      %v1317 = vrot.slane %v1316, 4
      %v1318 = vrot.slane %v1279, 5
      %v1319 = vsel %vm658, %v1317, %v1318
      %v1320 = vrot.slane %v1280, 5
      %v1321 = vrot.slane %v1320, 4
      %v1322 = vrot.slane %v1281, 5
      %v1323 = vsel %vm658, %v1321, %v1322
      %v1324 = vrot.slane %v1282, 5
      %v1325 = vrot.slane %v1324, 4
      %v1326 = vrot.slane %v1283, 5
      %v1327 = vsel %vm658, %v1325, %v1326
      %v1328 = vrot.slane %v1284, 5
      %v1329 = vrot.slane %v1328, 4
      %v1330 = vrot.slane %v1285, 5
      %v1331 = vsel %vm658, %v1329, %v1330
      %v1332 = vrot.slane %v1286, 5
      %v1333 = vrot.slane %v1332, 4
      %v1334 = vrot.slane %v1287, 5
      %v1335 = vsel %vm658, %v1333, %v1334
      %v1336 = vld [vmem:[%s845 + $0x40] sm:$0xf]
      %v1337 = vld [vmem:[%s845 + $0x44] sm:$0xf]
      %v1338 = vld [vmem:[%s845 + $0x48] sm:$0xf]
      %v1339 = vld [vmem:[%s845 + $0x4c] sm:$0xf]
      %v1340 = vld [vmem:[%s845 + $0x50] sm:$0xf]
      %v1341 = vld [vmem:[%s845 + $0x54] sm:$0xf]
      %v1342 = vld [vmem:[%s845 + $0x58] sm:$0xf]
      %v1343 = vld [vmem:[%s845 + $0x5c] sm:$0xf]
      %v1344 = vunpack.c.l.b16 %v1307
      %v1345 = vunpack.c.l.b16 %v1311
      %v1346 = vunpack.c.l.b16 %v1315
      %v1347 = vunpack.c.l.b16 %v1319
      %v1348 = vunpack.c.l.b16 %v1323
      %v1349 = vunpack.c.l.b16 %v1327
      %v1350 = vunpack.c.l.b16 %v1331
      %v1351 = vunpack.c.l.b16 %v1335
      %v1352 = vpack.c.b16 %v1345, %v1344
      %v1353 = vpack.c.b16 %v1347, %v1346
      %v1354 = vpack.c.b16 %v1349, %v1348
      %v1355 = vpack.c.b16 %v1351, %v1350
      %v1364 = vunpack.c.l.b16 %v1336
      %v1365 = vunpack.c.l.b16 %v1337
      %v1366 = vunpack.c.l.b16 %v1338
      %v1367 = vunpack.c.l.b16 %v1339
      %v1368 = vunpack.c.l.b16 %v1340
      %v1369 = vunpack.c.l.b16 %v1341
      %v1370 = vunpack.c.l.b16 %v1342
      %v1371 = vunpack.c.l.b16 %v1343
      %v1372 = vpack.c.b16 %v1365, %v1364
      %v1373 = vpack.c.b16 %v1367, %v1366
      %v1374 = vpack.c.b16 %v1369, %v1368
      %v1375 = vpack.c.b16 %v1371, %v1370
      %v1381 = vsel %vm262, %v1352, 0
      %v1384 = vsel %vm262, %v1353, 0
      %v1387 = vsel %vm262, %v1354, 0
      %v1390 = vsel %vm262, %v1355, 0
      %1392 = vmatprep.subr.bf16.mxu0 0
      %1393 = vmatpush1.bf16.msra.mxu0 %v1372
      %1394 = vmatprep.subr.bf16.mxu0 0
      %1395 = vmatpush1.bf16.msra.mxu0 %v1373
      %1396 = vmatprep.subr.bf16.mxu0 0
      %1397 = vmatpush1.bf16.msra.mxu0 %v1374
      %1398 = vmatprep.subr.bf16.mxu0 0
      %1399 = vmatpush1.bf16.msra.mxu0 %v1375
      %1400 = vmatprep.subr.bf16.mxu0 0
      %1401 = vmatpush1.bf16.msra.mxu0 0
      %1402 = vmatprep.subr.bf16.mxu0 0
      %1403 = vmatpush1.bf16.msra.mxu0 0
      %1404 = vmatprep.subr.bf16.mxu0 0
      %1405 = vmatpush1.bf16.msra.mxu0 0
      %1406 = vmatprep.subr.bf16.mxu0 0
      %1407 = vmatpush1.bf16.msra.mxu0 0
      %1408 = vmatprep.subr.bf16.mxu0 0
      %1409 = vmatpush1.bf16.msra.mxu0 0
      %1410 = vmatprep.subr.bf16.mxu0 0
      %1411 = vmatpush1.bf16.msra.mxu0 0
      %1412 = vmatprep.subr.bf16.mxu0 0
      %1413 = vmatpush1.bf16.msra.mxu0 0
      %1414 = vmatprep.subr.bf16.mxu0 0
      %1415 = vmatpush1.bf16.msra.mxu0 0
      %1416 = vmatprep.subr.bf16.mxu0 0
      %1417 = vmatpush1.bf16.msra.mxu0 0
      %1418 = vmatprep.subr.bf16.mxu0 0
      %1419 = vmatpush1.bf16.msra.mxu0 0
      %1420 = vmatprep.subr.bf16.mxu0 0
      %1421 = vmatpush1.bf16.msra.mxu0 0
      %1422 = vmatprep.subr.bf16.mxu0 0
      %1423 = vmatpush1.bf16.msra.mxu0 0
      %1424 = vmatprep.mubr.bf16.mxu0 0
      %1425 = vmatmul.mubr.bf16.gmra.mrb[0].mxu0 %v1381
      %v1426 = vpop.f32.mrb[0].mxu0
      %v1427 = vadd.f32 0.0, %v1426
      %v1428 = vpop.f32.mrb[0].mxu0
      %v1429 = vpop.f32.mrb[0].mxu0
      %v1430 = vadd.f32 0.0, %v1429
      %v1431 = vpop.f32.mrb[0].mxu0
      %1432 = vmatprep.mubr.bf16.mxu0 0
      %1433 = vmatmul.mubr.bf16.gmra.mrb[0].mxu0 %v1384
      %v1434 = vpop.f32.mrb[0].mxu0
      %v1435 = vadd.f32 0.0, %v1434
      %v1436 = vpop.f32.mrb[0].mxu0
      %v1437 = vpop.f32.mrb[0].mxu0
      %v1438 = vadd.f32 0.0, %v1437
      %v1439 = vpop.f32.mrb[0].mxu0
      %1440 = vmatprep.mubr.bf16.mxu0 0
      %1441 = vmatmul.mubr.bf16.gmra.mrb[0].mxu0 %v1387
      %v1442 = vpop.f32.mrb[0].mxu0
      %v1443 = vadd.f32 0.0, %v1442
      %v1444 = vpop.f32.mrb[0].mxu0
      %v1445 = vpop.f32.mrb[0].mxu0
      %v1446 = vadd.f32 0.0, %v1445
      %v1447 = vpop.f32.mrb[0].mxu0
      %1448 = vmatprep.mubr.bf16.mxu0 0
      %1449 = vmatmul.mubr.bf16.gmra.mrb[0].mxu0 %v1390
      %v1450 = vpop.f32.mrb[0].mxu0
      %v1451 = vadd.f32 0.0, %v1450
      %v1452 = vpop.f32.mrb[0].mxu0
      %v1453 = vpop.f32.mrb[0].mxu0
      %v1454 = vadd.f32 0.0, %v1453
      %v1455 = vpop.f32.mrb[0].mxu0
      %1456 = vdwg.mxu0
      %v1457 = vld [vmem:[#allocation2] sm:$0xff]
      %v1458 = vld [vmem:[#allocation2 + $0x8] sm:$0xff]
      %v1459 = vld [vmem:[#allocation2 + $0x10] sm:$0xff]
      %v1460 = vld [vmem:[#allocation2 + $0x18] sm:$0xff]
      %v1461 = vld [vmem:[#allocation2 + $0x20] sm:$0xff]
      %v1462 = vld [vmem:[#allocation2 + $0x28] sm:$0xff]
      %v1463 = vld [vmem:[#allocation2 + $0x30] sm:$0xff]
      %v1464 = vld [vmem:[#allocation2 + $0x38] sm:$0xff]
      %v1465 = vadd.f32 %v1457, %v1427
      %v1466 = vadd.f32 %v1458, %v1430
      %v1467 = vadd.f32 %v1459, %v1435
      %v1468 = vadd.f32 %v1460, %v1438
      %v1469 = vadd.f32 %v1461, %v1443
      %v1470 = vadd.f32 %v1462, %v1446
      %v1471 = vadd.f32 %v1463, %v1451
      %v1472 = vadd.f32 %v1464, %v1454
      %1473 = vst [vmem:[#allocation2] sm:$0xff] %v1465
      %1474 = vst [vmem:[#allocation2 + $0x8] sm:$0xff] %v1466
      %1475 = vst [vmem:[#allocation2 + $0x10] sm:$0xff] %v1467
      %1476 = vst [vmem:[#allocation2 + $0x18] sm:$0xff] %v1468
      %1477 = vst [vmem:[#allocation2 + $0x20] sm:$0xff] %v1469
      %1478 = vst [vmem:[#allocation2 + $0x28] sm:$0xff] %v1470
      %1479 = vst [vmem:[#allocation2 + $0x30] sm:$0xff] %v1471
      %1480 = vst [vmem:[#allocation2 + $0x38] sm:$0xff] %v1472
      %s1481 = scalar_lea.vmem %s189, 16
      %v1482 = vld [vmem:[%s1481] sm:$0xf]
      %v1483 = vld [vmem:[%s1481 + $0x8] sm:$0xf]
      %v1484 = vld [vmem:[%s1481 + $0x10] sm:$0xf]
      %v1485 = vld [vmem:[%s1481 + $0x18] sm:$0xf]
      %v1486 = vld [vmem:[%s1481 + $0x20] sm:$0xf]
      %v1487 = vld [vmem:[%s1481 + $0x28] sm:$0xf]
      %v1488 = vld [vmem:[%s1481 + $0x30] sm:$0xf]
      %v1489 = vld [vmem:[%s1481 + $0x38] sm:$0xf]
      %s1490 = scalar_lea.vmem %s1, 192
      %v1491 = vld [vmem:[%s1490] sm:$0xf]
      %v1492 = vld [vmem:[%s1490 + $0x4] sm:$0xf]
      %v1493 = vld [vmem:[%s1490 + $0x8] sm:$0xf]
      %v1494 = vld [vmem:[%s1490 + $0xc] sm:$0xf]
      %v1495 = vld [vmem:[%s1490 + $0x10] sm:$0xf]
      %v1496 = vld [vmem:[%s1490 + $0x14] sm:$0xf]
      %v1497 = vld [vmem:[%s1490 + $0x18] sm:$0xf]
      %v1498 = vld [vmem:[%s1490 + $0x1c] sm:$0xf]
      %v1507 = vunpack.c.l.b16 %v1482
      %v1508 = vunpack.c.l.b16 %v1483
      %v1509 = vunpack.c.l.b16 %v1484
      %v1510 = vunpack.c.l.b16 %v1485
      %v1511 = vunpack.c.l.b16 %v1486
      %v1512 = vunpack.c.l.b16 %v1487
      %v1513 = vunpack.c.l.b16 %v1488
      %v1514 = vunpack.c.l.b16 %v1489
      %v1515 = vpack.c.b16 %v1508, %v1507
      %v1516 = vpack.c.b16 %v1510, %v1509
      %v1517 = vpack.c.b16 %v1512, %v1511
      %v1518 = vpack.c.b16 %v1514, %v1513
      %v1527 = vunpack.c.l.b16 %v1491
      %v1528 = vunpack.c.l.b16 %v1492
      %v1529 = vunpack.c.l.b16 %v1493
      %v1530 = vunpack.c.l.b16 %v1494
      %v1531 = vunpack.c.l.b16 %v1495
      %v1532 = vunpack.c.l.b16 %v1496
      %v1533 = vunpack.c.l.b16 %v1497
      %v1534 = vunpack.c.l.b16 %v1498
      %v1535 = vpack.c.b16 %v1528, %v1527
      %v1536 = vpack.c.b16 %v1530, %v1529
      %v1537 = vpack.c.b16 %v1532, %v1531
      %v1538 = vpack.c.b16 %v1534, %v1533
      %v1544 = vsel %vm262, %v1515, 0
      %v1547 = vsel %vm262, %v1516, 0
      %v1550 = vsel %vm262, %v1517, 0
      %v1553 = vsel %vm262, %v1518, 0
      %1555 = vmatprep.subr.bf16.mxu0 0
      %1556 = vmatpush1.bf16.msra.mxu0 %v1535
      %1557 = vmatprep.subr.bf16.mxu0 0
      %1558 = vmatpush1.bf16.msra.mxu0 %v1536
      %1559 = vmatprep.subr.bf16.mxu0 0
      %1560 = vmatpush1.bf16.msra.mxu0 %v1537
      %1561 = vmatprep.subr.bf16.mxu0 0
      %1562 = vmatpush1.bf16.msra.mxu0 %v1538
      %1563 = vmatprep.subr.bf16.mxu0 0
      %1564 = vmatpush1.bf16.msra.mxu0 0
      %1565 = vmatprep.subr.bf16.mxu0 0
      %1566 = vmatpush1.bf16.msra.mxu0 0
      %1567 = vmatprep.subr.bf16.mxu0 0
      %1568 = vmatpush1.bf16.msra.mxu0 0
      %1569 = vmatprep.subr.bf16.mxu0 0
      %1570 = vmatpush1.bf16.msra.mxu0 0
      %1571 = vmatprep.subr.bf16.mxu0 0
      %1572 = vmatpush1.bf16.msra.mxu0 0
      %1573 = vmatprep.subr.bf16.mxu0 0
      %1574 = vmatpush1.bf16.msra.mxu0 0
      %1575 = vmatprep.subr.bf16.mxu0 0
      %1576 = vmatpush1.bf16.msra.mxu0 0
      %1577 = vmatprep.subr.bf16.mxu0 0
      %1578 = vmatpush1.bf16.msra.mxu0 0
      %1579 = vmatprep.subr.bf16.mxu0 0
      %1580 = vmatpush1.bf16.msra.mxu0 0
      %1581 = vmatprep.subr.bf16.mxu0 0
      %1582 = vmatpush1.bf16.msra.mxu0 0
      %1583 = vmatprep.subr.bf16.mxu0 0
      %1584 = vmatpush1.bf16.msra.mxu0 0
      %1585 = vmatprep.subr.bf16.mxu0 0
      %1586 = vmatpush1.bf16.msra.mxu0 0
      %1587 = vmatprep.mubr.bf16.mxu0 0
      %1588 = vmatmul.mubr.bf16.gmra.mrb[0].mxu0 %v1544
      %v1589 = vpop.f32.mrb[0].mxu0
      %v1590 = vadd.f32 0.0, %v1589
      %v1591 = vpop.f32.mrb[0].mxu0
      %v1592 = vpop.f32.mrb[0].mxu0
      %v1593 = vadd.f32 0.0, %v1592
      %v1594 = vpop.f32.mrb[0].mxu0
      %1595 = vmatprep.mubr.bf16.mxu0 0
      %1596 = vmatmul.mubr.bf16.gmra.mrb[0].mxu0 %v1547
      %v1597 = vpop.f32.mrb[0].mxu0
      %v1598 = vadd.f32 0.0, %v1597
      %v1599 = vpop.f32.mrb[0].mxu0
      %v1600 = vpop.f32.mrb[0].mxu0
      %v1601 = vadd.f32 0.0, %v1600
      %v1602 = vpop.f32.mrb[0].mxu0
      %1603 = vmatprep.mubr.bf16.mxu0 0
      %1604 = vmatmul.mubr.bf16.gmra.mrb[0].mxu0 %v1550
      %v1605 = vpop.f32.mrb[0].mxu0
      %v1606 = vadd.f32 0.0, %v1605
      %v1607 = vpop.f32.mrb[0].mxu0
      %v1608 = vpop.f32.mrb[0].mxu0
      %v1609 = vadd.f32 0.0, %v1608
      %v1610 = vpop.f32.mrb[0].mxu0
      %1611 = vmatprep.mubr.bf16.mxu0 0
      %1612 = vmatmul.mubr.bf16.gmra.mrb[0].mxu0 %v1553
      %v1613 = vpop.f32.mrb[0].mxu0
      %v1614 = vadd.f32 0.0, %v1613
      %v1615 = vpop.f32.mrb[0].mxu0
      %v1616 = vpop.f32.mrb[0].mxu0
      %v1617 = vadd.f32 0.0, %v1616
      %v1618 = vpop.f32.mrb[0].mxu0
      %1619 = vdwg.mxu0
      %v1620 = vld [vmem:[#allocation2] sm:$0xff]
      %v1621 = vld [vmem:[#allocation2 + $0x8] sm:$0xff]
      %v1622 = vld [vmem:[#allocation2 + $0x10] sm:$0xff]
      %v1623 = vld [vmem:[#allocation2 + $0x18] sm:$0xff]
      %v1624 = vld [vmem:[#allocation2 + $0x20] sm:$0xff]
      %v1625 = vld [vmem:[#allocation2 + $0x28] sm:$0xff]
      %v1626 = vld [vmem:[#allocation2 + $0x30] sm:$0xff]
      %v1627 = vld [vmem:[#allocation2 + $0x38] sm:$0xff]
      %v1628 = vadd.f32 %v1620, %v1590
      %v1629 = vadd.f32 %v1621, %v1593
      %v1630 = vadd.f32 %v1622, %v1598
      %v1631 = vadd.f32 %v1623, %v1601
      %v1632 = vadd.f32 %v1624, %v1606
      %v1633 = vadd.f32 %v1625, %v1609
      %v1634 = vadd.f32 %v1626, %v1614
      %v1635 = vadd.f32 %v1627, %v1617
      %1636 = vst [vmem:[#allocation2] sm:$0xff] %v1628
      %1637 = vst [vmem:[#allocation2 + $0x8] sm:$0xff] %v1629
      %1638 = vst [vmem:[#allocation2 + $0x10] sm:$0xff] %v1630
      %1639 = vst [vmem:[#allocation2 + $0x18] sm:$0xff] %v1631
      %1640 = vst [vmem:[#allocation2 + $0x20] sm:$0xff] %v1632
      %1641 = vst [vmem:[#allocation2 + $0x28] sm:$0xff] %v1633
      %1642 = vst [vmem:[#allocation2 + $0x30] sm:$0xff] %v1634
      %1643 = vst [vmem:[#allocation2 + $0x38] sm:$0xff] %v1635
      %v1644 = vld [vmem:[%s1481] sm:$0xf]
      %v1645 = vld [vmem:[%s1481 + $0x4] sm:$0x1]
      %v1646 = vld [vmem:[%s1481 + $0x8] sm:$0xf]
      %v1647 = vld [vmem:[%s1481 + $0xc] sm:$0x1]
      %v1648 = vld [vmem:[%s1481 + $0x10] sm:$0xf]
      %v1649 = vld [vmem:[%s1481 + $0x14] sm:$0x1]
      %v1650 = vld [vmem:[%s1481 + $0x18] sm:$0xf]
      %v1651 = vld [vmem:[%s1481 + $0x1c] sm:$0x1]
      %v1652 = vld [vmem:[%s1481 + $0x20] sm:$0xf]
      %v1653 = vld [vmem:[%s1481 + $0x24] sm:$0x1]
      %v1654 = vld [vmem:[%s1481 + $0x28] sm:$0xf]
      %v1655 = vld [vmem:[%s1481 + $0x2c] sm:$0x1]
      %v1656 = vld [vmem:[%s1481 + $0x30] sm:$0xf]
      %v1657 = vld [vmem:[%s1481 + $0x34] sm:$0x1]
      %v1658 = vld [vmem:[%s1481 + $0x38] sm:$0xf]
      %v1659 = vld [vmem:[%s1481 + $0x3c] sm:$0x1]
      %v1661 = vshrl.u32 %v1644, 16
      %v1663 = vrot.slane %v1661, 4
      %v1664 = vshll.u32 %v1644, 16
      %v1666 = vrot.slane %v1664, 5
      %v1667 = vor.u32 %v1663, %v1666
      %v1668 = vrot.slane %v1667, 4
      %v1670 = vshll.u32 %v1645, 16
      %v1672 = vrot.slane %v1670, 5
      %v1673 = vsel %vm366, %v1668, %v1672
      %v1675 = vshrl.u32 %v1646, 16
      %v1677 = vrot.slane %v1675, 4
      %v1678 = vshll.u32 %v1646, 16
      %v1680 = vrot.slane %v1678, 5
      %v1681 = vor.u32 %v1677, %v1680
      %v1682 = vrot.slane %v1681, 4
      %v1684 = vshll.u32 %v1647, 16
      %v1686 = vrot.slane %v1684, 5
      %v1687 = vsel %vm366, %v1682, %v1686
      %v1689 = vshrl.u32 %v1648, 16
      %v1691 = vrot.slane %v1689, 4
      %v1692 = vshll.u32 %v1648, 16
      %v1694 = vrot.slane %v1692, 5
      %v1695 = vor.u32 %v1691, %v1694
      %v1696 = vrot.slane %v1695, 4
      %v1698 = vshll.u32 %v1649, 16
      %v1700 = vrot.slane %v1698, 5
      %v1701 = vsel %vm366, %v1696, %v1700
      %v1703 = vshrl.u32 %v1650, 16
      %v1705 = vrot.slane %v1703, 4
      %v1706 = vshll.u32 %v1650, 16
      %v1708 = vrot.slane %v1706, 5
      %v1709 = vor.u32 %v1705, %v1708
      %v1710 = vrot.slane %v1709, 4
      %v1712 = vshll.u32 %v1651, 16
      %v1714 = vrot.slane %v1712, 5
      %v1715 = vsel %vm366, %v1710, %v1714
      %v1717 = vshrl.u32 %v1652, 16
      %v1719 = vrot.slane %v1717, 4
      %v1720 = vshll.u32 %v1652, 16
      %v1722 = vrot.slane %v1720, 5
      %v1723 = vor.u32 %v1719, %v1722
      %v1724 = vrot.slane %v1723, 4
      %v1726 = vshll.u32 %v1653, 16
      %v1728 = vrot.slane %v1726, 5
      %v1729 = vsel %vm366, %v1724, %v1728
      %v1731 = vshrl.u32 %v1654, 16
      %v1733 = vrot.slane %v1731, 4
      %v1734 = vshll.u32 %v1654, 16
      %v1736 = vrot.slane %v1734, 5
      %v1737 = vor.u32 %v1733, %v1736
      %v1738 = vrot.slane %v1737, 4
      %v1740 = vshll.u32 %v1655, 16
      %v1742 = vrot.slane %v1740, 5
      %v1743 = vsel %vm366, %v1738, %v1742
      %v1745 = vshrl.u32 %v1656, 16
      %v1747 = vrot.slane %v1745, 4
      %v1748 = vshll.u32 %v1656, 16
      %v1750 = vrot.slane %v1748, 5
      %v1751 = vor.u32 %v1747, %v1750
      %v1752 = vrot.slane %v1751, 4
      %v1754 = vshll.u32 %v1657, 16
      %v1756 = vrot.slane %v1754, 5
      %v1757 = vsel %vm366, %v1752, %v1756
      %v1759 = vshrl.u32 %v1658, 16
      %v1761 = vrot.slane %v1759, 4
      %v1762 = vshll.u32 %v1658, 16
      %v1764 = vrot.slane %v1762, 5
      %v1765 = vor.u32 %v1761, %v1764
      %v1766 = vrot.slane %v1765, 4
      %v1768 = vshll.u32 %v1659, 16
      %v1770 = vrot.slane %v1768, 5
      %v1771 = vsel %vm366, %v1766, %v1770
      %v1772 = vld [vmem:[%s1490 + $0x20] sm:$0xf]
      %v1773 = vld [vmem:[%s1490 + $0x24] sm:$0xf]
      %v1774 = vld [vmem:[%s1490 + $0x28] sm:$0xf]
      %v1775 = vld [vmem:[%s1490 + $0x2c] sm:$0xf]
      %v1776 = vld [vmem:[%s1490 + $0x30] sm:$0xf]
      %v1777 = vld [vmem:[%s1490 + $0x34] sm:$0xf]
      %v1778 = vld [vmem:[%s1490 + $0x38] sm:$0xf]
      %v1779 = vld [vmem:[%s1490 + $0x3c] sm:$0xf]
      %v1780 = vunpack.c.l.b16 %v1673
      %v1781 = vunpack.c.l.b16 %v1687
      %v1782 = vunpack.c.l.b16 %v1701
      %v1783 = vunpack.c.l.b16 %v1715
      %v1784 = vunpack.c.l.b16 %v1729
      %v1785 = vunpack.c.l.b16 %v1743
      %v1786 = vunpack.c.l.b16 %v1757
      %v1787 = vunpack.c.l.b16 %v1771
      %v1788 = vpack.c.b16 %v1781, %v1780
      %v1789 = vpack.c.b16 %v1783, %v1782
      %v1790 = vpack.c.b16 %v1785, %v1784
      %v1791 = vpack.c.b16 %v1787, %v1786
      %v1800 = vunpack.c.l.b16 %v1772
      %v1801 = vunpack.c.l.b16 %v1773
      %v1802 = vunpack.c.l.b16 %v1774
      %v1803 = vunpack.c.l.b16 %v1775
      %v1804 = vunpack.c.l.b16 %v1776
      %v1805 = vunpack.c.l.b16 %v1777
      %v1806 = vunpack.c.l.b16 %v1778
      %v1807 = vunpack.c.l.b16 %v1779
      %v1808 = vpack.c.b16 %v1801, %v1800
      %v1809 = vpack.c.b16 %v1803, %v1802
      %v1810 = vpack.c.b16 %v1805, %v1804
      %v1811 = vpack.c.b16 %v1807, %v1806
      %v1817 = vsel %vm262, %v1788, 0
      %v1820 = vsel %vm262, %v1789, 0
      %v1823 = vsel %vm262, %v1790, 0
      %v1826 = vsel %vm262, %v1791, 0
      %1828 = vmatprep.subr.bf16.mxu0 0
      %1829 = vmatpush1.bf16.msra.mxu0 %v1808
      %1830 = vmatprep.subr.bf16.mxu0 0
      %1831 = vmatpush1.bf16.msra.mxu0 %v1809
      %1832 = vmatprep.subr.bf16.mxu0 0
      %1833 = vmatpush1.bf16.msra.mxu0 %v1810
      %1834 = vmatprep.subr.bf16.mxu0 0
      %1835 = vmatpush1.bf16.msra.mxu0 %v1811
      %1836 = vmatprep.subr.bf16.mxu0 0
      %1837 = vmatpush1.bf16.msra.mxu0 0
      %1838 = vmatprep.subr.bf16.mxu0 0
      %1839 = vmatpush1.bf16.msra.mxu0 0
      %1840 = vmatprep.subr.bf16.mxu0 0
      %1841 = vmatpush1.bf16.msra.mxu0 0
      %1842 = vmatprep.subr.bf16.mxu0 0
      %1843 = vmatpush1.bf16.msra.mxu0 0
      %1844 = vmatprep.subr.bf16.mxu0 0
      %1845 = vmatpush1.bf16.msra.mxu0 0
      %1846 = vmatprep.subr.bf16.mxu0 0
      %1847 = vmatpush1.bf16.msra.mxu0 0
      %1848 = vmatprep.subr.bf16.mxu0 0
      %1849 = vmatpush1.bf16.msra.mxu0 0
      %1850 = vmatprep.subr.bf16.mxu0 0
      %1851 = vmatpush1.bf16.msra.mxu0 0
      %1852 = vmatprep.subr.bf16.mxu0 0
      %1853 = vmatpush1.bf16.msra.mxu0 0
      %1854 = vmatprep.subr.bf16.mxu0 0
      %1855 = vmatpush1.bf16.msra.mxu0 0
      %1856 = vmatprep.subr.bf16.mxu0 0
      %1857 = vmatpush1.bf16.msra.mxu0 0
      %1858 = vmatprep.subr.bf16.mxu0 0
      %1859 = vmatpush1.bf16.msra.mxu0 0
      %1860 = vmatprep.mubr.bf16.mxu0 0
      %1861 = vmatmul.mubr.bf16.gmra.mrb[0].mxu0 %v1817
      %v1862 = vpop.f32.mrb[0].mxu0
      %v1863 = vadd.f32 0.0, %v1862
      %v1864 = vpop.f32.mrb[0].mxu0
      %v1865 = vpop.f32.mrb[0].mxu0
      %v1866 = vadd.f32 0.0, %v1865
      %v1867 = vpop.f32.mrb[0].mxu0
      %1868 = vmatprep.mubr.bf16.mxu0 0
      %1869 = vmatmul.mubr.bf16.gmra.mrb[0].mxu0 %v1820
      %v1870 = vpop.f32.mrb[0].mxu0
      %v1871 = vadd.f32 0.0, %v1870
      %v1872 = vpop.f32.mrb[0].mxu0
      %v1873 = vpop.f32.mrb[0].mxu0
      %v1874 = vadd.f32 0.0, %v1873
      %v1875 = vpop.f32.mrb[0].mxu0
      %1876 = vmatprep.mubr.bf16.mxu0 0
      %1877 = vmatmul.mubr.bf16.gmra.mrb[0].mxu0 %v1823
      %v1878 = vpop.f32.mrb[0].mxu0
      %v1879 = vadd.f32 0.0, %v1878
      %v1880 = vpop.f32.mrb[0].mxu0
      %v1881 = vpop.f32.mrb[0].mxu0
      %v1882 = vadd.f32 0.0, %v1881
      %v1883 = vpop.f32.mrb[0].mxu0
      %1884 = vmatprep.mubr.bf16.mxu0 0
      %1885 = vmatmul.mubr.bf16.gmra.mrb[0].mxu0 %v1826
      %v1886 = vpop.f32.mrb[0].mxu0
      %v1887 = vadd.f32 0.0, %v1886
      %v1888 = vpop.f32.mrb[0].mxu0
      %v1889 = vpop.f32.mrb[0].mxu0
      %v1890 = vadd.f32 0.0, %v1889
      %v1891 = vpop.f32.mrb[0].mxu0
      %1892 = vdwg.mxu0
      %v1893 = vld [vmem:[#allocation2] sm:$0xff]
      %v1894 = vld [vmem:[#allocation2 + $0x8] sm:$0xff]
      %v1895 = vld [vmem:[#allocation2 + $0x10] sm:$0xff]
      %v1896 = vld [vmem:[#allocation2 + $0x18] sm:$0xff]
      %v1897 = vld [vmem:[#allocation2 + $0x20] sm:$0xff]
      %v1898 = vld [vmem:[#allocation2 + $0x28] sm:$0xff]
      %v1899 = vld [vmem:[#allocation2 + $0x30] sm:$0xff]
      %v1900 = vld [vmem:[#allocation2 + $0x38] sm:$0xff]
      %v1901 = vadd.f32 %v1893, %v1863
      %v1902 = vadd.f32 %v1894, %v1866
      %v1903 = vadd.f32 %v1895, %v1871
      %v1904 = vadd.f32 %v1896, %v1874
      %v1905 = vadd.f32 %v1897, %v1879
      %v1906 = vadd.f32 %v1898, %v1882
      %v1907 = vadd.f32 %v1899, %v1887
      %v1908 = vadd.f32 %v1900, %v1890
      %1909 = vst [vmem:[#allocation2] sm:$0xff] %v1901
      %1910 = vst [vmem:[#allocation2 + $0x8] sm:$0xff] %v1902
      %1911 = vst [vmem:[#allocation2 + $0x10] sm:$0xff] %v1903
      %1912 = vst [vmem:[#allocation2 + $0x18] sm:$0xff] %v1904
      %1913 = vst [vmem:[#allocation2 + $0x20] sm:$0xff] %v1905
      %1914 = vst [vmem:[#allocation2 + $0x28] sm:$0xff] %v1906
      %1915 = vst [vmem:[#allocation2 + $0x30] sm:$0xff] %v1907
      %1916 = vst [vmem:[#allocation2 + $0x38] sm:$0xff] %v1908
      %v1917 = vld [vmem:[%s1481] sm:$0xe]
      %v1918 = vld [vmem:[%s1481 + $0x4] sm:$0x1]
      %v1919 = vld [vmem:[%s1481 + $0x8] sm:$0xe]
      %v1920 = vld [vmem:[%s1481 + $0xc] sm:$0x1]
      %v1921 = vld [vmem:[%s1481 + $0x10] sm:$0xe]
      %v1922 = vld [vmem:[%s1481 + $0x14] sm:$0x1]
      %v1923 = vld [vmem:[%s1481 + $0x18] sm:$0xe]
      %v1924 = vld [vmem:[%s1481 + $0x1c] sm:$0x1]
      %v1925 = vld [vmem:[%s1481 + $0x20] sm:$0xe]
      %v1926 = vld [vmem:[%s1481 + $0x24] sm:$0x1]
      %v1927 = vld [vmem:[%s1481 + $0x28] sm:$0xe]
      %v1928 = vld [vmem:[%s1481 + $0x2c] sm:$0x1]
      %v1929 = vld [vmem:[%s1481 + $0x30] sm:$0xe]
      %v1930 = vld [vmem:[%s1481 + $0x34] sm:$0x1]
      %v1931 = vld [vmem:[%s1481 + $0x38] sm:$0xe]
      %v1932 = vld [vmem:[%s1481 + $0x3c] sm:$0x1]
      %v1949 = vrot.slane %v1917, 5
      %v1950 = vrot.slane %v1949, 4
      %v1951 = vrot.slane %v1918, 5
      %v1952 = vsel %vm658, %v1950, %v1951
      %v1953 = vrot.slane %v1919, 5
      %v1954 = vrot.slane %v1953, 4
      %v1955 = vrot.slane %v1920, 5
      %v1956 = vsel %vm658, %v1954, %v1955
      %v1957 = vrot.slane %v1921, 5
      %v1958 = vrot.slane %v1957, 4
      %v1959 = vrot.slane %v1922, 5
      %v1960 = vsel %vm658, %v1958, %v1959
      %v1961 = vrot.slane %v1923, 5
      %v1962 = vrot.slane %v1961, 4
      %v1963 = vrot.slane %v1924, 5
      %v1964 = vsel %vm658, %v1962, %v1963
      %v1965 = vrot.slane %v1925, 5
      %v1966 = vrot.slane %v1965, 4
      %v1967 = vrot.slane %v1926, 5
      %v1968 = vsel %vm658, %v1966, %v1967
      %v1969 = vrot.slane %v1927, 5
      %v1970 = vrot.slane %v1969, 4
      %v1971 = vrot.slane %v1928, 5
      %v1972 = vsel %vm658, %v1970, %v1971
      %v1973 = vrot.slane %v1929, 5
      %v1974 = vrot.slane %v1973, 4
      %v1975 = vrot.slane %v1930, 5
      %v1976 = vsel %vm658, %v1974, %v1975
      %v1977 = vrot.slane %v1931, 5
      %v1978 = vrot.slane %v1977, 4
      %v1979 = vrot.slane %v1932, 5
      %v1980 = vsel %vm658, %v1978, %v1979
      %v1981 = vld [vmem:[%s1490 + $0x40] sm:$0xf]
      %v1982 = vld [vmem:[%s1490 + $0x44] sm:$0xf]
      %v1983 = vld [vmem:[%s1490 + $0x48] sm:$0xf]
      %v1984 = vld [vmem:[%s1490 + $0x4c] sm:$0xf]
      %v1985 = vld [vmem:[%s1490 + $0x50] sm:$0xf]
      %v1986 = vld [vmem:[%s1490 + $0x54] sm:$0xf]
      %v1987 = vld [vmem:[%s1490 + $0x58] sm:$0xf]
      %v1988 = vld [vmem:[%s1490 + $0x5c] sm:$0xf]
      %v1989 = vunpack.c.l.b16 %v1952
      %v1990 = vunpack.c.l.b16 %v1956
      %v1991 = vunpack.c.l.b16 %v1960
      %v1992 = vunpack.c.l.b16 %v1964
      %v1993 = vunpack.c.l.b16 %v1968
      %v1994 = vunpack.c.l.b16 %v1972
      %v1995 = vunpack.c.l.b16 %v1976
      %v1996 = vunpack.c.l.b16 %v1980
      %v1997 = vpack.c.b16 %v1990, %v1989
      %v1998 = vpack.c.b16 %v1992, %v1991
      %v1999 = vpack.c.b16 %v1994, %v1993
      %v2000 = vpack.c.b16 %v1996, %v1995
      %v2009 = vunpack.c.l.b16 %v1981
      %v2010 = vunpack.c.l.b16 %v1982
      %v2011 = vunpack.c.l.b16 %v1983
      %v2012 = vunpack.c.l.b16 %v1984
      %v2013 = vunpack.c.l.b16 %v1985
      %v2014 = vunpack.c.l.b16 %v1986
      %v2015 = vunpack.c.l.b16 %v1987
      %v2016 = vunpack.c.l.b16 %v1988
      %v2017 = vpack.c.b16 %v2010, %v2009
      %v2018 = vpack.c.b16 %v2012, %v2011
      %v2019 = vpack.c.b16 %v2014, %v2013
      %v2020 = vpack.c.b16 %v2016, %v2015
      %v2026 = vsel %vm262, %v1997, 0
      %v2029 = vsel %vm262, %v1998, 0
      %v2032 = vsel %vm262, %v1999, 0
      %v2035 = vsel %vm262, %v2000, 0
      %2037 = vmatprep.subr.bf16.mxu0 0
      %2038 = vmatpush1.bf16.msra.mxu0 %v2017
      %2039 = vmatprep.subr.bf16.mxu0 0
      %2040 = vmatpush1.bf16.msra.mxu0 %v2018
      %2041 = vmatprep.subr.bf16.mxu0 0
      %2042 = vmatpush1.bf16.msra.mxu0 %v2019
      %2043 = vmatprep.subr.bf16.mxu0 0
      %2044 = vmatpush1.bf16.msra.mxu0 %v2020
      %2045 = vmatprep.subr.bf16.mxu0 0
      %2046 = vmatpush1.bf16.msra.mxu0 0
      %2047 = vmatprep.subr.bf16.mxu0 0
      %2048 = vmatpush1.bf16.msra.mxu0 0
      %2049 = vmatprep.subr.bf16.mxu0 0
      %2050 = vmatpush1.bf16.msra.mxu0 0
      %2051 = vmatprep.subr.bf16.mxu0 0
      %2052 = vmatpush1.bf16.msra.mxu0 0
      %2053 = vmatprep.subr.bf16.mxu0 0
      %2054 = vmatpush1.bf16.msra.mxu0 0
      %2055 = vmatprep.subr.bf16.mxu0 0
      %2056 = vmatpush1.bf16.msra.mxu0 0
      %2057 = vmatprep.subr.bf16.mxu0 0
      %2058 = vmatpush1.bf16.msra.mxu0 0
      %2059 = vmatprep.subr.bf16.mxu0 0
      %2060 = vmatpush1.bf16.msra.mxu0 0
      %2061 = vmatprep.subr.bf16.mxu0 0
      %2062 = vmatpush1.bf16.msra.mxu0 0
      %2063 = vmatprep.subr.bf16.mxu0 0
      %2064 = vmatpush1.bf16.msra.mxu0 0
      %2065 = vmatprep.subr.bf16.mxu0 0
      %2066 = vmatpush1.bf16.msra.mxu0 0
      %2067 = vmatprep.subr.bf16.mxu0 0
      %2068 = vmatpush1.bf16.msra.mxu0 0
      %2069 = vmatprep.mubr.bf16.mxu0 0
      %2070 = vmatmul.mubr.bf16.gmra.mrb[0].mxu0 %v2026
      %v2071 = vpop.f32.mrb[0].mxu0
      %v2072 = vadd.f32 0.0, %v2071
      %v2073 = vpop.f32.mrb[0].mxu0
      %v2074 = vpop.f32.mrb[0].mxu0
      %v2075 = vadd.f32 0.0, %v2074
      %v2076 = vpop.f32.mrb[0].mxu0
      %2077 = vmatprep.mubr.bf16.mxu0 0
      %2078 = vmatmul.mubr.bf16.gmra.mrb[0].mxu0 %v2029
      %v2079 = vpop.f32.mrb[0].mxu0
      %v2080 = vadd.f32 0.0, %v2079
      %v2081 = vpop.f32.mrb[0].mxu0
      %v2082 = vpop.f32.mrb[0].mxu0
      %v2083 = vadd.f32 0.0, %v2082
      %v2084 = vpop.f32.mrb[0].mxu0
      %2085 = vmatprep.mubr.bf16.mxu0 0
      %2086 = vmatmul.mubr.bf16.gmra.mrb[0].mxu0 %v2032
      %v2087 = vpop.f32.mrb[0].mxu0
      %v2088 = vadd.f32 0.0, %v2087
      %v2089 = vpop.f32.mrb[0].mxu0
      %v2090 = vpop.f32.mrb[0].mxu0
      %v2091 = vadd.f32 0.0, %v2090
      %v2092 = vpop.f32.mrb[0].mxu0
      %2093 = vmatprep.mubr.bf16.mxu0 0
      %2094 = vmatmul.mubr.bf16.gmra.mrb[0].mxu0 %v2035
      %v2095 = vpop.f32.mrb[0].mxu0
      %v2096 = vadd.f32 0.0, %v2095
      %v2097 = vpop.f32.mrb[0].mxu0
      %v2098 = vpop.f32.mrb[0].mxu0
      %v2099 = vadd.f32 0.0, %v2098
      %v2100 = vpop.f32.mrb[0].mxu0
      %2101 = vdwg.mxu0
      %v2102 = vld [vmem:[#allocation2] sm:$0xff]
      %v2103 = vld [vmem:[#allocation2 + $0x8] sm:$0xff]
      %v2104 = vld [vmem:[#allocation2 + $0x10] sm:$0xff]
      %v2105 = vld [vmem:[#allocation2 + $0x18] sm:$0xff]
      %v2106 = vld [vmem:[#allocation2 + $0x20] sm:$0xff]
      %v2107 = vld [vmem:[#allocation2 + $0x28] sm:$0xff]
      %v2108 = vld [vmem:[#allocation2 + $0x30] sm:$0xff]
      %v2109 = vld [vmem:[#allocation2 + $0x38] sm:$0xff]
      %v2110 = vadd.f32 %v2102, %v2072
      %v2111 = vadd.f32 %v2103, %v2075
      %v2112 = vadd.f32 %v2104, %v2080
      %v2113 = vadd.f32 %v2105, %v2083
      %v2114 = vadd.f32 %v2106, %v2088
      %v2115 = vadd.f32 %v2107, %v2091
      %v2116 = vadd.f32 %v2108, %v2096
      %v2117 = vadd.f32 %v2109, %v2099
      %2118 = vst [vmem:[#allocation2] sm:$0xff] %v2110
      %2119 = vst [vmem:[#allocation2 + $0x8] sm:$0xff] %v2111
      %2120 = vst [vmem:[#allocation2 + $0x10] sm:$0xff] %v2112
      %2121 = vst [vmem:[#allocation2 + $0x18] sm:$0xff] %v2113
      %2122 = vst [vmem:[#allocation2 + $0x20] sm:$0xff] %v2114
      %2123 = vst [vmem:[#allocation2 + $0x28] sm:$0xff] %v2115
      %2124 = vst [vmem:[#allocation2 + $0x30] sm:$0xff] %v2116
      %2125 = vst [vmem:[#allocation2 + $0x38] sm:$0xff] %v2117
      %v2126 = vld [vmem:[#allocation2] sm:$0xff]
      %v2127 = vld [vmem:[#allocation2 + $0x8] sm:$0xff]
      %v2128 = vld [vmem:[#allocation2 + $0x10] sm:$0xff]
      %v2129 = vld [vmem:[#allocation2 + $0x18] sm:$0xff]
      %v2130 = vld [vmem:[#allocation2 + $0x20] sm:$0xff]
      %v2131 = vld [vmem:[#allocation2 + $0x28] sm:$0xff]
      %v2132 = vld [vmem:[#allocation2 + $0x30] sm:$0xff]
      %v2133 = vld [vmem:[#allocation2 + $0x38] sm:$0xff]
      %v2134 = vld [vmem:[%s2] sm:$0x1]
      %v2136 = vlaneseq
      %v2137 = vshrl.u32 %v2136, 7
      %v2138 = vsub.s32 0, %v2137
      %v2139 = vrot.slane %v2134, %v2138
      %v2141 = vadd.f32 %v2126, %v2139
      %v2142 = vadd.f32 %v2127, %v2139
      %v2143 = vadd.f32 %v2128, %v2139
      %v2144 = vadd.f32 %v2129, %v2139
      %v2145 = vadd.f32 %v2130, %v2139
      %v2146 = vadd.f32 %v2131, %v2139
      %v2147 = vadd.f32 %v2132, %v2139
      %v2148 = vadd.f32 %v2133, %v2139
      %v2149 = vmax.f32 %v2141, 0.0
      %v2150 = vmax.f32 %v2142, 0.0
      %v2151 = vmax.f32 %v2143, 0.0
      %v2152 = vmax.f32 %v2144, 0.0
      %v2153 = vmax.f32 %v2145, 0.0
      %v2154 = vmax.f32 %v2146, 0.0
      %v2155 = vmax.f32 %v2147, 0.0
      %v2156 = vmax.f32 %v2148, 0.0
      %v2157 = vpack.c.bf16 %v2149, %v2149
      %v2158 = vpack.c.bf16 %v2150, %v2150
      %v2159 = vpack.c.bf16 %v2151, %v2151
      %v2160 = vpack.c.bf16 %v2152, %v2152
      %v2161 = vpack.c.bf16 %v2153, %v2153
      %v2162 = vpack.c.bf16 %v2154, %v2154
      %v2163 = vpack.c.bf16 %v2155, %v2155
      %v2164 = vpack.c.bf16 %v2156, %v2156
      %2165 = vst [vmem:[%s199] sm:$0xf] %v2157
      %2166 = vst [vmem:[%s199 + $0x4] sm:$0xf] %v2158
      %2167 = vst [vmem:[%s199 + $0x8] sm:$0xf] %v2159
      %2168 = vst [vmem:[%s199 + $0xc] sm:$0xf] %v2160
      %2169 = vst [vmem:[%s199 + $0x10] sm:$0xf] %v2161
      %2170 = vst [vmem:[%s199 + $0x14] sm:$0xf] %v2162
      %2171 = vst [vmem:[%s199 + $0x18] sm:$0xf] %v2163
      %2172 = vst [vmem:[%s199 + $0x1c] sm:$0xf] %v2164
      %s2173 = smul.u32 8, %s19
      %p2174 = scmp.lt.s32.totalorder %s18, 1
      %s2175 = scalar_select %p2174, %s18, 1
      %p2176 = scmp.lt.s32.totalorder %s2173, 7
      %s2177 = scalar_select %p2176, %s2173, 7
      %s2178 = smul.addr %s2175, 8
      %s2179 = sadd.s32 %s2177, %s2178
      %s2180 = smul.addr %s2179, 4
      %s2181 = scalar_lea.vmem %s3, %s2180
      // Predicated region
      $region33: #{correspondence_generation_forward.7} parent=31 // pred_check
        %p2182 = pneg %p116
      $region34: #{correspondence_generation_forward.7} parent=31 // pred_check_branch
        %2184 = sbr.rel (%p2182) target = $region36
      $region35: #{correspondence_generation_forward.7} parent=31 // pred_region
        %s2185 = smul.u32 8, %s19
      $region36: #{correspondence_generation_forward.7} parent=31 // pred_fallthru
        _
    $region32: #{correspondence_generation_forward.7} parent=5 // pred_fallthru
      _
    %p2186 = scmp.le.s32.totalorder 2, %s9
    // Predicated region
    $region37: #{correspondence_generation_forward.7} parent=5 // pred_check
      %p2187 = pneg %p2186
    $region38: #{correspondence_generation_forward.7} parent=5 // pred_check_branch
      %2189 = sbr.rel (%p2187) target = $region40
    $region39: #{correspondence_generation_forward.7} parent=5 // pred_region
      %s2190 = ssub.s32 %s9, 2
      // Predicated region
      $region41: #{correspondence_generation_forward.7} parent=39 // pred_check
        %p2191 = pneg %p122
      $region42: #{correspondence_generation_forward.7} parent=39 // pred_check_branch
        %2193 = sbr.rel (%p2191) target = $region44
      $region43: #{correspondence_generation_forward.7} parent=39 // pred_region
        %s2194 = smul.u32 8, %s21
        %p2195 = scmp.lt.s32.totalorder %s20, 1
        %s2196 = scalar_select %p2195, %s20, 1
        %p2197 = scmp.lt.s32.totalorder %s2194, 7
        %s2198 = scalar_select %p2197, %s2194, 7
        %s2199 = smul.addr %s2196, 8
        %s2200 = sadd.s32 %s2198, %s2199
        %s2201 = smul.addr %s2200, 4
        %s2202 = scalar_lea.vmem %s3, %s2201
      $region44: #{correspondence_generation_forward.7} parent=39 // pred_fallthru
        _
    $region40: #{correspondence_generation_forward.7} parent=5 // pred_fallthru
      _
  $region6: #{correspondence_generation_forward.7} parent=0 // loop_footer
    %s13 = sadd.s32 1, %s9
  $region7: #{correspondence_generation_forward.7} parent=0 // loop_footer_branch
    %8 = sbr.rel target = $region3
  $region8: #{correspondence_generation_forward.7} parent=0 // loop_exit
    _

// kernel: correspondence_generation_forward.6
$region0: #{correspondence_generation_forward.6}
  #allocation0 [shape = 'u32[]', space=smem, size = 0x4, offset = 0x4, fixed_abs, tag = 'smem constant byte address 0x4 - core index']
  #allocation1 [shape = 'u32[144,128]{1,0:T(1,128)}', space=vmem, size = 0x12000, scoped, tag = 'internal scratch']
  #allocation2 [shape = 'f32[128,64]{1,0:T(8,128)}', space=vmem, size = 0x10000, scoped, tag = 'scratch operand']
  %s0 = inlined_call_operand.vmem [shape: bf16[4,10,18,64], index: 0, kind: input, shape index: {}]
  %s1 = inlined_call_operand.vmem [shape: bf16[3,192,64], index: 1, kind: input, shape index: {}]
  %s2 = inlined_call_operand.vmem [shape: f32[1,64], index: 2, kind: input, shape index: {}]
  %s3 = inlined_call_operand.vmem [shape: bf16[2,8,8,64], index: 3, kind: output, shape index: {}]
  %s4 = sld [smem:[#allocation0]]
  $region45: #{correspondence_generation_forward.6} parent=0
    _
  %s6 = ssub.s32 1, %s4
  %s7 = scalar_select 0, %s6, %s4
  loop: start=0, step=1, limit=6
  $region2: #{correspondence_generation_forward.6} parent=0 // loop_pre_header
    _
  $region3: #{correspondence_generation_forward.6} parent=0 // loop_header
    %s9 = sphi 0, %s13
    %p10 = scmp.ge.s32.totalorder %s9, 6
    %s16 = sphi 0, %s28
    %s17 = sphi 0, %s24
    %s18 = sphi 0, %s16
    %s19 = sphi 0, %s17
    %s20 = sphi 0, %s18
    %s21 = sphi 0, %s19
    %s35 = sphi 0, %s37
    %s38 = sphi 0, %s35
    %s39 = sphi 0, %s38
    %s55 = sphi 0, %s39
    %s59 = sphi 0, %s59
    %s61 = sphi 0, %s59
    %s62 = sphi 0, %s61
    %s76 = sphi 0, %s62
    %s80 = sphi 0, %s80
    %s82 = sphi 0, %s80
    %s83 = sphi 0, %s82
    %s97 = sphi 0, %s83
    %s105 = sphi 0, %s107
    %s108 = sphi 0, %s105
    %s109 = sphi 0, %s108
    %s125 = sphi 0, %s109
  $region4: #{correspondence_generation_forward.6} parent=0 // loop_header_branch
    %12 = sbr.rel (%p10) target = $region8
  $region5: #{correspondence_generation_forward.6} parent=0 // loop_body
    %s14 = ssub.s32 %s9, 1
    %s15 = ssub.s32 %s9, 2
    %s22 = sadd.s32 1, %s17
    %p23 = scmp.ge.s32.totalorder %s22, 2
    %s24 = scalar_select %p23, 0, %s22
    %s25 = sadd.s32 1, %s16
    %s26 = scalar_select %p23, %s25, %s16
    %p27 = scmp.ge.s32.totalorder %s26, 2
    %s28 = scalar_select %p27, 0, %s26
    %s29 = smul.u32 %s16, 2
    %s30 = sadd.s32 %s29, %s17
    %s31 = smul.u32 %s28, 2
    %s32 = sadd.s32 %s31, %s24
    %s33 = ssub.s32 %s30, %s32
    %p34 = scmp.eq.s32.totalorder %s33, 0
    %s36 = sadd.s32 %s35, 1
    %s37 = scalar_select %p34, %s35, %s36
    %p40 = pneg %p34
    %p41 = scmp.eq.s32.totalorder %s9, 3
    %p42 = por %p40, %p41
    %p43 = scmp.ne.s32.totalorder %s35, %s38
    %p44 = scmp.eq.s32.totalorder %s9, 0
    %p45 = por %p43, %p44
    %p46 = scmp.ne.s32.totalorder %s35, %s38
    %p47 = scmp.eq.s32.totalorder %s14, 3
    %p48 = por %p46, %p47
    %p49 = scmp.ne.s32.totalorder %s38, %s39
    %p50 = scmp.eq.s32.totalorder %s14, 0
    %p51 = por %p49, %p50
    %p52 = scmp.ne.s32.totalorder %s38, %s39
    %p53 = scmp.eq.s32.totalorder %s15, 3
    %p54 = por %p52, %p53
    %p56 = scmp.ne.s32.totalorder %s39, %s55
    %p57 = scmp.eq.s32.totalorder %s15, 0
    %p58 = por %p56, %p57
    %s60 = sadd.s32 %s59, 1
    %p63 = scmp.eq.s32.totalorder %s9, 3
    %p64 = scmp.ne.s32.totalorder %s59, %s61
    %p65 = scmp.eq.s32.totalorder %s9, 0
    %p66 = por %p64, %p65
    %p67 = scmp.ne.s32.totalorder %s59, %s61
    %p68 = scmp.eq.s32.totalorder %s14, 3
    %p69 = por %p67, %p68
    %p70 = scmp.ne.s32.totalorder %s61, %s62
    %p71 = scmp.eq.s32.totalorder %s14, 0
    %p72 = por %p70, %p71
    %p73 = scmp.ne.s32.totalorder %s61, %s62
    %p74 = scmp.eq.s32.totalorder %s15, 3
    %p75 = por %p73, %p74
    %p77 = scmp.ne.s32.totalorder %s62, %s76
    %p78 = scmp.eq.s32.totalorder %s15, 0
    %p79 = por %p77, %p78
    %s81 = sadd.s32 %s80, 1
    %p84 = scmp.eq.s32.totalorder %s9, 3
    %p85 = scmp.ne.s32.totalorder %s80, %s82
    %p86 = scmp.eq.s32.totalorder %s9, 0
    %p87 = por %p85, %p86
    %p88 = scmp.ne.s32.totalorder %s80, %s82
    %p89 = scmp.eq.s32.totalorder %s14, 3
    %p90 = por %p88, %p89
    %p91 = scmp.ne.s32.totalorder %s82, %s83
    %p92 = scmp.eq.s32.totalorder %s14, 0
    %p93 = por %p91, %p92
    %p94 = scmp.ne.s32.totalorder %s82, %s83
    %p95 = scmp.eq.s32.totalorder %s15, 3
    %p96 = por %p94, %p95
    %p98 = scmp.ne.s32.totalorder %s83, %s97
    %p99 = scmp.eq.s32.totalorder %s15, 0
    %p100 = por %p98, %p99
    %s101 = ssub.s32 %s16, %s28
    %s102 = ssub.s32 %s17, %s24
    %s103 = sor.u32 %s101, %s102
    %p104 = scmp.eq.s32.totalorder %s103, 0
    %s106 = sadd.s32 %s105, 1
    %s107 = scalar_select %p104, %s105, %s106
    %p110 = pneg %p104
    %p111 = scmp.eq.s32.totalorder %s9, 3
    %p112 = por %p110, %p111
    %p113 = scmp.ne.s32.totalorder %s105, %s108
    %p114 = scmp.eq.s32.totalorder %s9, 0
    %p115 = por %p113, %p114
    %p116 = scmp.ne.s32.totalorder %s105, %s108
    %p117 = scmp.eq.s32.totalorder %s14, 3
    %p118 = por %p116, %p117
    %p119 = scmp.ne.s32.totalorder %s108, %s109
    %p120 = scmp.eq.s32.totalorder %s14, 0
    %p121 = por %p119, %p120
    %p122 = scmp.ne.s32.totalorder %s108, %s109
    %p123 = scmp.eq.s32.totalorder %s15, 3
    %p124 = por %p122, %p123
    %p126 = scmp.ne.s32.totalorder %s109, %s125
    %p127 = scmp.eq.s32.totalorder %s15, 0
    %p128 = por %p126, %p127
    %p129 = scmp.le.s32.totalorder 1, %s9
    %p130 = scmp.lt.s32.totalorder %s9, 5
    %p131 = pnand %p129, %p130
    %p132 = pneg %p131
    // Predicated region
    $region9: #{correspondence_generation_forward.6} parent=5 // pred_check
      _
    $region10: #{correspondence_generation_forward.6} parent=5 // pred_check_branch
      %134 = sbr.rel (%p131) target = $region12
    $region11: #{correspondence_generation_forward.6} parent=5 // pred_region
      %s135 = ssub.s32 %s9, 1
      // Predicated region
      $region13: #{correspondence_generation_forward.6} parent=11 // pred_check
        %p136 = pneg %p72
      $region14: #{correspondence_generation_forward.6} parent=11 // pred_check_branch
        %138 = sbr.rel (%p136) target = $region16
      $region15: #{correspondence_generation_forward.6} parent=11 // pred_region
        _
      $region16: #{correspondence_generation_forward.6} parent=11 // pred_fallthru
        _
      // Predicated region
      $region17: #{correspondence_generation_forward.6} parent=11 // pred_check
        %p139 = pneg %p93
      $region18: #{correspondence_generation_forward.6} parent=11 // pred_check_branch
        %141 = sbr.rel (%p139) target = $region20
      $region19: #{correspondence_generation_forward.6} parent=11 // pred_region
        _
      $region20: #{correspondence_generation_forward.6} parent=11 // pred_fallthru
        _
    $region12: #{correspondence_generation_forward.6} parent=5 // pred_fallthru
      _
    %p142 = scmp.lt.s32.totalorder %s9, 4
    // Predicated region
    $region21: #{correspondence_generation_forward.6} parent=5 // pred_check
      %p143 = pneg %p142
    $region22: #{correspondence_generation_forward.6} parent=5 // pred_check_branch
      %145 = sbr.rel (%p143) target = $region24
    $region23: #{correspondence_generation_forward.6} parent=5 // pred_region
      // Predicated region
      $region25: #{correspondence_generation_forward.6} parent=23 // pred_check
        %p146 = pneg %p45
      $region26: #{correspondence_generation_forward.6} parent=23 // pred_check_branch
        %148 = sbr.rel (%p146) target = $region28
      $region27: #{correspondence_generation_forward.6} parent=23 // pred_region
        %s149 = smul.u32 %s16, 2
        %s150 = sadd.s32 %s149, %s17
        %p151 = scmp.lt.s32.totalorder %s150, 3
        %s152 = scalar_select %p151, %s150, 3
        %s153 = smul.addr %s152, 30
        %s154 = smul.addr %s153, 4
        %s155 = scalar_lea.vmem %s0, %s154
        %s156 = smul.u32 %s16, 2
        %s157 = sadd.s32 %s156, %s17
      $region28: #{correspondence_generation_forward.6} parent=23 // pred_fallthru
        _
    $region24: #{correspondence_generation_forward.6} parent=5 // pred_fallthru
      _
    %p158 = scmp.le.s32.totalorder 1, %s9
    %p159 = scmp.lt.s32.totalorder %s9, 5
    %p160 = pnand %p158, %p159
    %p161 = pneg %p160
    // Predicated region
    $region29: #{correspondence_generation_forward.6} parent=5 // pred_check
      _
    $region30: #{correspondence_generation_forward.6} parent=5 // pred_check_branch
      %163 = sbr.rel (%p160) target = $region32
    $region31: #{correspondence_generation_forward.6} parent=5 // pred_region
      %s164 = ssub.s32 %s9, 1
      %s165 = smul.u32 %s18, 2
      %s166 = sadd.s32 %s165, %s19
      %p167 = scmp.lt.s32.totalorder %s166, 3
      %s168 = scalar_select %p167, %s166, 3
      %s169 = smul.addr %s168, 30
      %s170 = smul.addr %s169, 4
      %s171 = scalar_lea.vmem %s0, %s170
      %p172 = pneg %p51
      %p173 = pneg %p48
      %p174 = pneg %p72
      %p175 = pneg %p69
      %p176 = pneg %p93
      %p177 = pneg %p90
      %p178 = pneg %p121
      %p179 = pneg %p118
      %s180 = smul.u32 4, %s19
      %p181 = scmp.lt.s32.totalorder %s18, 1
      %s182 = scalar_select %p181, %s18, 1
      %p183 = scmp.lt.s32.totalorder %s180, 7
      %s184 = scalar_select %p183, %s180, 7
      %s185 = smul.addr %s182, 8
      %s186 = sadd.s32 %s184, %s185
      %s187 = smul.addr %s186, 4
      %s188 = scalar_lea.vmem %s3, %s187
      %s189 = smul.u32 %s18, 2
      %s190 = sadd.s32 %s189, %s19
      %p191 = scmp.lt.s32.totalorder %s190, 3
      %s192 = scalar_select %p191, %s190, 3
      %s193 = smul.addr %s192, 30
      %s194 = smul.addr %s193, 4
      %s195 = scalar_lea.vmem %s0, %s194
      %s196 = smul.u32 %s18, 2
      %s197 = sadd.s32 %s196, %s19
      %s198 = smul.u32 4, %s19
      %p199 = scmp.lt.s32.totalorder %s18, 1
      %s200 = scalar_select %p199, %s18, 1
      %p201 = scmp.lt.s32.totalorder %s198, 7
      %s202 = scalar_select %p201, %s198, 7
      %s203 = smul.addr %s200, 8
      %s204 = sadd.s32 %s202, %s203
      %s205 = smul.addr %s204, 4
      %s206 = scalar_lea.vmem %s3, %s205
      %s207 = smul.u32 4, %s19
      %v209 = vld [vmem:[%s195] sm:$0xf]
      %v210 = vld [vmem:[%s195 + $0x4] sm:$0xf]
      %v211 = vld [vmem:[%s195 + $0xc] sm:$0xf]
      %v212 = vld [vmem:[%s195 + $0x10] sm:$0xf]
      %v213 = vld [vmem:[%s195 + $0x18] sm:$0xf]
      %v214 = vld [vmem:[%s195 + $0x1c] sm:$0xf]
      %v215 = vld [vmem:[%s195 + $0x24] sm:$0xf]
      %v216 = vld [vmem:[%s195 + $0x28] sm:$0xf]
      %v217 = vld [vmem:[%s195 + $0x30] sm:$0xf]
      %v218 = vld [vmem:[%s195 + $0x34] sm:$0xf]
      %v219 = vld [vmem:[%s195 + $0x3c] sm:$0xf]
      %v220 = vld [vmem:[%s195 + $0x40] sm:$0xf]
      %v221 = vld [vmem:[%s195 + $0x48] sm:$0xf]
      %v222 = vld [vmem:[%s195 + $0x4c] sm:$0xf]
      %v223 = vld [vmem:[%s195 + $0x54] sm:$0xf]
      %v224 = vld [vmem:[%s195 + $0x58] sm:$0xf]
      %v225 = vld [vmem:[%s1] sm:$0xf]
      %v226 = vld [vmem:[%s1 + $0x4] sm:$0xf]
      %v227 = vld [vmem:[%s1 + $0x8] sm:$0xf]
      %v228 = vld [vmem:[%s1 + $0xc] sm:$0xf]
      %v229 = vld [vmem:[%s1 + $0x10] sm:$0xf]
      %v230 = vld [vmem:[%s1 + $0x14] sm:$0xf]
      %v231 = vld [vmem:[%s1 + $0x18] sm:$0xf]
      %v232 = vld [vmem:[%s1 + $0x1c] sm:$0xf]
      %v249 = vunpack.c.l.b16 %v209
      %v250 = vunpack.c.l.b16 %v210
      %v251 = vunpack.c.l.b16 %v211
      %v252 = vunpack.c.l.b16 %v212
      %v253 = vunpack.c.l.b16 %v213
      %v254 = vunpack.c.l.b16 %v214
      %v255 = vunpack.c.l.b16 %v215
      %v256 = vunpack.c.l.b16 %v216
      %v257 = vunpack.c.l.b16 %v217
      %v258 = vunpack.c.l.b16 %v218
      %v259 = vunpack.c.l.b16 %v219
      %v260 = vunpack.c.l.b16 %v220
      %v261 = vunpack.c.l.b16 %v221
      %v262 = vunpack.c.l.b16 %v222
      %v263 = vunpack.c.l.b16 %v223
      %v264 = vunpack.c.l.b16 %v224
      %v265 = vpack.c.b16 %v250, %v249
      %v266 = vpack.c.b16 %v252, %v251
      %v267 = vpack.c.b16 %v254, %v253
      %v268 = vpack.c.b16 %v256, %v255
      %v269 = vpack.c.b16 %v258, %v257
      %v270 = vpack.c.b16 %v260, %v259
      %v271 = vpack.c.b16 %v262, %v261
      %v272 = vpack.c.b16 %v264, %v263
      %v281 = vunpack.c.l.b16 %v225
      %v282 = vunpack.c.l.b16 %v226
      %v283 = vunpack.c.l.b16 %v227
      %v284 = vunpack.c.l.b16 %v228
      %v285 = vunpack.c.l.b16 %v229
      %v286 = vunpack.c.l.b16 %v230
      %v287 = vunpack.c.l.b16 %v231
      %v288 = vunpack.c.l.b16 %v232
      %v289 = vpack.c.b16 %v282, %v281
      %v290 = vpack.c.b16 %v284, %v283
      %v291 = vpack.c.b16 %v286, %v285
      %v292 = vpack.c.b16 %v288, %v287
      %vm297 = vcmask 523264
      %v299 = vsel %vm297, %v265, 0
      %v302 = vsel %vm297, %v266, 0
      %v305 = vsel %vm297, %v267, 0
      %v308 = vsel %vm297, %v268, 0
      %v311 = vsel %vm297, %v269, 0
      %v314 = vsel %vm297, %v270, 0
      %v317 = vsel %vm297, %v271, 0
      %v320 = vsel %vm297, %v272, 0
      %322 = vmatprep.subr.bf16.mxu0 0
      %323 = vmatpush1.bf16.msra.mxu0 %v289
      %324 = vmatprep.subr.bf16.mxu0 0
      %325 = vmatpush1.bf16.msra.mxu0 %v290
      %326 = vmatprep.subr.bf16.mxu0 0
      %327 = vmatpush1.bf16.msra.mxu0 %v291
      %328 = vmatprep.subr.bf16.mxu0 0
      %329 = vmatpush1.bf16.msra.mxu0 %v292
      %330 = vmatprep.subr.bf16.mxu0 0
      %331 = vmatpush1.bf16.msra.mxu0 0
      %332 = vmatprep.subr.bf16.mxu0 0
      %333 = vmatpush1.bf16.msra.mxu0 0
      %334 = vmatprep.subr.bf16.mxu0 0
      %335 = vmatpush1.bf16.msra.mxu0 0
      %336 = vmatprep.subr.bf16.mxu0 0
      %337 = vmatpush1.bf16.msra.mxu0 0
      %338 = vmatprep.subr.bf16.mxu0 0
      %339 = vmatpush1.bf16.msra.mxu0 0
      %340 = vmatprep.subr.bf16.mxu0 0
      %341 = vmatpush1.bf16.msra.mxu0 0
      %342 = vmatprep.subr.bf16.mxu0 0
      %343 = vmatpush1.bf16.msra.mxu0 0
      %344 = vmatprep.subr.bf16.mxu0 0
      %345 = vmatpush1.bf16.msra.mxu0 0
      %346 = vmatprep.subr.bf16.mxu0 0
      %347 = vmatpush1.bf16.msra.mxu0 0
      %348 = vmatprep.subr.bf16.mxu0 0
      %349 = vmatpush1.bf16.msra.mxu0 0
      %350 = vmatprep.subr.bf16.mxu0 0
      %351 = vmatpush1.bf16.msra.mxu0 0
      %352 = vmatprep.subr.bf16.mxu0 0
      %353 = vmatpush1.bf16.msra.mxu0 0
      %354 = vmatprep.mubr.bf16.mxu0 0
      %355 = vmatmul.mubr.bf16.gmra.mrb[0].mxu0 %v299
      %v356 = vpop.f32.mrb[0].mxu0
      %v357 = vadd.f32 0.0, %v356
      %v358 = vpop.f32.mrb[0].mxu0
      %v359 = vpop.f32.mrb[0].mxu0
      %v360 = vadd.f32 0.0, %v359
      %v361 = vpop.f32.mrb[0].mxu0
      %362 = vmatprep.mubr.bf16.mxu0 0
      %363 = vmatmul.mubr.bf16.gmra.mrb[0].mxu0 %v302
      %v364 = vpop.f32.mrb[0].mxu0
      %v365 = vadd.f32 0.0, %v364
      %v366 = vpop.f32.mrb[0].mxu0
      %v367 = vpop.f32.mrb[0].mxu0
      %v368 = vadd.f32 0.0, %v367
      %v369 = vpop.f32.mrb[0].mxu0
      %370 = vmatprep.mubr.bf16.mxu0 0
      %371 = vmatmul.mubr.bf16.gmra.mrb[0].mxu0 %v305
      %v372 = vpop.f32.mrb[0].mxu0
      %v373 = vadd.f32 0.0, %v372
      %v374 = vpop.f32.mrb[0].mxu0
      %v375 = vpop.f32.mrb[0].mxu0
      %v376 = vadd.f32 0.0, %v375
      %v377 = vpop.f32.mrb[0].mxu0
      %378 = vmatprep.mubr.bf16.mxu0 0
      %379 = vmatmul.mubr.bf16.gmra.mrb[0].mxu0 %v308
      %v380 = vpop.f32.mrb[0].mxu0
      %v381 = vadd.f32 0.0, %v380
      %v382 = vpop.f32.mrb[0].mxu0
      %v383 = vpop.f32.mrb[0].mxu0
      %v384 = vadd.f32 0.0, %v383
      %v385 = vpop.f32.mrb[0].mxu0
      %386 = vmatprep.mubr.bf16.mxu0 0
      %387 = vmatmul.mubr.bf16.gmra.mrb[0].mxu0 %v311
      %v388 = vpop.f32.mrb[0].mxu0
      %v389 = vadd.f32 0.0, %v388
      %v390 = vpop.f32.mrb[0].mxu0
      %v391 = vpop.f32.mrb[0].mxu0
      %v392 = vadd.f32 0.0, %v391
      %v393 = vpop.f32.mrb[0].mxu0
      %394 = vmatprep.mubr.bf16.mxu0 0
      %395 = vmatmul.mubr.bf16.gmra.mrb[0].mxu0 %v314
      %v396 = vpop.f32.mrb[0].mxu0
      %v397 = vadd.f32 0.0, %v396
      %v398 = vpop.f32.mrb[0].mxu0
      %v399 = vpop.f32.mrb[0].mxu0
      %v400 = vadd.f32 0.0, %v399
      %v401 = vpop.f32.mrb[0].mxu0
      %402 = vmatprep.mubr.bf16.mxu0 0
      %403 = vmatmul.mubr.bf16.gmra.mrb[0].mxu0 %v317
      %v404 = vpop.f32.mrb[0].mxu0
      %v405 = vadd.f32 0.0, %v404
      %v406 = vpop.f32.mrb[0].mxu0
      %v407 = vpop.f32.mrb[0].mxu0
      %v408 = vadd.f32 0.0, %v407
      %v409 = vpop.f32.mrb[0].mxu0
      %410 = vmatprep.mubr.bf16.mxu0 0
      %411 = vmatmul.mubr.bf16.gmra.mrb[0].mxu0 %v320
      %v412 = vpop.f32.mrb[0].mxu0
      %v413 = vadd.f32 0.0, %v412
      %v414 = vpop.f32.mrb[0].mxu0
      %v415 = vpop.f32.mrb[0].mxu0
      %v416 = vadd.f32 0.0, %v415
      %v417 = vpop.f32.mrb[0].mxu0
      %418 = vdwg.mxu0
      %419 = vst.msk [vmem:[#allocation2] sm:$0xff] %vm297, %v357
      %420 = vst.msk [vmem:[#allocation2 + $0x8] sm:$0xff] %vm297, %v360
      %421 = vst.msk [vmem:[#allocation2 + $0x10] sm:$0xff] %vm297, %v365
      %422 = vst.msk [vmem:[#allocation2 + $0x18] sm:$0xff] %vm297, %v368
      %423 = vst.msk [vmem:[#allocation2 + $0x20] sm:$0xff] %vm297, %v373
      %424 = vst.msk [vmem:[#allocation2 + $0x28] sm:$0xff] %vm297, %v376
      %425 = vst.msk [vmem:[#allocation2 + $0x30] sm:$0xff] %vm297, %v381
      %426 = vst.msk [vmem:[#allocation2 + $0x38] sm:$0xff] %vm297, %v384
      %427 = vst.msk [vmem:[#allocation2 + $0x40] sm:$0xff] %vm297, %v389
      %428 = vst.msk [vmem:[#allocation2 + $0x48] sm:$0xff] %vm297, %v392
      %429 = vst.msk [vmem:[#allocation2 + $0x50] sm:$0xff] %vm297, %v397
      %430 = vst.msk [vmem:[#allocation2 + $0x58] sm:$0xff] %vm297, %v400
      %431 = vst.msk [vmem:[#allocation2 + $0x60] sm:$0xff] %vm297, %v405
      %432 = vst.msk [vmem:[#allocation2 + $0x68] sm:$0xff] %vm297, %v408
      %433 = vst.msk [vmem:[#allocation2 + $0x70] sm:$0xff] %vm297, %v413
      %434 = vst.msk [vmem:[#allocation2 + $0x78] sm:$0xff] %vm297, %v416
      %v435 = vld [vmem:[%s195] sm:$0xf]
      %v436 = vld [vmem:[%s195 + $0x4] sm:$0xf]
      %v437 = vld [vmem:[%s195 + $0x8] sm:$0x1]
      %v438 = vld [vmem:[%s195 + $0xc] sm:$0xf]
      %v439 = vld [vmem:[%s195 + $0x10] sm:$0xf]
      %v440 = vld [vmem:[%s195 + $0x14] sm:$0x1]
      %v441 = vld [vmem:[%s195 + $0x18] sm:$0xf]
      %v442 = vld [vmem:[%s195 + $0x1c] sm:$0xf]
      %v443 = vld [vmem:[%s195 + $0x20] sm:$0x1]
      %v444 = vld [vmem:[%s195 + $0x24] sm:$0xf]
      %v445 = vld [vmem:[%s195 + $0x28] sm:$0xf]
      %v446 = vld [vmem:[%s195 + $0x2c] sm:$0x1]
      %v447 = vld [vmem:[%s195 + $0x30] sm:$0xf]
      %v448 = vld [vmem:[%s195 + $0x34] sm:$0xf]
      %v449 = vld [vmem:[%s195 + $0x38] sm:$0x1]
      %v450 = vld [vmem:[%s195 + $0x3c] sm:$0xf]
      %v451 = vld [vmem:[%s195 + $0x40] sm:$0xf]
      %v452 = vld [vmem:[%s195 + $0x44] sm:$0x1]
      %v453 = vld [vmem:[%s195 + $0x48] sm:$0xf]
      %v454 = vld [vmem:[%s195 + $0x4c] sm:$0xf]
      %v455 = vld [vmem:[%s195 + $0x50] sm:$0x1]
      %v456 = vld [vmem:[%s195 + $0x54] sm:$0xf]
      %v457 = vld [vmem:[%s195 + $0x58] sm:$0xf]
      %v458 = vld [vmem:[%s195 + $0x5c] sm:$0x1]
      %vm459 = vsmask.f32 3328
      %vm460 = vsmask.f32 7440
      %vm461 = vmor %vm459, %vm460
      %v463 = vshrl.u32 %v435, 16
      %v465 = vrot.slane %v463, 4
      %v466 = vshll.u32 %v435, 16
      %v468 = vrot.slane %v466, 5
      %v469 = vor.u32 %v465, %v468
      %v470 = vrot.slane %v469, 4
      %v472 = vshll.u32 %v436, 16
      %v474 = vrot.slane %v472, 5
      %v475 = vsel %vm461, %v470, %v474
      %v476 = vshrl.u32 %v436, 16
      %v478 = vrot.slane %v476, 4
      %v479 = vor.u32 %v478, %v474
      %v480 = vrot.slane %v479, 4
      %v482 = vshll.u32 %v437, 16
      %v484 = vrot.slane %v482, 5
      %v485 = vsel %vm461, %v480, %v484
      %v487 = vshrl.u32 %v438, 16
      %v489 = vrot.slane %v487, 4
      %v490 = vshll.u32 %v438, 16
      %v492 = vrot.slane %v490, 5
      %v493 = vor.u32 %v489, %v492
      %v494 = vrot.slane %v493, 4
      %v496 = vshll.u32 %v439, 16
      %v498 = vrot.slane %v496, 5
      %v499 = vsel %vm461, %v494, %v498
      %v500 = vshrl.u32 %v439, 16
      %v502 = vrot.slane %v500, 4
      %v503 = vor.u32 %v502, %v498
      %v504 = vrot.slane %v503, 4
      %v506 = vshll.u32 %v440, 16
      %v508 = vrot.slane %v506, 5
      %v509 = vsel %vm461, %v504, %v508
      %v511 = vshrl.u32 %v441, 16
      %v513 = vrot.slane %v511, 4
      %v514 = vshll.u32 %v441, 16
      %v516 = vrot.slane %v514, 5
      %v517 = vor.u32 %v513, %v516
      %v518 = vrot.slane %v517, 4
      %v520 = vshll.u32 %v442, 16
      %v522 = vrot.slane %v520, 5
      %v523 = vsel %vm461, %v518, %v522
      %v524 = vshrl.u32 %v442, 16
      %v526 = vrot.slane %v524, 4
      %v527 = vor.u32 %v526, %v522
      %v528 = vrot.slane %v527, 4
      %v530 = vshll.u32 %v443, 16
      %v532 = vrot.slane %v530, 5
      %v533 = vsel %vm461, %v528, %v532
      %v535 = vshrl.u32 %v444, 16
      %v537 = vrot.slane %v535, 4
      %v538 = vshll.u32 %v444, 16
      %v540 = vrot.slane %v538, 5
      %v541 = vor.u32 %v537, %v540
      %v542 = vrot.slane %v541, 4
      %v544 = vshll.u32 %v445, 16
      %v546 = vrot.slane %v544, 5
      %v547 = vsel %vm461, %v542, %v546
      %v548 = vshrl.u32 %v445, 16
      %v550 = vrot.slane %v548, 4
      %v551 = vor.u32 %v550, %v546
      %v552 = vrot.slane %v551, 4
      %v554 = vshll.u32 %v446, 16
      %v556 = vrot.slane %v554, 5
      %v557 = vsel %vm461, %v552, %v556
      %v559 = vshrl.u32 %v447, 16
      %v561 = vrot.slane %v559, 4
      %v562 = vshll.u32 %v447, 16
      %v564 = vrot.slane %v562, 5
      %v565 = vor.u32 %v561, %v564
      %v566 = vrot.slane %v565, 4
      %v568 = vshll.u32 %v448, 16
      %v570 = vrot.slane %v568, 5
      %v571 = vsel %vm461, %v566, %v570
      %v572 = vshrl.u32 %v448, 16
      %v574 = vrot.slane %v572, 4
      %v575 = vor.u32 %v574, %v570
      %v576 = vrot.slane %v575, 4
      %v578 = vshll.u32 %v449, 16
      %v580 = vrot.slane %v578, 5
      %v581 = vsel %vm461, %v576, %v580
      %v583 = vshrl.u32 %v450, 16
      %v585 = vrot.slane %v583, 4
      %v586 = vshll.u32 %v450, 16
      %v588 = vrot.slane %v586, 5
      %v589 = vor.u32 %v585, %v588
      %v590 = vrot.slane %v589, 4
      %v592 = vshll.u32 %v451, 16
      %v594 = vrot.slane %v592, 5
      %v595 = vsel %vm461, %v590, %v594
      %v596 = vshrl.u32 %v451, 16
      %v598 = vrot.slane %v596, 4
      %v599 = vor.u32 %v598, %v594
      %v600 = vrot.slane %v599, 4
      %v602 = vshll.u32 %v452, 16
      %v604 = vrot.slane %v602, 5
      %v605 = vsel %vm461, %v600, %v604
      %v607 = vshrl.u32 %v453, 16
      %v609 = vrot.slane %v607, 4
      %v610 = vshll.u32 %v453, 16
      %v612 = vrot.slane %v610, 5
      %v613 = vor.u32 %v609, %v612
      %v614 = vrot.slane %v613, 4
      %v616 = vshll.u32 %v454, 16
      %v618 = vrot.slane %v616, 5
      %v619 = vsel %vm461, %v614, %v618
      %v620 = vshrl.u32 %v454, 16
      %v622 = vrot.slane %v620, 4
      %v623 = vor.u32 %v622, %v618
      %v624 = vrot.slane %v623, 4
      %v626 = vshll.u32 %v455, 16
      %v628 = vrot.slane %v626, 5
      %v629 = vsel %vm461, %v624, %v628
      %v631 = vshrl.u32 %v456, 16
      %v633 = vrot.slane %v631, 4
      %v634 = vshll.u32 %v456, 16
      %v636 = vrot.slane %v634, 5
      %v637 = vor.u32 %v633, %v636
      %v638 = vrot.slane %v637, 4
      %v640 = vshll.u32 %v457, 16
      %v642 = vrot.slane %v640, 5
      %v643 = vsel %vm461, %v638, %v642
      %v644 = vshrl.u32 %v457, 16
      %v646 = vrot.slane %v644, 4
      %v647 = vor.u32 %v646, %v642
      %v648 = vrot.slane %v647, 4
      %v650 = vshll.u32 %v458, 16
      %v652 = vrot.slane %v650, 5
      %v653 = vsel %vm461, %v648, %v652
      %v654 = vld [vmem:[%s1 + $0x20] sm:$0xf]
      %v655 = vld [vmem:[%s1 + $0x24] sm:$0xf]
      %v656 = vld [vmem:[%s1 + $0x28] sm:$0xf]
      %v657 = vld [vmem:[%s1 + $0x2c] sm:$0xf]
      %v658 = vld [vmem:[%s1 + $0x30] sm:$0xf]
      %v659 = vld [vmem:[%s1 + $0x34] sm:$0xf]
      %v660 = vld [vmem:[%s1 + $0x38] sm:$0xf]
      %v661 = vld [vmem:[%s1 + $0x3c] sm:$0xf]
      %v662 = vunpack.c.l.b16 %v475
      %v663 = vunpack.c.l.b16 %v485
      %v664 = vunpack.c.l.b16 %v499
      %v665 = vunpack.c.l.b16 %v509
      %v666 = vunpack.c.l.b16 %v523
      %v667 = vunpack.c.l.b16 %v533
      %v668 = vunpack.c.l.b16 %v547
      %v669 = vunpack.c.l.b16 %v557
      %v670 = vunpack.c.l.b16 %v571
      %v671 = vunpack.c.l.b16 %v581
      %v672 = vunpack.c.l.b16 %v595
      %v673 = vunpack.c.l.b16 %v605
      %v674 = vunpack.c.l.b16 %v619
      %v675 = vunpack.c.l.b16 %v629
      %v676 = vunpack.c.l.b16 %v643
      %v677 = vunpack.c.l.b16 %v653
      %v678 = vpack.c.b16 %v663, %v662
      %v679 = vpack.c.b16 %v665, %v664
      %v680 = vpack.c.b16 %v667, %v666
      %v681 = vpack.c.b16 %v669, %v668
      %v682 = vpack.c.b16 %v671, %v670
      %v683 = vpack.c.b16 %v673, %v672
      %v684 = vpack.c.b16 %v675, %v674
      %v685 = vpack.c.b16 %v677, %v676
      %v694 = vunpack.c.l.b16 %v654
      %v695 = vunpack.c.l.b16 %v655
      %v696 = vunpack.c.l.b16 %v656
      %v697 = vunpack.c.l.b16 %v657
      %v698 = vunpack.c.l.b16 %v658
      %v699 = vunpack.c.l.b16 %v659
      %v700 = vunpack.c.l.b16 %v660
      %v701 = vunpack.c.l.b16 %v661
      %v702 = vpack.c.b16 %v695, %v694
      %v703 = vpack.c.b16 %v697, %v696
      %v704 = vpack.c.b16 %v699, %v698
      %v705 = vpack.c.b16 %v701, %v700
      %v711 = vsel %vm297, %v678, 0
      %v714 = vsel %vm297, %v679, 0
      %v717 = vsel %vm297, %v680, 0
      %v720 = vsel %vm297, %v681, 0
      %v723 = vsel %vm297, %v682, 0
      %v726 = vsel %vm297, %v683, 0
      %v729 = vsel %vm297, %v684, 0
      %v732 = vsel %vm297, %v685, 0
      %734 = vmatprep.subr.bf16.mxu0 0
      %735 = vmatpush1.bf16.msra.mxu0 %v702
      %736 = vmatprep.subr.bf16.mxu0 0
      %737 = vmatpush1.bf16.msra.mxu0 %v703
      %738 = vmatprep.subr.bf16.mxu0 0
      %739 = vmatpush1.bf16.msra.mxu0 %v704
      %740 = vmatprep.subr.bf16.mxu0 0
      %741 = vmatpush1.bf16.msra.mxu0 %v705
      %742 = vmatprep.subr.bf16.mxu0 0
      %743 = vmatpush1.bf16.msra.mxu0 0
      %744 = vmatprep.subr.bf16.mxu0 0
      %745 = vmatpush1.bf16.msra.mxu0 0
      %746 = vmatprep.subr.bf16.mxu0 0
      %747 = vmatpush1.bf16.msra.mxu0 0
      %748 = vmatprep.subr.bf16.mxu0 0
      %749 = vmatpush1.bf16.msra.mxu0 0
      %750 = vmatprep.subr.bf16.mxu0 0
      %751 = vmatpush1.bf16.msra.mxu0 0
      %752 = vmatprep.subr.bf16.mxu0 0
      %753 = vmatpush1.bf16.msra.mxu0 0
      %754 = vmatprep.subr.bf16.mxu0 0
      %755 = vmatpush1.bf16.msra.mxu0 0
      %756 = vmatprep.subr.bf16.mxu0 0
      %757 = vmatpush1.bf16.msra.mxu0 0
      %758 = vmatprep.subr.bf16.mxu0 0
      %759 = vmatpush1.bf16.msra.mxu0 0
      %760 = vmatprep.subr.bf16.mxu0 0
      %761 = vmatpush1.bf16.msra.mxu0 0
      %762 = vmatprep.subr.bf16.mxu0 0
      %763 = vmatpush1.bf16.msra.mxu0 0
      %764 = vmatprep.subr.bf16.mxu0 0
      %765 = vmatpush1.bf16.msra.mxu0 0
      %766 = vmatprep.mubr.bf16.mxu0 0
      %767 = vmatmul.mubr.bf16.gmra.mrb[0].mxu0 %v711
      %v768 = vpop.f32.mrb[0].mxu0
      %v769 = vadd.f32 0.0, %v768
      %v770 = vpop.f32.mrb[0].mxu0
      %v771 = vpop.f32.mrb[0].mxu0
      %v772 = vadd.f32 0.0, %v771
      %v773 = vpop.f32.mrb[0].mxu0
      %774 = vmatprep.mubr.bf16.mxu0 0
      %775 = vmatmul.mubr.bf16.gmra.mrb[0].mxu0 %v714
      %v776 = vpop.f32.mrb[0].mxu0
      %v777 = vadd.f32 0.0, %v776
      %v778 = vpop.f32.mrb[0].mxu0
      %v779 = vpop.f32.mrb[0].mxu0
      %v780 = vadd.f32 0.0, %v779
      %v781 = vpop.f32.mrb[0].mxu0
      %782 = vmatprep.mubr.bf16.mxu0 0
      %783 = vmatmul.mubr.bf16.gmra.mrb[0].mxu0 %v717
      %v784 = vpop.f32.mrb[0].mxu0
      %v785 = vadd.f32 0.0, %v784
      %v786 = vpop.f32.mrb[0].mxu0
      %v787 = vpop.f32.mrb[0].mxu0
      %v788 = vadd.f32 0.0, %v787
      %v789 = vpop.f32.mrb[0].mxu0
      %790 = vmatprep.mubr.bf16.mxu0 0
      %791 = vmatmul.mubr.bf16.gmra.mrb[0].mxu0 %v720
      %v792 = vpop.f32.mrb[0].mxu0
      %v793 = vadd.f32 0.0, %v792
      %v794 = vpop.f32.mrb[0].mxu0
      %v795 = vpop.f32.mrb[0].mxu0
      %v796 = vadd.f32 0.0, %v795
      %v797 = vpop.f32.mrb[0].mxu0
      %798 = vmatprep.mubr.bf16.mxu0 0
      %799 = vmatmul.mubr.bf16.gmra.mrb[0].mxu0 %v723
      %v800 = vpop.f32.mrb[0].mxu0
      %v801 = vadd.f32 0.0, %v800
      %v802 = vpop.f32.mrb[0].mxu0
      %v803 = vpop.f32.mrb[0].mxu0
      %v804 = vadd.f32 0.0, %v803
      %v805 = vpop.f32.mrb[0].mxu0
      %806 = vmatprep.mubr.bf16.mxu0 0
      %807 = vmatmul.mubr.bf16.gmra.mrb[0].mxu0 %v726
      %v808 = vpop.f32.mrb[0].mxu0
      %v809 = vadd.f32 0.0, %v808
      %v810 = vpop.f32.mrb[0].mxu0
      %v811 = vpop.f32.mrb[0].mxu0
      %v812 = vadd.f32 0.0, %v811
      %v813 = vpop.f32.mrb[0].mxu0
      %814 = vmatprep.mubr.bf16.mxu0 0
      %815 = vmatmul.mubr.bf16.gmra.mrb[0].mxu0 %v729
      %v816 = vpop.f32.mrb[0].mxu0
      %v817 = vadd.f32 0.0, %v816
      %v818 = vpop.f32.mrb[0].mxu0
      %v819 = vpop.f32.mrb[0].mxu0
      %v820 = vadd.f32 0.0, %v819
      %v821 = vpop.f32.mrb[0].mxu0
      %822 = vmatprep.mubr.bf16.mxu0 0
      %823 = vmatmul.mubr.bf16.gmra.mrb[0].mxu0 %v732
      %v824 = vpop.f32.mrb[0].mxu0
      %v825 = vadd.f32 0.0, %v824
      %v826 = vpop.f32.mrb[0].mxu0
      %v827 = vpop.f32.mrb[0].mxu0
      %v828 = vadd.f32 0.0, %v827
      %v829 = vpop.f32.mrb[0].mxu0
      %830 = vdwg.mxu0
      %v831 = vld [vmem:[#allocation2] sm:$0xff]
      %v832 = vld [vmem:[#allocation2 + $0x8] sm:$0xff]
      %v833 = vld [vmem:[#allocation2 + $0x10] sm:$0xff]
      %v834 = vld [vmem:[#allocation2 + $0x18] sm:$0xff]
      %v835 = vld [vmem:[#allocation2 + $0x20] sm:$0xff]
      %v836 = vld [vmem:[#allocation2 + $0x28] sm:$0xff]
      %v837 = vld [vmem:[#allocation2 + $0x30] sm:$0xff]
      %v838 = vld [vmem:[#allocation2 + $0x38] sm:$0xff]
      %v839 = vld [vmem:[#allocation2 + $0x40] sm:$0xff]
      %v840 = vld [vmem:[#allocation2 + $0x48] sm:$0xff]
      %v841 = vld [vmem:[#allocation2 + $0x50] sm:$0xff]
      %v842 = vld [vmem:[#allocation2 + $0x58] sm:$0xff]
      %v843 = vld [vmem:[#allocation2 + $0x60] sm:$0xff]
      %v844 = vld [vmem:[#allocation2 + $0x68] sm:$0xff]
      %v845 = vld [vmem:[#allocation2 + $0x70] sm:$0xff]
      %v846 = vld [vmem:[#allocation2 + $0x78] sm:$0xff]
      %v847 = vadd.f32 %v831, %v769
      %v848 = vadd.f32 %v832, %v772
      %v849 = vadd.f32 %v833, %v777
      %v850 = vadd.f32 %v834, %v780
      %v851 = vadd.f32 %v835, %v785
      %v852 = vadd.f32 %v836, %v788
      %v853 = vadd.f32 %v837, %v793
      %v854 = vadd.f32 %v838, %v796
      %v855 = vadd.f32 %v839, %v801
      %v856 = vadd.f32 %v840, %v804
      %v857 = vadd.f32 %v841, %v809
      %v858 = vadd.f32 %v842, %v812
      %v859 = vadd.f32 %v843, %v817
      %v860 = vadd.f32 %v844, %v820
      %v861 = vadd.f32 %v845, %v825
      %v862 = vadd.f32 %v846, %v828
      %863 = vst.msk [vmem:[#allocation2] sm:$0xff] %vm297, %v847
      %864 = vst.msk [vmem:[#allocation2 + $0x8] sm:$0xff] %vm297, %v848
      %865 = vst.msk [vmem:[#allocation2 + $0x10] sm:$0xff] %vm297, %v849
      %866 = vst.msk [vmem:[#allocation2 + $0x18] sm:$0xff] %vm297, %v850
      %867 = vst.msk [vmem:[#allocation2 + $0x20] sm:$0xff] %vm297, %v851
      %868 = vst.msk [vmem:[#allocation2 + $0x28] sm:$0xff] %vm297, %v852
      %869 = vst.msk [vmem:[#allocation2 + $0x30] sm:$0xff] %vm297, %v853
      %870 = vst.msk [vmem:[#allocation2 + $0x38] sm:$0xff] %vm297, %v854
      %871 = vst.msk [vmem:[#allocation2 + $0x40] sm:$0xff] %vm297, %v855
      %872 = vst.msk [vmem:[#allocation2 + $0x48] sm:$0xff] %vm297, %v856
      %873 = vst.msk [vmem:[#allocation2 + $0x50] sm:$0xff] %vm297, %v857
      %874 = vst.msk [vmem:[#allocation2 + $0x58] sm:$0xff] %vm297, %v858
      %875 = vst.msk [vmem:[#allocation2 + $0x60] sm:$0xff] %vm297, %v859
      %876 = vst.msk [vmem:[#allocation2 + $0x68] sm:$0xff] %vm297, %v860
      %877 = vst.msk [vmem:[#allocation2 + $0x70] sm:$0xff] %vm297, %v861
      %878 = vst.msk [vmem:[#allocation2 + $0x78] sm:$0xff] %vm297, %v862
      %v879 = vld [vmem:[%s195] sm:$0xe]
      %v880 = vld [vmem:[%s195 + $0x4] sm:$0xf]
      %v881 = vld [vmem:[%s195 + $0x8] sm:$0x1]
      %v882 = vld [vmem:[%s195 + $0xc] sm:$0xe]
      %v883 = vld [vmem:[%s195 + $0x10] sm:$0xf]
      %v884 = vld [vmem:[%s195 + $0x14] sm:$0x1]
      %v885 = vld [vmem:[%s195 + $0x18] sm:$0xe]
      %v886 = vld [vmem:[%s195 + $0x1c] sm:$0xf]
      %v887 = vld [vmem:[%s195 + $0x20] sm:$0x1]
      %v888 = vld [vmem:[%s195 + $0x24] sm:$0xe]
      %v889 = vld [vmem:[%s195 + $0x28] sm:$0xf]
      %v890 = vld [vmem:[%s195 + $0x2c] sm:$0x1]
      %v891 = vld [vmem:[%s195 + $0x30] sm:$0xe]
      %v892 = vld [vmem:[%s195 + $0x34] sm:$0xf]
      %v893 = vld [vmem:[%s195 + $0x38] sm:$0x1]
      %v894 = vld [vmem:[%s195 + $0x3c] sm:$0xe]
      %v895 = vld [vmem:[%s195 + $0x40] sm:$0xf]
      %v896 = vld [vmem:[%s195 + $0x44] sm:$0x1]
      %v897 = vld [vmem:[%s195 + $0x48] sm:$0xe]
      %v898 = vld [vmem:[%s195 + $0x4c] sm:$0xf]
      %v899 = vld [vmem:[%s195 + $0x50] sm:$0x1]
      %v900 = vld [vmem:[%s195 + $0x54] sm:$0xe]
      %v901 = vld [vmem:[%s195 + $0x58] sm:$0xf]
      %v902 = vld [vmem:[%s195 + $0x5c] sm:$0x1]
      %vm927 = vcmask 1042432
      %vm928 = vcmask 1046532
      %vm929 = vmor %vm927, %vm928
      %v930 = vrot.slane %v879, 5
      %v931 = vrot.slane %v930, 4
      %v932 = vrot.slane %v880, 5
      %v933 = vsel %vm929, %v931, %v932
      %v934 = vrot.slane %v932, 4
      %v935 = vrot.slane %v881, 5
      %v936 = vsel %vm929, %v934, %v935
      %v937 = vrot.slane %v882, 5
      %v938 = vrot.slane %v937, 4
      %v939 = vrot.slane %v883, 5
      %v940 = vsel %vm929, %v938, %v939
      %v941 = vrot.slane %v939, 4
      %v942 = vrot.slane %v884, 5
      %v943 = vsel %vm929, %v941, %v942
      %v944 = vrot.slane %v885, 5
      %v945 = vrot.slane %v944, 4
      %v946 = vrot.slane %v886, 5
      %v947 = vsel %vm929, %v945, %v946
      %v948 = vrot.slane %v946, 4
      %v949 = vrot.slane %v887, 5
      %v950 = vsel %vm929, %v948, %v949
      %v951 = vrot.slane %v888, 5
      %v952 = vrot.slane %v951, 4
      %v953 = vrot.slane %v889, 5
      %v954 = vsel %vm929, %v952, %v953
      %v955 = vrot.slane %v953, 4
      %v956 = vrot.slane %v890, 5
      %v957 = vsel %vm929, %v955, %v956
      %v958 = vrot.slane %v891, 5
      %v959 = vrot.slane %v958, 4
      %v960 = vrot.slane %v892, 5
      %v961 = vsel %vm929, %v959, %v960
      %v962 = vrot.slane %v960, 4
      %v963 = vrot.slane %v893, 5
      %v964 = vsel %vm929, %v962, %v963
      %v965 = vrot.slane %v894, 5
      %v966 = vrot.slane %v965, 4
      %v967 = vrot.slane %v895, 5
      %v968 = vsel %vm929, %v966, %v967
      %v969 = vrot.slane %v967, 4
      %v970 = vrot.slane %v896, 5
      %v971 = vsel %vm929, %v969, %v970
      %v972 = vrot.slane %v897, 5
      %v973 = vrot.slane %v972, 4
      %v974 = vrot.slane %v898, 5
      %v975 = vsel %vm929, %v973, %v974
      %v976 = vrot.slane %v974, 4
      %v977 = vrot.slane %v899, 5
      %v978 = vsel %vm929, %v976, %v977
      %v979 = vrot.slane %v900, 5
      %v980 = vrot.slane %v979, 4
      %v981 = vrot.slane %v901, 5
      %v982 = vsel %vm929, %v980, %v981
      %v983 = vrot.slane %v981, 4
      %v984 = vrot.slane %v902, 5
      %v985 = vsel %vm929, %v983, %v984
      %v986 = vld [vmem:[%s1 + $0x40] sm:$0xf]
      %v987 = vld [vmem:[%s1 + $0x44] sm:$0xf]
      %v988 = vld [vmem:[%s1 + $0x48] sm:$0xf]
      %v989 = vld [vmem:[%s1 + $0x4c] sm:$0xf]
      %v990 = vld [vmem:[%s1 + $0x50] sm:$0xf]
      %v991 = vld [vmem:[%s1 + $0x54] sm:$0xf]
      %v992 = vld [vmem:[%s1 + $0x58] sm:$0xf]
      %v993 = vld [vmem:[%s1 + $0x5c] sm:$0xf]
      %v994 = vunpack.c.l.b16 %v933
      %v995 = vunpack.c.l.b16 %v936
      %v996 = vunpack.c.l.b16 %v940
      %v997 = vunpack.c.l.b16 %v943
      %v998 = vunpack.c.l.b16 %v947
      %v999 = vunpack.c.l.b16 %v950
      %v1000 = vunpack.c.l.b16 %v954
      %v1001 = vunpack.c.l.b16 %v957
      %v1002 = vunpack.c.l.b16 %v961
      %v1003 = vunpack.c.l.b16 %v964
      %v1004 = vunpack.c.l.b16 %v968
      %v1005 = vunpack.c.l.b16 %v971
      %v1006 = vunpack.c.l.b16 %v975
      %v1007 = vunpack.c.l.b16 %v978
      %v1008 = vunpack.c.l.b16 %v982
      %v1009 = vunpack.c.l.b16 %v985
      %v1010 = vpack.c.b16 %v995, %v994
      %v1011 = vpack.c.b16 %v997, %v996
      %v1012 = vpack.c.b16 %v999, %v998
      %v1013 = vpack.c.b16 %v1001, %v1000
      %v1014 = vpack.c.b16 %v1003, %v1002
      %v1015 = vpack.c.b16 %v1005, %v1004
      %v1016 = vpack.c.b16 %v1007, %v1006
      %v1017 = vpack.c.b16 %v1009, %v1008
      %v1026 = vunpack.c.l.b16 %v986
      %v1027 = vunpack.c.l.b16 %v987
      %v1028 = vunpack.c.l.b16 %v988
      %v1029 = vunpack.c.l.b16 %v989
      %v1030 = vunpack.c.l.b16 %v990
      %v1031 = vunpack.c.l.b16 %v991
      %v1032 = vunpack.c.l.b16 %v992
      %v1033 = vunpack.c.l.b16 %v993
      %v1034 = vpack.c.b16 %v1027, %v1026
      %v1035 = vpack.c.b16 %v1029, %v1028
      %v1036 = vpack.c.b16 %v1031, %v1030
      %v1037 = vpack.c.b16 %v1033, %v1032
      %v1043 = vsel %vm297, %v1010, 0
      %v1046 = vsel %vm297, %v1011, 0
      %v1049 = vsel %vm297, %v1012, 0
      %v1052 = vsel %vm297, %v1013, 0
      %v1055 = vsel %vm297, %v1014, 0
      %v1058 = vsel %vm297, %v1015, 0
      %v1061 = vsel %vm297, %v1016, 0
      %v1064 = vsel %vm297, %v1017, 0
      %1066 = vmatprep.subr.bf16.mxu0 0
      %1067 = vmatpush1.bf16.msra.mxu0 %v1034
      %1068 = vmatprep.subr.bf16.mxu0 0
      %1069 = vmatpush1.bf16.msra.mxu0 %v1035
      %1070 = vmatprep.subr.bf16.mxu0 0
      %1071 = vmatpush1.bf16.msra.mxu0 %v1036
      %1072 = vmatprep.subr.bf16.mxu0 0
      %1073 = vmatpush1.bf16.msra.mxu0 %v1037
      %1074 = vmatprep.subr.bf16.mxu0 0
      %1075 = vmatpush1.bf16.msra.mxu0 0
      %1076 = vmatprep.subr.bf16.mxu0 0
      %1077 = vmatpush1.bf16.msra.mxu0 0
      %1078 = vmatprep.subr.bf16.mxu0 0
      %1079 = vmatpush1.bf16.msra.mxu0 0
      %1080 = vmatprep.subr.bf16.mxu0 0
      %1081 = vmatpush1.bf16.msra.mxu0 0
      %1082 = vmatprep.subr.bf16.mxu0 0
      %1083 = vmatpush1.bf16.msra.mxu0 0
      %1084 = vmatprep.subr.bf16.mxu0 0
      %1085 = vmatpush1.bf16.msra.mxu0 0
      %1086 = vmatprep.subr.bf16.mxu0 0
      %1087 = vmatpush1.bf16.msra.mxu0 0
      %1088 = vmatprep.subr.bf16.mxu0 0
      %1089 = vmatpush1.bf16.msra.mxu0 0
      %1090 = vmatprep.subr.bf16.mxu0 0
      %1091 = vmatpush1.bf16.msra.mxu0 0
      %1092 = vmatprep.subr.bf16.mxu0 0
      %1093 = vmatpush1.bf16.msra.mxu0 0
      %1094 = vmatprep.subr.bf16.mxu0 0
      %1095 = vmatpush1.bf16.msra.mxu0 0
      %1096 = vmatprep.subr.bf16.mxu0 0
      %1097 = vmatpush1.bf16.msra.mxu0 0
      %1098 = vmatprep.mubr.bf16.mxu0 0
      %1099 = vmatmul.mubr.bf16.gmra.mrb[0].mxu0 %v1043
      %v1100 = vpop.f32.mrb[0].mxu0
      %v1101 = vadd.f32 0.0, %v1100
      %v1102 = vpop.f32.mrb[0].mxu0
      %v1103 = vpop.f32.mrb[0].mxu0
      %v1104 = vadd.f32 0.0, %v1103
      %v1105 = vpop.f32.mrb[0].mxu0
      %1106 = vmatprep.mubr.bf16.mxu0 0
      %1107 = vmatmul.mubr.bf16.gmra.mrb[0].mxu0 %v1046
      %v1108 = vpop.f32.mrb[0].mxu0
      %v1109 = vadd.f32 0.0, %v1108
      %v1110 = vpop.f32.mrb[0].mxu0
      %v1111 = vpop.f32.mrb[0].mxu0
      %v1112 = vadd.f32 0.0, %v1111
      %v1113 = vpop.f32.mrb[0].mxu0
      %1114 = vmatprep.mubr.bf16.mxu0 0
      %1115 = vmatmul.mubr.bf16.gmra.mrb[0].mxu0 %v1049
      %v1116 = vpop.f32.mrb[0].mxu0
      %v1117 = vadd.f32 0.0, %v1116
      %v1118 = vpop.f32.mrb[0].mxu0
      %v1119 = vpop.f32.mrb[0].mxu0
      %v1120 = vadd.f32 0.0, %v1119
      %v1121 = vpop.f32.mrb[0].mxu0
      %1122 = vmatprep.mubr.bf16.mxu0 0
      %1123 = vmatmul.mubr.bf16.gmra.mrb[0].mxu0 %v1052
      %v1124 = vpop.f32.mrb[0].mxu0
      %v1125 = vadd.f32 0.0, %v1124
      %v1126 = vpop.f32.mrb[0].mxu0
      %v1127 = vpop.f32.mrb[0].mxu0
      %v1128 = vadd.f32 0.0, %v1127
      %v1129 = vpop.f32.mrb[0].mxu0
      %1130 = vmatprep.mubr.bf16.mxu0 0
      %1131 = vmatmul.mubr.bf16.gmra.mrb[0].mxu0 %v1055
      %v1132 = vpop.f32.mrb[0].mxu0
      %v1133 = vadd.f32 0.0, %v1132
      %v1134 = vpop.f32.mrb[0].mxu0
      %v1135 = vpop.f32.mrb[0].mxu0
      %v1136 = vadd.f32 0.0, %v1135
      %v1137 = vpop.f32.mrb[0].mxu0
      %1138 = vmatprep.mubr.bf16.mxu0 0
      %1139 = vmatmul.mubr.bf16.gmra.mrb[0].mxu0 %v1058
      %v1140 = vpop.f32.mrb[0].mxu0
      %v1141 = vadd.f32 0.0, %v1140
      %v1142 = vpop.f32.mrb[0].mxu0
      %v1143 = vpop.f32.mrb[0].mxu0
      %v1144 = vadd.f32 0.0, %v1143
      %v1145 = vpop.f32.mrb[0].mxu0
      %1146 = vmatprep.mubr.bf16.mxu0 0
      %1147 = vmatmul.mubr.bf16.gmra.mrb[0].mxu0 %v1061
      %v1148 = vpop.f32.mrb[0].mxu0
      %v1149 = vadd.f32 0.0, %v1148
      %v1150 = vpop.f32.mrb[0].mxu0
      %v1151 = vpop.f32.mrb[0].mxu0
      %v1152 = vadd.f32 0.0, %v1151
      %v1153 = vpop.f32.mrb[0].mxu0
      %1154 = vmatprep.mubr.bf16.mxu0 0
      %1155 = vmatmul.mubr.bf16.gmra.mrb[0].mxu0 %v1064
      %v1156 = vpop.f32.mrb[0].mxu0
      %v1157 = vadd.f32 0.0, %v1156
      %v1158 = vpop.f32.mrb[0].mxu0
      %v1159 = vpop.f32.mrb[0].mxu0
      %v1160 = vadd.f32 0.0, %v1159
      %v1161 = vpop.f32.mrb[0].mxu0
      %1162 = vdwg.mxu0
      %v1163 = vld [vmem:[#allocation2] sm:$0xff]
      %v1164 = vld [vmem:[#allocation2 + $0x8] sm:$0xff]
      %v1165 = vld [vmem:[#allocation2 + $0x10] sm:$0xff]
      %v1166 = vld [vmem:[#allocation2 + $0x18] sm:$0xff]
      %v1167 = vld [vmem:[#allocation2 + $0x20] sm:$0xff]
      %v1168 = vld [vmem:[#allocation2 + $0x28] sm:$0xff]
      %v1169 = vld [vmem:[#allocation2 + $0x30] sm:$0xff]
      %v1170 = vld [vmem:[#allocation2 + $0x38] sm:$0xff]
      %v1171 = vld [vmem:[#allocation2 + $0x40] sm:$0xff]
      %v1172 = vld [vmem:[#allocation2 + $0x48] sm:$0xff]
      %v1173 = vld [vmem:[#allocation2 + $0x50] sm:$0xff]
      %v1174 = vld [vmem:[#allocation2 + $0x58] sm:$0xff]
      %v1175 = vld [vmem:[#allocation2 + $0x60] sm:$0xff]
      %v1176 = vld [vmem:[#allocation2 + $0x68] sm:$0xff]
      %v1177 = vld [vmem:[#allocation2 + $0x70] sm:$0xff]
      %v1178 = vld [vmem:[#allocation2 + $0x78] sm:$0xff]
      %v1179 = vadd.f32 %v1163, %v1101
      %v1180 = vadd.f32 %v1164, %v1104
      %v1181 = vadd.f32 %v1165, %v1109
      %v1182 = vadd.f32 %v1166, %v1112
      %v1183 = vadd.f32 %v1167, %v1117
      %v1184 = vadd.f32 %v1168, %v1120
      %v1185 = vadd.f32 %v1169, %v1125
      %v1186 = vadd.f32 %v1170, %v1128
      %v1187 = vadd.f32 %v1171, %v1133
      %v1188 = vadd.f32 %v1172, %v1136
      %v1189 = vadd.f32 %v1173, %v1141
      %v1190 = vadd.f32 %v1174, %v1144
      %v1191 = vadd.f32 %v1175, %v1149
      %v1192 = vadd.f32 %v1176, %v1152
      %v1193 = vadd.f32 %v1177, %v1157
      %v1194 = vadd.f32 %v1178, %v1160
      %1195 = vst.msk [vmem:[#allocation2] sm:$0xff] %vm297, %v1179
      %1196 = vst.msk [vmem:[#allocation2 + $0x8] sm:$0xff] %vm297, %v1180
      %1197 = vst.msk [vmem:[#allocation2 + $0x10] sm:$0xff] %vm297, %v1181
      %1198 = vst.msk [vmem:[#allocation2 + $0x18] sm:$0xff] %vm297, %v1182
      %1199 = vst.msk [vmem:[#allocation2 + $0x20] sm:$0xff] %vm297, %v1183
      %1200 = vst.msk [vmem:[#allocation2 + $0x28] sm:$0xff] %vm297, %v1184
      %1201 = vst.msk [vmem:[#allocation2 + $0x30] sm:$0xff] %vm297, %v1185
      %1202 = vst.msk [vmem:[#allocation2 + $0x38] sm:$0xff] %vm297, %v1186
      %1203 = vst.msk [vmem:[#allocation2 + $0x40] sm:$0xff] %vm297, %v1187
      %1204 = vst.msk [vmem:[#allocation2 + $0x48] sm:$0xff] %vm297, %v1188
      %1205 = vst.msk [vmem:[#allocation2 + $0x50] sm:$0xff] %vm297, %v1189
      %1206 = vst.msk [vmem:[#allocation2 + $0x58] sm:$0xff] %vm297, %v1190
      %1207 = vst.msk [vmem:[#allocation2 + $0x60] sm:$0xff] %vm297, %v1191
      %1208 = vst.msk [vmem:[#allocation2 + $0x68] sm:$0xff] %vm297, %v1192
      %1209 = vst.msk [vmem:[#allocation2 + $0x70] sm:$0xff] %vm297, %v1193
      %1210 = vst.msk [vmem:[#allocation2 + $0x78] sm:$0xff] %vm297, %v1194
      %s1211 = scalar_lea.vmem %s195, 12
      %v1212 = vld [vmem:[%s1211] sm:$0xf]
      %v1213 = vld [vmem:[%s1211 + $0x4] sm:$0xf]
      %v1214 = vld [vmem:[%s1211 + $0xc] sm:$0xf]
      %v1215 = vld [vmem:[%s1211 + $0x10] sm:$0xf]
      %v1216 = vld [vmem:[%s1211 + $0x18] sm:$0xf]
      %v1217 = vld [vmem:[%s1211 + $0x1c] sm:$0xf]
      %v1218 = vld [vmem:[%s1211 + $0x24] sm:$0xf]
      %v1219 = vld [vmem:[%s1211 + $0x28] sm:$0xf]
      %v1220 = vld [vmem:[%s1211 + $0x30] sm:$0xf]
      %v1221 = vld [vmem:[%s1211 + $0x34] sm:$0xf]
      %v1222 = vld [vmem:[%s1211 + $0x3c] sm:$0xf]
      %v1223 = vld [vmem:[%s1211 + $0x40] sm:$0xf]
      %v1224 = vld [vmem:[%s1211 + $0x48] sm:$0xf]
      %v1225 = vld [vmem:[%s1211 + $0x4c] sm:$0xf]
      %v1226 = vld [vmem:[%s1211 + $0x54] sm:$0xf]
      %v1227 = vld [vmem:[%s1211 + $0x58] sm:$0xf]
      %s1228 = scalar_lea.vmem %s1, 96
      %v1229 = vld [vmem:[%s1228] sm:$0xf]
      %v1230 = vld [vmem:[%s1228 + $0x4] sm:$0xf]
      %v1231 = vld [vmem:[%s1228 + $0x8] sm:$0xf]
      %v1232 = vld [vmem:[%s1228 + $0xc] sm:$0xf]
      %v1233 = vld [vmem:[%s1228 + $0x10] sm:$0xf]
      %v1234 = vld [vmem:[%s1228 + $0x14] sm:$0xf]
      %v1235 = vld [vmem:[%s1228 + $0x18] sm:$0xf]
      %v1236 = vld [vmem:[%s1228 + $0x1c] sm:$0xf]
      %v1253 = vunpack.c.l.b16 %v1212
      %v1254 = vunpack.c.l.b16 %v1213
      %v1255 = vunpack.c.l.b16 %v1214
      %v1256 = vunpack.c.l.b16 %v1215
      %v1257 = vunpack.c.l.b16 %v1216
      %v1258 = vunpack.c.l.b16 %v1217
      %v1259 = vunpack.c.l.b16 %v1218
      %v1260 = vunpack.c.l.b16 %v1219
      %v1261 = vunpack.c.l.b16 %v1220
      %v1262 = vunpack.c.l.b16 %v1221
      %v1263 = vunpack.c.l.b16 %v1222
      %v1264 = vunpack.c.l.b16 %v1223
      %v1265 = vunpack.c.l.b16 %v1224
      %v1266 = vunpack.c.l.b16 %v1225
      %v1267 = vunpack.c.l.b16 %v1226
      %v1268 = vunpack.c.l.b16 %v1227
      %v1269 = vpack.c.b16 %v1254, %v1253
      %v1270 = vpack.c.b16 %v1256, %v1255
      %v1271 = vpack.c.b16 %v1258, %v1257
      %v1272 = vpack.c.b16 %v1260, %v1259
      %v1273 = vpack.c.b16 %v1262, %v1261
      %v1274 = vpack.c.b16 %v1264, %v1263
      %v1275 = vpack.c.b16 %v1266, %v1265
      %v1276 = vpack.c.b16 %v1268, %v1267
      %v1285 = vunpack.c.l.b16 %v1229
      %v1286 = vunpack.c.l.b16 %v1230
      %v1287 = vunpack.c.l.b16 %v1231
      %v1288 = vunpack.c.l.b16 %v1232
      %v1289 = vunpack.c.l.b16 %v1233
      %v1290 = vunpack.c.l.b16 %v1234
      %v1291 = vunpack.c.l.b16 %v1235
      %v1292 = vunpack.c.l.b16 %v1236
      %v1293 = vpack.c.b16 %v1286, %v1285
      %v1294 = vpack.c.b16 %v1288, %v1287
      %v1295 = vpack.c.b16 %v1290, %v1289
      %v1296 = vpack.c.b16 %v1292, %v1291
      %v1302 = vsel %vm297, %v1269, 0
      %v1305 = vsel %vm297, %v1270, 0
      %v1308 = vsel %vm297, %v1271, 0
      %v1311 = vsel %vm297, %v1272, 0
      %v1314 = vsel %vm297, %v1273, 0
      %v1317 = vsel %vm297, %v1274, 0
      %v1320 = vsel %vm297, %v1275, 0
      %v1323 = vsel %vm297, %v1276, 0
      %1325 = vmatprep.subr.bf16.mxu0 0
      %1326 = vmatpush1.bf16.msra.mxu0 %v1293
      %1327 = vmatprep.subr.bf16.mxu0 0
      %1328 = vmatpush1.bf16.msra.mxu0 %v1294
      %1329 = vmatprep.subr.bf16.mxu0 0
      %1330 = vmatpush1.bf16.msra.mxu0 %v1295
      %1331 = vmatprep.subr.bf16.mxu0 0
      %1332 = vmatpush1.bf16.msra.mxu0 %v1296
      %1333 = vmatprep.subr.bf16.mxu0 0
      %1334 = vmatpush1.bf16.msra.mxu0 0
      %1335 = vmatprep.subr.bf16.mxu0 0
      %1336 = vmatpush1.bf16.msra.mxu0 0
      %1337 = vmatprep.subr.bf16.mxu0 0
      %1338 = vmatpush1.bf16.msra.mxu0 0
      %1339 = vmatprep.subr.bf16.mxu0 0
      %1340 = vmatpush1.bf16.msra.mxu0 0
      %1341 = vmatprep.subr.bf16.mxu0 0
      %1342 = vmatpush1.bf16.msra.mxu0 0
      %1343 = vmatprep.subr.bf16.mxu0 0
      %1344 = vmatpush1.bf16.msra.mxu0 0
      %1345 = vmatprep.subr.bf16.mxu0 0
      %1346 = vmatpush1.bf16.msra.mxu0 0
      %1347 = vmatprep.subr.bf16.mxu0 0
      %1348 = vmatpush1.bf16.msra.mxu0 0
      %1349 = vmatprep.subr.bf16.mxu0 0
      %1350 = vmatpush1.bf16.msra.mxu0 0
      %1351 = vmatprep.subr.bf16.mxu0 0
      %1352 = vmatpush1.bf16.msra.mxu0 0
      %1353 = vmatprep.subr.bf16.mxu0 0
      %1354 = vmatpush1.bf16.msra.mxu0 0
      %1355 = vmatprep.subr.bf16.mxu0 0
      %1356 = vmatpush1.bf16.msra.mxu0 0
      %1357 = vmatprep.mubr.bf16.mxu0 0
      %1358 = vmatmul.mubr.bf16.gmra.mrb[0].mxu0 %v1302
      %v1359 = vpop.f32.mrb[0].mxu0
      %v1360 = vadd.f32 0.0, %v1359
      %v1361 = vpop.f32.mrb[0].mxu0
      %v1362 = vpop.f32.mrb[0].mxu0
      %v1363 = vadd.f32 0.0, %v1362
      %v1364 = vpop.f32.mrb[0].mxu0
      %1365 = vmatprep.mubr.bf16.mxu0 0
      %1366 = vmatmul.mubr.bf16.gmra.mrb[0].mxu0 %v1305
      %v1367 = vpop.f32.mrb[0].mxu0
      %v1368 = vadd.f32 0.0, %v1367
      %v1369 = vpop.f32.mrb[0].mxu0
      %v1370 = vpop.f32.mrb[0].mxu0
      %v1371 = vadd.f32 0.0, %v1370
      %v1372 = vpop.f32.mrb[0].mxu0
      %1373 = vmatprep.mubr.bf16.mxu0 0
      %1374 = vmatmul.mubr.bf16.gmra.mrb[0].mxu0 %v1308
      %v1375 = vpop.f32.mrb[0].mxu0
      %v1376 = vadd.f32 0.0, %v1375
      %v1377 = vpop.f32.mrb[0].mxu0
      %v1378 = vpop.f32.mrb[0].mxu0
      %v1379 = vadd.f32 0.0, %v1378
      %v1380 = vpop.f32.mrb[0].mxu0
      %1381 = vmatprep.mubr.bf16.mxu0 0
      %1382 = vmatmul.mubr.bf16.gmra.mrb[0].mxu0 %v1311
      %v1383 = vpop.f32.mrb[0].mxu0
      %v1384 = vadd.f32 0.0, %v1383
      %v1385 = vpop.f32.mrb[0].mxu0
      %v1386 = vpop.f32.mrb[0].mxu0
      %v1387 = vadd.f32 0.0, %v1386
      %v1388 = vpop.f32.mrb[0].mxu0
      %1389 = vmatprep.mubr.bf16.mxu0 0
      %1390 = vmatmul.mubr.bf16.gmra.mrb[0].mxu0 %v1314
      %v1391 = vpop.f32.mrb[0].mxu0
      %v1392 = vadd.f32 0.0, %v1391
      %v1393 = vpop.f32.mrb[0].mxu0
      %v1394 = vpop.f32.mrb[0].mxu0
      %v1395 = vadd.f32 0.0, %v1394
      %v1396 = vpop.f32.mrb[0].mxu0
      %1397 = vmatprep.mubr.bf16.mxu0 0
      %1398 = vmatmul.mubr.bf16.gmra.mrb[0].mxu0 %v1317
      %v1399 = vpop.f32.mrb[0].mxu0
      %v1400 = vadd.f32 0.0, %v1399
      %v1401 = vpop.f32.mrb[0].mxu0
      %v1402 = vpop.f32.mrb[0].mxu0
      %v1403 = vadd.f32 0.0, %v1402
      %v1404 = vpop.f32.mrb[0].mxu0
      %1405 = vmatprep.mubr.bf16.mxu0 0
      %1406 = vmatmul.mubr.bf16.gmra.mrb[0].mxu0 %v1320
      %v1407 = vpop.f32.mrb[0].mxu0
      %v1408 = vadd.f32 0.0, %v1407
      %v1409 = vpop.f32.mrb[0].mxu0
      %v1410 = vpop.f32.mrb[0].mxu0
      %v1411 = vadd.f32 0.0, %v1410
      %v1412 = vpop.f32.mrb[0].mxu0
      %1413 = vmatprep.mubr.bf16.mxu0 0
      %1414 = vmatmul.mubr.bf16.gmra.mrb[0].mxu0 %v1323
      %v1415 = vpop.f32.mrb[0].mxu0
      %v1416 = vadd.f32 0.0, %v1415
      %v1417 = vpop.f32.mrb[0].mxu0
      %v1418 = vpop.f32.mrb[0].mxu0
      %v1419 = vadd.f32 0.0, %v1418
      %v1420 = vpop.f32.mrb[0].mxu0
      %1421 = vdwg.mxu0
      %v1422 = vld [vmem:[#allocation2] sm:$0xff]
      %v1423 = vld [vmem:[#allocation2 + $0x8] sm:$0xff]
      %v1424 = vld [vmem:[#allocation2 + $0x10] sm:$0xff]
      %v1425 = vld [vmem:[#allocation2 + $0x18] sm:$0xff]
      %v1426 = vld [vmem:[#allocation2 + $0x20] sm:$0xff]
      %v1427 = vld [vmem:[#allocation2 + $0x28] sm:$0xff]
      %v1428 = vld [vmem:[#allocation2 + $0x30] sm:$0xff]
      %v1429 = vld [vmem:[#allocation2 + $0x38] sm:$0xff]
      %v1430 = vld [vmem:[#allocation2 + $0x40] sm:$0xff]
      %v1431 = vld [vmem:[#allocation2 + $0x48] sm:$0xff]
      %v1432 = vld [vmem:[#allocation2 + $0x50] sm:$0xff]
      %v1433 = vld [vmem:[#allocation2 + $0x58] sm:$0xff]
      %v1434 = vld [vmem:[#allocation2 + $0x60] sm:$0xff]
      %v1435 = vld [vmem:[#allocation2 + $0x68] sm:$0xff]
      %v1436 = vld [vmem:[#allocation2 + $0x70] sm:$0xff]
      %v1437 = vld [vmem:[#allocation2 + $0x78] sm:$0xff]
      %v1438 = vadd.f32 %v1422, %v1360
      %v1439 = vadd.f32 %v1423, %v1363
      %v1440 = vadd.f32 %v1424, %v1368
      %v1441 = vadd.f32 %v1425, %v1371
      %v1442 = vadd.f32 %v1426, %v1376
      %v1443 = vadd.f32 %v1427, %v1379
      %v1444 = vadd.f32 %v1428, %v1384
      %v1445 = vadd.f32 %v1429, %v1387
      %v1446 = vadd.f32 %v1430, %v1392
      %v1447 = vadd.f32 %v1431, %v1395
      %v1448 = vadd.f32 %v1432, %v1400
      %v1449 = vadd.f32 %v1433, %v1403
      %v1450 = vadd.f32 %v1434, %v1408
      %v1451 = vadd.f32 %v1435, %v1411
      %v1452 = vadd.f32 %v1436, %v1416
      %v1453 = vadd.f32 %v1437, %v1419
      %1454 = vst.msk [vmem:[#allocation2] sm:$0xff] %vm297, %v1438
      %1455 = vst.msk [vmem:[#allocation2 + $0x8] sm:$0xff] %vm297, %v1439
      %1456 = vst.msk [vmem:[#allocation2 + $0x10] sm:$0xff] %vm297, %v1440
      %1457 = vst.msk [vmem:[#allocation2 + $0x18] sm:$0xff] %vm297, %v1441
      %1458 = vst.msk [vmem:[#allocation2 + $0x20] sm:$0xff] %vm297, %v1442
      %1459 = vst.msk [vmem:[#allocation2 + $0x28] sm:$0xff] %vm297, %v1443
      %1460 = vst.msk [vmem:[#allocation2 + $0x30] sm:$0xff] %vm297, %v1444
      %1461 = vst.msk [vmem:[#allocation2 + $0x38] sm:$0xff] %vm297, %v1445
      %1462 = vst.msk [vmem:[#allocation2 + $0x40] sm:$0xff] %vm297, %v1446
      %1463 = vst.msk [vmem:[#allocation2 + $0x48] sm:$0xff] %vm297, %v1447
      %1464 = vst.msk [vmem:[#allocation2 + $0x50] sm:$0xff] %vm297, %v1448
      %1465 = vst.msk [vmem:[#allocation2 + $0x58] sm:$0xff] %vm297, %v1449
      %1466 = vst.msk [vmem:[#allocation2 + $0x60] sm:$0xff] %vm297, %v1450
      %1467 = vst.msk [vmem:[#allocation2 + $0x68] sm:$0xff] %vm297, %v1451
      %1468 = vst.msk [vmem:[#allocation2 + $0x70] sm:$0xff] %vm297, %v1452
      %1469 = vst.msk [vmem:[#allocation2 + $0x78] sm:$0xff] %vm297, %v1453
      %v1470 = vld [vmem:[%s1211] sm:$0xf]
      %v1471 = vld [vmem:[%s1211 + $0x4] sm:$0xf]
      %v1472 = vld [vmem:[%s1211 + $0x8] sm:$0x1]
      %v1473 = vld [vmem:[%s1211 + $0xc] sm:$0xf]
      %v1474 = vld [vmem:[%s1211 + $0x10] sm:$0xf]
      %v1475 = vld [vmem:[%s1211 + $0x14] sm:$0x1]
      %v1476 = vld [vmem:[%s1211 + $0x18] sm:$0xf]
      %v1477 = vld [vmem:[%s1211 + $0x1c] sm:$0xf]
      %v1478 = vld [vmem:[%s1211 + $0x20] sm:$0x1]
      %v1479 = vld [vmem:[%s1211 + $0x24] sm:$0xf]
      %v1480 = vld [vmem:[%s1211 + $0x28] sm:$0xf]
      %v1481 = vld [vmem:[%s1211 + $0x2c] sm:$0x1]
      %v1482 = vld [vmem:[%s1211 + $0x30] sm:$0xf]
      %v1483 = vld [vmem:[%s1211 + $0x34] sm:$0xf]
      %v1484 = vld [vmem:[%s1211 + $0x38] sm:$0x1]
      %v1485 = vld [vmem:[%s1211 + $0x3c] sm:$0xf]
      %v1486 = vld [vmem:[%s1211 + $0x40] sm:$0xf]
      %v1487 = vld [vmem:[%s1211 + $0x44] sm:$0x1]
      %v1488 = vld [vmem:[%s1211 + $0x48] sm:$0xf]
      %v1489 = vld [vmem:[%s1211 + $0x4c] sm:$0xf]
      %v1490 = vld [vmem:[%s1211 + $0x50] sm:$0x1]
      %v1491 = vld [vmem:[%s1211 + $0x54] sm:$0xf]
      %v1492 = vld [vmem:[%s1211 + $0x58] sm:$0xf]
      %v1493 = vld [vmem:[%s1211 + $0x5c] sm:$0x1]
      %v1495 = vshrl.u32 %v1470, 16
      %v1497 = vrot.slane %v1495, 4
      %v1498 = vshll.u32 %v1470, 16
      %v1500 = vrot.slane %v1498, 5
      %v1501 = vor.u32 %v1497, %v1500
      %v1502 = vrot.slane %v1501, 4
      %v1504 = vshll.u32 %v1471, 16
      %v1506 = vrot.slane %v1504, 5
      %v1507 = vsel %vm461, %v1502, %v1506
      %v1508 = vshrl.u32 %v1471, 16
      %v1510 = vrot.slane %v1508, 4
      %v1511 = vor.u32 %v1510, %v1506
      %v1512 = vrot.slane %v1511, 4
      %v1514 = vshll.u32 %v1472, 16
      %v1516 = vrot.slane %v1514, 5
      %v1517 = vsel %vm461, %v1512, %v1516
      %v1519 = vshrl.u32 %v1473, 16
      %v1521 = vrot.slane %v1519, 4
      %v1522 = vshll.u32 %v1473, 16
      %v1524 = vrot.slane %v1522, 5
      %v1525 = vor.u32 %v1521, %v1524
      %v1526 = vrot.slane %v1525, 4
      %v1528 = vshll.u32 %v1474, 16
      %v1530 = vrot.slane %v1528, 5
      %v1531 = vsel %vm461, %v1526, %v1530
      %v1532 = vshrl.u32 %v1474, 16
      %v1534 = vrot.slane %v1532, 4
      %v1535 = vor.u32 %v1534, %v1530
      %v1536 = vrot.slane %v1535, 4
      %v1538 = vshll.u32 %v1475, 16
      %v1540 = vrot.slane %v1538, 5
      %v1541 = vsel %vm461, %v1536, %v1540
      %v1543 = vshrl.u32 %v1476, 16
      %v1545 = vrot.slane %v1543, 4
      %v1546 = vshll.u32 %v1476, 16
      %v1548 = vrot.slane %v1546, 5
      %v1549 = vor.u32 %v1545, %v1548
      %v1550 = vrot.slane %v1549, 4
      %v1552 = vshll.u32 %v1477, 16
      %v1554 = vrot.slane %v1552, 5
      %v1555 = vsel %vm461, %v1550, %v1554
      %v1556 = vshrl.u32 %v1477, 16
      %v1558 = vrot.slane %v1556, 4
      %v1559 = vor.u32 %v1558, %v1554
      %v1560 = vrot.slane %v1559, 4
      %v1562 = vshll.u32 %v1478, 16
      %v1564 = vrot.slane %v1562, 5
      %v1565 = vsel %vm461, %v1560, %v1564
      %v1567 = vshrl.u32 %v1479, 16
      %v1569 = vrot.slane %v1567, 4
      %v1570 = vshll.u32 %v1479, 16
      %v1572 = vrot.slane %v1570, 5
      %v1573 = vor.u32 %v1569, %v1572
      %v1574 = vrot.slane %v1573, 4
      %v1576 = vshll.u32 %v1480, 16
      %v1578 = vrot.slane %v1576, 5
      %v1579 = vsel %vm461, %v1574, %v1578
      %v1580 = vshrl.u32 %v1480, 16
      %v1582 = vrot.slane %v1580, 4
      %v1583 = vor.u32 %v1582, %v1578
      %v1584 = vrot.slane %v1583, 4
      %v1586 = vshll.u32 %v1481, 16
      %v1588 = vrot.slane %v1586, 5
      %v1589 = vsel %vm461, %v1584, %v1588
      %v1591 = vshrl.u32 %v1482, 16
      %v1593 = vrot.slane %v1591, 4
      %v1594 = vshll.u32 %v1482, 16
      %v1596 = vrot.slane %v1594, 5
      %v1597 = vor.u32 %v1593, %v1596
      %v1598 = vrot.slane %v1597, 4
      %v1600 = vshll.u32 %v1483, 16
      %v1602 = vrot.slane %v1600, 5
      %v1603 = vsel %vm461, %v1598, %v1602
      %v1604 = vshrl.u32 %v1483, 16
      %v1606 = vrot.slane %v1604, 4
      %v1607 = vor.u32 %v1606, %v1602
      %v1608 = vrot.slane %v1607, 4
      %v1610 = vshll.u32 %v1484, 16
      %v1612 = vrot.slane %v1610, 5
      %v1613 = vsel %vm461, %v1608, %v1612
      %v1615 = vshrl.u32 %v1485, 16
      %v1617 = vrot.slane %v1615, 4
      %v1618 = vshll.u32 %v1485, 16
      %v1620 = vrot.slane %v1618, 5
      %v1621 = vor.u32 %v1617, %v1620
      %v1622 = vrot.slane %v1621, 4
      %v1624 = vshll.u32 %v1486, 16
      %v1626 = vrot.slane %v1624, 5
      %v1627 = vsel %vm461, %v1622, %v1626
      %v1628 = vshrl.u32 %v1486, 16
      %v1630 = vrot.slane %v1628, 4
      %v1631 = vor.u32 %v1630, %v1626
      %v1632 = vrot.slane %v1631, 4
      %v1634 = vshll.u32 %v1487, 16
      %v1636 = vrot.slane %v1634, 5
      %v1637 = vsel %vm461, %v1632, %v1636
      %v1639 = vshrl.u32 %v1488, 16
      %v1641 = vrot.slane %v1639, 4
      %v1642 = vshll.u32 %v1488, 16
      %v1644 = vrot.slane %v1642, 5
      %v1645 = vor.u32 %v1641, %v1644
      %v1646 = vrot.slane %v1645, 4
      %v1648 = vshll.u32 %v1489, 16
      %v1650 = vrot.slane %v1648, 5
      %v1651 = vsel %vm461, %v1646, %v1650
      %v1652 = vshrl.u32 %v1489, 16
      %v1654 = vrot.slane %v1652, 4
      %v1655 = vor.u32 %v1654, %v1650
      %v1656 = vrot.slane %v1655, 4
      %v1658 = vshll.u32 %v1490, 16
      %v1660 = vrot.slane %v1658, 5
      %v1661 = vsel %vm461, %v1656, %v1660
      %v1663 = vshrl.u32 %v1491, 16
      %v1665 = vrot.slane %v1663, 4
      %v1666 = vshll.u32 %v1491, 16
      %v1668 = vrot.slane %v1666, 5
      %v1669 = vor.u32 %v1665, %v1668
      %v1670 = vrot.slane %v1669, 4
      %v1672 = vshll.u32 %v1492, 16
      %v1674 = vrot.slane %v1672, 5
      %v1675 = vsel %vm461, %v1670, %v1674
      %v1676 = vshrl.u32 %v1492, 16
      %v1678 = vrot.slane %v1676, 4
      %v1679 = vor.u32 %v1678, %v1674
      %v1680 = vrot.slane %v1679, 4
      %v1682 = vshll.u32 %v1493, 16
      %v1684 = vrot.slane %v1682, 5
      %v1685 = vsel %vm461, %v1680, %v1684
      %v1686 = vld [vmem:[%s1228 + $0x20] sm:$0xf]
      %v1687 = vld [vmem:[%s1228 + $0x24] sm:$0xf]
      %v1688 = vld [vmem:[%s1228 + $0x28] sm:$0xf]
      %v1689 = vld [vmem:[%s1228 + $0x2c] sm:$0xf]
      %v1690 = vld [vmem:[%s1228 + $0x30] sm:$0xf]
      %v1691 = vld [vmem:[%s1228 + $0x34] sm:$0xf]
      %v1692 = vld [vmem:[%s1228 + $0x38] sm:$0xf]
      %v1693 = vld [vmem:[%s1228 + $0x3c] sm:$0xf]
      %v1694 = vunpack.c.l.b16 %v1507
      %v1695 = vunpack.c.l.b16 %v1517
      %v1696 = vunpack.c.l.b16 %v1531
      %v1697 = vunpack.c.l.b16 %v1541
      %v1698 = vunpack.c.l.b16 %v1555
      %v1699 = vunpack.c.l.b16 %v1565
      %v1700 = vunpack.c.l.b16 %v1579
      %v1701 = vunpack.c.l.b16 %v1589
      %v1702 = vunpack.c.l.b16 %v1603
      %v1703 = vunpack.c.l.b16 %v1613
      %v1704 = vunpack.c.l.b16 %v1627
      %v1705 = vunpack.c.l.b16 %v1637
      %v1706 = vunpack.c.l.b16 %v1651
      %v1707 = vunpack.c.l.b16 %v1661
      %v1708 = vunpack.c.l.b16 %v1675
      %v1709 = vunpack.c.l.b16 %v1685
      %v1710 = vpack.c.b16 %v1695, %v1694
      %v1711 = vpack.c.b16 %v1697, %v1696
      %v1712 = vpack.c.b16 %v1699, %v1698
      %v1713 = vpack.c.b16 %v1701, %v1700
      %v1714 = vpack.c.b16 %v1703, %v1702
      %v1715 = vpack.c.b16 %v1705, %v1704
      %v1716 = vpack.c.b16 %v1707, %v1706
      %v1717 = vpack.c.b16 %v1709, %v1708
      %v1726 = vunpack.c.l.b16 %v1686
      %v1727 = vunpack.c.l.b16 %v1687
      %v1728 = vunpack.c.l.b16 %v1688
      %v1729 = vunpack.c.l.b16 %v1689
      %v1730 = vunpack.c.l.b16 %v1690
      %v1731 = vunpack.c.l.b16 %v1691
      %v1732 = vunpack.c.l.b16 %v1692
      %v1733 = vunpack.c.l.b16 %v1693
      %v1734 = vpack.c.b16 %v1727, %v1726
      %v1735 = vpack.c.b16 %v1729, %v1728
      %v1736 = vpack.c.b16 %v1731, %v1730
      %v1737 = vpack.c.b16 %v1733, %v1732
      %v1743 = vsel %vm297, %v1710, 0
      %v1746 = vsel %vm297, %v1711, 0
      %v1749 = vsel %vm297, %v1712, 0
      %v1752 = vsel %vm297, %v1713, 0
      %v1755 = vsel %vm297, %v1714, 0
      %v1758 = vsel %vm297, %v1715, 0
      %v1761 = vsel %vm297, %v1716, 0
      %v1764 = vsel %vm297, %v1717, 0
      %1766 = vmatprep.subr.bf16.mxu0 0
      %1767 = vmatpush1.bf16.msra.mxu0 %v1734
      %1768 = vmatprep.subr.bf16.mxu0 0
      %1769 = vmatpush1.bf16.msra.mxu0 %v1735
      %1770 = vmatprep.subr.bf16.mxu0 0
      %1771 = vmatpush1.bf16.msra.mxu0 %v1736
      %1772 = vmatprep.subr.bf16.mxu0 0
      %1773 = vmatpush1.bf16.msra.mxu0 %v1737
      %1774 = vmatprep.subr.bf16.mxu0 0
      %1775 = vmatpush1.bf16.msra.mxu0 0
      %1776 = vmatprep.subr.bf16.mxu0 0
      %1777 = vmatpush1.bf16.msra.mxu0 0
      %1778 = vmatprep.subr.bf16.mxu0 0
      %1779 = vmatpush1.bf16.msra.mxu0 0
      %1780 = vmatprep.subr.bf16.mxu0 0
      %1781 = vmatpush1.bf16.msra.mxu0 0
      %1782 = vmatprep.subr.bf16.mxu0 0
      %1783 = vmatpush1.bf16.msra.mxu0 0
      %1784 = vmatprep.subr.bf16.mxu0 0
      %1785 = vmatpush1.bf16.msra.mxu0 0
      %1786 = vmatprep.subr.bf16.mxu0 0
      %1787 = vmatpush1.bf16.msra.mxu0 0
      %1788 = vmatprep.subr.bf16.mxu0 0
      %1789 = vmatpush1.bf16.msra.mxu0 0
      %1790 = vmatprep.subr.bf16.mxu0 0
      %1791 = vmatpush1.bf16.msra.mxu0 0
      %1792 = vmatprep.subr.bf16.mxu0 0
      %1793 = vmatpush1.bf16.msra.mxu0 0
      %1794 = vmatprep.subr.bf16.mxu0 0
      %1795 = vmatpush1.bf16.msra.mxu0 0
      %1796 = vmatprep.subr.bf16.mxu0 0
      %1797 = vmatpush1.bf16.msra.mxu0 0
      %1798 = vmatprep.mubr.bf16.mxu0 0
      %1799 = vmatmul.mubr.bf16.gmra.mrb[0].mxu0 %v1743
      %v1800 = vpop.f32.mrb[0].mxu0
      %v1801 = vadd.f32 0.0, %v1800
      %v1802 = vpop.f32.mrb[0].mxu0
      %v1803 = vpop.f32.mrb[0].mxu0
      %v1804 = vadd.f32 0.0, %v1803
      %v1805 = vpop.f32.mrb[0].mxu0
      %1806 = vmatprep.mubr.bf16.mxu0 0
      %1807 = vmatmul.mubr.bf16.gmra.mrb[0].mxu0 %v1746
      %v1808 = vpop.f32.mrb[0].mxu0
      %v1809 = vadd.f32 0.0, %v1808
      %v1810 = vpop.f32.mrb[0].mxu0
      %v1811 = vpop.f32.mrb[0].mxu0
      %v1812 = vadd.f32 0.0, %v1811
      %v1813 = vpop.f32.mrb[0].mxu0
      %1814 = vmatprep.mubr.bf16.mxu0 0
      %1815 = vmatmul.mubr.bf16.gmra.mrb[0].mxu0 %v1749
      %v1816 = vpop.f32.mrb[0].mxu0
      %v1817 = vadd.f32 0.0, %v1816
      %v1818 = vpop.f32.mrb[0].mxu0
      %v1819 = vpop.f32.mrb[0].mxu0
      %v1820 = vadd.f32 0.0, %v1819
      %v1821 = vpop.f32.mrb[0].mxu0
      %1822 = vmatprep.mubr.bf16.mxu0 0
      %1823 = vmatmul.mubr.bf16.gmra.mrb[0].mxu0 %v1752
      %v1824 = vpop.f32.mrb[0].mxu0
      %v1825 = vadd.f32 0.0, %v1824
      %v1826 = vpop.f32.mrb[0].mxu0
      %v1827 = vpop.f32.mrb[0].mxu0
      %v1828 = vadd.f32 0.0, %v1827
      %v1829 = vpop.f32.mrb[0].mxu0
      %1830 = vmatprep.mubr.bf16.mxu0 0
      %1831 = vmatmul.mubr.bf16.gmra.mrb[0].mxu0 %v1755
      %v1832 = vpop.f32.mrb[0].mxu0
      %v1833 = vadd.f32 0.0, %v1832
      %v1834 = vpop.f32.mrb[0].mxu0
      %v1835 = vpop.f32.mrb[0].mxu0
      %v1836 = vadd.f32 0.0, %v1835
      %v1837 = vpop.f32.mrb[0].mxu0
      %1838 = vmatprep.mubr.bf16.mxu0 0
      %1839 = vmatmul.mubr.bf16.gmra.mrb[0].mxu0 %v1758
      %v1840 = vpop.f32.mrb[0].mxu0
      %v1841 = vadd.f32 0.0, %v1840
      %v1842 = vpop.f32.mrb[0].mxu0
      %v1843 = vpop.f32.mrb[0].mxu0
      %v1844 = vadd.f32 0.0, %v1843
      %v1845 = vpop.f32.mrb[0].mxu0
      %1846 = vmatprep.mubr.bf16.mxu0 0
      %1847 = vmatmul.mubr.bf16.gmra.mrb[0].mxu0 %v1761
      %v1848 = vpop.f32.mrb[0].mxu0
      %v1849 = vadd.f32 0.0, %v1848
      %v1850 = vpop.f32.mrb[0].mxu0
      %v1851 = vpop.f32.mrb[0].mxu0
      %v1852 = vadd.f32 0.0, %v1851
      %v1853 = vpop.f32.mrb[0].mxu0
      %1854 = vmatprep.mubr.bf16.mxu0 0
      %1855 = vmatmul.mubr.bf16.gmra.mrb[0].mxu0 %v1764
      %v1856 = vpop.f32.mrb[0].mxu0
      %v1857 = vadd.f32 0.0, %v1856
      %v1858 = vpop.f32.mrb[0].mxu0
      %v1859 = vpop.f32.mrb[0].mxu0
      %v1860 = vadd.f32 0.0, %v1859
      %v1861 = vpop.f32.mrb[0].mxu0
      %1862 = vdwg.mxu0
      %v1863 = vld [vmem:[#allocation2] sm:$0xff]
      %v1864 = vld [vmem:[#allocation2 + $0x8] sm:$0xff]
      %v1865 = vld [vmem:[#allocation2 + $0x10] sm:$0xff]
      %v1866 = vld [vmem:[#allocation2 + $0x18] sm:$0xff]
      %v1867 = vld [vmem:[#allocation2 + $0x20] sm:$0xff]
      %v1868 = vld [vmem:[#allocation2 + $0x28] sm:$0xff]
      %v1869 = vld [vmem:[#allocation2 + $0x30] sm:$0xff]
      %v1870 = vld [vmem:[#allocation2 + $0x38] sm:$0xff]
      %v1871 = vld [vmem:[#allocation2 + $0x40] sm:$0xff]
      %v1872 = vld [vmem:[#allocation2 + $0x48] sm:$0xff]
      %v1873 = vld [vmem:[#allocation2 + $0x50] sm:$0xff]
      %v1874 = vld [vmem:[#allocation2 + $0x58] sm:$0xff]
      %v1875 = vld [vmem:[#allocation2 + $0x60] sm:$0xff]
      %v1876 = vld [vmem:[#allocation2 + $0x68] sm:$0xff]
      %v1877 = vld [vmem:[#allocation2 + $0x70] sm:$0xff]
      %v1878 = vld [vmem:[#allocation2 + $0x78] sm:$0xff]
      %v1879 = vadd.f32 %v1863, %v1801
      %v1880 = vadd.f32 %v1864, %v1804
      %v1881 = vadd.f32 %v1865, %v1809
      %v1882 = vadd.f32 %v1866, %v1812
      %v1883 = vadd.f32 %v1867, %v1817
      %v1884 = vadd.f32 %v1868, %v1820
      %v1885 = vadd.f32 %v1869, %v1825
      %v1886 = vadd.f32 %v1870, %v1828
      %v1887 = vadd.f32 %v1871, %v1833
      %v1888 = vadd.f32 %v1872, %v1836
      %v1889 = vadd.f32 %v1873, %v1841
      %v1890 = vadd.f32 %v1874, %v1844
      %v1891 = vadd.f32 %v1875, %v1849
      %v1892 = vadd.f32 %v1876, %v1852
      %v1893 = vadd.f32 %v1877, %v1857
      %v1894 = vadd.f32 %v1878, %v1860
      %1895 = vst.msk [vmem:[#allocation2] sm:$0xff] %vm297, %v1879
      %1896 = vst.msk [vmem:[#allocation2 + $0x8] sm:$0xff] %vm297, %v1880
      %1897 = vst.msk [vmem:[#allocation2 + $0x10] sm:$0xff] %vm297, %v1881
      %1898 = vst.msk [vmem:[#allocation2 + $0x18] sm:$0xff] %vm297, %v1882
      %1899 = vst.msk [vmem:[#allocation2 + $0x20] sm:$0xff] %vm297, %v1883
      %1900 = vst.msk [vmem:[#allocation2 + $0x28] sm:$0xff] %vm297, %v1884
      %1901 = vst.msk [vmem:[#allocation2 + $0x30] sm:$0xff] %vm297, %v1885
      %1902 = vst.msk [vmem:[#allocation2 + $0x38] sm:$0xff] %vm297, %v1886
      %1903 = vst.msk [vmem:[#allocation2 + $0x40] sm:$0xff] %vm297, %v1887
      %1904 = vst.msk [vmem:[#allocation2 + $0x48] sm:$0xff] %vm297, %v1888
      %1905 = vst.msk [vmem:[#allocation2 + $0x50] sm:$0xff] %vm297, %v1889
      %1906 = vst.msk [vmem:[#allocation2 + $0x58] sm:$0xff] %vm297, %v1890
      %1907 = vst.msk [vmem:[#allocation2 + $0x60] sm:$0xff] %vm297, %v1891
      %1908 = vst.msk [vmem:[#allocation2 + $0x68] sm:$0xff] %vm297, %v1892
      %1909 = vst.msk [vmem:[#allocation2 + $0x70] sm:$0xff] %vm297, %v1893
      %1910 = vst.msk [vmem:[#allocation2 + $0x78] sm:$0xff] %vm297, %v1894
      %v1911 = vld [vmem:[%s1211] sm:$0xe]
      %v1912 = vld [vmem:[%s1211 + $0x4] sm:$0xf]
      %v1913 = vld [vmem:[%s1211 + $0x8] sm:$0x1]
      %v1914 = vld [vmem:[%s1211 + $0xc] sm:$0xe]
      %v1915 = vld [vmem:[%s1211 + $0x10] sm:$0xf]
      %v1916 = vld [vmem:[%s1211 + $0x14] sm:$0x1]
      %v1917 = vld [vmem:[%s1211 + $0x18] sm:$0xe]
      %v1918 = vld [vmem:[%s1211 + $0x1c] sm:$0xf]
      %v1919 = vld [vmem:[%s1211 + $0x20] sm:$0x1]
      %v1920 = vld [vmem:[%s1211 + $0x24] sm:$0xe]
      %v1921 = vld [vmem:[%s1211 + $0x28] sm:$0xf]
      %v1922 = vld [vmem:[%s1211 + $0x2c] sm:$0x1]
      %v1923 = vld [vmem:[%s1211 + $0x30] sm:$0xe]
      %v1924 = vld [vmem:[%s1211 + $0x34] sm:$0xf]
      %v1925 = vld [vmem:[%s1211 + $0x38] sm:$0x1]
      %v1926 = vld [vmem:[%s1211 + $0x3c] sm:$0xe]
      %v1927 = vld [vmem:[%s1211 + $0x40] sm:$0xf]
      %v1928 = vld [vmem:[%s1211 + $0x44] sm:$0x1]
      %v1929 = vld [vmem:[%s1211 + $0x48] sm:$0xe]
      %v1930 = vld [vmem:[%s1211 + $0x4c] sm:$0xf]
      %v1931 = vld [vmem:[%s1211 + $0x50] sm:$0x1]
      %v1932 = vld [vmem:[%s1211 + $0x54] sm:$0xe]
      %v1933 = vld [vmem:[%s1211 + $0x58] sm:$0xf]
      %v1934 = vld [vmem:[%s1211 + $0x5c] sm:$0x1]
      %v1959 = vrot.slane %v1911, 5
      %v1960 = vrot.slane %v1959, 4
      %v1961 = vrot.slane %v1912, 5
      %v1962 = vsel %vm929, %v1960, %v1961
      %v1963 = vrot.slane %v1961, 4
      %v1964 = vrot.slane %v1913, 5
      %v1965 = vsel %vm929, %v1963, %v1964
      %v1966 = vrot.slane %v1914, 5
      %v1967 = vrot.slane %v1966, 4
      %v1968 = vrot.slane %v1915, 5
      %v1969 = vsel %vm929, %v1967, %v1968
      %v1970 = vrot.slane %v1968, 4
      %v1971 = vrot.slane %v1916, 5
      %v1972 = vsel %vm929, %v1970, %v1971
      %v1973 = vrot.slane %v1917, 5
      %v1974 = vrot.slane %v1973, 4
      %v1975 = vrot.slane %v1918, 5
      %v1976 = vsel %vm929, %v1974, %v1975
      %v1977 = vrot.slane %v1975, 4
      %v1978 = vrot.slane %v1919, 5
      %v1979 = vsel %vm929, %v1977, %v1978
      %v1980 = vrot.slane %v1920, 5
      %v1981 = vrot.slane %v1980, 4
      %v1982 = vrot.slane %v1921, 5
      %v1983 = vsel %vm929, %v1981, %v1982
      %v1984 = vrot.slane %v1982, 4
      %v1985 = vrot.slane %v1922, 5
      %v1986 = vsel %vm929, %v1984, %v1985
      %v1987 = vrot.slane %v1923, 5
      %v1988 = vrot.slane %v1987, 4
      %v1989 = vrot.slane %v1924, 5
      %v1990 = vsel %vm929, %v1988, %v1989
      %v1991 = vrot.slane %v1989, 4
      %v1992 = vrot.slane %v1925, 5
      %v1993 = vsel %vm929, %v1991, %v1992
      %v1994 = vrot.slane %v1926, 5
      %v1995 = vrot.slane %v1994, 4
      %v1996 = vrot.slane %v1927, 5
      %v1997 = vsel %vm929, %v1995, %v1996
      %v1998 = vrot.slane %v1996, 4
      %v1999 = vrot.slane %v1928, 5
      %v2000 = vsel %vm929, %v1998, %v1999
      %v2001 = vrot.slane %v1929, 5
      %v2002 = vrot.slane %v2001, 4
      %v2003 = vrot.slane %v1930, 5
      %v2004 = vsel %vm929, %v2002, %v2003
      %v2005 = vrot.slane %v2003, 4
      %v2006 = vrot.slane %v1931, 5
      %v2007 = vsel %vm929, %v2005, %v2006
      %v2008 = vrot.slane %v1932, 5
      %v2009 = vrot.slane %v2008, 4
      %v2010 = vrot.slane %v1933, 5
      %v2011 = vsel %vm929, %v2009, %v2010
      %v2012 = vrot.slane %v2010, 4
      %v2013 = vrot.slane %v1934, 5
      %v2014 = vsel %vm929, %v2012, %v2013
      %v2015 = vld [vmem:[%s1228 + $0x40] sm:$0xf]
      %v2016 = vld [vmem:[%s1228 + $0x44] sm:$0xf]
      %v2017 = vld [vmem:[%s1228 + $0x48] sm:$0xf]
      %v2018 = vld [vmem:[%s1228 + $0x4c] sm:$0xf]
      %v2019 = vld [vmem:[%s1228 + $0x50] sm:$0xf]
      %v2020 = vld [vmem:[%s1228 + $0x54] sm:$0xf]
      %v2021 = vld [vmem:[%s1228 + $0x58] sm:$0xf]
      %v2022 = vld [vmem:[%s1228 + $0x5c] sm:$0xf]
      %v2023 = vunpack.c.l.b16 %v1962
      %v2024 = vunpack.c.l.b16 %v1965
      %v2025 = vunpack.c.l.b16 %v1969
      %v2026 = vunpack.c.l.b16 %v1972
      %v2027 = vunpack.c.l.b16 %v1976
      %v2028 = vunpack.c.l.b16 %v1979
      %v2029 = vunpack.c.l.b16 %v1983
      %v2030 = vunpack.c.l.b16 %v1986
      %v2031 = vunpack.c.l.b16 %v1990
      %v2032 = vunpack.c.l.b16 %v1993
      %v2033 = vunpack.c.l.b16 %v1997
      %v2034 = vunpack.c.l.b16 %v2000
      %v2035 = vunpack.c.l.b16 %v2004
      %v2036 = vunpack.c.l.b16 %v2007
      %v2037 = vunpack.c.l.b16 %v2011
      %v2038 = vunpack.c.l.b16 %v2014
      %v2039 = vpack.c.b16 %v2024, %v2023
      %v2040 = vpack.c.b16 %v2026, %v2025
      %v2041 = vpack.c.b16 %v2028, %v2027
      %v2042 = vpack.c.b16 %v2030, %v2029
      %v2043 = vpack.c.b16 %v2032, %v2031
      %v2044 = vpack.c.b16 %v2034, %v2033
      %v2045 = vpack.c.b16 %v2036, %v2035
      %v2046 = vpack.c.b16 %v2038, %v2037
      %v2055 = vunpack.c.l.b16 %v2015
      %v2056 = vunpack.c.l.b16 %v2016
      %v2057 = vunpack.c.l.b16 %v2017
      %v2058 = vunpack.c.l.b16 %v2018
      %v2059 = vunpack.c.l.b16 %v2019
      %v2060 = vunpack.c.l.b16 %v2020
      %v2061 = vunpack.c.l.b16 %v2021
      %v2062 = vunpack.c.l.b16 %v2022
      %v2063 = vpack.c.b16 %v2056, %v2055
      %v2064 = vpack.c.b16 %v2058, %v2057
      %v2065 = vpack.c.b16 %v2060, %v2059
      %v2066 = vpack.c.b16 %v2062, %v2061
      %v2072 = vsel %vm297, %v2039, 0
      %v2075 = vsel %vm297, %v2040, 0
      %v2078 = vsel %vm297, %v2041, 0
      %v2081 = vsel %vm297, %v2042, 0
      %v2084 = vsel %vm297, %v2043, 0
      %v2087 = vsel %vm297, %v2044, 0
      %v2090 = vsel %vm297, %v2045, 0
      %v2093 = vsel %vm297, %v2046, 0
      %2095 = vmatprep.subr.bf16.mxu0 0
      %2096 = vmatpush1.bf16.msra.mxu0 %v2063
      %2097 = vmatprep.subr.bf16.mxu0 0
      %2098 = vmatpush1.bf16.msra.mxu0 %v2064
      %2099 = vmatprep.subr.bf16.mxu0 0
      %2100 = vmatpush1.bf16.msra.mxu0 %v2065
      %2101 = vmatprep.subr.bf16.mxu0 0
      %2102 = vmatpush1.bf16.msra.mxu0 %v2066
      %2103 = vmatprep.subr.bf16.mxu0 0
      %2104 = vmatpush1.bf16.msra.mxu0 0
      %2105 = vmatprep.subr.bf16.mxu0 0
      %2106 = vmatpush1.bf16.msra.mxu0 0
      %2107 = vmatprep.subr.bf16.mxu0 0
      %2108 = vmatpush1.bf16.msra.mxu0 0
      %2109 = vmatprep.subr.bf16.mxu0 0
      %2110 = vmatpush1.bf16.msra.mxu0 0
      %2111 = vmatprep.subr.bf16.mxu0 0
      %2112 = vmatpush1.bf16.msra.mxu0 0
      %2113 = vmatprep.subr.bf16.mxu0 0
      %2114 = vmatpush1.bf16.msra.mxu0 0
      %2115 = vmatprep.subr.bf16.mxu0 0
      %2116 = vmatpush1.bf16.msra.mxu0 0
      %2117 = vmatprep.subr.bf16.mxu0 0
      %2118 = vmatpush1.bf16.msra.mxu0 0
      %2119 = vmatprep.subr.bf16.mxu0 0
      %2120 = vmatpush1.bf16.msra.mxu0 0
      %2121 = vmatprep.subr.bf16.mxu0 0
      %2122 = vmatpush1.bf16.msra.mxu0 0
      %2123 = vmatprep.subr.bf16.mxu0 0
      %2124 = vmatpush1.bf16.msra.mxu0 0
      %2125 = vmatprep.subr.bf16.mxu0 0
      %2126 = vmatpush1.bf16.msra.mxu0 0
      %2127 = vmatprep.mubr.bf16.mxu0 0
      %2128 = vmatmul.mubr.bf16.gmra.mrb[0].mxu0 %v2072
      %v2129 = vpop.f32.mrb[0].mxu0
      %v2130 = vadd.f32 0.0, %v2129
      %v2131 = vpop.f32.mrb[0].mxu0
      %v2132 = vpop.f32.mrb[0].mxu0
      %v2133 = vadd.f32 0.0, %v2132
      %v2134 = vpop.f32.mrb[0].mxu0
      %2135 = vmatprep.mubr.bf16.mxu0 0
      %2136 = vmatmul.mubr.bf16.gmra.mrb[0].mxu0 %v2075
      %v2137 = vpop.f32.mrb[0].mxu0
      %v2138 = vadd.f32 0.0, %v2137
      %v2139 = vpop.f32.mrb[0].mxu0
      %v2140 = vpop.f32.mrb[0].mxu0
      %v2141 = vadd.f32 0.0, %v2140
      %v2142 = vpop.f32.mrb[0].mxu0
      %2143 = vmatprep.mubr.bf16.mxu0 0
      %2144 = vmatmul.mubr.bf16.gmra.mrb[0].mxu0 %v2078
      %v2145 = vpop.f32.mrb[0].mxu0
      %v2146 = vadd.f32 0.0, %v2145
      %v2147 = vpop.f32.mrb[0].mxu0
      %v2148 = vpop.f32.mrb[0].mxu0
      %v2149 = vadd.f32 0.0, %v2148
      %v2150 = vpop.f32.mrb[0].mxu0
      %2151 = vmatprep.mubr.bf16.mxu0 0
      %2152 = vmatmul.mubr.bf16.gmra.mrb[0].mxu0 %v2081
      %v2153 = vpop.f32.mrb[0].mxu0
      %v2154 = vadd.f32 0.0, %v2153
      %v2155 = vpop.f32.mrb[0].mxu0
      %v2156 = vpop.f32.mrb[0].mxu0
      %v2157 = vadd.f32 0.0, %v2156
      %v2158 = vpop.f32.mrb[0].mxu0
      %2159 = vmatprep.mubr.bf16.mxu0 0
      %2160 = vmatmul.mubr.bf16.gmra.mrb[0].mxu0 %v2084
      %v2161 = vpop.f32.mrb[0].mxu0
      %v2162 = vadd.f32 0.0, %v2161
      %v2163 = vpop.f32.mrb[0].mxu0
      %v2164 = vpop.f32.mrb[0].mxu0
      %v2165 = vadd.f32 0.0, %v2164
      %v2166 = vpop.f32.mrb[0].mxu0
      %2167 = vmatprep.mubr.bf16.mxu0 0
      %2168 = vmatmul.mubr.bf16.gmra.mrb[0].mxu0 %v2087
      %v2169 = vpop.f32.mrb[0].mxu0
      %v2170 = vadd.f32 0.0, %v2169
      %v2171 = vpop.f32.mrb[0].mxu0
      %v2172 = vpop.f32.mrb[0].mxu0
      %v2173 = vadd.f32 0.0, %v2172
      %v2174 = vpop.f32.mrb[0].mxu0
      %2175 = vmatprep.mubr.bf16.mxu0 0
      %2176 = vmatmul.mubr.bf16.gmra.mrb[0].mxu0 %v2090
      %v2177 = vpop.f32.mrb[0].mxu0
      %v2178 = vadd.f32 0.0, %v2177
      %v2179 = vpop.f32.mrb[0].mxu0
      %v2180 = vpop.f32.mrb[0].mxu0
      %v2181 = vadd.f32 0.0, %v2180
      %v2182 = vpop.f32.mrb[0].mxu0
      %2183 = vmatprep.mubr.bf16.mxu0 0
      %2184 = vmatmul.mubr.bf16.gmra.mrb[0].mxu0 %v2093
      %v2185 = vpop.f32.mrb[0].mxu0
      %v2186 = vadd.f32 0.0, %v2185
      %v2187 = vpop.f32.mrb[0].mxu0
      %v2188 = vpop.f32.mrb[0].mxu0
      %v2189 = vadd.f32 0.0, %v2188
      %v2190 = vpop.f32.mrb[0].mxu0
      %2191 = vdwg.mxu0
      %v2192 = vld [vmem:[#allocation2] sm:$0xff]
      %v2193 = vld [vmem:[#allocation2 + $0x8] sm:$0xff]
      %v2194 = vld [vmem:[#allocation2 + $0x10] sm:$0xff]
      %v2195 = vld [vmem:[#allocation2 + $0x18] sm:$0xff]
      %v2196 = vld [vmem:[#allocation2 + $0x20] sm:$0xff]
      %v2197 = vld [vmem:[#allocation2 + $0x28] sm:$0xff]
      %v2198 = vld [vmem:[#allocation2 + $0x30] sm:$0xff]
      %v2199 = vld [vmem:[#allocation2 + $0x38] sm:$0xff]
      %v2200 = vld [vmem:[#allocation2 + $0x40] sm:$0xff]
      %v2201 = vld [vmem:[#allocation2 + $0x48] sm:$0xff]
      %v2202 = vld [vmem:[#allocation2 + $0x50] sm:$0xff]
      %v2203 = vld [vmem:[#allocation2 + $0x58] sm:$0xff]
      %v2204 = vld [vmem:[#allocation2 + $0x60] sm:$0xff]
      %v2205 = vld [vmem:[#allocation2 + $0x68] sm:$0xff]
      %v2206 = vld [vmem:[#allocation2 + $0x70] sm:$0xff]
      %v2207 = vld [vmem:[#allocation2 + $0x78] sm:$0xff]
      %v2208 = vadd.f32 %v2192, %v2130
      %v2209 = vadd.f32 %v2193, %v2133
      %v2210 = vadd.f32 %v2194, %v2138
      %v2211 = vadd.f32 %v2195, %v2141
      %v2212 = vadd.f32 %v2196, %v2146
      %v2213 = vadd.f32 %v2197, %v2149
      %v2214 = vadd.f32 %v2198, %v2154
      %v2215 = vadd.f32 %v2199, %v2157
      %v2216 = vadd.f32 %v2200, %v2162
      %v2217 = vadd.f32 %v2201, %v2165
      %v2218 = vadd.f32 %v2202, %v2170
      %v2219 = vadd.f32 %v2203, %v2173
      %v2220 = vadd.f32 %v2204, %v2178
      %v2221 = vadd.f32 %v2205, %v2181
      %v2222 = vadd.f32 %v2206, %v2186
      %v2223 = vadd.f32 %v2207, %v2189
      %2224 = vst.msk [vmem:[#allocation2] sm:$0xff] %vm297, %v2208
      %2225 = vst.msk [vmem:[#allocation2 + $0x8] sm:$0xff] %vm297, %v2209
      %2226 = vst.msk [vmem:[#allocation2 + $0x10] sm:$0xff] %vm297, %v2210
      %2227 = vst.msk [vmem:[#allocation2 + $0x18] sm:$0xff] %vm297, %v2211
      %2228 = vst.msk [vmem:[#allocation2 + $0x20] sm:$0xff] %vm297, %v2212
      %2229 = vst.msk [vmem:[#allocation2 + $0x28] sm:$0xff] %vm297, %v2213
      %2230 = vst.msk [vmem:[#allocation2 + $0x30] sm:$0xff] %vm297, %v2214
      %2231 = vst.msk [vmem:[#allocation2 + $0x38] sm:$0xff] %vm297, %v2215
      %2232 = vst.msk [vmem:[#allocation2 + $0x40] sm:$0xff] %vm297, %v2216
      %2233 = vst.msk [vmem:[#allocation2 + $0x48] sm:$0xff] %vm297, %v2217
      %2234 = vst.msk [vmem:[#allocation2 + $0x50] sm:$0xff] %vm297, %v2218
      %2235 = vst.msk [vmem:[#allocation2 + $0x58] sm:$0xff] %vm297, %v2219
      %2236 = vst.msk [vmem:[#allocation2 + $0x60] sm:$0xff] %vm297, %v2220
      %2237 = vst.msk [vmem:[#allocation2 + $0x68] sm:$0xff] %vm297, %v2221
      %2238 = vst.msk [vmem:[#allocation2 + $0x70] sm:$0xff] %vm297, %v2222
      %2239 = vst.msk [vmem:[#allocation2 + $0x78] sm:$0xff] %vm297, %v2223
      %s2240 = scalar_lea.vmem %s195, 24
      %v2241 = vld [vmem:[%s2240] sm:$0xf]
      %v2242 = vld [vmem:[%s2240 + $0x4] sm:$0xf]
      %v2243 = vld [vmem:[%s2240 + $0xc] sm:$0xf]
      %v2244 = vld [vmem:[%s2240 + $0x10] sm:$0xf]
      %v2245 = vld [vmem:[%s2240 + $0x18] sm:$0xf]
      %v2246 = vld [vmem:[%s2240 + $0x1c] sm:$0xf]
      %v2247 = vld [vmem:[%s2240 + $0x24] sm:$0xf]
      %v2248 = vld [vmem:[%s2240 + $0x28] sm:$0xf]
      %v2249 = vld [vmem:[%s2240 + $0x30] sm:$0xf]
      %v2250 = vld [vmem:[%s2240 + $0x34] sm:$0xf]
      %v2251 = vld [vmem:[%s2240 + $0x3c] sm:$0xf]
      %v2252 = vld [vmem:[%s2240 + $0x40] sm:$0xf]
      %v2253 = vld [vmem:[%s2240 + $0x48] sm:$0xf]
      %v2254 = vld [vmem:[%s2240 + $0x4c] sm:$0xf]
      %v2255 = vld [vmem:[%s2240 + $0x54] sm:$0xf]
      %v2256 = vld [vmem:[%s2240 + $0x58] sm:$0xf]
      %s2257 = scalar_lea.vmem %s1, 192
      %v2258 = vld [vmem:[%s2257] sm:$0xf]
      %v2259 = vld [vmem:[%s2257 + $0x4] sm:$0xf]
      %v2260 = vld [vmem:[%s2257 + $0x8] sm:$0xf]
      %v2261 = vld [vmem:[%s2257 + $0xc] sm:$0xf]
      %v2262 = vld [vmem:[%s2257 + $0x10] sm:$0xf]
      %v2263 = vld [vmem:[%s2257 + $0x14] sm:$0xf]
      %v2264 = vld [vmem:[%s2257 + $0x18] sm:$0xf]
      %v2265 = vld [vmem:[%s2257 + $0x1c] sm:$0xf]
      %v2282 = vunpack.c.l.b16 %v2241
      %v2283 = vunpack.c.l.b16 %v2242
      %v2284 = vunpack.c.l.b16 %v2243
      %v2285 = vunpack.c.l.b16 %v2244
      %v2286 = vunpack.c.l.b16 %v2245
      %v2287 = vunpack.c.l.b16 %v2246
      %v2288 = vunpack.c.l.b16 %v2247
      %v2289 = vunpack.c.l.b16 %v2248
      %v2290 = vunpack.c.l.b16 %v2249
      %v2291 = vunpack.c.l.b16 %v2250
      %v2292 = vunpack.c.l.b16 %v2251
      %v2293 = vunpack.c.l.b16 %v2252
      %v2294 = vunpack.c.l.b16 %v2253
      %v2295 = vunpack.c.l.b16 %v2254
      %v2296 = vunpack.c.l.b16 %v2255
      %v2297 = vunpack.c.l.b16 %v2256
      %v2298 = vpack.c.b16 %v2283, %v2282
      %v2299 = vpack.c.b16 %v2285, %v2284
      %v2300 = vpack.c.b16 %v2287, %v2286
      %v2301 = vpack.c.b16 %v2289, %v2288
      %v2302 = vpack.c.b16 %v2291, %v2290
      %v2303 = vpack.c.b16 %v2293, %v2292
      %v2304 = vpack.c.b16 %v2295, %v2294
      %v2305 = vpack.c.b16 %v2297, %v2296
      %v2314 = vunpack.c.l.b16 %v2258
      %v2315 = vunpack.c.l.b16 %v2259
      %v2316 = vunpack.c.l.b16 %v2260
      %v2317 = vunpack.c.l.b16 %v2261
      %v2318 = vunpack.c.l.b16 %v2262
      %v2319 = vunpack.c.l.b16 %v2263
      %v2320 = vunpack.c.l.b16 %v2264
      %v2321 = vunpack.c.l.b16 %v2265
      %v2322 = vpack.c.b16 %v2315, %v2314
      %v2323 = vpack.c.b16 %v2317, %v2316
      %v2324 = vpack.c.b16 %v2319, %v2318
      %v2325 = vpack.c.b16 %v2321, %v2320
      %v2331 = vsel %vm297, %v2298, 0
      %v2334 = vsel %vm297, %v2299, 0
      %v2337 = vsel %vm297, %v2300, 0
      %v2340 = vsel %vm297, %v2301, 0
      %v2343 = vsel %vm297, %v2302, 0
      %v2346 = vsel %vm297, %v2303, 0
      %v2349 = vsel %vm297, %v2304, 0
      %v2352 = vsel %vm297, %v2305, 0
      %2354 = vmatprep.subr.bf16.mxu0 0
      %2355 = vmatpush1.bf16.msra.mxu0 %v2322
      %2356 = vmatprep.subr.bf16.mxu0 0
      %2357 = vmatpush1.bf16.msra.mxu0 %v2323
      %2358 = vmatprep.subr.bf16.mxu0 0
      %2359 = vmatpush1.bf16.msra.mxu0 %v2324
      %2360 = vmatprep.subr.bf16.mxu0 0
      %2361 = vmatpush1.bf16.msra.mxu0 %v2325
      %2362 = vmatprep.subr.bf16.mxu0 0
      %2363 = vmatpush1.bf16.msra.mxu0 0
      %2364 = vmatprep.subr.bf16.mxu0 0
      %2365 = vmatpush1.bf16.msra.mxu0 0
      %2366 = vmatprep.subr.bf16.mxu0 0
      %2367 = vmatpush1.bf16.msra.mxu0 0
      %2368 = vmatprep.subr.bf16.mxu0 0
      %2369 = vmatpush1.bf16.msra.mxu0 0
      %2370 = vmatprep.subr.bf16.mxu0 0
      %2371 = vmatpush1.bf16.msra.mxu0 0
      %2372 = vmatprep.subr.bf16.mxu0 0
      %2373 = vmatpush1.bf16.msra.mxu0 0
      %2374 = vmatprep.subr.bf16.mxu0 0
      %2375 = vmatpush1.bf16.msra.mxu0 0
      %2376 = vmatprep.subr.bf16.mxu0 0
      %2377 = vmatpush1.bf16.msra.mxu0 0
      %2378 = vmatprep.subr.bf16.mxu0 0
      %2379 = vmatpush1.bf16.msra.mxu0 0
      %2380 = vmatprep.subr.bf16.mxu0 0
      %2381 = vmatpush1.bf16.msra.mxu0 0
      %2382 = vmatprep.subr.bf16.mxu0 0
      %2383 = vmatpush1.bf16.msra.mxu0 0
      %2384 = vmatprep.subr.bf16.mxu0 0
      %2385 = vmatpush1.bf16.msra.mxu0 0
      %2386 = vmatprep.mubr.bf16.mxu0 0
      %2387 = vmatmul.mubr.bf16.gmra.mrb[0].mxu0 %v2331
      %v2388 = vpop.f32.mrb[0].mxu0
      %v2389 = vadd.f32 0.0, %v2388
      %v2390 = vpop.f32.mrb[0].mxu0
      %v2391 = vpop.f32.mrb[0].mxu0
      %v2392 = vadd.f32 0.0, %v2391
      %v2393 = vpop.f32.mrb[0].mxu0
      %2394 = vmatprep.mubr.bf16.mxu0 0
      %2395 = vmatmul.mubr.bf16.gmra.mrb[0].mxu0 %v2334
      %v2396 = vpop.f32.mrb[0].mxu0
      %v2397 = vadd.f32 0.0, %v2396
      %v2398 = vpop.f32.mrb[0].mxu0
      %v2399 = vpop.f32.mrb[0].mxu0
      %v2400 = vadd.f32 0.0, %v2399
      %v2401 = vpop.f32.mrb[0].mxu0
      %2402 = vmatprep.mubr.bf16.mxu0 0
      %2403 = vmatmul.mubr.bf16.gmra.mrb[0].mxu0 %v2337
      %v2404 = vpop.f32.mrb[0].mxu0
      %v2405 = vadd.f32 0.0, %v2404
      %v2406 = vpop.f32.mrb[0].mxu0
      %v2407 = vpop.f32.mrb[0].mxu0
      %v2408 = vadd.f32 0.0, %v2407
      %v2409 = vpop.f32.mrb[0].mxu0
      %2410 = vmatprep.mubr.bf16.mxu0 0
      %2411 = vmatmul.mubr.bf16.gmra.mrb[0].mxu0 %v2340
      %v2412 = vpop.f32.mrb[0].mxu0
      %v2413 = vadd.f32 0.0, %v2412
      %v2414 = vpop.f32.mrb[0].mxu0
      %v2415 = vpop.f32.mrb[0].mxu0
      %v2416 = vadd.f32 0.0, %v2415
      %v2417 = vpop.f32.mrb[0].mxu0
      %2418 = vmatprep.mubr.bf16.mxu0 0
      %2419 = vmatmul.mubr.bf16.gmra.mrb[0].mxu0 %v2343
      %v2420 = vpop.f32.mrb[0].mxu0
      %v2421 = vadd.f32 0.0, %v2420
      %v2422 = vpop.f32.mrb[0].mxu0
      %v2423 = vpop.f32.mrb[0].mxu0
      %v2424 = vadd.f32 0.0, %v2423
      %v2425 = vpop.f32.mrb[0].mxu0
      %2426 = vmatprep.mubr.bf16.mxu0 0
      %2427 = vmatmul.mubr.bf16.gmra.mrb[0].mxu0 %v2346
      %v2428 = vpop.f32.mrb[0].mxu0
      %v2429 = vadd.f32 0.0, %v2428
      %v2430 = vpop.f32.mrb[0].mxu0
      %v2431 = vpop.f32.mrb[0].mxu0
      %v2432 = vadd.f32 0.0, %v2431
      %v2433 = vpop.f32.mrb[0].mxu0
      %2434 = vmatprep.mubr.bf16.mxu0 0
      %2435 = vmatmul.mubr.bf16.gmra.mrb[0].mxu0 %v2349
      %v2436 = vpop.f32.mrb[0].mxu0
      %v2437 = vadd.f32 0.0, %v2436
      %v2438 = vpop.f32.mrb[0].mxu0
      %v2439 = vpop.f32.mrb[0].mxu0
      %v2440 = vadd.f32 0.0, %v2439
      %v2441 = vpop.f32.mrb[0].mxu0
      %2442 = vmatprep.mubr.bf16.mxu0 0
      %2443 = vmatmul.mubr.bf16.gmra.mrb[0].mxu0 %v2352
      %v2444 = vpop.f32.mrb[0].mxu0
      %v2445 = vadd.f32 0.0, %v2444
      %v2446 = vpop.f32.mrb[0].mxu0
      %v2447 = vpop.f32.mrb[0].mxu0
      %v2448 = vadd.f32 0.0, %v2447
      %v2449 = vpop.f32.mrb[0].mxu0
      %2450 = vdwg.mxu0
      %v2451 = vld [vmem:[#allocation2] sm:$0xff]
      %v2452 = vld [vmem:[#allocation2 + $0x8] sm:$0xff]
      %v2453 = vld [vmem:[#allocation2 + $0x10] sm:$0xff]
      %v2454 = vld [vmem:[#allocation2 + $0x18] sm:$0xff]
      %v2455 = vld [vmem:[#allocation2 + $0x20] sm:$0xff]
      %v2456 = vld [vmem:[#allocation2 + $0x28] sm:$0xff]
      %v2457 = vld [vmem:[#allocation2 + $0x30] sm:$0xff]
      %v2458 = vld [vmem:[#allocation2 + $0x38] sm:$0xff]
      %v2459 = vld [vmem:[#allocation2 + $0x40] sm:$0xff]
      %v2460 = vld [vmem:[#allocation2 + $0x48] sm:$0xff]
      %v2461 = vld [vmem:[#allocation2 + $0x50] sm:$0xff]
      %v2462 = vld [vmem:[#allocation2 + $0x58] sm:$0xff]
      %v2463 = vld [vmem:[#allocation2 + $0x60] sm:$0xff]
      %v2464 = vld [vmem:[#allocation2 + $0x68] sm:$0xff]
      %v2465 = vld [vmem:[#allocation2 + $0x70] sm:$0xff]
      %v2466 = vld [vmem:[#allocation2 + $0x78] sm:$0xff]
      %v2467 = vadd.f32 %v2451, %v2389
      %v2468 = vadd.f32 %v2452, %v2392
      %v2469 = vadd.f32 %v2453, %v2397
      %v2470 = vadd.f32 %v2454, %v2400
      %v2471 = vadd.f32 %v2455, %v2405
      %v2472 = vadd.f32 %v2456, %v2408
      %v2473 = vadd.f32 %v2457, %v2413
      %v2474 = vadd.f32 %v2458, %v2416
      %v2475 = vadd.f32 %v2459, %v2421
      %v2476 = vadd.f32 %v2460, %v2424
      %v2477 = vadd.f32 %v2461, %v2429
      %v2478 = vadd.f32 %v2462, %v2432
      %v2479 = vadd.f32 %v2463, %v2437
      %v2480 = vadd.f32 %v2464, %v2440
      %v2481 = vadd.f32 %v2465, %v2445
      %v2482 = vadd.f32 %v2466, %v2448
      %2483 = vst.msk [vmem:[#allocation2] sm:$0xff] %vm297, %v2467
      %2484 = vst.msk [vmem:[#allocation2 + $0x8] sm:$0xff] %vm297, %v2468
      %2485 = vst.msk [vmem:[#allocation2 + $0x10] sm:$0xff] %vm297, %v2469
      %2486 = vst.msk [vmem:[#allocation2 + $0x18] sm:$0xff] %vm297, %v2470
      %2487 = vst.msk [vmem:[#allocation2 + $0x20] sm:$0xff] %vm297, %v2471
      %2488 = vst.msk [vmem:[#allocation2 + $0x28] sm:$0xff] %vm297, %v2472
      %2489 = vst.msk [vmem:[#allocation2 + $0x30] sm:$0xff] %vm297, %v2473
      %2490 = vst.msk [vmem:[#allocation2 + $0x38] sm:$0xff] %vm297, %v2474
      %2491 = vst.msk [vmem:[#allocation2 + $0x40] sm:$0xff] %vm297, %v2475
      %2492 = vst.msk [vmem:[#allocation2 + $0x48] sm:$0xff] %vm297, %v2476
      %2493 = vst.msk [vmem:[#allocation2 + $0x50] sm:$0xff] %vm297, %v2477
      %2494 = vst.msk [vmem:[#allocation2 + $0x58] sm:$0xff] %vm297, %v2478
      %2495 = vst.msk [vmem:[#allocation2 + $0x60] sm:$0xff] %vm297, %v2479
      %2496 = vst.msk [vmem:[#allocation2 + $0x68] sm:$0xff] %vm297, %v2480
      %2497 = vst.msk [vmem:[#allocation2 + $0x70] sm:$0xff] %vm297, %v2481
      %2498 = vst.msk [vmem:[#allocation2 + $0x78] sm:$0xff] %vm297, %v2482
      %v2499 = vld [vmem:[%s2240] sm:$0xf]
      %v2500 = vld [vmem:[%s2240 + $0x4] sm:$0xf]
      %v2501 = vld [vmem:[%s2240 + $0x8] sm:$0x1]
      %v2502 = vld [vmem:[%s2240 + $0xc] sm:$0xf]
      %v2503 = vld [vmem:[%s2240 + $0x10] sm:$0xf]
      %v2504 = vld [vmem:[%s2240 + $0x14] sm:$0x1]
      %v2505 = vld [vmem:[%s2240 + $0x18] sm:$0xf]
      %v2506 = vld [vmem:[%s2240 + $0x1c] sm:$0xf]
      %v2507 = vld [vmem:[%s2240 + $0x20] sm:$0x1]
      %v2508 = vld [vmem:[%s2240 + $0x24] sm:$0xf]
      %v2509 = vld [vmem:[%s2240 + $0x28] sm:$0xf]
      %v2510 = vld [vmem:[%s2240 + $0x2c] sm:$0x1]
      %v2511 = vld [vmem:[%s2240 + $0x30] sm:$0xf]
      %v2512 = vld [vmem:[%s2240 + $0x34] sm:$0xf]
      %v2513 = vld [vmem:[%s2240 + $0x38] sm:$0x1]
      %v2514 = vld [vmem:[%s2240 + $0x3c] sm:$0xf]
      %v2515 = vld [vmem:[%s2240 + $0x40] sm:$0xf]
      %v2516 = vld [vmem:[%s2240 + $0x44] sm:$0x1]
      %v2517 = vld [vmem:[%s2240 + $0x48] sm:$0xf]
      %v2518 = vld [vmem:[%s2240 + $0x4c] sm:$0xf]
      %v2519 = vld [vmem:[%s2240 + $0x50] sm:$0x1]
      %v2520 = vld [vmem:[%s2240 + $0x54] sm:$0xf]
      %v2521 = vld [vmem:[%s2240 + $0x58] sm:$0xf]
      %v2522 = vld [vmem:[%s2240 + $0x5c] sm:$0x1]
      %v2524 = vshrl.u32 %v2499, 16
      %v2526 = vrot.slane %v2524, 4
      %v2527 = vshll.u32 %v2499, 16
      %v2529 = vrot.slane %v2527, 5
      %v2530 = vor.u32 %v2526, %v2529
      %v2531 = vrot.slane %v2530, 4
      %v2533 = vshll.u32 %v2500, 16
      %v2535 = vrot.slane %v2533, 5
      %v2536 = vsel %vm461, %v2531, %v2535
      %v2537 = vshrl.u32 %v2500, 16
      %v2539 = vrot.slane %v2537, 4
      %v2540 = vor.u32 %v2539, %v2535
      %v2541 = vrot.slane %v2540, 4
      %v2543 = vshll.u32 %v2501, 16
      %v2545 = vrot.slane %v2543, 5
      %v2546 = vsel %vm461, %v2541, %v2545
      %v2548 = vshrl.u32 %v2502, 16
      %v2550 = vrot.slane %v2548, 4
      %v2551 = vshll.u32 %v2502, 16
      %v2553 = vrot.slane %v2551, 5
      %v2554 = vor.u32 %v2550, %v2553
      %v2555 = vrot.slane %v2554, 4
      %v2557 = vshll.u32 %v2503, 16
      %v2559 = vrot.slane %v2557, 5
      %v2560 = vsel %vm461, %v2555, %v2559
      %v2561 = vshrl.u32 %v2503, 16
      %v2563 = vrot.slane %v2561, 4
      %v2564 = vor.u32 %v2563, %v2559
      %v2565 = vrot.slane %v2564, 4
      %v2567 = vshll.u32 %v2504, 16
      %v2569 = vrot.slane %v2567, 5
      %v2570 = vsel %vm461, %v2565, %v2569
      %v2572 = vshrl.u32 %v2505, 16
      %v2574 = vrot.slane %v2572, 4
      %v2575 = vshll.u32 %v2505, 16
      %v2577 = vrot.slane %v2575, 5
      %v2578 = vor.u32 %v2574, %v2577
      %v2579 = vrot.slane %v2578, 4
      %v2581 = vshll.u32 %v2506, 16
      %v2583 = vrot.slane %v2581, 5
      %v2584 = vsel %vm461, %v2579, %v2583
      %v2585 = vshrl.u32 %v2506, 16
      %v2587 = vrot.slane %v2585, 4
      %v2588 = vor.u32 %v2587, %v2583
      %v2589 = vrot.slane %v2588, 4
      %v2591 = vshll.u32 %v2507, 16
      %v2593 = vrot.slane %v2591, 5
      %v2594 = vsel %vm461, %v2589, %v2593
      %v2596 = vshrl.u32 %v2508, 16
      %v2598 = vrot.slane %v2596, 4
      %v2599 = vshll.u32 %v2508, 16
      %v2601 = vrot.slane %v2599, 5
      %v2602 = vor.u32 %v2598, %v2601
      %v2603 = vrot.slane %v2602, 4
      %v2605 = vshll.u32 %v2509, 16
      %v2607 = vrot.slane %v2605, 5
      %v2608 = vsel %vm461, %v2603, %v2607
      %v2609 = vshrl.u32 %v2509, 16
      %v2611 = vrot.slane %v2609, 4
      %v2612 = vor.u32 %v2611, %v2607
      %v2613 = vrot.slane %v2612, 4
      %v2615 = vshll.u32 %v2510, 16
      %v2617 = vrot.slane %v2615, 5
      %v2618 = vsel %vm461, %v2613, %v2617
      %v2620 = vshrl.u32 %v2511, 16
      %v2622 = vrot.slane %v2620, 4
      %v2623 = vshll.u32 %v2511, 16
      %v2625 = vrot.slane %v2623, 5
      %v2626 = vor.u32 %v2622, %v2625
      %v2627 = vrot.slane %v2626, 4
      %v2629 = vshll.u32 %v2512, 16
      %v2631 = vrot.slane %v2629, 5
      %v2632 = vsel %vm461, %v2627, %v2631
      %v2633 = vshrl.u32 %v2512, 16
      %v2635 = vrot.slane %v2633, 4
      %v2636 = vor.u32 %v2635, %v2631
      %v2637 = vrot.slane %v2636, 4
      %v2639 = vshll.u32 %v2513, 16
      %v2641 = vrot.slane %v2639, 5
      %v2642 = vsel %vm461, %v2637, %v2641
      %v2644 = vshrl.u32 %v2514, 16
      %v2646 = vrot.slane %v2644, 4
      %v2647 = vshll.u32 %v2514, 16
      %v2649 = vrot.slane %v2647, 5
      %v2650 = vor.u32 %v2646, %v2649
      %v2651 = vrot.slane %v2650, 4
      %v2653 = vshll.u32 %v2515, 16
      %v2655 = vrot.slane %v2653, 5
      %v2656 = vsel %vm461, %v2651, %v2655
      %v2657 = vshrl.u32 %v2515, 16
      %v2659 = vrot.slane %v2657, 4
      %v2660 = vor.u32 %v2659, %v2655
      %v2661 = vrot.slane %v2660, 4
      %v2663 = vshll.u32 %v2516, 16
      %v2665 = vrot.slane %v2663, 5
      %v2666 = vsel %vm461, %v2661, %v2665
      %v2668 = vshrl.u32 %v2517, 16
      %v2670 = vrot.slane %v2668, 4
      %v2671 = vshll.u32 %v2517, 16
      %v2673 = vrot.slane %v2671, 5
      %v2674 = vor.u32 %v2670, %v2673
      %v2675 = vrot.slane %v2674, 4
      %v2677 = vshll.u32 %v2518, 16
      %v2679 = vrot.slane %v2677, 5
      %v2680 = vsel %vm461, %v2675, %v2679
      %v2681 = vshrl.u32 %v2518, 16
      %v2683 = vrot.slane %v2681, 4
      %v2684 = vor.u32 %v2683, %v2679
      %v2685 = vrot.slane %v2684, 4
      %v2687 = vshll.u32 %v2519, 16
      %v2689 = vrot.slane %v2687, 5
      %v2690 = vsel %vm461, %v2685, %v2689
      %v2692 = vshrl.u32 %v2520, 16
      %v2694 = vrot.slane %v2692, 4
      %v2695 = vshll.u32 %v2520, 16
      %v2697 = vrot.slane %v2695, 5
      %v2698 = vor.u32 %v2694, %v2697
      %v2699 = vrot.slane %v2698, 4
      %v2701 = vshll.u32 %v2521, 16
      %v2703 = vrot.slane %v2701, 5
      %v2704 = vsel %vm461, %v2699, %v2703
      %v2705 = vshrl.u32 %v2521, 16
      %v2707 = vrot.slane %v2705, 4
      %v2708 = vor.u32 %v2707, %v2703
      %v2709 = vrot.slane %v2708, 4
      %v2711 = vshll.u32 %v2522, 16
      %v2713 = vrot.slane %v2711, 5
      %v2714 = vsel %vm461, %v2709, %v2713
      %v2715 = vld [vmem:[%s2257 + $0x20] sm:$0xf]
      %v2716 = vld [vmem:[%s2257 + $0x24] sm:$0xf]
      %v2717 = vld [vmem:[%s2257 + $0x28] sm:$0xf]
      %v2718 = vld [vmem:[%s2257 + $0x2c] sm:$0xf]
      %v2719 = vld [vmem:[%s2257 + $0x30] sm:$0xf]
      %v2720 = vld [vmem:[%s2257 + $0x34] sm:$0xf]
      %v2721 = vld [vmem:[%s2257 + $0x38] sm:$0xf]
      %v2722 = vld [vmem:[%s2257 + $0x3c] sm:$0xf]
      %v2723 = vunpack.c.l.b16 %v2536
      %v2724 = vunpack.c.l.b16 %v2546
      %v2725 = vunpack.c.l.b16 %v2560
      %v2726 = vunpack.c.l.b16 %v2570
      %v2727 = vunpack.c.l.b16 %v2584
      %v2728 = vunpack.c.l.b16 %v2594
      %v2729 = vunpack.c.l.b16 %v2608
      %v2730 = vunpack.c.l.b16 %v2618
      %v2731 = vunpack.c.l.b16 %v2632
      %v2732 = vunpack.c.l.b16 %v2642
      %v2733 = vunpack.c.l.b16 %v2656
      %v2734 = vunpack.c.l.b16 %v2666
      %v2735 = vunpack.c.l.b16 %v2680
      %v2736 = vunpack.c.l.b16 %v2690
      %v2737 = vunpack.c.l.b16 %v2704
      %v2738 = vunpack.c.l.b16 %v2714
      %v2739 = vpack.c.b16 %v2724, %v2723
      %v2740 = vpack.c.b16 %v2726, %v2725
      %v2741 = vpack.c.b16 %v2728, %v2727
      %v2742 = vpack.c.b16 %v2730, %v2729
      %v2743 = vpack.c.b16 %v2732, %v2731
      %v2744 = vpack.c.b16 %v2734, %v2733
      %v2745 = vpack.c.b16 %v2736, %v2735
      %v2746 = vpack.c.b16 %v2738, %v2737
      %v2755 = vunpack.c.l.b16 %v2715
      %v2756 = vunpack.c.l.b16 %v2716
      %v2757 = vunpack.c.l.b16 %v2717
      %v2758 = vunpack.c.l.b16 %v2718
      %v2759 = vunpack.c.l.b16 %v2719
      %v2760 = vunpack.c.l.b16 %v2720
      %v2761 = vunpack.c.l.b16 %v2721
      %v2762 = vunpack.c.l.b16 %v2722
      %v2763 = vpack.c.b16 %v2756, %v2755
      %v2764 = vpack.c.b16 %v2758, %v2757
      %v2765 = vpack.c.b16 %v2760, %v2759
      %v2766 = vpack.c.b16 %v2762, %v2761
      %v2772 = vsel %vm297, %v2739, 0
      %v2775 = vsel %vm297, %v2740, 0
      %v2778 = vsel %vm297, %v2741, 0
      %v2781 = vsel %vm297, %v2742, 0
      %v2784 = vsel %vm297, %v2743, 0
      %v2787 = vsel %vm297, %v2744, 0
      %v2790 = vsel %vm297, %v2745, 0
      %v2793 = vsel %vm297, %v2746, 0
      %2795 = vmatprep.subr.bf16.mxu0 0
      %2796 = vmatpush1.bf16.msra.mxu0 %v2763
      %2797 = vmatprep.subr.bf16.mxu0 0
      %2798 = vmatpush1.bf16.msra.mxu0 %v2764
      %2799 = vmatprep.subr.bf16.mxu0 0
      %2800 = vmatpush1.bf16.msra.mxu0 %v2765
      %2801 = vmatprep.subr.bf16.mxu0 0
      %2802 = vmatpush1.bf16.msra.mxu0 %v2766
      %2803 = vmatprep.subr.bf16.mxu0 0
      %2804 = vmatpush1.bf16.msra.mxu0 0
      %2805 = vmatprep.subr.bf16.mxu0 0
      %2806 = vmatpush1.bf16.msra.mxu0 0
      %2807 = vmatprep.subr.bf16.mxu0 0
      %2808 = vmatpush1.bf16.msra.mxu0 0
      %2809 = vmatprep.subr.bf16.mxu0 0
      %2810 = vmatpush1.bf16.msra.mxu0 0
      %2811 = vmatprep.subr.bf16.mxu0 0
      %2812 = vmatpush1.bf16.msra.mxu0 0
      %2813 = vmatprep.subr.bf16.mxu0 0
      %2814 = vmatpush1.bf16.msra.mxu0 0
      %2815 = vmatprep.subr.bf16.mxu0 0
      %2816 = vmatpush1.bf16.msra.mxu0 0
      %2817 = vmatprep.subr.bf16.mxu0 0
      %2818 = vmatpush1.bf16.msra.mxu0 0
      %2819 = vmatprep.subr.bf16.mxu0 0
      %2820 = vmatpush1.bf16.msra.mxu0 0
      %2821 = vmatprep.subr.bf16.mxu0 0
      %2822 = vmatpush1.bf16.msra.mxu0 0
      %2823 = vmatprep.subr.bf16.mxu0 0
      %2824 = vmatpush1.bf16.msra.mxu0 0
      %2825 = vmatprep.subr.bf16.mxu0 0
      %2826 = vmatpush1.bf16.msra.mxu0 0
      %2827 = vmatprep.mubr.bf16.mxu0 0
      %2828 = vmatmul.mubr.bf16.gmra.mrb[0].mxu0 %v2772
      %v2829 = vpop.f32.mrb[0].mxu0
      %v2830 = vadd.f32 0.0, %v2829
      %v2831 = vpop.f32.mrb[0].mxu0
      %v2832 = vpop.f32.mrb[0].mxu0
      %v2833 = vadd.f32 0.0, %v2832
      %v2834 = vpop.f32.mrb[0].mxu0
      %2835 = vmatprep.mubr.bf16.mxu0 0
      %2836 = vmatmul.mubr.bf16.gmra.mrb[0].mxu0 %v2775
      %v2837 = vpop.f32.mrb[0].mxu0
      %v2838 = vadd.f32 0.0, %v2837
      %v2839 = vpop.f32.mrb[0].mxu0
      %v2840 = vpop.f32.mrb[0].mxu0
      %v2841 = vadd.f32 0.0, %v2840
      %v2842 = vpop.f32.mrb[0].mxu0
      %2843 = vmatprep.mubr.bf16.mxu0 0
      %2844 = vmatmul.mubr.bf16.gmra.mrb[0].mxu0 %v2778
      %v2845 = vpop.f32.mrb[0].mxu0
      %v2846 = vadd.f32 0.0, %v2845
      %v2847 = vpop.f32.mrb[0].mxu0
      %v2848 = vpop.f32.mrb[0].mxu0
      %v2849 = vadd.f32 0.0, %v2848
      %v2850 = vpop.f32.mrb[0].mxu0
      %2851 = vmatprep.mubr.bf16.mxu0 0
      %2852 = vmatmul.mubr.bf16.gmra.mrb[0].mxu0 %v2781
      %v2853 = vpop.f32.mrb[0].mxu0
      %v2854 = vadd.f32 0.0, %v2853
      %v2855 = vpop.f32.mrb[0].mxu0
      %v2856 = vpop.f32.mrb[0].mxu0
      %v2857 = vadd.f32 0.0, %v2856
      %v2858 = vpop.f32.mrb[0].mxu0
      %2859 = vmatprep.mubr.bf16.mxu0 0
      %2860 = vmatmul.mubr.bf16.gmra.mrb[0].mxu0 %v2784
      %v2861 = vpop.f32.mrb[0].mxu0
      %v2862 = vadd.f32 0.0, %v2861
      %v2863 = vpop.f32.mrb[0].mxu0
      %v2864 = vpop.f32.mrb[0].mxu0
      %v2865 = vadd.f32 0.0, %v2864
      %v2866 = vpop.f32.mrb[0].mxu0
      %2867 = vmatprep.mubr.bf16.mxu0 0
      %2868 = vmatmul.mubr.bf16.gmra.mrb[0].mxu0 %v2787
      %v2869 = vpop.f32.mrb[0].mxu0
      %v2870 = vadd.f32 0.0, %v2869
      %v2871 = vpop.f32.mrb[0].mxu0
      %v2872 = vpop.f32.mrb[0].mxu0
      %v2873 = vadd.f32 0.0, %v2872
      %v2874 = vpop.f32.mrb[0].mxu0
      %2875 = vmatprep.mubr.bf16.mxu0 0
      %2876 = vmatmul.mubr.bf16.gmra.mrb[0].mxu0 %v2790
      %v2877 = vpop.f32.mrb[0].mxu0
      %v2878 = vadd.f32 0.0, %v2877
      %v2879 = vpop.f32.mrb[0].mxu0
      %v2880 = vpop.f32.mrb[0].mxu0
      %v2881 = vadd.f32 0.0, %v2880
      %v2882 = vpop.f32.mrb[0].mxu0
      %2883 = vmatprep.mubr.bf16.mxu0 0
      %2884 = vmatmul.mubr.bf16.gmra.mrb[0].mxu0 %v2793
      %v2885 = vpop.f32.mrb[0].mxu0
      %v2886 = vadd.f32 0.0, %v2885
      %v2887 = vpop.f32.mrb[0].mxu0
      %v2888 = vpop.f32.mrb[0].mxu0
      %v2889 = vadd.f32 0.0, %v2888
      %v2890 = vpop.f32.mrb[0].mxu0
      %2891 = vdwg.mxu0
      %v2892 = vld [vmem:[#allocation2] sm:$0xff]
      %v2893 = vld [vmem:[#allocation2 + $0x8] sm:$0xff]
      %v2894 = vld [vmem:[#allocation2 + $0x10] sm:$0xff]
      %v2895 = vld [vmem:[#allocation2 + $0x18] sm:$0xff]
      %v2896 = vld [vmem:[#allocation2 + $0x20] sm:$0xff]
      %v2897 = vld [vmem:[#allocation2 + $0x28] sm:$0xff]
      %v2898 = vld [vmem:[#allocation2 + $0x30] sm:$0xff]
      %v2899 = vld [vmem:[#allocation2 + $0x38] sm:$0xff]
      %v2900 = vld [vmem:[#allocation2 + $0x40] sm:$0xff]
      %v2901 = vld [vmem:[#allocation2 + $0x48] sm:$0xff]
      %v2902 = vld [vmem:[#allocation2 + $0x50] sm:$0xff]
      %v2903 = vld [vmem:[#allocation2 + $0x58] sm:$0xff]
      %v2904 = vld [vmem:[#allocation2 + $0x60] sm:$0xff]
      %v2905 = vld [vmem:[#allocation2 + $0x68] sm:$0xff]
      %v2906 = vld [vmem:[#allocation2 + $0x70] sm:$0xff]
      %v2907 = vld [vmem:[#allocation2 + $0x78] sm:$0xff]
      %v2908 = vadd.f32 %v2892, %v2830
      %v2909 = vadd.f32 %v2893, %v2833
      %v2910 = vadd.f32 %v2894, %v2838
      %v2911 = vadd.f32 %v2895, %v2841
      %v2912 = vadd.f32 %v2896, %v2846
      %v2913 = vadd.f32 %v2897, %v2849
      %v2914 = vadd.f32 %v2898, %v2854
      %v2915 = vadd.f32 %v2899, %v2857
      %v2916 = vadd.f32 %v2900, %v2862
      %v2917 = vadd.f32 %v2901, %v2865
      %v2918 = vadd.f32 %v2902, %v2870
      %v2919 = vadd.f32 %v2903, %v2873
      %v2920 = vadd.f32 %v2904, %v2878
      %v2921 = vadd.f32 %v2905, %v2881
      %v2922 = vadd.f32 %v2906, %v2886
      %v2923 = vadd.f32 %v2907, %v2889
      %2924 = vst.msk [vmem:[#allocation2] sm:$0xff] %vm297, %v2908
      %2925 = vst.msk [vmem:[#allocation2 + $0x8] sm:$0xff] %vm297, %v2909
      %2926 = vst.msk [vmem:[#allocation2 + $0x10] sm:$0xff] %vm297, %v2910
      %2927 = vst.msk [vmem:[#allocation2 + $0x18] sm:$0xff] %vm297, %v2911
      %2928 = vst.msk [vmem:[#allocation2 + $0x20] sm:$0xff] %vm297, %v2912
      %2929 = vst.msk [vmem:[#allocation2 + $0x28] sm:$0xff] %vm297, %v2913
      %2930 = vst.msk [vmem:[#allocation2 + $0x30] sm:$0xff] %vm297, %v2914
      %2931 = vst.msk [vmem:[#allocation2 + $0x38] sm:$0xff] %vm297, %v2915
      %2932 = vst.msk [vmem:[#allocation2 + $0x40] sm:$0xff] %vm297, %v2916
      %2933 = vst.msk [vmem:[#allocation2 + $0x48] sm:$0xff] %vm297, %v2917
      %2934 = vst.msk [vmem:[#allocation2 + $0x50] sm:$0xff] %vm297, %v2918
      %2935 = vst.msk [vmem:[#allocation2 + $0x58] sm:$0xff] %vm297, %v2919
      %2936 = vst.msk [vmem:[#allocation2 + $0x60] sm:$0xff] %vm297, %v2920
      %2937 = vst.msk [vmem:[#allocation2 + $0x68] sm:$0xff] %vm297, %v2921
      %2938 = vst.msk [vmem:[#allocation2 + $0x70] sm:$0xff] %vm297, %v2922
      %2939 = vst.msk [vmem:[#allocation2 + $0x78] sm:$0xff] %vm297, %v2923
      %v2940 = vld [vmem:[%s2240] sm:$0xe]
      %v2941 = vld [vmem:[%s2240 + $0x4] sm:$0xf]
      %v2942 = vld [vmem:[%s2240 + $0x8] sm:$0x1]
      %v2943 = vld [vmem:[%s2240 + $0xc] sm:$0xe]
      %v2944 = vld [vmem:[%s2240 + $0x10] sm:$0xf]
      %v2945 = vld [vmem:[%s2240 + $0x14] sm:$0x1]
      %v2946 = vld [vmem:[%s2240 + $0x18] sm:$0xe]
      %v2947 = vld [vmem:[%s2240 + $0x1c] sm:$0xf]
      %v2948 = vld [vmem:[%s2240 + $0x20] sm:$0x1]
      %v2949 = vld [vmem:[%s2240 + $0x24] sm:$0xe]
      %v2950 = vld [vmem:[%s2240 + $0x28] sm:$0xf]
      %v2951 = vld [vmem:[%s2240 + $0x2c] sm:$0x1]
      %v2952 = vld [vmem:[%s2240 + $0x30] sm:$0xe]
      %v2953 = vld [vmem:[%s2240 + $0x34] sm:$0xf]
      %v2954 = vld [vmem:[%s2240 + $0x38] sm:$0x1]
      %v2955 = vld [vmem:[%s2240 + $0x3c] sm:$0xe]
      %v2956 = vld [vmem:[%s2240 + $0x40] sm:$0xf]
      %v2957 = vld [vmem:[%s2240 + $0x44] sm:$0x1]
      %v2958 = vld [vmem:[%s2240 + $0x48] sm:$0xe]
      %v2959 = vld [vmem:[%s2240 + $0x4c] sm:$0xf]
      %v2960 = vld [vmem:[%s2240 + $0x50] sm:$0x1]
      %v2961 = vld [vmem:[%s2240 + $0x54] sm:$0xe]
      %v2962 = vld [vmem:[%s2240 + $0x58] sm:$0xf]
      %v2963 = vld [vmem:[%s2240 + $0x5c] sm:$0x1]
      %v2988 = vrot.slane %v2940, 5
      %v2989 = vrot.slane %v2988, 4
      %v2990 = vrot.slane %v2941, 5
      %v2991 = vsel %vm929, %v2989, %v2990
      %v2992 = vrot.slane %v2990, 4
      %v2993 = vrot.slane %v2942, 5
      %v2994 = vsel %vm929, %v2992, %v2993
      %v2995 = vrot.slane %v2943, 5
      %v2996 = vrot.slane %v2995, 4
      %v2997 = vrot.slane %v2944, 5
      %v2998 = vsel %vm929, %v2996, %v2997
      %v2999 = vrot.slane %v2997, 4
      %v3000 = vrot.slane %v2945, 5
      %v3001 = vsel %vm929, %v2999, %v3000
      %v3002 = vrot.slane %v2946, 5
      %v3003 = vrot.slane %v3002, 4
      %v3004 = vrot.slane %v2947, 5
      %v3005 = vsel %vm929, %v3003, %v3004
      %v3006 = vrot.slane %v3004, 4
      %v3007 = vrot.slane %v2948, 5
      %v3008 = vsel %vm929, %v3006, %v3007
      %v3009 = vrot.slane %v2949, 5
      %v3010 = vrot.slane %v3009, 4
      %v3011 = vrot.slane %v2950, 5
      %v3012 = vsel %vm929, %v3010, %v3011
      %v3013 = vrot.slane %v3011, 4
      %v3014 = vrot.slane %v2951, 5
      %v3015 = vsel %vm929, %v3013, %v3014
      %v3016 = vrot.slane %v2952, 5
      %v3017 = vrot.slane %v3016, 4
      %v3018 = vrot.slane %v2953, 5
      %v3019 = vsel %vm929, %v3017, %v3018
      %v3020 = vrot.slane %v3018, 4
      %v3021 = vrot.slane %v2954, 5
      %v3022 = vsel %vm929, %v3020, %v3021
      %v3023 = vrot.slane %v2955, 5
      %v3024 = vrot.slane %v3023, 4
      %v3025 = vrot.slane %v2956, 5
      %v3026 = vsel %vm929, %v3024, %v3025
      %v3027 = vrot.slane %v3025, 4
      %v3028 = vrot.slane %v2957, 5
      %v3029 = vsel %vm929, %v3027, %v3028
      %v3030 = vrot.slane %v2958, 5
      %v3031 = vrot.slane %v3030, 4
      %v3032 = vrot.slane %v2959, 5
      %v3033 = vsel %vm929, %v3031, %v3032
      %v3034 = vrot.slane %v3032, 4
      %v3035 = vrot.slane %v2960, 5
      %v3036 = vsel %vm929, %v3034, %v3035
      %v3037 = vrot.slane %v2961, 5
      %v3038 = vrot.slane %v3037, 4
      %v3039 = vrot.slane %v2962, 5
      %v3040 = vsel %vm929, %v3038, %v3039
      %v3041 = vrot.slane %v3039, 4
      %v3042 = vrot.slane %v2963, 5
      %v3043 = vsel %vm929, %v3041, %v3042
      %v3044 = vld [vmem:[%s2257 + $0x40] sm:$0xf]
      %v3045 = vld [vmem:[%s2257 + $0x44] sm:$0xf]
      %v3046 = vld [vmem:[%s2257 + $0x48] sm:$0xf]
      %v3047 = vld [vmem:[%s2257 + $0x4c] sm:$0xf]
      %v3048 = vld [vmem:[%s2257 + $0x50] sm:$0xf]
      %v3049 = vld [vmem:[%s2257 + $0x54] sm:$0xf]
      %v3050 = vld [vmem:[%s2257 + $0x58] sm:$0xf]
      %v3051 = vld [vmem:[%s2257 + $0x5c] sm:$0xf]
      %v3052 = vunpack.c.l.b16 %v2991
      %v3053 = vunpack.c.l.b16 %v2994
      %v3054 = vunpack.c.l.b16 %v2998
      %v3055 = vunpack.c.l.b16 %v3001
      %v3056 = vunpack.c.l.b16 %v3005
      %v3057 = vunpack.c.l.b16 %v3008
      %v3058 = vunpack.c.l.b16 %v3012
      %v3059 = vunpack.c.l.b16 %v3015
      %v3060 = vunpack.c.l.b16 %v3019
      %v3061 = vunpack.c.l.b16 %v3022
      %v3062 = vunpack.c.l.b16 %v3026
      %v3063 = vunpack.c.l.b16 %v3029
      %v3064 = vunpack.c.l.b16 %v3033
      %v3065 = vunpack.c.l.b16 %v3036
      %v3066 = vunpack.c.l.b16 %v3040
      %v3067 = vunpack.c.l.b16 %v3043
      %v3068 = vpack.c.b16 %v3053, %v3052
      %v3069 = vpack.c.b16 %v3055, %v3054
      %v3070 = vpack.c.b16 %v3057, %v3056
      %v3071 = vpack.c.b16 %v3059, %v3058
      %v3072 = vpack.c.b16 %v3061, %v3060
      %v3073 = vpack.c.b16 %v3063, %v3062
      %v3074 = vpack.c.b16 %v3065, %v3064
      %v3075 = vpack.c.b16 %v3067, %v3066
      %v3084 = vunpack.c.l.b16 %v3044
      %v3085 = vunpack.c.l.b16 %v3045
      %v3086 = vunpack.c.l.b16 %v3046
      %v3087 = vunpack.c.l.b16 %v3047
      %v3088 = vunpack.c.l.b16 %v3048
      %v3089 = vunpack.c.l.b16 %v3049
      %v3090 = vunpack.c.l.b16 %v3050
      %v3091 = vunpack.c.l.b16 %v3051
      %v3092 = vpack.c.b16 %v3085, %v3084
      %v3093 = vpack.c.b16 %v3087, %v3086
      %v3094 = vpack.c.b16 %v3089, %v3088
      %v3095 = vpack.c.b16 %v3091, %v3090
      %v3101 = vsel %vm297, %v3068, 0
      %v3104 = vsel %vm297, %v3069, 0
      %v3107 = vsel %vm297, %v3070, 0
      %v3110 = vsel %vm297, %v3071, 0
      %v3113 = vsel %vm297, %v3072, 0
      %v3116 = vsel %vm297, %v3073, 0
      %v3119 = vsel %vm297, %v3074, 0
      %v3122 = vsel %vm297, %v3075, 0
      %3124 = vmatprep.subr.bf16.mxu0 0
      %3125 = vmatpush1.bf16.msra.mxu0 %v3092
      %3126 = vmatprep.subr.bf16.mxu0 0
      %3127 = vmatpush1.bf16.msra.mxu0 %v3093
      %3128 = vmatprep.subr.bf16.mxu0 0
      %3129 = vmatpush1.bf16.msra.mxu0 %v3094
      %3130 = vmatprep.subr.bf16.mxu0 0
      %3131 = vmatpush1.bf16.msra.mxu0 %v3095
      %3132 = vmatprep.subr.bf16.mxu0 0
      %3133 = vmatpush1.bf16.msra.mxu0 0
      %3134 = vmatprep.subr.bf16.mxu0 0
      %3135 = vmatpush1.bf16.msra.mxu0 0
      %3136 = vmatprep.subr.bf16.mxu0 0
      %3137 = vmatpush1.bf16.msra.mxu0 0
      %3138 = vmatprep.subr.bf16.mxu0 0
      %3139 = vmatpush1.bf16.msra.mxu0 0
      %3140 = vmatprep.subr.bf16.mxu0 0
      %3141 = vmatpush1.bf16.msra.mxu0 0
      %3142 = vmatprep.subr.bf16.mxu0 0
      %3143 = vmatpush1.bf16.msra.mxu0 0
      %3144 = vmatprep.subr.bf16.mxu0 0
      %3145 = vmatpush1.bf16.msra.mxu0 0
      %3146 = vmatprep.subr.bf16.mxu0 0
      %3147 = vmatpush1.bf16.msra.mxu0 0
      %3148 = vmatprep.subr.bf16.mxu0 0
      %3149 = vmatpush1.bf16.msra.mxu0 0
      %3150 = vmatprep.subr.bf16.mxu0 0
      %3151 = vmatpush1.bf16.msra.mxu0 0
      %3152 = vmatprep.subr.bf16.mxu0 0
      %3153 = vmatpush1.bf16.msra.mxu0 0
      %3154 = vmatprep.subr.bf16.mxu0 0
      %3155 = vmatpush1.bf16.msra.mxu0 0
      %3156 = vmatprep.mubr.bf16.mxu0 0
      %3157 = vmatmul.mubr.bf16.gmra.mrb[0].mxu0 %v3101
      %v3158 = vpop.f32.mrb[0].mxu0
      %v3159 = vadd.f32 0.0, %v3158
      %v3160 = vpop.f32.mrb[0].mxu0
      %v3161 = vpop.f32.mrb[0].mxu0
      %v3162 = vadd.f32 0.0, %v3161
      %v3163 = vpop.f32.mrb[0].mxu0
      %3164 = vmatprep.mubr.bf16.mxu0 0
      %3165 = vmatmul.mubr.bf16.gmra.mrb[0].mxu0 %v3104
      %v3166 = vpop.f32.mrb[0].mxu0
      %v3167 = vadd.f32 0.0, %v3166
      %v3168 = vpop.f32.mrb[0].mxu0
      %v3169 = vpop.f32.mrb[0].mxu0
      %v3170 = vadd.f32 0.0, %v3169
      %v3171 = vpop.f32.mrb[0].mxu0
      %3172 = vmatprep.mubr.bf16.mxu0 0
      %3173 = vmatmul.mubr.bf16.gmra.mrb[0].mxu0 %v3107
      %v3174 = vpop.f32.mrb[0].mxu0
      %v3175 = vadd.f32 0.0, %v3174
      %v3176 = vpop.f32.mrb[0].mxu0
      %v3177 = vpop.f32.mrb[0].mxu0
      %v3178 = vadd.f32 0.0, %v3177
      %v3179 = vpop.f32.mrb[0].mxu0
      %3180 = vmatprep.mubr.bf16.mxu0 0
      %3181 = vmatmul.mubr.bf16.gmra.mrb[0].mxu0 %v3110
      %v3182 = vpop.f32.mrb[0].mxu0
      %v3183 = vadd.f32 0.0, %v3182
      %v3184 = vpop.f32.mrb[0].mxu0
      %v3185 = vpop.f32.mrb[0].mxu0
      %v3186 = vadd.f32 0.0, %v3185
      %v3187 = vpop.f32.mrb[0].mxu0
      %3188 = vmatprep.mubr.bf16.mxu0 0
      %3189 = vmatmul.mubr.bf16.gmra.mrb[0].mxu0 %v3113
      %v3190 = vpop.f32.mrb[0].mxu0
      %v3191 = vadd.f32 0.0, %v3190
      %v3192 = vpop.f32.mrb[0].mxu0
      %v3193 = vpop.f32.mrb[0].mxu0
      %v3194 = vadd.f32 0.0, %v3193
      %v3195 = vpop.f32.mrb[0].mxu0
      %3196 = vmatprep.mubr.bf16.mxu0 0
      %3197 = vmatmul.mubr.bf16.gmra.mrb[0].mxu0 %v3116
      %v3198 = vpop.f32.mrb[0].mxu0
      %v3199 = vadd.f32 0.0, %v3198
      %v3200 = vpop.f32.mrb[0].mxu0
      %v3201 = vpop.f32.mrb[0].mxu0
      %v3202 = vadd.f32 0.0, %v3201
      %v3203 = vpop.f32.mrb[0].mxu0
      %3204 = vmatprep.mubr.bf16.mxu0 0
      %3205 = vmatmul.mubr.bf16.gmra.mrb[0].mxu0 %v3119
      %v3206 = vpop.f32.mrb[0].mxu0
      %v3207 = vadd.f32 0.0, %v3206
      %v3208 = vpop.f32.mrb[0].mxu0
      %v3209 = vpop.f32.mrb[0].mxu0
      %v3210 = vadd.f32 0.0, %v3209
      %v3211 = vpop.f32.mrb[0].mxu0
      %3212 = vmatprep.mubr.bf16.mxu0 0
      %3213 = vmatmul.mubr.bf16.gmra.mrb[0].mxu0 %v3122
      %v3214 = vpop.f32.mrb[0].mxu0
      %v3215 = vadd.f32 0.0, %v3214
      %v3216 = vpop.f32.mrb[0].mxu0
      %v3217 = vpop.f32.mrb[0].mxu0
      %v3218 = vadd.f32 0.0, %v3217
      %v3219 = vpop.f32.mrb[0].mxu0
      %3220 = vdwg.mxu0
      %v3221 = vld [vmem:[#allocation2] sm:$0xff]
      %v3222 = vld [vmem:[#allocation2 + $0x8] sm:$0xff]
      %v3223 = vld [vmem:[#allocation2 + $0x10] sm:$0xff]
      %v3224 = vld [vmem:[#allocation2 + $0x18] sm:$0xff]
      %v3225 = vld [vmem:[#allocation2 + $0x20] sm:$0xff]
      %v3226 = vld [vmem:[#allocation2 + $0x28] sm:$0xff]
      %v3227 = vld [vmem:[#allocation2 + $0x30] sm:$0xff]
      %v3228 = vld [vmem:[#allocation2 + $0x38] sm:$0xff]
      %v3229 = vld [vmem:[#allocation2 + $0x40] sm:$0xff]
      %v3230 = vld [vmem:[#allocation2 + $0x48] sm:$0xff]
      %v3231 = vld [vmem:[#allocation2 + $0x50] sm:$0xff]
      %v3232 = vld [vmem:[#allocation2 + $0x58] sm:$0xff]
      %v3233 = vld [vmem:[#allocation2 + $0x60] sm:$0xff]
      %v3234 = vld [vmem:[#allocation2 + $0x68] sm:$0xff]
      %v3235 = vld [vmem:[#allocation2 + $0x70] sm:$0xff]
      %v3236 = vld [vmem:[#allocation2 + $0x78] sm:$0xff]
      %v3237 = vadd.f32 %v3221, %v3159
      %v3238 = vadd.f32 %v3222, %v3162
      %v3239 = vadd.f32 %v3223, %v3167
      %v3240 = vadd.f32 %v3224, %v3170
      %v3241 = vadd.f32 %v3225, %v3175
      %v3242 = vadd.f32 %v3226, %v3178
      %v3243 = vadd.f32 %v3227, %v3183
      %v3244 = vadd.f32 %v3228, %v3186
      %v3245 = vadd.f32 %v3229, %v3191
      %v3246 = vadd.f32 %v3230, %v3194
      %v3247 = vadd.f32 %v3231, %v3199
      %v3248 = vadd.f32 %v3232, %v3202
      %v3249 = vadd.f32 %v3233, %v3207
      %v3250 = vadd.f32 %v3234, %v3210
      %v3251 = vadd.f32 %v3235, %v3215
      %v3252 = vadd.f32 %v3236, %v3218
      %3253 = vst.msk [vmem:[#allocation2] sm:$0xff] %vm297, %v3237
      %3254 = vst.msk [vmem:[#allocation2 + $0x8] sm:$0xff] %vm297, %v3238
      %3255 = vst.msk [vmem:[#allocation2 + $0x10] sm:$0xff] %vm297, %v3239
      %3256 = vst.msk [vmem:[#allocation2 + $0x18] sm:$0xff] %vm297, %v3240
      %3257 = vst.msk [vmem:[#allocation2 + $0x20] sm:$0xff] %vm297, %v3241
      %3258 = vst.msk [vmem:[#allocation2 + $0x28] sm:$0xff] %vm297, %v3242
      %3259 = vst.msk [vmem:[#allocation2 + $0x30] sm:$0xff] %vm297, %v3243
      %3260 = vst.msk [vmem:[#allocation2 + $0x38] sm:$0xff] %vm297, %v3244
      %3261 = vst.msk [vmem:[#allocation2 + $0x40] sm:$0xff] %vm297, %v3245
      %3262 = vst.msk [vmem:[#allocation2 + $0x48] sm:$0xff] %vm297, %v3246
      %3263 = vst.msk [vmem:[#allocation2 + $0x50] sm:$0xff] %vm297, %v3247
      %3264 = vst.msk [vmem:[#allocation2 + $0x58] sm:$0xff] %vm297, %v3248
      %3265 = vst.msk [vmem:[#allocation2 + $0x60] sm:$0xff] %vm297, %v3249
      %3266 = vst.msk [vmem:[#allocation2 + $0x68] sm:$0xff] %vm297, %v3250
      %3267 = vst.msk [vmem:[#allocation2 + $0x70] sm:$0xff] %vm297, %v3251
      %3268 = vst.msk [vmem:[#allocation2 + $0x78] sm:$0xff] %vm297, %v3252
      %v3269 = vld [vmem:[#allocation2] sm:$0xff]
      %v3270 = vld [vmem:[#allocation2 + $0x8] sm:$0xff]
      %v3271 = vld [vmem:[#allocation2 + $0x10] sm:$0xff]
      %v3272 = vld [vmem:[#allocation2 + $0x18] sm:$0xff]
      %v3273 = vld [vmem:[#allocation2 + $0x20] sm:$0xff]
      %v3274 = vld [vmem:[#allocation2 + $0x28] sm:$0xff]
      %v3275 = vld [vmem:[#allocation2 + $0x30] sm:$0xff]
      %v3276 = vld [vmem:[#allocation2 + $0x38] sm:$0xff]
      %v3277 = vld [vmem:[#allocation2 + $0x40] sm:$0xff]
      %v3278 = vld [vmem:[#allocation2 + $0x48] sm:$0xff]
      %v3279 = vld [vmem:[#allocation2 + $0x50] sm:$0xff]
      %v3280 = vld [vmem:[#allocation2 + $0x58] sm:$0xff]
      %v3281 = vld [vmem:[#allocation2 + $0x60] sm:$0xff]
      %v3282 = vld [vmem:[#allocation2 + $0x68] sm:$0xff]
      %v3283 = vld [vmem:[#allocation2 + $0x70] sm:$0xff]
      %v3284 = vld [vmem:[#allocation2 + $0x78] sm:$0xff]
      %v3285 = vld [vmem:[%s2] sm:$0x1]
      %v3287 = vlaneseq
      %v3288 = vshrl.u32 %v3287, 7
      %v3289 = vsub.s32 0, %v3288
      %v3290 = vrot.slane %v3285, %v3289
      %v3292 = vadd.f32 %v3269, %v3290
      %v3293 = vadd.f32 %v3270, %v3290
      %v3294 = vadd.f32 %v3271, %v3290
      %v3295 = vadd.f32 %v3272, %v3290
      %v3296 = vadd.f32 %v3273, %v3290
      %v3297 = vadd.f32 %v3274, %v3290
      %v3298 = vadd.f32 %v3275, %v3290
      %v3299 = vadd.f32 %v3276, %v3290
      %v3300 = vadd.f32 %v3277, %v3290
      %v3301 = vadd.f32 %v3278, %v3290
      %v3302 = vadd.f32 %v3279, %v3290
      %v3303 = vadd.f32 %v3280, %v3290
      %v3304 = vadd.f32 %v3281, %v3290
      %v3305 = vadd.f32 %v3282, %v3290
      %v3306 = vadd.f32 %v3283, %v3290
      %v3307 = vadd.f32 %v3284, %v3290
      %v3308 = vmax.f32 %v3292, 0.0
      %v3309 = vmax.f32 %v3293, 0.0
      %v3310 = vmax.f32 %v3294, 0.0
      %v3311 = vmax.f32 %v3295, 0.0
      %v3312 = vmax.f32 %v3296, 0.0
      %v3313 = vmax.f32 %v3297, 0.0
      %v3314 = vmax.f32 %v3298, 0.0
      %v3315 = vmax.f32 %v3299, 0.0
      %v3316 = vmax.f32 %v3300, 0.0
      %v3317 = vmax.f32 %v3301, 0.0
      %v3318 = vmax.f32 %v3302, 0.0
      %v3319 = vmax.f32 %v3303, 0.0
      %v3320 = vmax.f32 %v3304, 0.0
      %v3321 = vmax.f32 %v3305, 0.0
      %v3322 = vmax.f32 %v3306, 0.0
      %v3323 = vmax.f32 %v3307, 0.0
      %v3324 = vmax.f32 %v3308, %v3310
      %v3325 = vmax.f32 %v3309, %v3311
      %v3326 = vmax.f32 %v3312, %v3314
      %v3327 = vmax.f32 %v3313, %v3315
      %v3328 = vmax.f32 %v3316, %v3318
      %v3329 = vmax.f32 %v3317, %v3319
      %v3330 = vmax.f32 %v3320, %v3322
      %v3331 = vmax.f32 %v3321, %v3323
      %v3340 = vcombine.high %v3324, %v3324
      %v3342 = vunpack.c.l.s4 1983009808
      %v3343 = vunpack.c.0.s8 %v3342
      %v3344 = vlaneseq
      %v3345 = vshrl.u32 %v3344, 7
      %v3346 = vsub.s32 %v3343, %v3345
      %v3347 = vrot.slane %v3324, %v3346
      %v3349 = vunpack.c.l.s4 1983009808
      %v3350 = vunpack.c.0.s8 %v3349
      %v3351 = vlaneseq
      %v3352 = vshrl.u32 %v3351, 7
      %v3353 = vsub.s32 %v3350, %v3352
      %v3354 = vrot.slane %v3340, %v3353
      %v3355 = vcombine.high %v3347, %v3347
      %v3356 = vcombine.high %v3354, %v3354
      %v3357 = vcombine.high %v3325, %v3325
      %v3359 = vunpack.c.l.s4 1983009808
      %v3360 = vunpack.c.0.s8 %v3359
      %v3361 = vlaneseq
      %v3362 = vshrl.u32 %v3361, 7
      %v3363 = vsub.s32 %v3360, %v3362
      %v3364 = vrot.slane %v3325, %v3363
      %v3366 = vunpack.c.l.s4 1983009808
      %v3367 = vunpack.c.0.s8 %v3366
      %v3368 = vlaneseq
      %v3369 = vshrl.u32 %v3368, 7
      %v3370 = vsub.s32 %v3367, %v3369
      %v3371 = vrot.slane %v3357, %v3370
      %v3372 = vcombine.high %v3364, %v3364
      %v3373 = vcombine.high %v3371, %v3371
      %v3374 = vcombine.high %v3326, %v3326
      %v3376 = vunpack.c.l.s4 1983009808
      %v3377 = vunpack.c.0.s8 %v3376
      %v3378 = vlaneseq
      %v3379 = vshrl.u32 %v3378, 7
      %v3380 = vsub.s32 %v3377, %v3379
      %v3381 = vrot.slane %v3326, %v3380
      %v3383 = vunpack.c.l.s4 1983009808
      %v3384 = vunpack.c.0.s8 %v3383
      %v3385 = vlaneseq
      %v3386 = vshrl.u32 %v3385, 7
      %v3387 = vsub.s32 %v3384, %v3386
      %v3388 = vrot.slane %v3374, %v3387
      %v3389 = vcombine.high %v3381, %v3381
      %v3390 = vcombine.high %v3388, %v3388
      %v3391 = vcombine.high %v3327, %v3327
      %v3393 = vunpack.c.l.s4 1983009808
      %v3394 = vunpack.c.0.s8 %v3393
      %v3395 = vlaneseq
      %v3396 = vshrl.u32 %v3395, 7
      %v3397 = vsub.s32 %v3394, %v3396
      %v3398 = vrot.slane %v3327, %v3397
      %v3400 = vunpack.c.l.s4 1983009808
      %v3401 = vunpack.c.0.s8 %v3400
      %v3402 = vlaneseq
      %v3403 = vshrl.u32 %v3402, 7
      %v3404 = vsub.s32 %v3401, %v3403
      %v3405 = vrot.slane %v3391, %v3404
      %v3406 = vcombine.high %v3398, %v3398
      %v3407 = vcombine.high %v3405, %v3405
      %v3408 = vcombine.high %v3328, %v3328
      %v3410 = vunpack.c.l.s4 1983009808
      %v3411 = vunpack.c.0.s8 %v3410
      %v3412 = vlaneseq
      %v3413 = vshrl.u32 %v3412, 7
      %v3414 = vsub.s32 %v3411, %v3413
      %v3415 = vrot.slane %v3328, %v3414
      %v3417 = vunpack.c.l.s4 1983009808
      %v3418 = vunpack.c.0.s8 %v3417
      %v3419 = vlaneseq
      %v3420 = vshrl.u32 %v3419, 7
      %v3421 = vsub.s32 %v3418, %v3420
      %v3422 = vrot.slane %v3408, %v3421
      %v3423 = vcombine.high %v3415, %v3415
      %v3424 = vcombine.high %v3422, %v3422
      %v3425 = vcombine.high %v3329, %v3329
      %v3427 = vunpack.c.l.s4 1983009808
      %v3428 = vunpack.c.0.s8 %v3427
      %v3429 = vlaneseq
      %v3430 = vshrl.u32 %v3429, 7
      %v3431 = vsub.s32 %v3428, %v3430
      %v3432 = vrot.slane %v3329, %v3431
      %v3434 = vunpack.c.l.s4 1983009808
      %v3435 = vunpack.c.0.s8 %v3434
      %v3436 = vlaneseq
      %v3437 = vshrl.u32 %v3436, 7
      %v3438 = vsub.s32 %v3435, %v3437
      %v3439 = vrot.slane %v3425, %v3438
      %v3440 = vcombine.high %v3432, %v3432
      %v3441 = vcombine.high %v3439, %v3439
      %v3442 = vcombine.high %v3330, %v3330
      %v3444 = vunpack.c.l.s4 1983009808
      %v3445 = vunpack.c.0.s8 %v3444
      %v3446 = vlaneseq
      %v3447 = vshrl.u32 %v3446, 7
      %v3448 = vsub.s32 %v3445, %v3447
      %v3449 = vrot.slane %v3330, %v3448
      %v3451 = vunpack.c.l.s4 1983009808
      %v3452 = vunpack.c.0.s8 %v3451
      %v3453 = vlaneseq
      %v3454 = vshrl.u32 %v3453, 7
      %v3455 = vsub.s32 %v3452, %v3454
      %v3456 = vrot.slane %v3442, %v3455
      %v3457 = vcombine.high %v3449, %v3449
      %v3458 = vcombine.high %v3456, %v3456
      %v3459 = vcombine.high %v3331, %v3331
      %v3461 = vunpack.c.l.s4 1983009808
      %v3462 = vunpack.c.0.s8 %v3461
      %v3463 = vlaneseq
      %v3464 = vshrl.u32 %v3463, 7
      %v3465 = vsub.s32 %v3462, %v3464
      %v3466 = vrot.slane %v3331, %v3465
      %v3468 = vunpack.c.l.s4 1983009808
      %v3469 = vunpack.c.0.s8 %v3468
      %v3470 = vlaneseq
      %v3471 = vshrl.u32 %v3470, 7
      %v3472 = vsub.s32 %v3469, %v3471
      %v3473 = vrot.slane %v3459, %v3472
      %v3474 = vcombine.high %v3466, %v3466
      %v3475 = vcombine.high %v3473, %v3473
      %v3508 = vrot.slane %v3347, 7
      %v3509 = vrot.slane %v3508, 2
      %v3510 = vrot.slane %v3355, 7
      %v3511 = vrot.slane %v3510, 2
      %v3512 = vrot.slane %v3354, 7
      %v3513 = vrot.slane %v3512, 2
      %v3514 = vrot.slane %v3356, 7
      %v3515 = vrot.slane %v3514, 2
      %v3516 = vrot.slane %v3364, 7
      %v3517 = vrot.slane %v3516, 2
      %v3518 = vrot.slane %v3372, 7
      %v3519 = vrot.slane %v3518, 2
      %v3520 = vrot.slane %v3371, 7
      %v3521 = vrot.slane %v3520, 2
      %v3522 = vrot.slane %v3373, 7
      %v3523 = vrot.slane %v3522, 2
      %v3524 = vrot.slane %v3381, 7
      %v3525 = vrot.slane %v3524, 2
      %v3526 = vrot.slane %v3389, 7
      %v3527 = vrot.slane %v3526, 2
      %v3528 = vrot.slane %v3388, 7
      %v3529 = vrot.slane %v3528, 2
      %v3530 = vrot.slane %v3390, 7
      %v3531 = vrot.slane %v3530, 2
      %v3532 = vrot.slane %v3398, 7
      %v3533 = vrot.slane %v3532, 2
      %v3534 = vrot.slane %v3406, 7
      %v3535 = vrot.slane %v3534, 2
      %v3536 = vrot.slane %v3405, 7
      %v3537 = vrot.slane %v3536, 2
      %v3538 = vrot.slane %v3407, 7
      %v3539 = vrot.slane %v3538, 2
      %v3540 = vrot.slane %v3415, 7
      %v3541 = vrot.slane %v3540, 2
      %v3542 = vrot.slane %v3423, 7
      %v3543 = vrot.slane %v3542, 2
      %v3544 = vrot.slane %v3422, 7
      %v3545 = vrot.slane %v3544, 2
      %v3546 = vrot.slane %v3424, 7
      %v3547 = vrot.slane %v3546, 2
      %v3548 = vrot.slane %v3432, 7
      %v3549 = vrot.slane %v3548, 2
      %v3550 = vrot.slane %v3440, 7
      %v3551 = vrot.slane %v3550, 2
      %v3552 = vrot.slane %v3439, 7
      %v3553 = vrot.slane %v3552, 2
      %v3554 = vrot.slane %v3441, 7
      %v3555 = vrot.slane %v3554, 2
      %v3556 = vrot.slane %v3449, 7
      %v3557 = vrot.slane %v3556, 2
      %v3558 = vrot.slane %v3457, 7
      %v3559 = vrot.slane %v3558, 2
      %v3560 = vrot.slane %v3456, 7
      %v3561 = vrot.slane %v3560, 2
      %v3562 = vrot.slane %v3458, 7
      %v3563 = vrot.slane %v3562, 2
      %v3564 = vrot.slane %v3466, 7
      %v3565 = vrot.slane %v3564, 2
      %v3566 = vrot.slane %v3474, 7
      %v3567 = vrot.slane %v3566, 2
      %v3568 = vrot.slane %v3473, 7
      %v3569 = vrot.slane %v3568, 2
      %v3570 = vrot.slane %v3475, 7
      %v3571 = vrot.slane %v3570, 2
      %v3604 = vmax.f32 %v3347, %v3509
      %v3605 = vmax.f32 %v3355, %v3511
      %v3606 = vmax.f32 %v3354, %v3513
      %v3607 = vmax.f32 %v3356, %v3515
      %v3608 = vmax.f32 %v3364, %v3517
      %v3609 = vmax.f32 %v3372, %v3519
      %v3610 = vmax.f32 %v3371, %v3521
      %v3611 = vmax.f32 %v3373, %v3523
      %v3612 = vmax.f32 %v3381, %v3525
      %v3613 = vmax.f32 %v3389, %v3527
      %v3614 = vmax.f32 %v3388, %v3529
      %v3615 = vmax.f32 %v3390, %v3531
      %v3616 = vmax.f32 %v3398, %v3533
      %v3617 = vmax.f32 %v3406, %v3535
      %v3618 = vmax.f32 %v3405, %v3537
      %v3619 = vmax.f32 %v3407, %v3539
      %v3620 = vmax.f32 %v3415, %v3541
      %v3621 = vmax.f32 %v3423, %v3543
      %v3622 = vmax.f32 %v3422, %v3545
      %v3623 = vmax.f32 %v3424, %v3547
      %v3624 = vmax.f32 %v3432, %v3549
      %v3625 = vmax.f32 %v3440, %v3551
      %v3626 = vmax.f32 %v3439, %v3553
      %v3627 = vmax.f32 %v3441, %v3555
      %v3628 = vmax.f32 %v3449, %v3557
      %v3629 = vmax.f32 %v3457, %v3559
      %v3630 = vmax.f32 %v3456, %v3561
      %v3631 = vmax.f32 %v3458, %v3563
      %v3632 = vmax.f32 %v3466, %v3565
      %v3633 = vmax.f32 %v3474, %v3567
      %v3634 = vmax.f32 %v3473, %v3569
      %v3635 = vmax.f32 %v3475, %v3571
      %v3636 = vpack.c.bf16 %v3604, %v3604
      %v3637 = vpack.c.bf16 %v3605, %v3605
      %v3638 = vpack.c.bf16 %v3606, %v3606
      %v3639 = vpack.c.bf16 %v3607, %v3607
      %v3640 = vpack.c.bf16 %v3608, %v3608
      %v3641 = vpack.c.bf16 %v3609, %v3609
      %v3642 = vpack.c.bf16 %v3610, %v3610
      %v3643 = vpack.c.bf16 %v3611, %v3611
      %v3644 = vpack.c.bf16 %v3612, %v3612
      %v3645 = vpack.c.bf16 %v3613, %v3613
      %v3646 = vpack.c.bf16 %v3614, %v3614
      %v3647 = vpack.c.bf16 %v3615, %v3615
      %v3648 = vpack.c.bf16 %v3616, %v3616
      %v3649 = vpack.c.bf16 %v3617, %v3617
      %v3650 = vpack.c.bf16 %v3618, %v3618
      %v3651 = vpack.c.bf16 %v3619, %v3619
      %v3652 = vpack.c.bf16 %v3620, %v3620
      %v3653 = vpack.c.bf16 %v3621, %v3621
      %v3654 = vpack.c.bf16 %v3622, %v3622
      %v3655 = vpack.c.bf16 %v3623, %v3623
      %v3656 = vpack.c.bf16 %v3624, %v3624
      %v3657 = vpack.c.bf16 %v3625, %v3625
      %v3658 = vpack.c.bf16 %v3626, %v3626
      %v3659 = vpack.c.bf16 %v3627, %v3627
      %v3660 = vpack.c.bf16 %v3628, %v3628
      %v3661 = vpack.c.bf16 %v3629, %v3629
      %v3662 = vpack.c.bf16 %v3630, %v3630
      %v3663 = vpack.c.bf16 %v3631, %v3631
      %v3664 = vpack.c.bf16 %v3632, %v3632
      %v3665 = vpack.c.bf16 %v3633, %v3633
      %v3666 = vpack.c.bf16 %v3634, %v3634
      %v3667 = vpack.c.bf16 %v3635, %v3635
      %v3700 = vunpack.c.l.b16 %v3636
      %v3701 = vunpack.c.l.b16 %v3637
      %v3702 = vunpack.c.l.b16 %v3638
      %v3703 = vunpack.c.l.b16 %v3639
      %v3704 = vunpack.c.l.b16 %v3640
      %v3705 = vunpack.c.l.b16 %v3641
      %v3706 = vunpack.c.l.b16 %v3642
      %v3707 = vunpack.c.l.b16 %v3643
      %v3708 = vunpack.c.l.b16 %v3644
      %v3709 = vunpack.c.l.b16 %v3645
      %v3710 = vunpack.c.l.b16 %v3646
      %v3711 = vunpack.c.l.b16 %v3647
      %v3712 = vunpack.c.l.b16 %v3648
      %v3713 = vunpack.c.l.b16 %v3649
      %v3714 = vunpack.c.l.b16 %v3650
      %v3715 = vunpack.c.l.b16 %v3651
      %v3716 = vunpack.c.l.b16 %v3652
      %v3717 = vunpack.c.l.b16 %v3653
      %v3718 = vunpack.c.l.b16 %v3654
      %v3719 = vunpack.c.l.b16 %v3655
      %v3720 = vunpack.c.l.b16 %v3656
      %v3721 = vunpack.c.l.b16 %v3657
      %v3722 = vunpack.c.l.b16 %v3658
      %v3723 = vunpack.c.l.b16 %v3659
      %v3724 = vunpack.c.l.b16 %v3660
      %v3725 = vunpack.c.l.b16 %v3661
      %v3726 = vunpack.c.l.b16 %v3662
      %v3727 = vunpack.c.l.b16 %v3663
      %v3728 = vunpack.c.l.b16 %v3664
      %v3729 = vunpack.c.l.b16 %v3665
      %v3730 = vunpack.c.l.b16 %v3666
      %v3731 = vunpack.c.l.b16 %v3667
      %v3732 = vpack.c.b16 %v3700, %v3700
      %v3733 = vpack.c.b16 %v3701, %v3701
      %v3734 = vpack.c.b16 %v3702, %v3702
      %v3735 = vpack.c.b16 %v3703, %v3703
      %v3736 = vpack.c.b16 %v3704, %v3704
      %v3737 = vpack.c.b16 %v3705, %v3705
      %v3738 = vpack.c.b16 %v3706, %v3706
      %v3739 = vpack.c.b16 %v3707, %v3707
      %v3740 = vpack.c.b16 %v3708, %v3708
      %v3741 = vpack.c.b16 %v3709, %v3709
      %v3742 = vpack.c.b16 %v3710, %v3710
      %v3743 = vpack.c.b16 %v3711, %v3711
      %v3744 = vpack.c.b16 %v3712, %v3712
      %v3745 = vpack.c.b16 %v3713, %v3713
      %v3746 = vpack.c.b16 %v3714, %v3714
      %v3747 = vpack.c.b16 %v3715, %v3715
      %v3748 = vpack.c.b16 %v3716, %v3716
      %v3749 = vpack.c.b16 %v3717, %v3717
      %v3750 = vpack.c.b16 %v3718, %v3718
      %v3751 = vpack.c.b16 %v3719, %v3719
      %v3752 = vpack.c.b16 %v3720, %v3720
      %v3753 = vpack.c.b16 %v3721, %v3721
      %v3754 = vpack.c.b16 %v3722, %v3722
      %v3755 = vpack.c.b16 %v3723, %v3723
      %v3756 = vpack.c.b16 %v3724, %v3724
      %v3757 = vpack.c.b16 %v3725, %v3725
      %v3758 = vpack.c.b16 %v3726, %v3726
      %v3759 = vpack.c.b16 %v3727, %v3727
      %v3760 = vpack.c.b16 %v3728, %v3728
      %v3761 = vpack.c.b16 %v3729, %v3729
      %v3762 = vpack.c.b16 %v3730, %v3730
      %v3763 = vpack.c.b16 %v3731, %v3731
      %v3764 = vunpack.c.l.b16 %v3732
      %v3765 = vunpack.c.l.b16 %v3733
      %v3766 = vunpack.c.l.b16 %v3734
      %v3767 = vunpack.c.l.b16 %v3735
      %v3768 = vunpack.c.l.b16 %v3736
      %v3769 = vunpack.c.l.b16 %v3737
      %v3770 = vunpack.c.l.b16 %v3738
      %v3771 = vunpack.c.l.b16 %v3739
      %v3772 = vunpack.c.l.b16 %v3740
      %v3773 = vunpack.c.l.b16 %v3741
      %v3774 = vunpack.c.l.b16 %v3742
      %v3775 = vunpack.c.l.b16 %v3743
      %v3776 = vunpack.c.l.b16 %v3744
      %v3777 = vunpack.c.l.b16 %v3745
      %v3778 = vunpack.c.l.b16 %v3746
      %v3779 = vunpack.c.l.b16 %v3747
      %v3780 = vunpack.c.l.b16 %v3748
      %v3781 = vunpack.c.l.b16 %v3749
      %v3782 = vunpack.c.l.b16 %v3750
      %v3783 = vunpack.c.l.b16 %v3751
      %v3784 = vunpack.c.l.b16 %v3752
      %v3785 = vunpack.c.l.b16 %v3753
      %v3786 = vunpack.c.l.b16 %v3754
      %v3787 = vunpack.c.l.b16 %v3755
      %v3788 = vunpack.c.l.b16 %v3756
      %v3789 = vunpack.c.l.b16 %v3757
      %v3790 = vunpack.c.l.b16 %v3758
      %v3791 = vunpack.c.l.b16 %v3759
      %v3792 = vunpack.c.l.b16 %v3760
      %v3793 = vunpack.c.l.b16 %v3761
      %v3794 = vunpack.c.l.b16 %v3762
      %v3795 = vunpack.c.l.b16 %v3763
      %v3796 = vrot.slane %v3765, 7
      %vm3797 = vcmask 1041409
      %v3798 = vsel %vm3797, %v3796, %v3764
      %v3799 = vrot.slane %v3766, 6
      %vm3800 = vcmask 1042434
      %v3801 = vsel %vm3800, %v3799, %v3798
      %v3802 = vrot.slane %v3767, 5
      %vm3803 = vcmask 1043459
      %v3804 = vsel %vm3803, %v3802, %v3801
      %v3805 = vrot.slane %v3768, 4
      %vm3806 = vcmask 1044484
      %v3807 = vsel %vm3806, %v3805, %v3804
      %v3808 = vrot.slane %v3769, 3
      %vm3809 = vcmask 1045509
      %v3810 = vsel %vm3809, %v3808, %v3807
      %v3811 = vrot.slane %v3770, 2
      %vm3812 = vcmask 1046534
      %v3813 = vsel %vm3812, %v3811, %v3810
      %v3814 = vrot.slane %v3771, 1
      %vm3815 = vcmask 1047559
      %v3816 = vsel %vm3815, %v3814, %v3813
      %v3817 = vrot.slane %v3773, 7
      %v3818 = vsel %vm3797, %v3817, %v3772
      %v3819 = vrot.slane %v3774, 6
      %v3820 = vsel %vm3800, %v3819, %v3818
      %v3821 = vrot.slane %v3775, 5
      %v3822 = vsel %vm3803, %v3821, %v3820
      %v3823 = vrot.slane %v3776, 4
      %v3824 = vsel %vm3806, %v3823, %v3822
      %v3825 = vrot.slane %v3777, 3
      %v3826 = vsel %vm3809, %v3825, %v3824
      %v3827 = vrot.slane %v3778, 2
      %v3828 = vsel %vm3812, %v3827, %v3826
      %v3829 = vrot.slane %v3779, 1
      %v3830 = vsel %vm3815, %v3829, %v3828
      %v3831 = vrot.slane %v3781, 7
      %v3832 = vsel %vm3797, %v3831, %v3780
      %v3833 = vrot.slane %v3782, 6
      %v3834 = vsel %vm3800, %v3833, %v3832
      %v3835 = vrot.slane %v3783, 5
      %v3836 = vsel %vm3803, %v3835, %v3834
      %v3837 = vrot.slane %v3784, 4
      %v3838 = vsel %vm3806, %v3837, %v3836
      %v3839 = vrot.slane %v3785, 3
      %v3840 = vsel %vm3809, %v3839, %v3838
      %v3841 = vrot.slane %v3786, 2
      %v3842 = vsel %vm3812, %v3841, %v3840
      %v3843 = vrot.slane %v3787, 1
      %v3844 = vsel %vm3815, %v3843, %v3842
      %v3845 = vrot.slane %v3789, 7
      %v3846 = vsel %vm3797, %v3845, %v3788
      %v3847 = vrot.slane %v3790, 6
      %v3848 = vsel %vm3800, %v3847, %v3846
      %v3849 = vrot.slane %v3791, 5
      %v3850 = vsel %vm3803, %v3849, %v3848
      %v3851 = vrot.slane %v3792, 4
      %v3852 = vsel %vm3806, %v3851, %v3850
      %v3853 = vrot.slane %v3793, 3
      %v3854 = vsel %vm3809, %v3853, %v3852
      %v3855 = vrot.slane %v3794, 2
      %v3856 = vsel %vm3812, %v3855, %v3854
      %v3857 = vrot.slane %v3795, 1
      %v3858 = vsel %vm3815, %v3857, %v3856
      %v3859 = vpack.c.b16 %v3816, %v3816
      %v3860 = vpack.c.b16 %v3830, %v3830
      %v3861 = vpack.c.b16 %v3844, %v3844
      %v3862 = vpack.c.b16 %v3858, %v3858
      %vm3867 = vcmask 519168
      %3868 = vst.msk [vmem:[%s206] sm:$0xf] %vm3867, %v3859
      %3869 = vst.msk [vmem:[%s206 + $0x4] sm:$0xf] %vm3867, %v3860
      %3870 = vst.msk [vmem:[%s206 + $0x8] sm:$0xf] %vm3867, %v3861
      %3871 = vst.msk [vmem:[%s206 + $0xc] sm:$0xf] %vm3867, %v3862
      %s3872 = smul.u32 4, %s19
      %p3873 = scmp.lt.s32.totalorder %s18, 1
      %s3874 = scalar_select %p3873, %s18, 1
      %p3875 = scmp.lt.s32.totalorder %s3872, 7
      %s3876 = scalar_select %p3875, %s3872, 7
      %s3877 = smul.addr %s3874, 8
      %s3878 = sadd.s32 %s3876, %s3877
      %s3879 = smul.addr %s3878, 4
      %s3880 = scalar_lea.vmem %s3, %s3879
      // Predicated region
      $region33: #{correspondence_generation_forward.6} parent=31 // pred_check
        %p3881 = pneg %p118
      $region34: #{correspondence_generation_forward.6} parent=31 // pred_check_branch
        %3883 = sbr.rel (%p3881) target = $region36
      $region35: #{correspondence_generation_forward.6} parent=31 // pred_region
        %s3884 = smul.u32 4, %s19
      $region36: #{correspondence_generation_forward.6} parent=31 // pred_fallthru
        _
    $region32: #{correspondence_generation_forward.6} parent=5 // pred_fallthru
      _
    %p3885 = scmp.le.s32.totalorder 2, %s9
    // Predicated region
    $region37: #{correspondence_generation_forward.6} parent=5 // pred_check
      %p3886 = pneg %p3885
    $region38: #{correspondence_generation_forward.6} parent=5 // pred_check_branch
      %3888 = sbr.rel (%p3886) target = $region40
    $region39: #{correspondence_generation_forward.6} parent=5 // pred_region
      %s3889 = ssub.s32 %s9, 2
      // Predicated region
      $region41: #{correspondence_generation_forward.6} parent=39 // pred_check
        %p3890 = pneg %p124
      $region42: #{correspondence_generation_forward.6} parent=39 // pred_check_branch
        %3892 = sbr.rel (%p3890) target = $region44
      $region43: #{correspondence_generation_forward.6} parent=39 // pred_region
        %s3893 = smul.u32 4, %s21
        %p3894 = scmp.lt.s32.totalorder %s20, 1
        %s3895 = scalar_select %p3894, %s20, 1
        %p3896 = scmp.lt.s32.totalorder %s3893, 7
        %s3897 = scalar_select %p3896, %s3893, 7
        %s3898 = smul.addr %s3895, 8
        %s3899 = sadd.s32 %s3897, %s3898
        %s3900 = smul.addr %s3899, 4
        %s3901 = scalar_lea.vmem %s3, %s3900
      $region44: #{correspondence_generation_forward.6} parent=39 // pred_fallthru
        _
    $region40: #{correspondence_generation_forward.6} parent=5 // pred_fallthru
      _
  $region6: #{correspondence_generation_forward.6} parent=0 // loop_footer
    %s13 = sadd.s32 1, %s9
  $region7: #{correspondence_generation_forward.6} parent=0 // loop_footer_branch
    %8 = sbr.rel target = $region3
  $region8: #{correspondence_generation_forward.6} parent=0 // loop_exit
    _

// kernel: correspondence_generation_forward.9
$region0: #{correspondence_generation_forward.9}
  #allocation0 [shape = 'u32[]', space=smem, size = 0x4, offset = 0x4, fixed_abs, tag = 'smem constant byte address 0x4 - core index']
  #allocation1 [shape = 'u32[144,128]{1,0:T(1,128)}', space=vmem, size = 0x12000, scoped, tag = 'internal scratch']
  #allocation2 [shape = 'f32[16,256]{1,0:T(8,128)}', space=vmem, size = 0x4000, scoped, tag = 'scratch operand']
  %s0 = inlined_call_operand.vmem [shape: bf16[2,6,6,128], index: 0, kind: input, shape index: {}]
  %s1 = inlined_call_operand.vmem [shape: bf16[3,384,256], index: 1, kind: input, shape index: {}]
  %s2 = inlined_call_operand.vmem [shape: f32[1,256], index: 2, kind: input, shape index: {}]
  %s3 = inlined_call_operand.vmem [shape: bf16[2,4,4,256], index: 3, kind: output, shape index: {}]
  %s4 = sld [smem:[#allocation0]]
  $region45: #{correspondence_generation_forward.9} parent=0
    _
  %s6 = ssub.s32 1, %s4
  %s7 = scalar_select 0, %s6, %s4
  loop: start=0, step=1, limit=4
  $region2: #{correspondence_generation_forward.9} parent=0 // loop_pre_header
    _
  $region3: #{correspondence_generation_forward.9} parent=0 // loop_header
    %s9 = sphi 0, %s13
    %p10 = scmp.ge.s32.totalorder %s9, 4
    %s16 = sphi 0, %s28
    %s17 = sphi 0, %s24
    %s18 = sphi 0, %s16
    %s19 = sphi 0, %s17
    %s20 = sphi 0, %s18
    %s21 = sphi 0, %s19
    %s33 = sphi 0, %s35
    %s36 = sphi 0, %s33
    %s37 = sphi 0, %s36
    %s53 = sphi 0, %s37
    %s57 = sphi 0, %s57
    %s59 = sphi 0, %s57
    %s60 = sphi 0, %s59
    %s74 = sphi 0, %s60
    %s78 = sphi 0, %s78
    %s80 = sphi 0, %s78
    %s81 = sphi 0, %s80
    %s95 = sphi 0, %s81
    %s103 = sphi 0, %s105
    %s106 = sphi 0, %s103
    %s107 = sphi 0, %s106
    %s123 = sphi 0, %s107
  $region4: #{correspondence_generation_forward.9} parent=0 // loop_header_branch
    %12 = sbr.rel (%p10) target = $region8
  $region5: #{correspondence_generation_forward.9} parent=0 // loop_body
    %s14 = ssub.s32 %s9, 1
    %s15 = ssub.s32 %s9, 2
    %s22 = sadd.s32 1, %s17
    %p23 = scmp.ge.s32.totalorder %s22, 1
    %s24 = scalar_select %p23, 0, %s22
    %s25 = sadd.s32 1, %s16
    %s26 = scalar_select %p23, %s25, %s16
    %p27 = scmp.ge.s32.totalorder %s26, 2
    %s28 = scalar_select %p27, 0, %s26
    %s29 = sadd.s32 %s16, %s17
    %s30 = sadd.s32 %s28, %s24
    %s31 = ssub.s32 %s29, %s30
    %p32 = scmp.eq.s32.totalorder %s31, 0
    %s34 = sadd.s32 %s33, 1
    %s35 = scalar_select %p32, %s33, %s34
    %p38 = pneg %p32
    %p39 = scmp.eq.s32.totalorder %s9, 1
    %p40 = por %p38, %p39
    %p41 = scmp.ne.s32.totalorder %s33, %s36
    %p42 = scmp.eq.s32.totalorder %s9, 0
    %p43 = por %p41, %p42
    %p44 = scmp.ne.s32.totalorder %s33, %s36
    %p45 = scmp.eq.s32.totalorder %s14, 1
    %p46 = por %p44, %p45
    %p47 = scmp.ne.s32.totalorder %s36, %s37
    %p48 = scmp.eq.s32.totalorder %s14, 0
    %p49 = por %p47, %p48
    %p50 = scmp.ne.s32.totalorder %s36, %s37
    %p51 = scmp.eq.s32.totalorder %s15, 1
    %p52 = por %p50, %p51
    %p54 = scmp.ne.s32.totalorder %s37, %s53
    %p55 = scmp.eq.s32.totalorder %s15, 0
    %p56 = por %p54, %p55
    %s58 = sadd.s32 %s57, 1
    %p61 = scmp.eq.s32.totalorder %s9, 1
    %p62 = scmp.ne.s32.totalorder %s57, %s59
    %p63 = scmp.eq.s32.totalorder %s9, 0
    %p64 = por %p62, %p63
    %p65 = scmp.ne.s32.totalorder %s57, %s59
    %p66 = scmp.eq.s32.totalorder %s14, 1
    %p67 = por %p65, %p66
    %p68 = scmp.ne.s32.totalorder %s59, %s60
    %p69 = scmp.eq.s32.totalorder %s14, 0
    %p70 = por %p68, %p69
    %p71 = scmp.ne.s32.totalorder %s59, %s60
    %p72 = scmp.eq.s32.totalorder %s15, 1
    %p73 = por %p71, %p72
    %p75 = scmp.ne.s32.totalorder %s60, %s74
    %p76 = scmp.eq.s32.totalorder %s15, 0
    %p77 = por %p75, %p76
    %s79 = sadd.s32 %s78, 1
    %p82 = scmp.eq.s32.totalorder %s9, 1
    %p83 = scmp.ne.s32.totalorder %s78, %s80
    %p84 = scmp.eq.s32.totalorder %s9, 0
    %p85 = por %p83, %p84
    %p86 = scmp.ne.s32.totalorder %s78, %s80
    %p87 = scmp.eq.s32.totalorder %s14, 1
    %p88 = por %p86, %p87
    %p89 = scmp.ne.s32.totalorder %s80, %s81
    %p90 = scmp.eq.s32.totalorder %s14, 0
    %p91 = por %p89, %p90
    %p92 = scmp.ne.s32.totalorder %s80, %s81
    %p93 = scmp.eq.s32.totalorder %s15, 1
    %p94 = por %p92, %p93
    %p96 = scmp.ne.s32.totalorder %s81, %s95
    %p97 = scmp.eq.s32.totalorder %s15, 0
    %p98 = por %p96, %p97
    %s99 = ssub.s32 %s16, %s28
    %s100 = ssub.s32 %s17, %s24
    %s101 = sor.u32 %s99, %s100
    %p102 = scmp.eq.s32.totalorder %s101, 0
    %s104 = sadd.s32 %s103, 1
    %s105 = scalar_select %p102, %s103, %s104
    %p108 = pneg %p102
    %p109 = scmp.eq.s32.totalorder %s9, 1
    %p110 = por %p108, %p109
    %p111 = scmp.ne.s32.totalorder %s103, %s106
    %p112 = scmp.eq.s32.totalorder %s9, 0
    %p113 = por %p111, %p112
    %p114 = scmp.ne.s32.totalorder %s103, %s106
    %p115 = scmp.eq.s32.totalorder %s14, 1
    %p116 = por %p114, %p115
    %p117 = scmp.ne.s32.totalorder %s106, %s107
    %p118 = scmp.eq.s32.totalorder %s14, 0
    %p119 = por %p117, %p118
    %p120 = scmp.ne.s32.totalorder %s106, %s107
    %p121 = scmp.eq.s32.totalorder %s15, 1
    %p122 = por %p120, %p121
    %p124 = scmp.ne.s32.totalorder %s107, %s123
    %p125 = scmp.eq.s32.totalorder %s15, 0
    %p126 = por %p124, %p125
    %p127 = scmp.le.s32.totalorder 1, %s9
    %p128 = scmp.lt.s32.totalorder %s9, 3
    %p129 = pnand %p127, %p128
    %p130 = pneg %p129
    // Predicated region
    $region9: #{correspondence_generation_forward.9} parent=5 // pred_check
      _
    $region10: #{correspondence_generation_forward.9} parent=5 // pred_check_branch
      %132 = sbr.rel (%p129) target = $region12
    $region11: #{correspondence_generation_forward.9} parent=5 // pred_region
      %s133 = ssub.s32 %s9, 1
      // Predicated region
      $region13: #{correspondence_generation_forward.9} parent=11 // pred_check
        %p134 = pneg %p70
      $region14: #{correspondence_generation_forward.9} parent=11 // pred_check_branch
        %136 = sbr.rel (%p134) target = $region16
      $region15: #{correspondence_generation_forward.9} parent=11 // pred_region
        _
      $region16: #{correspondence_generation_forward.9} parent=11 // pred_fallthru
        _
      // Predicated region
      $region17: #{correspondence_generation_forward.9} parent=11 // pred_check
        %p137 = pneg %p91
      $region18: #{correspondence_generation_forward.9} parent=11 // pred_check_branch
        %139 = sbr.rel (%p137) target = $region20
      $region19: #{correspondence_generation_forward.9} parent=11 // pred_region
        _
      $region20: #{correspondence_generation_forward.9} parent=11 // pred_fallthru
        _
    $region12: #{correspondence_generation_forward.9} parent=5 // pred_fallthru
      _
    %p140 = scmp.lt.s32.totalorder %s9, 2
    // Predicated region
    $region21: #{correspondence_generation_forward.9} parent=5 // pred_check
      %p141 = pneg %p140
    $region22: #{correspondence_generation_forward.9} parent=5 // pred_check_branch
      %143 = sbr.rel (%p141) target = $region24
    $region23: #{correspondence_generation_forward.9} parent=5 // pred_region
      // Predicated region
      $region25: #{correspondence_generation_forward.9} parent=23 // pred_check
        %p144 = pneg %p43
      $region26: #{correspondence_generation_forward.9} parent=23 // pred_check_branch
        %146 = sbr.rel (%p144) target = $region28
      $region27: #{correspondence_generation_forward.9} parent=23 // pred_region
        %s147 = sadd.s32 %s16, %s17
        %p148 = scmp.lt.s32.totalorder %s147, 1
        %s149 = scalar_select %p148, %s147, 1
        %s150 = smul.addr %s149, 6
        %s151 = smul.addr %s150, 4
        %s152 = scalar_lea.vmem %s0, %s151
        %s153 = sadd.s32 %s16, %s17
      $region28: #{correspondence_generation_forward.9} parent=23 // pred_fallthru
        _
    $region24: #{correspondence_generation_forward.9} parent=5 // pred_fallthru
      _
    %p154 = scmp.le.s32.totalorder 1, %s9
    %p155 = scmp.lt.s32.totalorder %s9, 3
    %p156 = pnand %p154, %p155
    %p157 = pneg %p156
    // Predicated region
    $region29: #{correspondence_generation_forward.9} parent=5 // pred_check
      _
    $region30: #{correspondence_generation_forward.9} parent=5 // pred_check_branch
      %159 = sbr.rel (%p156) target = $region32
    $region31: #{correspondence_generation_forward.9} parent=5 // pred_region
      %s160 = ssub.s32 %s9, 1
      %s161 = sadd.s32 %s18, %s19
      %p162 = scmp.lt.s32.totalorder %s161, 1
      %s163 = scalar_select %p162, %s161, 1
      %s164 = smul.addr %s163, 6
      %s165 = smul.addr %s164, 4
      %s166 = scalar_lea.vmem %s0, %s165
      %p167 = pneg %p49
      %p168 = pneg %p46
      %p169 = pneg %p70
      %p170 = pneg %p67
      %p171 = pneg %p91
      %p172 = pneg %p88
      %p173 = pneg %p119
      %p174 = pneg %p116
      %s175 = smul.u32 4, %s19
      %p176 = scmp.lt.s32.totalorder %s18, 1
      %s177 = scalar_select %p176, %s18, 1
      %p178 = scmp.lt.s32.totalorder %s175, 3
      %s179 = scalar_select %p178, %s175, 3
      %s180 = smul.addr %s179, 2
      %s181 = smul.addr %s177, 8
      %s182 = sadd.s32 %s180, %s181
      %s183 = smul.addr %s182, 2
      %s184 = scalar_lea.vmem %s3, %s183
      %s185 = sadd.s32 %s18, %s19
      %p186 = scmp.lt.s32.totalorder %s185, 1
      %s187 = scalar_select %p186, %s185, 1
      %s188 = smul.addr %s187, 6
      %s189 = smul.addr %s188, 4
      %s190 = scalar_lea.vmem %s0, %s189
      %s191 = sadd.s32 %s18, %s19
      %s192 = smul.u32 4, %s19
      %p193 = scmp.lt.s32.totalorder %s18, 1
      %s194 = scalar_select %p193, %s18, 1
      %p195 = scmp.lt.s32.totalorder %s192, 3
      %s196 = scalar_select %p195, %s192, 3
      %s197 = smul.addr %s196, 2
      %s198 = smul.addr %s194, 8
      %s199 = sadd.s32 %s197, %s198
      %s200 = smul.addr %s199, 2
      %s201 = scalar_lea.vmem %s3, %s200
      %s202 = smul.u32 4, %s19
      %v204 = vld [vmem:[%s190] sm:$0x3]
      %v205 = vld [vmem:[%s190 + $0x4] sm:$0x3]
      %v206 = vld [vmem:[%s190 + $0x8] sm:$0x3]
      %v207 = vld [vmem:[%s190 + $0xc] sm:$0x3]
      %v208 = vld [vmem:[%s190] sm:$0x7]
      %v209 = vld [vmem:[%s190 + $0x4] sm:$0x7]
      %v210 = vld [vmem:[%s190 + $0x8] sm:$0x7]
      %v211 = vld [vmem:[%s190 + $0xc] sm:$0x7]
      %v212 = vld [vmem:[%s190] sm:$0x6]
      %v213 = vld [vmem:[%s190 + $0x4] sm:$0x6]
      %v214 = vld [vmem:[%s190 + $0x8] sm:$0x6]
      %v215 = vld [vmem:[%s190 + $0xc] sm:$0x6]
      %v220 = vunpack.c.l.b16 %v208
      %v221 = vunpack.c.l.b16 %v209
      %v222 = vunpack.c.l.b16 %v210
      %v223 = vunpack.c.l.b16 %v211
      %v224 = vpack.c.b16 %v220, %v220
      %v225 = vpack.c.b16 %v221, %v221
      %v226 = vpack.c.b16 %v222, %v222
      %v227 = vpack.c.b16 %v223, %v223
      %v229 = vshrl.u32 %v224, 16
      %v231 = vshll.u32 %v224, 16
      %v233 = vrot.slane %v231, 1
      %v234 = vor.u32 %v229, %v233
      %v236 = vshrl.u32 %v225, 16
      %v238 = vshll.u32 %v225, 16
      %v240 = vrot.slane %v238, 1
      %v241 = vor.u32 %v236, %v240
      %v243 = vshrl.u32 %v226, 16
      %v245 = vshll.u32 %v226, 16
      %v247 = vrot.slane %v245, 1
      %v248 = vor.u32 %v243, %v247
      %v250 = vshrl.u32 %v227, 16
      %v252 = vshll.u32 %v227, 16
      %v254 = vrot.slane %v252, 1
      %v255 = vor.u32 %v250, %v254
      %v260 = vunpack.c.l.b16 %v212
      %v261 = vunpack.c.l.b16 %v213
      %v262 = vunpack.c.l.b16 %v214
      %v263 = vunpack.c.l.b16 %v215
      %v264 = vpack.c.b16 %v260, %v260
      %v265 = vpack.c.b16 %v261, %v261
      %v266 = vpack.c.b16 %v262, %v262
      %v267 = vpack.c.b16 %v263, %v263
      %v268 = vrot.slane %v264, 1
      %v269 = vrot.slane %v265, 1
      %v270 = vrot.slane %v266, 1
      %v271 = vrot.slane %v267, 1
      %v276 = vcombine.low %v204, %v234
      %v278 = vunpack.c.l.s4 1983009808
      %v279 = vunpack.c.0.s8 %v278
      %v280 = vlaneseq
      %v281 = vshrl.u32 %v280, 7
      %v282 = vsub.s32 %v279, %v281
      %v283 = vrot.slane %v276, %v282
      %v285 = vunpack.c.l.s4 1983009808
      %v286 = vunpack.c.0.s8 %v285
      %v287 = vlaneseq
      %v288 = vshrl.u32 %v287, 7
      %v289 = vsub.s32 %v286, %v288
      %v290 = vrot.slane %v268, %v289
      %v291 = vcombine.low %v283, %v290
      %v292 = vcombine.low %v205, %v241
      %v294 = vunpack.c.l.s4 1983009808
      %v295 = vunpack.c.0.s8 %v294
      %v296 = vlaneseq
      %v297 = vshrl.u32 %v296, 7
      %v298 = vsub.s32 %v295, %v297
      %v299 = vrot.slane %v292, %v298
      %v301 = vunpack.c.l.s4 1983009808
      %v302 = vunpack.c.0.s8 %v301
      %v303 = vlaneseq
      %v304 = vshrl.u32 %v303, 7
      %v305 = vsub.s32 %v302, %v304
      %v306 = vrot.slane %v269, %v305
      %v307 = vcombine.low %v299, %v306
      %v308 = vcombine.low %v206, %v248
      %v310 = vunpack.c.l.s4 1983009808
      %v311 = vunpack.c.0.s8 %v310
      %v312 = vlaneseq
      %v313 = vshrl.u32 %v312, 7
      %v314 = vsub.s32 %v311, %v313
      %v315 = vrot.slane %v308, %v314
      %v317 = vunpack.c.l.s4 1983009808
      %v318 = vunpack.c.0.s8 %v317
      %v319 = vlaneseq
      %v320 = vshrl.u32 %v319, 7
      %v321 = vsub.s32 %v318, %v320
      %v322 = vrot.slane %v270, %v321
      %v323 = vcombine.low %v315, %v322
      %v324 = vcombine.low %v207, %v255
      %v326 = vunpack.c.l.s4 1983009808
      %v327 = vunpack.c.0.s8 %v326
      %v328 = vlaneseq
      %v329 = vshrl.u32 %v328, 7
      %v330 = vsub.s32 %v327, %v329
      %v331 = vrot.slane %v324, %v330
      %v333 = vunpack.c.l.s4 1983009808
      %v334 = vunpack.c.0.s8 %v333
      %v335 = vlaneseq
      %v336 = vshrl.u32 %v335, 7
      %v337 = vsub.s32 %v334, %v336
      %v338 = vrot.slane %v271, %v337
      %v339 = vcombine.low %v331, %v338
      %v340 = vld [vmem:[%s1] sm:$0xff]
      %v341 = vld [vmem:[%s1 + $0x8] sm:$0xff]
      %v342 = vld [vmem:[%s1 + $0x10] sm:$0xff]
      %v343 = vld [vmem:[%s1 + $0x18] sm:$0xff]
      %v344 = vld [vmem:[%s1 + $0x20] sm:$0xff]
      %v345 = vld [vmem:[%s1 + $0x28] sm:$0xff]
      %v346 = vld [vmem:[%s1 + $0x30] sm:$0xff]
      %v347 = vld [vmem:[%s1 + $0x38] sm:$0xff]
      %v348 = vld [vmem:[%s1 + $0x40] sm:$0xff]
      %v349 = vld [vmem:[%s1 + $0x48] sm:$0xff]
      %v350 = vld [vmem:[%s1 + $0x50] sm:$0xff]
      %v351 = vld [vmem:[%s1 + $0x58] sm:$0xff]
      %v352 = vld [vmem:[%s1 + $0x60] sm:$0xff]
      %v353 = vld [vmem:[%s1 + $0x68] sm:$0xff]
      %v354 = vld [vmem:[%s1 + $0x70] sm:$0xff]
      %v355 = vld [vmem:[%s1 + $0x78] sm:$0xff]
      %v356 = vld [vmem:[%s1 + $0x80] sm:$0xff]
      %v357 = vld [vmem:[%s1 + $0x88] sm:$0xff]
      %v358 = vld [vmem:[%s1 + $0x90] sm:$0xff]
      %v359 = vld [vmem:[%s1 + $0x98] sm:$0xff]
      %v360 = vld [vmem:[%s1 + $0xa0] sm:$0xff]
      %v361 = vld [vmem:[%s1 + $0xa8] sm:$0xff]
      %v362 = vld [vmem:[%s1 + $0xb0] sm:$0xff]
      %v363 = vld [vmem:[%s1 + $0xb8] sm:$0xff]
      %v364 = vld [vmem:[%s1 + $0xc0] sm:$0xff]
      %v365 = vld [vmem:[%s1 + $0xc8] sm:$0xff]
      %v366 = vld [vmem:[%s1 + $0xd0] sm:$0xff]
      %v367 = vld [vmem:[%s1 + $0xd8] sm:$0xff]
      %v368 = vld [vmem:[%s1 + $0xe0] sm:$0xff]
      %v369 = vld [vmem:[%s1 + $0xe8] sm:$0xff]
      %v370 = vld [vmem:[%s1 + $0xf0] sm:$0xff]
      %v371 = vld [vmem:[%s1 + $0xf8] sm:$0xff]
      %v372 = vld [vmem:[%s1 + $0x100] sm:$0xff]
      %v373 = vld [vmem:[%s1 + $0x108] sm:$0xff]
      %v374 = vld [vmem:[%s1 + $0x110] sm:$0xff]
      %v375 = vld [vmem:[%s1 + $0x118] sm:$0xff]
      %v376 = vld [vmem:[%s1 + $0x120] sm:$0xff]
      %v377 = vld [vmem:[%s1 + $0x128] sm:$0xff]
      %v378 = vld [vmem:[%s1 + $0x130] sm:$0xff]
      %v379 = vld [vmem:[%s1 + $0x138] sm:$0xff]
      %v380 = vld [vmem:[%s1 + $0x140] sm:$0xff]
      %v381 = vld [vmem:[%s1 + $0x148] sm:$0xff]
      %v382 = vld [vmem:[%s1 + $0x150] sm:$0xff]
      %v383 = vld [vmem:[%s1 + $0x158] sm:$0xff]
      %v384 = vld [vmem:[%s1 + $0x160] sm:$0xff]
      %v385 = vld [vmem:[%s1 + $0x168] sm:$0xff]
      %v386 = vld [vmem:[%s1 + $0x170] sm:$0xff]
      %v387 = vld [vmem:[%s1 + $0x178] sm:$0xff]
      %v388 = vcombine.low %v291, %v307
      %v389 = vcombine.high %v291, %v307
      %v390 = vcombine.low %v323, %v339
      %v391 = vcombine.high %v323, %v339
      %v393 = vunpack.c.l.s4 1983009808
      %v394 = vunpack.c.0.s8 %v393
      %v395 = vlaneseq
      %v396 = vshrl.u32 %v395, 7
      %v397 = vsub.s32 %v394, %v396
      %v398 = vrot.slane %v388, %v397
      %v400 = vunpack.c.l.s4 1983009808
      %v401 = vunpack.c.0.s8 %v400
      %v402 = vlaneseq
      %v403 = vshrl.u32 %v402, 7
      %v404 = vsub.s32 %v401, %v403
      %v405 = vrot.slane %v389, %v404
      %v407 = vunpack.c.l.s4 1983009808
      %v408 = vunpack.c.0.s8 %v407
      %v409 = vlaneseq
      %v410 = vshrl.u32 %v409, 7
      %v411 = vsub.s32 %v408, %v410
      %v412 = vrot.slane %v390, %v411
      %v414 = vunpack.c.l.s4 1983009808
      %v415 = vunpack.c.0.s8 %v414
      %v416 = vlaneseq
      %v417 = vshrl.u32 %v416, 7
      %v418 = vsub.s32 %v415, %v417
      %v419 = vrot.slane %v391, %v418
      %v420 = vcombine.low %v398, %v412
      %v421 = vcombine.high %v398, %v412
      %v422 = vcombine.low %v405, %v419
      %v474 = vunpack.c.l.b16 %v340
      %v475 = vunpack.c.h.b16 %v340
      %v476 = vunpack.c.l.b16 %v341
      %v477 = vunpack.c.h.b16 %v341
      %v478 = vunpack.c.l.b16 %v342
      %v479 = vunpack.c.h.b16 %v342
      %v480 = vunpack.c.l.b16 %v343
      %v481 = vunpack.c.h.b16 %v343
      %v482 = vunpack.c.l.b16 %v344
      %v483 = vunpack.c.h.b16 %v344
      %v484 = vunpack.c.l.b16 %v345
      %v485 = vunpack.c.h.b16 %v345
      %v486 = vunpack.c.l.b16 %v346
      %v487 = vunpack.c.h.b16 %v346
      %v488 = vunpack.c.l.b16 %v347
      %v489 = vunpack.c.h.b16 %v347
      %v490 = vunpack.c.l.b16 %v348
      %v491 = vunpack.c.h.b16 %v348
      %v492 = vunpack.c.l.b16 %v349
      %v493 = vunpack.c.h.b16 %v349
      %v494 = vunpack.c.l.b16 %v350
      %v495 = vunpack.c.h.b16 %v350
      %v496 = vunpack.c.l.b16 %v351
      %v497 = vunpack.c.h.b16 %v351
      %v498 = vunpack.c.l.b16 %v352
      %v499 = vunpack.c.h.b16 %v352
      %v500 = vunpack.c.l.b16 %v353
      %v501 = vunpack.c.h.b16 %v353
      %v502 = vunpack.c.l.b16 %v354
      %v503 = vunpack.c.h.b16 %v354
      %v504 = vunpack.c.l.b16 %v355
      %v505 = vunpack.c.h.b16 %v355
      %v506 = vunpack.c.l.b16 %v356
      %v507 = vunpack.c.h.b16 %v356
      %v508 = vunpack.c.l.b16 %v357
      %v509 = vunpack.c.h.b16 %v357
      %v510 = vunpack.c.l.b16 %v358
      %v511 = vunpack.c.h.b16 %v358
      %v512 = vunpack.c.l.b16 %v359
      %v513 = vunpack.c.h.b16 %v359
      %v514 = vunpack.c.l.b16 %v360
      %v515 = vunpack.c.h.b16 %v360
      %v516 = vunpack.c.l.b16 %v361
      %v517 = vunpack.c.h.b16 %v361
      %v518 = vunpack.c.l.b16 %v362
      %v519 = vunpack.c.h.b16 %v362
      %v520 = vunpack.c.l.b16 %v363
      %v521 = vunpack.c.h.b16 %v363
      %v522 = vunpack.c.l.b16 %v364
      %v523 = vunpack.c.h.b16 %v364
      %v524 = vunpack.c.l.b16 %v365
      %v525 = vunpack.c.h.b16 %v365
      %v526 = vunpack.c.l.b16 %v366
      %v527 = vunpack.c.h.b16 %v366
      %v528 = vunpack.c.l.b16 %v367
      %v529 = vunpack.c.h.b16 %v367
      %v530 = vunpack.c.l.b16 %v368
      %v531 = vunpack.c.h.b16 %v368
      %v532 = vunpack.c.l.b16 %v369
      %v533 = vunpack.c.h.b16 %v369
      %v534 = vunpack.c.l.b16 %v370
      %v535 = vunpack.c.h.b16 %v370
      %v536 = vunpack.c.l.b16 %v371
      %v537 = vunpack.c.h.b16 %v371
      %v538 = vunpack.c.l.b16 %v372
      %v539 = vunpack.c.h.b16 %v372
      %v540 = vunpack.c.l.b16 %v373
      %v541 = vunpack.c.h.b16 %v373
      %v542 = vunpack.c.l.b16 %v374
      %v543 = vunpack.c.h.b16 %v374
      %v544 = vunpack.c.l.b16 %v375
      %v545 = vunpack.c.h.b16 %v375
      %v546 = vunpack.c.l.b16 %v376
      %v547 = vunpack.c.h.b16 %v376
      %v548 = vunpack.c.l.b16 %v377
      %v549 = vunpack.c.h.b16 %v377
      %v550 = vunpack.c.l.b16 %v378
      %v551 = vunpack.c.h.b16 %v378
      %v552 = vunpack.c.l.b16 %v379
      %v553 = vunpack.c.h.b16 %v379
      %v554 = vunpack.c.l.b16 %v380
      %v555 = vunpack.c.h.b16 %v380
      %v556 = vunpack.c.l.b16 %v381
      %v557 = vunpack.c.h.b16 %v381
      %v558 = vunpack.c.l.b16 %v382
      %v559 = vunpack.c.h.b16 %v382
      %v560 = vunpack.c.l.b16 %v383
      %v561 = vunpack.c.h.b16 %v383
      %v562 = vunpack.c.l.b16 %v384
      %v563 = vunpack.c.h.b16 %v384
      %v564 = vunpack.c.l.b16 %v385
      %v565 = vunpack.c.h.b16 %v385
      %v566 = vunpack.c.l.b16 %v386
      %v567 = vunpack.c.h.b16 %v386
      %v568 = vunpack.c.l.b16 %v387
      %v569 = vunpack.c.h.b16 %v387
      %v570 = vpack.c.b16 %v476, %v474
      %v571 = vpack.c.b16 %v477, %v475
      %v572 = vpack.c.b16 %v480, %v478
      %v573 = vpack.c.b16 %v481, %v479
      %v574 = vpack.c.b16 %v484, %v482
      %v575 = vpack.c.b16 %v485, %v483
      %v576 = vpack.c.b16 %v488, %v486
      %v577 = vpack.c.b16 %v489, %v487
      %v578 = vpack.c.b16 %v492, %v490
      %v579 = vpack.c.b16 %v493, %v491
      %v580 = vpack.c.b16 %v496, %v494
      %v581 = vpack.c.b16 %v497, %v495
      %v582 = vpack.c.b16 %v500, %v498
      %v583 = vpack.c.b16 %v501, %v499
      %v584 = vpack.c.b16 %v504, %v502
      %v585 = vpack.c.b16 %v505, %v503
      %v586 = vpack.c.b16 %v508, %v506
      %v587 = vpack.c.b16 %v509, %v507
      %v588 = vpack.c.b16 %v512, %v510
      %v589 = vpack.c.b16 %v513, %v511
      %v590 = vpack.c.b16 %v516, %v514
      %v591 = vpack.c.b16 %v517, %v515
      %v592 = vpack.c.b16 %v520, %v518
      %v593 = vpack.c.b16 %v521, %v519
      %v594 = vpack.c.b16 %v524, %v522
      %v595 = vpack.c.b16 %v525, %v523
      %v596 = vpack.c.b16 %v528, %v526
      %v597 = vpack.c.b16 %v529, %v527
      %v598 = vpack.c.b16 %v532, %v530
      %v599 = vpack.c.b16 %v533, %v531
      %v600 = vpack.c.b16 %v536, %v534
      %v601 = vpack.c.b16 %v537, %v535
      %v602 = vpack.c.b16 %v540, %v538
      %v603 = vpack.c.b16 %v541, %v539
      %v604 = vpack.c.b16 %v544, %v542
      %v605 = vpack.c.b16 %v545, %v543
      %v606 = vpack.c.b16 %v548, %v546
      %v607 = vpack.c.b16 %v549, %v547
      %v608 = vpack.c.b16 %v552, %v550
      %v609 = vpack.c.b16 %v553, %v551
      %v610 = vpack.c.b16 %v556, %v554
      %v611 = vpack.c.b16 %v557, %v555
      %v612 = vpack.c.b16 %v560, %v558
      %v613 = vpack.c.b16 %v561, %v559
      %v614 = vpack.c.b16 %v564, %v562
      %v615 = vpack.c.b16 %v565, %v563
      %v616 = vpack.c.b16 %v568, %v566
      %v617 = vpack.c.b16 %v569, %v567
      %666 = vmatprep.subr.bf16.mxu0 %v571
      %667 = vmatpush1.bf16.msra.mxu0 %v570
      %668 = vmatprep.subr.bf16.mxu0 %v573
      %669 = vmatpush1.bf16.msra.mxu0 %v572
      %670 = vmatprep.subr.bf16.mxu0 %v575
      %671 = vmatpush1.bf16.msra.mxu0 %v574
      %672 = vmatprep.subr.bf16.mxu0 %v577
      %673 = vmatpush1.bf16.msra.mxu0 %v576
      %674 = vmatprep.subr.bf16.mxu0 %v579
      %675 = vmatpush1.bf16.msra.mxu0 %v578
      %676 = vmatprep.subr.bf16.mxu0 %v581
      %677 = vmatpush1.bf16.msra.mxu0 %v580
      %678 = vmatprep.subr.bf16.mxu0 %v583
      %679 = vmatpush1.bf16.msra.mxu0 %v582
      %680 = vmatprep.subr.bf16.mxu0 %v585
      %681 = vmatpush1.bf16.msra.mxu0 %v584
      %682 = vmatprep.subr.bf16.mxu0 %v587
      %683 = vmatpush1.bf16.msra.mxu0 %v586
      %684 = vmatprep.subr.bf16.mxu0 %v589
      %685 = vmatpush1.bf16.msra.mxu0 %v588
      %686 = vmatprep.subr.bf16.mxu0 %v591
      %687 = vmatpush1.bf16.msra.mxu0 %v590
      %688 = vmatprep.subr.bf16.mxu0 %v593
      %689 = vmatpush1.bf16.msra.mxu0 %v592
      %690 = vmatprep.subr.bf16.mxu0 %v595
      %691 = vmatpush1.bf16.msra.mxu0 %v594
      %692 = vmatprep.subr.bf16.mxu0 %v597
      %693 = vmatpush1.bf16.msra.mxu0 %v596
      %694 = vmatprep.subr.bf16.mxu0 %v599
      %695 = vmatpush1.bf16.msra.mxu0 %v598
      %696 = vmatprep.subr.bf16.mxu0 %v601
      %697 = vmatpush1.bf16.msra.mxu0 %v600
      %698 = vmatprep.mubr.bf16.mxu0 %v421
      %699 = vmatmul.mubr.bf16.gmra.mrb[0].mxu0 %v420
      %v700 = vpop.f32.mrb[0].mxu0
      %v701 = vadd.f32 0.0, %v700
      %v702 = vpop.f32.mrb[0].mxu0
      %v703 = vadd.f32 0.0, %v702
      %v704 = vpop.f32.mrb[0].mxu0
      %v705 = vadd.f32 0.0, %v704
      %v706 = vpop.f32.mrb[0].mxu0
      %v707 = vadd.f32 0.0, %v706
      %708 = vdwg.mxu0
      %709 = vmatprep.subr.bf16.mxu0 %v603
      %710 = vmatpush1.bf16.msra.mxu0 %v602
      %711 = vmatprep.subr.bf16.mxu0 %v605
      %712 = vmatpush1.bf16.msra.mxu0 %v604
      %713 = vmatprep.subr.bf16.mxu0 %v607
      %714 = vmatpush1.bf16.msra.mxu0 %v606
      %715 = vmatprep.subr.bf16.mxu0 %v609
      %716 = vmatpush1.bf16.msra.mxu0 %v608
      %717 = vmatprep.subr.bf16.mxu0 %v611
      %718 = vmatpush1.bf16.msra.mxu0 %v610
      %719 = vmatprep.subr.bf16.mxu0 %v613
      %720 = vmatpush1.bf16.msra.mxu0 %v612
      %721 = vmatprep.subr.bf16.mxu0 %v615
      %722 = vmatpush1.bf16.msra.mxu0 %v614
      %723 = vmatprep.subr.bf16.mxu0 %v617
      %724 = vmatpush1.bf16.msra.mxu0 %v616
      %725 = vmatprep.subr.bf16.mxu0 0
      %726 = vmatpush1.bf16.msra.mxu0 0
      %727 = vmatprep.subr.bf16.mxu0 0
      %728 = vmatpush1.bf16.msra.mxu0 0
      %729 = vmatprep.subr.bf16.mxu0 0
      %730 = vmatpush1.bf16.msra.mxu0 0
      %731 = vmatprep.subr.bf16.mxu0 0
      %732 = vmatpush1.bf16.msra.mxu0 0
      %733 = vmatprep.subr.bf16.mxu0 0
      %734 = vmatpush1.bf16.msra.mxu0 0
      %735 = vmatprep.subr.bf16.mxu0 0
      %736 = vmatpush1.bf16.msra.mxu0 0
      %737 = vmatprep.subr.bf16.mxu0 0
      %738 = vmatpush1.bf16.msra.mxu0 0
      %739 = vmatprep.subr.bf16.mxu0 0
      %740 = vmatpush1.bf16.msra.mxu0 0
      %741 = vmatprep.mubr.bf16.mxu0 0
      %742 = vmatmul.mubr.bf16.gmra.mrb[0].mxu0 %v422
      %v743 = vpop.f32.mrb[0].mxu0
      %v744 = vadd.f32 %v701, %v743
      %v745 = vpop.f32.mrb[0].mxu0
      %v746 = vadd.f32 %v703, %v745
      %v747 = vpop.f32.mrb[0].mxu0
      %v748 = vadd.f32 %v705, %v747
      %v749 = vpop.f32.mrb[0].mxu0
      %v750 = vadd.f32 %v707, %v749
      %751 = vdwg.mxu0
      %752 = vst [vmem:[#allocation2] sm:$0xff] %v744
      %753 = vst [vmem:[#allocation2 + $0x8] sm:$0xff] %v746
      %754 = vst [vmem:[#allocation2 + $0x10] sm:$0xff] %v748
      %755 = vst [vmem:[#allocation2 + $0x18] sm:$0xff] %v750
      %s756 = scalar_lea.vmem %s190, 4
      %v757 = vld [vmem:[%s756] sm:$0x3]
      %v758 = vld [vmem:[%s756 + $0x4] sm:$0x3]
      %v759 = vld [vmem:[%s756 + $0x8] sm:$0x3]
      %v760 = vld [vmem:[%s756 + $0xc] sm:$0x3]
      %v761 = vld [vmem:[%s756] sm:$0x7]
      %v762 = vld [vmem:[%s756 + $0x4] sm:$0x7]
      %v763 = vld [vmem:[%s756 + $0x8] sm:$0x7]
      %v764 = vld [vmem:[%s756 + $0xc] sm:$0x7]
      %v765 = vld [vmem:[%s756] sm:$0x6]
      %v766 = vld [vmem:[%s756 + $0x4] sm:$0x6]
      %v767 = vld [vmem:[%s756 + $0x8] sm:$0x6]
      %v768 = vld [vmem:[%s756 + $0xc] sm:$0x6]
      %v773 = vunpack.c.l.b16 %v761
      %v774 = vunpack.c.l.b16 %v762
      %v775 = vunpack.c.l.b16 %v763
      %v776 = vunpack.c.l.b16 %v764
      %v777 = vpack.c.b16 %v773, %v773
      %v778 = vpack.c.b16 %v774, %v774
      %v779 = vpack.c.b16 %v775, %v775
      %v780 = vpack.c.b16 %v776, %v776
      %v782 = vshrl.u32 %v777, 16
      %v784 = vshll.u32 %v777, 16
      %v786 = vrot.slane %v784, 1
      %v787 = vor.u32 %v782, %v786
      %v789 = vshrl.u32 %v778, 16
      %v791 = vshll.u32 %v778, 16
      %v793 = vrot.slane %v791, 1
      %v794 = vor.u32 %v789, %v793
      %v796 = vshrl.u32 %v779, 16
      %v798 = vshll.u32 %v779, 16
      %v800 = vrot.slane %v798, 1
      %v801 = vor.u32 %v796, %v800
      %v803 = vshrl.u32 %v780, 16
      %v805 = vshll.u32 %v780, 16
      %v807 = vrot.slane %v805, 1
      %v808 = vor.u32 %v803, %v807
      %v813 = vunpack.c.l.b16 %v765
      %v814 = vunpack.c.l.b16 %v766
      %v815 = vunpack.c.l.b16 %v767
      %v816 = vunpack.c.l.b16 %v768
      %v817 = vpack.c.b16 %v813, %v813
      %v818 = vpack.c.b16 %v814, %v814
      %v819 = vpack.c.b16 %v815, %v815
      %v820 = vpack.c.b16 %v816, %v816
      %v821 = vrot.slane %v817, 1
      %v822 = vrot.slane %v818, 1
      %v823 = vrot.slane %v819, 1
      %v824 = vrot.slane %v820, 1
      %v829 = vcombine.low %v757, %v787
      %v831 = vunpack.c.l.s4 1983009808
      %v832 = vunpack.c.0.s8 %v831
      %v833 = vlaneseq
      %v834 = vshrl.u32 %v833, 7
      %v835 = vsub.s32 %v832, %v834
      %v836 = vrot.slane %v829, %v835
      %v838 = vunpack.c.l.s4 1983009808
      %v839 = vunpack.c.0.s8 %v838
      %v840 = vlaneseq
      %v841 = vshrl.u32 %v840, 7
      %v842 = vsub.s32 %v839, %v841
      %v843 = vrot.slane %v821, %v842
      %v844 = vcombine.low %v836, %v843
      %v845 = vcombine.low %v758, %v794
      %v847 = vunpack.c.l.s4 1983009808
      %v848 = vunpack.c.0.s8 %v847
      %v849 = vlaneseq
      %v850 = vshrl.u32 %v849, 7
      %v851 = vsub.s32 %v848, %v850
      %v852 = vrot.slane %v845, %v851
      %v854 = vunpack.c.l.s4 1983009808
      %v855 = vunpack.c.0.s8 %v854
      %v856 = vlaneseq
      %v857 = vshrl.u32 %v856, 7
      %v858 = vsub.s32 %v855, %v857
      %v859 = vrot.slane %v822, %v858
      %v860 = vcombine.low %v852, %v859
      %v861 = vcombine.low %v759, %v801
      %v863 = vunpack.c.l.s4 1983009808
      %v864 = vunpack.c.0.s8 %v863
      %v865 = vlaneseq
      %v866 = vshrl.u32 %v865, 7
      %v867 = vsub.s32 %v864, %v866
      %v868 = vrot.slane %v861, %v867
      %v870 = vunpack.c.l.s4 1983009808
      %v871 = vunpack.c.0.s8 %v870
      %v872 = vlaneseq
      %v873 = vshrl.u32 %v872, 7
      %v874 = vsub.s32 %v871, %v873
      %v875 = vrot.slane %v823, %v874
      %v876 = vcombine.low %v868, %v875
      %v877 = vcombine.low %v760, %v808
      %v879 = vunpack.c.l.s4 1983009808
      %v880 = vunpack.c.0.s8 %v879
      %v881 = vlaneseq
      %v882 = vshrl.u32 %v881, 7
      %v883 = vsub.s32 %v880, %v882
      %v884 = vrot.slane %v877, %v883
      %v886 = vunpack.c.l.s4 1983009808
      %v887 = vunpack.c.0.s8 %v886
      %v888 = vlaneseq
      %v889 = vshrl.u32 %v888, 7
      %v890 = vsub.s32 %v887, %v889
      %v891 = vrot.slane %v824, %v890
      %v892 = vcombine.low %v884, %v891
      %s893 = scalar_lea.vmem %s1, 384
      %v894 = vld [vmem:[%s893] sm:$0xff]
      %v895 = vld [vmem:[%s893 + $0x8] sm:$0xff]
      %v896 = vld [vmem:[%s893 + $0x10] sm:$0xff]
      %v897 = vld [vmem:[%s893 + $0x18] sm:$0xff]
      %v898 = vld [vmem:[%s893 + $0x20] sm:$0xff]
      %v899 = vld [vmem:[%s893 + $0x28] sm:$0xff]
      %v900 = vld [vmem:[%s893 + $0x30] sm:$0xff]
      %v901 = vld [vmem:[%s893 + $0x38] sm:$0xff]
      %v902 = vld [vmem:[%s893 + $0x40] sm:$0xff]
      %v903 = vld [vmem:[%s893 + $0x48] sm:$0xff]
      %v904 = vld [vmem:[%s893 + $0x50] sm:$0xff]
      %v905 = vld [vmem:[%s893 + $0x58] sm:$0xff]
      %v906 = vld [vmem:[%s893 + $0x60] sm:$0xff]
      %v907 = vld [vmem:[%s893 + $0x68] sm:$0xff]
      %v908 = vld [vmem:[%s893 + $0x70] sm:$0xff]
      %v909 = vld [vmem:[%s893 + $0x78] sm:$0xff]
      %v910 = vld [vmem:[%s893 + $0x80] sm:$0xff]
      %v911 = vld [vmem:[%s893 + $0x88] sm:$0xff]
      %v912 = vld [vmem:[%s893 + $0x90] sm:$0xff]
      %v913 = vld [vmem:[%s893 + $0x98] sm:$0xff]
      %v914 = vld [vmem:[%s893 + $0xa0] sm:$0xff]
      %v915 = vld [vmem:[%s893 + $0xa8] sm:$0xff]
      %v916 = vld [vmem:[%s893 + $0xb0] sm:$0xff]
      %v917 = vld [vmem:[%s893 + $0xb8] sm:$0xff]
      %v918 = vld [vmem:[%s893 + $0xc0] sm:$0xff]
      %v919 = vld [vmem:[%s893 + $0xc8] sm:$0xff]
      %v920 = vld [vmem:[%s893 + $0xd0] sm:$0xff]
      %v921 = vld [vmem:[%s893 + $0xd8] sm:$0xff]
      %v922 = vld [vmem:[%s893 + $0xe0] sm:$0xff]
      %v923 = vld [vmem:[%s893 + $0xe8] sm:$0xff]
      %v924 = vld [vmem:[%s893 + $0xf0] sm:$0xff]
      %v925 = vld [vmem:[%s893 + $0xf8] sm:$0xff]
      %v926 = vld [vmem:[%s893 + $0x100] sm:$0xff]
      %v927 = vld [vmem:[%s893 + $0x108] sm:$0xff]
      %v928 = vld [vmem:[%s893 + $0x110] sm:$0xff]
      %v929 = vld [vmem:[%s893 + $0x118] sm:$0xff]
      %v930 = vld [vmem:[%s893 + $0x120] sm:$0xff]
      %v931 = vld [vmem:[%s893 + $0x128] sm:$0xff]
      %v932 = vld [vmem:[%s893 + $0x130] sm:$0xff]
      %v933 = vld [vmem:[%s893 + $0x138] sm:$0xff]
      %v934 = vld [vmem:[%s893 + $0x140] sm:$0xff]
      %v935 = vld [vmem:[%s893 + $0x148] sm:$0xff]
      %v936 = vld [vmem:[%s893 + $0x150] sm:$0xff]
      %v937 = vld [vmem:[%s893 + $0x158] sm:$0xff]
      %v938 = vld [vmem:[%s893 + $0x160] sm:$0xff]
      %v939 = vld [vmem:[%s893 + $0x168] sm:$0xff]
      %v940 = vld [vmem:[%s893 + $0x170] sm:$0xff]
      %v941 = vld [vmem:[%s893 + $0x178] sm:$0xff]
      %v942 = vcombine.low %v844, %v860
      %v943 = vcombine.high %v844, %v860
      %v944 = vcombine.low %v876, %v892
      %v945 = vcombine.high %v876, %v892
      %v947 = vunpack.c.l.s4 1983009808
      %v948 = vunpack.c.0.s8 %v947
      %v949 = vlaneseq
      %v950 = vshrl.u32 %v949, 7
      %v951 = vsub.s32 %v948, %v950
      %v952 = vrot.slane %v942, %v951
      %v954 = vunpack.c.l.s4 1983009808
      %v955 = vunpack.c.0.s8 %v954
      %v956 = vlaneseq
      %v957 = vshrl.u32 %v956, 7
      %v958 = vsub.s32 %v955, %v957
      %v959 = vrot.slane %v943, %v958
      %v961 = vunpack.c.l.s4 1983009808
      %v962 = vunpack.c.0.s8 %v961
      %v963 = vlaneseq
      %v964 = vshrl.u32 %v963, 7
      %v965 = vsub.s32 %v962, %v964
      %v966 = vrot.slane %v944, %v965
      %v968 = vunpack.c.l.s4 1983009808
      %v969 = vunpack.c.0.s8 %v968
      %v970 = vlaneseq
      %v971 = vshrl.u32 %v970, 7
      %v972 = vsub.s32 %v969, %v971
      %v973 = vrot.slane %v945, %v972
      %v974 = vcombine.low %v952, %v966
      %v975 = vcombine.high %v952, %v966
      %v976 = vcombine.low %v959, %v973
      %v1028 = vunpack.c.l.b16 %v894
      %v1029 = vunpack.c.h.b16 %v894
      %v1030 = vunpack.c.l.b16 %v895
      %v1031 = vunpack.c.h.b16 %v895
      %v1032 = vunpack.c.l.b16 %v896
      %v1033 = vunpack.c.h.b16 %v896
      %v1034 = vunpack.c.l.b16 %v897
      %v1035 = vunpack.c.h.b16 %v897
      %v1036 = vunpack.c.l.b16 %v898
      %v1037 = vunpack.c.h.b16 %v898
      %v1038 = vunpack.c.l.b16 %v899
      %v1039 = vunpack.c.h.b16 %v899
      %v1040 = vunpack.c.l.b16 %v900
      %v1041 = vunpack.c.h.b16 %v900
      %v1042 = vunpack.c.l.b16 %v901
      %v1043 = vunpack.c.h.b16 %v901
      %v1044 = vunpack.c.l.b16 %v902
      %v1045 = vunpack.c.h.b16 %v902
      %v1046 = vunpack.c.l.b16 %v903
      %v1047 = vunpack.c.h.b16 %v903
      %v1048 = vunpack.c.l.b16 %v904
      %v1049 = vunpack.c.h.b16 %v904
      %v1050 = vunpack.c.l.b16 %v905
      %v1051 = vunpack.c.h.b16 %v905
      %v1052 = vunpack.c.l.b16 %v906
      %v1053 = vunpack.c.h.b16 %v906
      %v1054 = vunpack.c.l.b16 %v907
      %v1055 = vunpack.c.h.b16 %v907
      %v1056 = vunpack.c.l.b16 %v908
      %v1057 = vunpack.c.h.b16 %v908
      %v1058 = vunpack.c.l.b16 %v909
      %v1059 = vunpack.c.h.b16 %v909
      %v1060 = vunpack.c.l.b16 %v910
      %v1061 = vunpack.c.h.b16 %v910
      %v1062 = vunpack.c.l.b16 %v911
      %v1063 = vunpack.c.h.b16 %v911
      %v1064 = vunpack.c.l.b16 %v912
      %v1065 = vunpack.c.h.b16 %v912
      %v1066 = vunpack.c.l.b16 %v913
      %v1067 = vunpack.c.h.b16 %v913
      %v1068 = vunpack.c.l.b16 %v914
      %v1069 = vunpack.c.h.b16 %v914
      %v1070 = vunpack.c.l.b16 %v915
      %v1071 = vunpack.c.h.b16 %v915
      %v1072 = vunpack.c.l.b16 %v916
      %v1073 = vunpack.c.h.b16 %v916
      %v1074 = vunpack.c.l.b16 %v917
      %v1075 = vunpack.c.h.b16 %v917
      %v1076 = vunpack.c.l.b16 %v918
      %v1077 = vunpack.c.h.b16 %v918
      %v1078 = vunpack.c.l.b16 %v919
      %v1079 = vunpack.c.h.b16 %v919
      %v1080 = vunpack.c.l.b16 %v920
      %v1081 = vunpack.c.h.b16 %v920
      %v1082 = vunpack.c.l.b16 %v921
      %v1083 = vunpack.c.h.b16 %v921
      %v1084 = vunpack.c.l.b16 %v922
      %v1085 = vunpack.c.h.b16 %v922
      %v1086 = vunpack.c.l.b16 %v923
      %v1087 = vunpack.c.h.b16 %v923
      %v1088 = vunpack.c.l.b16 %v924
      %v1089 = vunpack.c.h.b16 %v924
      %v1090 = vunpack.c.l.b16 %v925
      %v1091 = vunpack.c.h.b16 %v925
      %v1092 = vunpack.c.l.b16 %v926
      %v1093 = vunpack.c.h.b16 %v926
      %v1094 = vunpack.c.l.b16 %v927
      %v1095 = vunpack.c.h.b16 %v927
      %v1096 = vunpack.c.l.b16 %v928
      %v1097 = vunpack.c.h.b16 %v928
      %v1098 = vunpack.c.l.b16 %v929
      %v1099 = vunpack.c.h.b16 %v929
      %v1100 = vunpack.c.l.b16 %v930
      %v1101 = vunpack.c.h.b16 %v930
      %v1102 = vunpack.c.l.b16 %v931
      %v1103 = vunpack.c.h.b16 %v931
      %v1104 = vunpack.c.l.b16 %v932
      %v1105 = vunpack.c.h.b16 %v932
      %v1106 = vunpack.c.l.b16 %v933
      %v1107 = vunpack.c.h.b16 %v933
      %v1108 = vunpack.c.l.b16 %v934
      %v1109 = vunpack.c.h.b16 %v934
      %v1110 = vunpack.c.l.b16 %v935
      %v1111 = vunpack.c.h.b16 %v935
      %v1112 = vunpack.c.l.b16 %v936
      %v1113 = vunpack.c.h.b16 %v936
      %v1114 = vunpack.c.l.b16 %v937
      %v1115 = vunpack.c.h.b16 %v937
      %v1116 = vunpack.c.l.b16 %v938
      %v1117 = vunpack.c.h.b16 %v938
      %v1118 = vunpack.c.l.b16 %v939
      %v1119 = vunpack.c.h.b16 %v939
      %v1120 = vunpack.c.l.b16 %v940
      %v1121 = vunpack.c.h.b16 %v940
      %v1122 = vunpack.c.l.b16 %v941
      %v1123 = vunpack.c.h.b16 %v941
      %v1124 = vpack.c.b16 %v1030, %v1028
      %v1125 = vpack.c.b16 %v1031, %v1029
      %v1126 = vpack.c.b16 %v1034, %v1032
      %v1127 = vpack.c.b16 %v1035, %v1033
      %v1128 = vpack.c.b16 %v1038, %v1036
      %v1129 = vpack.c.b16 %v1039, %v1037
      %v1130 = vpack.c.b16 %v1042, %v1040
      %v1131 = vpack.c.b16 %v1043, %v1041
      %v1132 = vpack.c.b16 %v1046, %v1044
      %v1133 = vpack.c.b16 %v1047, %v1045
      %v1134 = vpack.c.b16 %v1050, %v1048
      %v1135 = vpack.c.b16 %v1051, %v1049
      %v1136 = vpack.c.b16 %v1054, %v1052
      %v1137 = vpack.c.b16 %v1055, %v1053
      %v1138 = vpack.c.b16 %v1058, %v1056
      %v1139 = vpack.c.b16 %v1059, %v1057
      %v1140 = vpack.c.b16 %v1062, %v1060
      %v1141 = vpack.c.b16 %v1063, %v1061
      %v1142 = vpack.c.b16 %v1066, %v1064
      %v1143 = vpack.c.b16 %v1067, %v1065
      %v1144 = vpack.c.b16 %v1070, %v1068
      %v1145 = vpack.c.b16 %v1071, %v1069
      %v1146 = vpack.c.b16 %v1074, %v1072
      %v1147 = vpack.c.b16 %v1075, %v1073
      %v1148 = vpack.c.b16 %v1078, %v1076
      %v1149 = vpack.c.b16 %v1079, %v1077
      %v1150 = vpack.c.b16 %v1082, %v1080
      %v1151 = vpack.c.b16 %v1083, %v1081
      %v1152 = vpack.c.b16 %v1086, %v1084
      %v1153 = vpack.c.b16 %v1087, %v1085
      %v1154 = vpack.c.b16 %v1090, %v1088
      %v1155 = vpack.c.b16 %v1091, %v1089
      %v1156 = vpack.c.b16 %v1094, %v1092
      %v1157 = vpack.c.b16 %v1095, %v1093
      %v1158 = vpack.c.b16 %v1098, %v1096
      %v1159 = vpack.c.b16 %v1099, %v1097
      %v1160 = vpack.c.b16 %v1102, %v1100
      %v1161 = vpack.c.b16 %v1103, %v1101
      %v1162 = vpack.c.b16 %v1106, %v1104
      %v1163 = vpack.c.b16 %v1107, %v1105
      %v1164 = vpack.c.b16 %v1110, %v1108
      %v1165 = vpack.c.b16 %v1111, %v1109
      %v1166 = vpack.c.b16 %v1114, %v1112
      %v1167 = vpack.c.b16 %v1115, %v1113
      %v1168 = vpack.c.b16 %v1118, %v1116
      %v1169 = vpack.c.b16 %v1119, %v1117
      %v1170 = vpack.c.b16 %v1122, %v1120
      %v1171 = vpack.c.b16 %v1123, %v1121
      %1220 = vmatprep.subr.bf16.mxu0 %v1125
      %1221 = vmatpush1.bf16.msra.mxu0 %v1124
      %1222 = vmatprep.subr.bf16.mxu0 %v1127
      %1223 = vmatpush1.bf16.msra.mxu0 %v1126
      %1224 = vmatprep.subr.bf16.mxu0 %v1129
      %1225 = vmatpush1.bf16.msra.mxu0 %v1128
      %1226 = vmatprep.subr.bf16.mxu0 %v1131
      %1227 = vmatpush1.bf16.msra.mxu0 %v1130
      %1228 = vmatprep.subr.bf16.mxu0 %v1133
      %1229 = vmatpush1.bf16.msra.mxu0 %v1132
      %1230 = vmatprep.subr.bf16.mxu0 %v1135
      %1231 = vmatpush1.bf16.msra.mxu0 %v1134
      %1232 = vmatprep.subr.bf16.mxu0 %v1137
      %1233 = vmatpush1.bf16.msra.mxu0 %v1136
      %1234 = vmatprep.subr.bf16.mxu0 %v1139
      %1235 = vmatpush1.bf16.msra.mxu0 %v1138
      %1236 = vmatprep.subr.bf16.mxu0 %v1141
      %1237 = vmatpush1.bf16.msra.mxu0 %v1140
      %1238 = vmatprep.subr.bf16.mxu0 %v1143
      %1239 = vmatpush1.bf16.msra.mxu0 %v1142
      %1240 = vmatprep.subr.bf16.mxu0 %v1145
      %1241 = vmatpush1.bf16.msra.mxu0 %v1144
      %1242 = vmatprep.subr.bf16.mxu0 %v1147
      %1243 = vmatpush1.bf16.msra.mxu0 %v1146
      %1244 = vmatprep.subr.bf16.mxu0 %v1149
      %1245 = vmatpush1.bf16.msra.mxu0 %v1148
      %1246 = vmatprep.subr.bf16.mxu0 %v1151
      %1247 = vmatpush1.bf16.msra.mxu0 %v1150
      %1248 = vmatprep.subr.bf16.mxu0 %v1153
      %1249 = vmatpush1.bf16.msra.mxu0 %v1152
      %1250 = vmatprep.subr.bf16.mxu0 %v1155
      %1251 = vmatpush1.bf16.msra.mxu0 %v1154
      %1252 = vmatprep.mubr.bf16.mxu0 %v975
      %1253 = vmatmul.mubr.bf16.gmra.mrb[0].mxu0 %v974
      %v1254 = vpop.f32.mrb[0].mxu0
      %v1255 = vadd.f32 0.0, %v1254
      %v1256 = vpop.f32.mrb[0].mxu0
      %v1257 = vadd.f32 0.0, %v1256
      %v1258 = vpop.f32.mrb[0].mxu0
      %v1259 = vadd.f32 0.0, %v1258
      %v1260 = vpop.f32.mrb[0].mxu0
      %v1261 = vadd.f32 0.0, %v1260
      %1262 = vdwg.mxu0
      %1263 = vmatprep.subr.bf16.mxu0 %v1157
      %1264 = vmatpush1.bf16.msra.mxu0 %v1156
      %1265 = vmatprep.subr.bf16.mxu0 %v1159
      %1266 = vmatpush1.bf16.msra.mxu0 %v1158
      %1267 = vmatprep.subr.bf16.mxu0 %v1161
      %1268 = vmatpush1.bf16.msra.mxu0 %v1160
      %1269 = vmatprep.subr.bf16.mxu0 %v1163
      %1270 = vmatpush1.bf16.msra.mxu0 %v1162
      %1271 = vmatprep.subr.bf16.mxu0 %v1165
      %1272 = vmatpush1.bf16.msra.mxu0 %v1164
      %1273 = vmatprep.subr.bf16.mxu0 %v1167
      %1274 = vmatpush1.bf16.msra.mxu0 %v1166
      %1275 = vmatprep.subr.bf16.mxu0 %v1169
      %1276 = vmatpush1.bf16.msra.mxu0 %v1168
      %1277 = vmatprep.subr.bf16.mxu0 %v1171
      %1278 = vmatpush1.bf16.msra.mxu0 %v1170
      %1279 = vmatprep.subr.bf16.mxu0 0
      %1280 = vmatpush1.bf16.msra.mxu0 0
      %1281 = vmatprep.subr.bf16.mxu0 0
      %1282 = vmatpush1.bf16.msra.mxu0 0
      %1283 = vmatprep.subr.bf16.mxu0 0
      %1284 = vmatpush1.bf16.msra.mxu0 0
      %1285 = vmatprep.subr.bf16.mxu0 0
      %1286 = vmatpush1.bf16.msra.mxu0 0
      %1287 = vmatprep.subr.bf16.mxu0 0
      %1288 = vmatpush1.bf16.msra.mxu0 0
      %1289 = vmatprep.subr.bf16.mxu0 0
      %1290 = vmatpush1.bf16.msra.mxu0 0
      %1291 = vmatprep.subr.bf16.mxu0 0
      %1292 = vmatpush1.bf16.msra.mxu0 0
      %1293 = vmatprep.subr.bf16.mxu0 0
      %1294 = vmatpush1.bf16.msra.mxu0 0
      %1295 = vmatprep.mubr.bf16.mxu0 0
      %1296 = vmatmul.mubr.bf16.gmra.mrb[0].mxu0 %v976
      %v1297 = vpop.f32.mrb[0].mxu0
      %v1298 = vadd.f32 %v1255, %v1297
      %v1299 = vpop.f32.mrb[0].mxu0
      %v1300 = vadd.f32 %v1257, %v1299
      %v1301 = vpop.f32.mrb[0].mxu0
      %v1302 = vadd.f32 %v1259, %v1301
      %v1303 = vpop.f32.mrb[0].mxu0
      %v1304 = vadd.f32 %v1261, %v1303
      %1305 = vdwg.mxu0
      %v1306 = vld [vmem:[#allocation2] sm:$0xff]
      %v1307 = vld [vmem:[#allocation2 + $0x8] sm:$0xff]
      %v1308 = vld [vmem:[#allocation2 + $0x10] sm:$0xff]
      %v1309 = vld [vmem:[#allocation2 + $0x18] sm:$0xff]
      %v1310 = vadd.f32 %v1306, %v1298
      %v1311 = vadd.f32 %v1307, %v1300
      %v1312 = vadd.f32 %v1308, %v1302
      %v1313 = vadd.f32 %v1309, %v1304
      %1314 = vst [vmem:[#allocation2] sm:$0xff] %v1310
      %1315 = vst [vmem:[#allocation2 + $0x8] sm:$0xff] %v1311
      %1316 = vst [vmem:[#allocation2 + $0x10] sm:$0xff] %v1312
      %1317 = vst [vmem:[#allocation2 + $0x18] sm:$0xff] %v1313
      %s1318 = scalar_lea.vmem %s190, 8
      %v1319 = vld [vmem:[%s1318] sm:$0x3]
      %v1320 = vld [vmem:[%s1318 + $0x4] sm:$0x3]
      %v1321 = vld [vmem:[%s1318 + $0x8] sm:$0x3]
      %v1322 = vld [vmem:[%s1318 + $0xc] sm:$0x3]
      %v1323 = vld [vmem:[%s1318] sm:$0x7]
      %v1324 = vld [vmem:[%s1318 + $0x4] sm:$0x7]
      %v1325 = vld [vmem:[%s1318 + $0x8] sm:$0x7]
      %v1326 = vld [vmem:[%s1318 + $0xc] sm:$0x7]
      %v1327 = vld [vmem:[%s1318] sm:$0x6]
      %v1328 = vld [vmem:[%s1318 + $0x4] sm:$0x6]
      %v1329 = vld [vmem:[%s1318 + $0x8] sm:$0x6]
      %v1330 = vld [vmem:[%s1318 + $0xc] sm:$0x6]
      %v1335 = vunpack.c.l.b16 %v1323
      %v1336 = vunpack.c.l.b16 %v1324
      %v1337 = vunpack.c.l.b16 %v1325
      %v1338 = vunpack.c.l.b16 %v1326
      %v1339 = vpack.c.b16 %v1335, %v1335
      %v1340 = vpack.c.b16 %v1336, %v1336
      %v1341 = vpack.c.b16 %v1337, %v1337
      %v1342 = vpack.c.b16 %v1338, %v1338
      %v1344 = vshrl.u32 %v1339, 16
      %v1346 = vshll.u32 %v1339, 16
      %v1348 = vrot.slane %v1346, 1
      %v1349 = vor.u32 %v1344, %v1348
      %v1351 = vshrl.u32 %v1340, 16
      %v1353 = vshll.u32 %v1340, 16
      %v1355 = vrot.slane %v1353, 1
      %v1356 = vor.u32 %v1351, %v1355
      %v1358 = vshrl.u32 %v1341, 16
      %v1360 = vshll.u32 %v1341, 16
      %v1362 = vrot.slane %v1360, 1
      %v1363 = vor.u32 %v1358, %v1362
      %v1365 = vshrl.u32 %v1342, 16
      %v1367 = vshll.u32 %v1342, 16
      %v1369 = vrot.slane %v1367, 1
      %v1370 = vor.u32 %v1365, %v1369
      %v1375 = vunpack.c.l.b16 %v1327
      %v1376 = vunpack.c.l.b16 %v1328
      %v1377 = vunpack.c.l.b16 %v1329
      %v1378 = vunpack.c.l.b16 %v1330
      %v1379 = vpack.c.b16 %v1375, %v1375
      %v1380 = vpack.c.b16 %v1376, %v1376
      %v1381 = vpack.c.b16 %v1377, %v1377
      %v1382 = vpack.c.b16 %v1378, %v1378
      %v1383 = vrot.slane %v1379, 1
      %v1384 = vrot.slane %v1380, 1
      %v1385 = vrot.slane %v1381, 1
      %v1386 = vrot.slane %v1382, 1
      %v1391 = vcombine.low %v1319, %v1349
      %v1393 = vunpack.c.l.s4 1983009808
      %v1394 = vunpack.c.0.s8 %v1393
      %v1395 = vlaneseq
      %v1396 = vshrl.u32 %v1395, 7
      %v1397 = vsub.s32 %v1394, %v1396
      %v1398 = vrot.slane %v1391, %v1397
      %v1400 = vunpack.c.l.s4 1983009808
      %v1401 = vunpack.c.0.s8 %v1400
      %v1402 = vlaneseq
      %v1403 = vshrl.u32 %v1402, 7
      %v1404 = vsub.s32 %v1401, %v1403
      %v1405 = vrot.slane %v1383, %v1404
      %v1406 = vcombine.low %v1398, %v1405
      %v1407 = vcombine.low %v1320, %v1356
      %v1409 = vunpack.c.l.s4 1983009808
      %v1410 = vunpack.c.0.s8 %v1409
      %v1411 = vlaneseq
      %v1412 = vshrl.u32 %v1411, 7
      %v1413 = vsub.s32 %v1410, %v1412
      %v1414 = vrot.slane %v1407, %v1413
      %v1416 = vunpack.c.l.s4 1983009808
      %v1417 = vunpack.c.0.s8 %v1416
      %v1418 = vlaneseq
      %v1419 = vshrl.u32 %v1418, 7
      %v1420 = vsub.s32 %v1417, %v1419
      %v1421 = vrot.slane %v1384, %v1420
      %v1422 = vcombine.low %v1414, %v1421
      %v1423 = vcombine.low %v1321, %v1363
      %v1425 = vunpack.c.l.s4 1983009808
      %v1426 = vunpack.c.0.s8 %v1425
      %v1427 = vlaneseq
      %v1428 = vshrl.u32 %v1427, 7
      %v1429 = vsub.s32 %v1426, %v1428
      %v1430 = vrot.slane %v1423, %v1429
      %v1432 = vunpack.c.l.s4 1983009808
      %v1433 = vunpack.c.0.s8 %v1432
      %v1434 = vlaneseq
      %v1435 = vshrl.u32 %v1434, 7
      %v1436 = vsub.s32 %v1433, %v1435
      %v1437 = vrot.slane %v1385, %v1436
      %v1438 = vcombine.low %v1430, %v1437
      %v1439 = vcombine.low %v1322, %v1370
      %v1441 = vunpack.c.l.s4 1983009808
      %v1442 = vunpack.c.0.s8 %v1441
      %v1443 = vlaneseq
      %v1444 = vshrl.u32 %v1443, 7
      %v1445 = vsub.s32 %v1442, %v1444
      %v1446 = vrot.slane %v1439, %v1445
      %v1448 = vunpack.c.l.s4 1983009808
      %v1449 = vunpack.c.0.s8 %v1448
      %v1450 = vlaneseq
      %v1451 = vshrl.u32 %v1450, 7
      %v1452 = vsub.s32 %v1449, %v1451
      %v1453 = vrot.slane %v1386, %v1452
      %v1454 = vcombine.low %v1446, %v1453
      %s1455 = scalar_lea.vmem %s1, 768
      %v1456 = vld [vmem:[%s1455] sm:$0xff]
      %v1457 = vld [vmem:[%s1455 + $0x8] sm:$0xff]
      %v1458 = vld [vmem:[%s1455 + $0x10] sm:$0xff]
      %v1459 = vld [vmem:[%s1455 + $0x18] sm:$0xff]
      %v1460 = vld [vmem:[%s1455 + $0x20] sm:$0xff]
      %v1461 = vld [vmem:[%s1455 + $0x28] sm:$0xff]
      %v1462 = vld [vmem:[%s1455 + $0x30] sm:$0xff]
      %v1463 = vld [vmem:[%s1455 + $0x38] sm:$0xff]
      %v1464 = vld [vmem:[%s1455 + $0x40] sm:$0xff]
      %v1465 = vld [vmem:[%s1455 + $0x48] sm:$0xff]
      %v1466 = vld [vmem:[%s1455 + $0x50] sm:$0xff]
      %v1467 = vld [vmem:[%s1455 + $0x58] sm:$0xff]
      %v1468 = vld [vmem:[%s1455 + $0x60] sm:$0xff]
      %v1469 = vld [vmem:[%s1455 + $0x68] sm:$0xff]
      %v1470 = vld [vmem:[%s1455 + $0x70] sm:$0xff]
      %v1471 = vld [vmem:[%s1455 + $0x78] sm:$0xff]
      %v1472 = vld [vmem:[%s1455 + $0x80] sm:$0xff]
      %v1473 = vld [vmem:[%s1455 + $0x88] sm:$0xff]
      %v1474 = vld [vmem:[%s1455 + $0x90] sm:$0xff]
      %v1475 = vld [vmem:[%s1455 + $0x98] sm:$0xff]
      %v1476 = vld [vmem:[%s1455 + $0xa0] sm:$0xff]
      %v1477 = vld [vmem:[%s1455 + $0xa8] sm:$0xff]
      %v1478 = vld [vmem:[%s1455 + $0xb0] sm:$0xff]
      %v1479 = vld [vmem:[%s1455 + $0xb8] sm:$0xff]
      %v1480 = vld [vmem:[%s1455 + $0xc0] sm:$0xff]
      %v1481 = vld [vmem:[%s1455 + $0xc8] sm:$0xff]
      %v1482 = vld [vmem:[%s1455 + $0xd0] sm:$0xff]
      %v1483 = vld [vmem:[%s1455 + $0xd8] sm:$0xff]
      %v1484 = vld [vmem:[%s1455 + $0xe0] sm:$0xff]
      %v1485 = vld [vmem:[%s1455 + $0xe8] sm:$0xff]
      %v1486 = vld [vmem:[%s1455 + $0xf0] sm:$0xff]
      %v1487 = vld [vmem:[%s1455 + $0xf8] sm:$0xff]
      %v1488 = vld [vmem:[%s1455 + $0x100] sm:$0xff]
      %v1489 = vld [vmem:[%s1455 + $0x108] sm:$0xff]
      %v1490 = vld [vmem:[%s1455 + $0x110] sm:$0xff]
      %v1491 = vld [vmem:[%s1455 + $0x118] sm:$0xff]
      %v1492 = vld [vmem:[%s1455 + $0x120] sm:$0xff]
      %v1493 = vld [vmem:[%s1455 + $0x128] sm:$0xff]
      %v1494 = vld [vmem:[%s1455 + $0x130] sm:$0xff]
      %v1495 = vld [vmem:[%s1455 + $0x138] sm:$0xff]
      %v1496 = vld [vmem:[%s1455 + $0x140] sm:$0xff]
      %v1497 = vld [vmem:[%s1455 + $0x148] sm:$0xff]
      %v1498 = vld [vmem:[%s1455 + $0x150] sm:$0xff]
      %v1499 = vld [vmem:[%s1455 + $0x158] sm:$0xff]
      %v1500 = vld [vmem:[%s1455 + $0x160] sm:$0xff]
      %v1501 = vld [vmem:[%s1455 + $0x168] sm:$0xff]
      %v1502 = vld [vmem:[%s1455 + $0x170] sm:$0xff]
      %v1503 = vld [vmem:[%s1455 + $0x178] sm:$0xff]
      %v1504 = vcombine.low %v1406, %v1422
      %v1505 = vcombine.high %v1406, %v1422
      %v1506 = vcombine.low %v1438, %v1454
      %v1507 = vcombine.high %v1438, %v1454
      %v1509 = vunpack.c.l.s4 1983009808
      %v1510 = vunpack.c.0.s8 %v1509
      %v1511 = vlaneseq
      %v1512 = vshrl.u32 %v1511, 7
      %v1513 = vsub.s32 %v1510, %v1512
      %v1514 = vrot.slane %v1504, %v1513
      %v1516 = vunpack.c.l.s4 1983009808
      %v1517 = vunpack.c.0.s8 %v1516
      %v1518 = vlaneseq
      %v1519 = vshrl.u32 %v1518, 7
      %v1520 = vsub.s32 %v1517, %v1519
      %v1521 = vrot.slane %v1505, %v1520
      %v1523 = vunpack.c.l.s4 1983009808
      %v1524 = vunpack.c.0.s8 %v1523
      %v1525 = vlaneseq
      %v1526 = vshrl.u32 %v1525, 7
      %v1527 = vsub.s32 %v1524, %v1526
      %v1528 = vrot.slane %v1506, %v1527
      %v1530 = vunpack.c.l.s4 1983009808
      %v1531 = vunpack.c.0.s8 %v1530
      %v1532 = vlaneseq
      %v1533 = vshrl.u32 %v1532, 7
      %v1534 = vsub.s32 %v1531, %v1533
      %v1535 = vrot.slane %v1507, %v1534
      %v1536 = vcombine.low %v1514, %v1528
      %v1537 = vcombine.high %v1514, %v1528
      %v1538 = vcombine.low %v1521, %v1535
      %v1590 = vunpack.c.l.b16 %v1456
      %v1591 = vunpack.c.h.b16 %v1456
      %v1592 = vunpack.c.l.b16 %v1457
      %v1593 = vunpack.c.h.b16 %v1457
      %v1594 = vunpack.c.l.b16 %v1458
      %v1595 = vunpack.c.h.b16 %v1458
      %v1596 = vunpack.c.l.b16 %v1459
      %v1597 = vunpack.c.h.b16 %v1459
      %v1598 = vunpack.c.l.b16 %v1460
      %v1599 = vunpack.c.h.b16 %v1460
      %v1600 = vunpack.c.l.b16 %v1461
      %v1601 = vunpack.c.h.b16 %v1461
      %v1602 = vunpack.c.l.b16 %v1462
      %v1603 = vunpack.c.h.b16 %v1462
      %v1604 = vunpack.c.l.b16 %v1463
      %v1605 = vunpack.c.h.b16 %v1463
      %v1606 = vunpack.c.l.b16 %v1464
      %v1607 = vunpack.c.h.b16 %v1464
      %v1608 = vunpack.c.l.b16 %v1465
      %v1609 = vunpack.c.h.b16 %v1465
      %v1610 = vunpack.c.l.b16 %v1466
      %v1611 = vunpack.c.h.b16 %v1466
      %v1612 = vunpack.c.l.b16 %v1467
      %v1613 = vunpack.c.h.b16 %v1467
      %v1614 = vunpack.c.l.b16 %v1468
      %v1615 = vunpack.c.h.b16 %v1468
      %v1616 = vunpack.c.l.b16 %v1469
      %v1617 = vunpack.c.h.b16 %v1469
      %v1618 = vunpack.c.l.b16 %v1470
      %v1619 = vunpack.c.h.b16 %v1470
      %v1620 = vunpack.c.l.b16 %v1471
      %v1621 = vunpack.c.h.b16 %v1471
      %v1622 = vunpack.c.l.b16 %v1472
      %v1623 = vunpack.c.h.b16 %v1472
      %v1624 = vunpack.c.l.b16 %v1473
      %v1625 = vunpack.c.h.b16 %v1473
      %v1626 = vunpack.c.l.b16 %v1474
      %v1627 = vunpack.c.h.b16 %v1474
      %v1628 = vunpack.c.l.b16 %v1475
      %v1629 = vunpack.c.h.b16 %v1475
      %v1630 = vunpack.c.l.b16 %v1476
      %v1631 = vunpack.c.h.b16 %v1476
      %v1632 = vunpack.c.l.b16 %v1477
      %v1633 = vunpack.c.h.b16 %v1477
      %v1634 = vunpack.c.l.b16 %v1478
      %v1635 = vunpack.c.h.b16 %v1478
      %v1636 = vunpack.c.l.b16 %v1479
      %v1637 = vunpack.c.h.b16 %v1479
      %v1638 = vunpack.c.l.b16 %v1480
      %v1639 = vunpack.c.h.b16 %v1480
      %v1640 = vunpack.c.l.b16 %v1481
      %v1641 = vunpack.c.h.b16 %v1481
      %v1642 = vunpack.c.l.b16 %v1482
      %v1643 = vunpack.c.h.b16 %v1482
      %v1644 = vunpack.c.l.b16 %v1483
      %v1645 = vunpack.c.h.b16 %v1483
      %v1646 = vunpack.c.l.b16 %v1484
      %v1647 = vunpack.c.h.b16 %v1484
      %v1648 = vunpack.c.l.b16 %v1485
      %v1649 = vunpack.c.h.b16 %v1485
      %v1650 = vunpack.c.l.b16 %v1486
      %v1651 = vunpack.c.h.b16 %v1486
      %v1652 = vunpack.c.l.b16 %v1487
      %v1653 = vunpack.c.h.b16 %v1487
      %v1654 = vunpack.c.l.b16 %v1488
      %v1655 = vunpack.c.h.b16 %v1488
      %v1656 = vunpack.c.l.b16 %v1489
      %v1657 = vunpack.c.h.b16 %v1489
      %v1658 = vunpack.c.l.b16 %v1490
      %v1659 = vunpack.c.h.b16 %v1490
      %v1660 = vunpack.c.l.b16 %v1491
      %v1661 = vunpack.c.h.b16 %v1491
      %v1662 = vunpack.c.l.b16 %v1492
      %v1663 = vunpack.c.h.b16 %v1492
      %v1664 = vunpack.c.l.b16 %v1493
      %v1665 = vunpack.c.h.b16 %v1493
      %v1666 = vunpack.c.l.b16 %v1494
      %v1667 = vunpack.c.h.b16 %v1494
      %v1668 = vunpack.c.l.b16 %v1495
      %v1669 = vunpack.c.h.b16 %v1495
      %v1670 = vunpack.c.l.b16 %v1496
      %v1671 = vunpack.c.h.b16 %v1496
      %v1672 = vunpack.c.l.b16 %v1497
      %v1673 = vunpack.c.h.b16 %v1497
      %v1674 = vunpack.c.l.b16 %v1498
      %v1675 = vunpack.c.h.b16 %v1498
      %v1676 = vunpack.c.l.b16 %v1499
      %v1677 = vunpack.c.h.b16 %v1499
      %v1678 = vunpack.c.l.b16 %v1500
      %v1679 = vunpack.c.h.b16 %v1500
      %v1680 = vunpack.c.l.b16 %v1501
      %v1681 = vunpack.c.h.b16 %v1501
      %v1682 = vunpack.c.l.b16 %v1502
      %v1683 = vunpack.c.h.b16 %v1502
      %v1684 = vunpack.c.l.b16 %v1503
      %v1685 = vunpack.c.h.b16 %v1503
      %v1686 = vpack.c.b16 %v1592, %v1590
      %v1687 = vpack.c.b16 %v1593, %v1591
      %v1688 = vpack.c.b16 %v1596, %v1594
      %v1689 = vpack.c.b16 %v1597, %v1595
      %v1690 = vpack.c.b16 %v1600, %v1598
      %v1691 = vpack.c.b16 %v1601, %v1599
      %v1692 = vpack.c.b16 %v1604, %v1602
      %v1693 = vpack.c.b16 %v1605, %v1603
      %v1694 = vpack.c.b16 %v1608, %v1606
      %v1695 = vpack.c.b16 %v1609, %v1607
      %v1696 = vpack.c.b16 %v1612, %v1610
      %v1697 = vpack.c.b16 %v1613, %v1611
      %v1698 = vpack.c.b16 %v1616, %v1614
      %v1699 = vpack.c.b16 %v1617, %v1615
      %v1700 = vpack.c.b16 %v1620, %v1618
      %v1701 = vpack.c.b16 %v1621, %v1619
      %v1702 = vpack.c.b16 %v1624, %v1622
      %v1703 = vpack.c.b16 %v1625, %v1623
      %v1704 = vpack.c.b16 %v1628, %v1626
      %v1705 = vpack.c.b16 %v1629, %v1627
      %v1706 = vpack.c.b16 %v1632, %v1630
      %v1707 = vpack.c.b16 %v1633, %v1631
      %v1708 = vpack.c.b16 %v1636, %v1634
      %v1709 = vpack.c.b16 %v1637, %v1635
      %v1710 = vpack.c.b16 %v1640, %v1638
      %v1711 = vpack.c.b16 %v1641, %v1639
      %v1712 = vpack.c.b16 %v1644, %v1642
      %v1713 = vpack.c.b16 %v1645, %v1643
      %v1714 = vpack.c.b16 %v1648, %v1646
      %v1715 = vpack.c.b16 %v1649, %v1647
      %v1716 = vpack.c.b16 %v1652, %v1650
      %v1717 = vpack.c.b16 %v1653, %v1651
      %v1718 = vpack.c.b16 %v1656, %v1654
      %v1719 = vpack.c.b16 %v1657, %v1655
      %v1720 = vpack.c.b16 %v1660, %v1658
      %v1721 = vpack.c.b16 %v1661, %v1659
      %v1722 = vpack.c.b16 %v1664, %v1662
      %v1723 = vpack.c.b16 %v1665, %v1663
      %v1724 = vpack.c.b16 %v1668, %v1666
      %v1725 = vpack.c.b16 %v1669, %v1667
      %v1726 = vpack.c.b16 %v1672, %v1670
      %v1727 = vpack.c.b16 %v1673, %v1671
      %v1728 = vpack.c.b16 %v1676, %v1674
      %v1729 = vpack.c.b16 %v1677, %v1675
      %v1730 = vpack.c.b16 %v1680, %v1678
      %v1731 = vpack.c.b16 %v1681, %v1679
      %v1732 = vpack.c.b16 %v1684, %v1682
      %v1733 = vpack.c.b16 %v1685, %v1683
      %1782 = vmatprep.subr.bf16.mxu0 %v1687
      %1783 = vmatpush1.bf16.msra.mxu0 %v1686
      %1784 = vmatprep.subr.bf16.mxu0 %v1689
      %1785 = vmatpush1.bf16.msra.mxu0 %v1688
      %1786 = vmatprep.subr.bf16.mxu0 %v1691
      %1787 = vmatpush1.bf16.msra.mxu0 %v1690
      %1788 = vmatprep.subr.bf16.mxu0 %v1693
      %1789 = vmatpush1.bf16.msra.mxu0 %v1692
      %1790 = vmatprep.subr.bf16.mxu0 %v1695
      %1791 = vmatpush1.bf16.msra.mxu0 %v1694
      %1792 = vmatprep.subr.bf16.mxu0 %v1697
      %1793 = vmatpush1.bf16.msra.mxu0 %v1696
      %1794 = vmatprep.subr.bf16.mxu0 %v1699
      %1795 = vmatpush1.bf16.msra.mxu0 %v1698
      %1796 = vmatprep.subr.bf16.mxu0 %v1701
      %1797 = vmatpush1.bf16.msra.mxu0 %v1700
      %1798 = vmatprep.subr.bf16.mxu0 %v1703
      %1799 = vmatpush1.bf16.msra.mxu0 %v1702
      %1800 = vmatprep.subr.bf16.mxu0 %v1705
      %1801 = vmatpush1.bf16.msra.mxu0 %v1704
      %1802 = vmatprep.subr.bf16.mxu0 %v1707
      %1803 = vmatpush1.bf16.msra.mxu0 %v1706
      %1804 = vmatprep.subr.bf16.mxu0 %v1709
      %1805 = vmatpush1.bf16.msra.mxu0 %v1708
      %1806 = vmatprep.subr.bf16.mxu0 %v1711
      %1807 = vmatpush1.bf16.msra.mxu0 %v1710
      %1808 = vmatprep.subr.bf16.mxu0 %v1713
      %1809 = vmatpush1.bf16.msra.mxu0 %v1712
      %1810 = vmatprep.subr.bf16.mxu0 %v1715
      %1811 = vmatpush1.bf16.msra.mxu0 %v1714
      %1812 = vmatprep.subr.bf16.mxu0 %v1717
      %1813 = vmatpush1.bf16.msra.mxu0 %v1716
      %1814 = vmatprep.mubr.bf16.mxu0 %v1537
      %1815 = vmatmul.mubr.bf16.gmra.mrb[0].mxu0 %v1536
      %v1816 = vpop.f32.mrb[0].mxu0
      %v1817 = vadd.f32 0.0, %v1816
      %v1818 = vpop.f32.mrb[0].mxu0
      %v1819 = vadd.f32 0.0, %v1818
      %v1820 = vpop.f32.mrb[0].mxu0
      %v1821 = vadd.f32 0.0, %v1820
      %v1822 = vpop.f32.mrb[0].mxu0
      %v1823 = vadd.f32 0.0, %v1822
      %1824 = vdwg.mxu0
      %1825 = vmatprep.subr.bf16.mxu0 %v1719
      %1826 = vmatpush1.bf16.msra.mxu0 %v1718
      %1827 = vmatprep.subr.bf16.mxu0 %v1721
      %1828 = vmatpush1.bf16.msra.mxu0 %v1720
      %1829 = vmatprep.subr.bf16.mxu0 %v1723
      %1830 = vmatpush1.bf16.msra.mxu0 %v1722
      %1831 = vmatprep.subr.bf16.mxu0 %v1725
      %1832 = vmatpush1.bf16.msra.mxu0 %v1724
      %1833 = vmatprep.subr.bf16.mxu0 %v1727
      %1834 = vmatpush1.bf16.msra.mxu0 %v1726
      %1835 = vmatprep.subr.bf16.mxu0 %v1729
      %1836 = vmatpush1.bf16.msra.mxu0 %v1728
      %1837 = vmatprep.subr.bf16.mxu0 %v1731
      %1838 = vmatpush1.bf16.msra.mxu0 %v1730
      %1839 = vmatprep.subr.bf16.mxu0 %v1733
      %1840 = vmatpush1.bf16.msra.mxu0 %v1732
      %1841 = vmatprep.subr.bf16.mxu0 0
      %1842 = vmatpush1.bf16.msra.mxu0 0
      %1843 = vmatprep.subr.bf16.mxu0 0
      %1844 = vmatpush1.bf16.msra.mxu0 0
      %1845 = vmatprep.subr.bf16.mxu0 0
      %1846 = vmatpush1.bf16.msra.mxu0 0
      %1847 = vmatprep.subr.bf16.mxu0 0
      %1848 = vmatpush1.bf16.msra.mxu0 0
      %1849 = vmatprep.subr.bf16.mxu0 0
      %1850 = vmatpush1.bf16.msra.mxu0 0
      %1851 = vmatprep.subr.bf16.mxu0 0
      %1852 = vmatpush1.bf16.msra.mxu0 0
      %1853 = vmatprep.subr.bf16.mxu0 0
      %1854 = vmatpush1.bf16.msra.mxu0 0
      %1855 = vmatprep.subr.bf16.mxu0 0
      %1856 = vmatpush1.bf16.msra.mxu0 0
      %1857 = vmatprep.mubr.bf16.mxu0 0
      %1858 = vmatmul.mubr.bf16.gmra.mrb[0].mxu0 %v1538
      %v1859 = vpop.f32.mrb[0].mxu0
      %v1860 = vadd.f32 %v1817, %v1859
      %v1861 = vpop.f32.mrb[0].mxu0
      %v1862 = vadd.f32 %v1819, %v1861
      %v1863 = vpop.f32.mrb[0].mxu0
      %v1864 = vadd.f32 %v1821, %v1863
      %v1865 = vpop.f32.mrb[0].mxu0
      %v1866 = vadd.f32 %v1823, %v1865
      %1867 = vdwg.mxu0
      %v1868 = vld [vmem:[#allocation2] sm:$0xff]
      %v1869 = vld [vmem:[#allocation2 + $0x8] sm:$0xff]
      %v1870 = vld [vmem:[#allocation2 + $0x10] sm:$0xff]
      %v1871 = vld [vmem:[#allocation2 + $0x18] sm:$0xff]
      %v1872 = vadd.f32 %v1868, %v1860
      %v1873 = vadd.f32 %v1869, %v1862
      %v1874 = vadd.f32 %v1870, %v1864
      %v1875 = vadd.f32 %v1871, %v1866
      %1876 = vst [vmem:[#allocation2] sm:$0xff] %v1872
      %1877 = vst [vmem:[#allocation2 + $0x8] sm:$0xff] %v1873
      %1878 = vst [vmem:[#allocation2 + $0x10] sm:$0xff] %v1874
      %1879 = vst [vmem:[#allocation2 + $0x18] sm:$0xff] %v1875
      %v1880 = vld [vmem:[#allocation2] sm:$0xff]
      %v1881 = vld [vmem:[#allocation2 + $0x8] sm:$0xff]
      %v1882 = vld [vmem:[#allocation2 + $0x10] sm:$0xff]
      %v1883 = vld [vmem:[#allocation2 + $0x18] sm:$0xff]
      %v1884 = vld [vmem:[%s2] sm:$0x3]
      %v1886 = vlaneseq
      %v1887 = vshrl.u32 %v1886, 7
      %v1888 = vsub.s32 0, %v1887
      %v1889 = vrot.slane %v1884, %v1888
      %v1890 = vlaneseq
      %v1891 = vshrl.u32 %v1890, 7
      %v1892 = vsub.s32 1, %v1891
      %v1893 = vrot.slane %v1884, %v1892
      %v1896 = vadd.f32 %v1880, %v1889
      %v1897 = vadd.f32 %v1881, %v1893
      %v1898 = vadd.f32 %v1882, %v1889
      %v1899 = vadd.f32 %v1883, %v1893
      %v1900 = vmax.f32 %v1896, 0.0
      %v1901 = vmax.f32 %v1897, 0.0
      %v1902 = vmax.f32 %v1898, 0.0
      %v1903 = vmax.f32 %v1899, 0.0
      %v1908 = vcombine.low %v1900, %v1901
      %v1909 = vcombine.high %v1900, %v1901
      %v1910 = vcombine.low %v1902, %v1903
      %v1911 = vcombine.high %v1902, %v1903
      %v1916 = vcombine.high %v1908, %v1908
      %v1917 = vcombine.high %v1909, %v1909
      %v1918 = vcombine.high %v1910, %v1910
      %v1919 = vcombine.high %v1911, %v1911
      %v1924 = vpack.c.bf16 %v1908, %v1908
      %v1925 = vpack.c.bf16 %v1916, %v1916
      %v1926 = vpack.c.bf16 %v1909, %v1909
      %v1927 = vpack.c.bf16 %v1917, %v1917
      %v1928 = vpack.c.bf16 %v1910, %v1910
      %v1929 = vpack.c.bf16 %v1918, %v1918
      %v1930 = vpack.c.bf16 %v1911, %v1911
      %v1931 = vpack.c.bf16 %v1919, %v1919
      %v1940 = vcombine.low %v1924, %v1925
      %v1942 = vunpack.c.l.s4 1983009808
      %v1943 = vunpack.c.0.s8 %v1942
      %v1944 = vlaneseq
      %v1945 = vshrl.u32 %v1944, 7
      %v1946 = vsub.s32 %v1943, %v1945
      %v1947 = vrot.slane %v1940, %v1946
      %v1948 = vcombine.low %v1926, %v1927
      %v1950 = vunpack.c.l.s4 1983009808
      %v1951 = vunpack.c.0.s8 %v1950
      %v1952 = vlaneseq
      %v1953 = vshrl.u32 %v1952, 7
      %v1954 = vsub.s32 %v1951, %v1953
      %v1955 = vrot.slane %v1948, %v1954
      %v1956 = vcombine.low %v1928, %v1929
      %v1958 = vunpack.c.l.s4 1983009808
      %v1959 = vunpack.c.0.s8 %v1958
      %v1960 = vlaneseq
      %v1961 = vshrl.u32 %v1960, 7
      %v1962 = vsub.s32 %v1959, %v1961
      %v1963 = vrot.slane %v1956, %v1962
      %v1964 = vcombine.low %v1930, %v1931
      %v1966 = vunpack.c.l.s4 1983009808
      %v1967 = vunpack.c.0.s8 %v1966
      %v1968 = vlaneseq
      %v1969 = vshrl.u32 %v1968, 7
      %v1970 = vsub.s32 %v1967, %v1969
      %v1971 = vrot.slane %v1964, %v1970
      %1976 = vst [vmem:[%s201] sm:$0xf] %v1947
      %1977 = vst [vmem:[%s201 + $0x4] sm:$0xf] %v1955
      %1978 = vst [vmem:[%s201 + $0x8] sm:$0xf] %v1963
      %1979 = vst [vmem:[%s201 + $0xc] sm:$0xf] %v1971
      %s1980 = smul.u32 4, %s19
      %p1981 = scmp.lt.s32.totalorder %s18, 1
      %s1982 = scalar_select %p1981, %s18, 1
      %p1983 = scmp.lt.s32.totalorder %s1980, 3
      %s1984 = scalar_select %p1983, %s1980, 3
      %s1985 = smul.addr %s1984, 2
      %s1986 = smul.addr %s1982, 8
      %s1987 = sadd.s32 %s1985, %s1986
      %s1988 = smul.addr %s1987, 2
      %s1989 = scalar_lea.vmem %s3, %s1988
      // Predicated region
      $region33: #{correspondence_generation_forward.9} parent=31 // pred_check
        %p1990 = pneg %p116
      $region34: #{correspondence_generation_forward.9} parent=31 // pred_check_branch
        %1992 = sbr.rel (%p1990) target = $region36
      $region35: #{correspondence_generation_forward.9} parent=31 // pred_region
        %s1993 = smul.u32 4, %s19
      $region36: #{correspondence_generation_forward.9} parent=31 // pred_fallthru
        _
    $region32: #{correspondence_generation_forward.9} parent=5 // pred_fallthru
      _
    %p1994 = scmp.le.s32.totalorder 2, %s9
    // Predicated region
    $region37: #{correspondence_generation_forward.9} parent=5 // pred_check
      %p1995 = pneg %p1994
    $region38: #{correspondence_generation_forward.9} parent=5 // pred_check_branch
      %1997 = sbr.rel (%p1995) target = $region40
    $region39: #{correspondence_generation_forward.9} parent=5 // pred_region
      %s1998 = ssub.s32 %s9, 2
      // Predicated region
      $region41: #{correspondence_generation_forward.9} parent=39 // pred_check
        %p1999 = pneg %p122
      $region42: #{correspondence_generation_forward.9} parent=39 // pred_check_branch
        %2001 = sbr.rel (%p1999) target = $region44
      $region43: #{correspondence_generation_forward.9} parent=39 // pred_region
        %s2002 = smul.u32 4, %s21
        %p2003 = scmp.lt.s32.totalorder %s20, 1
        %s2004 = scalar_select %p2003, %s20, 1
        %p2005 = scmp.lt.s32.totalorder %s2002, 3
        %s2006 = scalar_select %p2005, %s2002, 3
        %s2007 = smul.addr %s2006, 2
        %s2008 = smul.addr %s2004, 8
        %s2009 = sadd.s32 %s2007, %s2008
        %s2010 = smul.addr %s2009, 2
        %s2011 = scalar_lea.vmem %s3, %s2010
      $region44: #{correspondence_generation_forward.9} parent=39 // pred_fallthru
        _
    $region40: #{correspondence_generation_forward.9} parent=5 // pred_fallthru
      _
  $region6: #{correspondence_generation_forward.9} parent=0 // loop_footer
    %s13 = sadd.s32 1, %s9
  $region7: #{correspondence_generation_forward.9} parent=0 // loop_footer_branch
    %8 = sbr.rel target = $region3
  $region8: #{correspondence_generation_forward.9} parent=0 // loop_exit
    _

</llo_original>
